<compile_context>
chip_gen: v7x
topology: tpu7x:2x2x1
jax: 0.10.0
libtpu: 0.0.40
codegen_flags: <defaults>
</compile_context>

<pallas_src>
import jax
import jax.numpy as jnp
from jax.experimental import pallas as pl
from jax.experimental.pallas import tpu as pltpu

POSE_DIM = 7


# ----------------------------------------------------------------------------
# Pallas kernels: tiled GEMM + bias + ReLU (+ residual / + pre-activation bias)
#   grid = (j over N, i over M, k over K);  k innermost (reduction)
# ----------------------------------------------------------------------------
def _kernel_plain(x_ref, w_ref, b_ref, o_ref, acc_ref):
    k = pl.program_id(2)

    @pl.when(k == 0)
    def _():
        acc_ref[...] = jnp.zeros_like(acc_ref)

    acc_ref[...] += jnp.dot(x_ref[...], w_ref[...],
                            preferred_element_type=jnp.float32)

    @pl.when(k == pl.num_programs(2) - 1)
    def _():
        y = jnp.maximum(acc_ref[...] + b_ref[...], 0.0)
        o_ref[...] = y.astype(o_ref.dtype)


def _kernel_res(x_ref, w_ref, b_ref, r_ref, o_ref, acc_ref):
    k = pl.program_id(2)

    @pl.when(k == 0)
    def _():
        acc_ref[...] = jnp.zeros_like(acc_ref)

    acc_ref[...] += jnp.dot(x_ref[...], w_ref[...],
                            preferred_element_type=jnp.float32)

    @pl.when(k == pl.num_programs(2) - 1)
    def _():
        y = jnp.maximum(acc_ref[...] + b_ref[...], 0.0)
        y = y + r_ref[...].astype(jnp.float32)          # residual AFTER relu
        o_ref[...] = y.astype(o_ref.dtype)


def _kernel_prebias(x_ref, w_ref, b_ref, p_ref, o_ref, acc_ref):
    k = pl.program_id(2)

    @pl.when(k == 0)
    def _():
        acc_ref[...] = jnp.zeros_like(acc_ref)

    acc_ref[...] += jnp.dot(x_ref[...], w_ref[...],
                            preferred_element_type=jnp.float32)

    @pl.when(k == pl.num_programs(2) - 1)
    def _():
        y = jnp.maximum(acc_ref[...] + b_ref[...] + p_ref[...], 0.0)
        o_ref[...] = y.astype(o_ref.dtype)


def _kernel_res_proj(x_ref, w1_ref, b1_ref, r_ref, w2_ref, b2_ref,
                     o_ref, acc_ref):
    """out = relu( (relu(x @ w1 + b1) + res).bf16 @ w2 + b2 )  (conv7+conv8)"""
    k = pl.program_id(1)

    @pl.when(k == 0)
    def _():
        acc_ref[...] = jnp.zeros_like(acc_ref)

    acc_ref[...] += jnp.dot(x_ref[...], w1_ref[...],
                            preferred_element_type=jnp.float32)

    @pl.when(k == pl.num_programs(1) - 1)
    def _():
        y = jnp.maximum(acc_ref[...] + b1_ref[...], 0.0)
        y = y + r_ref[...].astype(jnp.float32)           # residual AFTER relu
        y = y.astype(jnp.bfloat16)                       # matches bf16 storage
        z = jnp.dot(y, w2_ref[...], preferred_element_type=jnp.float32)
        o_ref[...] = jnp.maximum(z + b2_ref[...], 0.0).astype(o_ref.dtype)


# ----------------------------------------------------------------------------
# Tile-size selection
# ----------------------------------------------------------------------------
def _round_up(x, m):
    return ((x + m - 1) // m) * m


def _pick_tm(M):
    if M >= 256:
        return 256
    return _round_up(M, 8)       # full-M single tile (rows padded if needed)


def _pick_tn(N):
    cap = 256
    try:                          # v5e MXU is 4x128x128 -> tn=128 there
        kind = jax.devices()[0].device_kind.lower()
        if "v5e" in kind or "v5 lite" in kind or "v5litepod" in kind:
            cap = 128
    except Exception:
        pass
    for t in (cap, 128):
        if N % t == 0:
            return t
    return N


def _pick_tk(K):
    if K <= 512:
        return K                  # single K step, full-K block
    for cand in (512, 768, 384, 256, 128):
        if K % cand == 0:
            return cand
    return 128                    # fallback: K gets zero-padded


_VMEM_LIMIT = 32 * 1024 * 1024


# ----------------------------------------------------------------------------
# Tiled GEMM wrapper:  out = relu(cols @ w + bias [+ prebias]) [+ res]
# ----------------------------------------------------------------------------
def conv_gemm(cols, wmat, bias, *, res=None, prebias=None,
              out_dtype=jnp.bfloat16):
    M, K = cols.shape
    K2, N = wmat.shape
    assert K == K2
    if res is not None and prebias is not None:
        raise NotImplementedError("not needed by this network")

    tm, tn, tk = _pick_tm(M), _pick_tn(N), _pick_tk(K)
    Mp, Kp = _round_up(M, tm), _round_up(K, tk)

    x = cols.astype(jnp.bfloat16)
    w = wmat.astype(jnp.bfloat16)
    if Kp != K:
        x = jnp.pad(x, ((0, 0), (0, Kp - K)))
        w = jnp.pad(w, ((0, Kp - K), (0, 0)))
    if Mp != M:
        x = jnp.pad(x, ((0, Mp - M), (0, 0)))
    b2 = bias.reshape(1, N).astype(jnp.float32)

    grid = (N // tn, Mp // tm, Kp // tk)

    x_spec = pl.BlockSpec((tm, tk), lambda j, i, k: (i, k))
    w_spec = pl.BlockSpec((tk, tn), lambda j, i, k: (k, j))   # invariant in i
    b_spec = pl.BlockSpec((1, tn), lambda j, i, k: (0, j))
    mn_spec = pl.BlockSpec((tm, tn), lambda j, i, k: (i, j))

    in_specs = [x_spec, w_spec, b_spec]
    args = [x, w, b2]
    if prebias is not None:
        p = prebias.reshape(M, N).astype(jnp.float32)
        if Mp != M:
            p = jnp.pad(p, ((0, Mp - M), (0, 0)))
        in_specs.append(mn_spec)
        args.append(p)
        kernel = _kernel_prebias
    elif res is not None:
        r = res.reshape(M, N).astype(jnp.bfloat16)
        if Mp != M:
            r = jnp.pad(r, ((0, Mp - M), (0, 0)))
        in_specs.append(mn_spec)
        args.append(r)
        kernel = _kernel_res
    else:
        kernel = _kernel_plain

    out = pl.pallas_call(
        kernel,
        out_shape=jax.ShapeDtypeStruct((Mp, N), out_dtype),
        grid_spec=pltpu.PrefetchScalarGridSpec(
            num_scalar_prefetch=0,
            grid=grid,
            in_specs=in_specs,
            out_specs=mn_spec,
            scratch_shapes=[pltpu.VMEM((tm, tn), jnp.float32)]),
        compiler_params=pltpu.CompilerParams(
            dimension_semantics=("parallel", "parallel", "arbitrary"),
            vmem_limit_bytes=_VMEM_LIMIT),
    )(*args)

    if Mp != M:
        out = out[:M]
    return out


# ----------------------------------------------------------------------------
# Fused conv7 + conv8 GEMM:
#   out = relu( (relu(cols @ w1 + b1) + res).bf16 @ w2 + b2 )
# ----------------------------------------------------------------------------
def fused_res_proj_gemm(cols, w1mat, b1, res, w2mat, b2,
                        *, out_dtype=jnp.float32):
    M, K = cols.shape
    K2, N1 = w1mat.shape
    N1b, N2 = w2mat.shape
    assert K == K2 and N1 == N1b

    tm, tk = _pick_tm(M), _pick_tk(K)
    Mp, Kp = _round_up(M, tm), _round_up(K, tk)

    x = cols.astype(jnp.bfloat16)
    w1 = w1mat.astype(jnp.bfloat16)
    w2 = w2mat.astype(jnp.bfloat16)
    r = res.reshape(M, N1).astype(jnp.bfloat16)
    if Kp != K:
        x = jnp.pad(x, ((0, 0), (0, Kp - K)))
        w1 = jnp.pad(w1, ((0, Kp - K), (0, 0)))
    if Mp != M:
        x = jnp.pad(x, ((0, Mp - M), (0, 0)))
        r = jnp.pad(r, ((0, Mp - M), (0, 0)))
    b1_ = b1.reshape(1, N1).astype(jnp.float32)
    b2_ = b2.reshape(1, N2).astype(jnp.float32)

    grid = (Mp // tm, Kp // tk)

    out = pl.pallas_call(
        _kernel_res_proj,
        out_shape=jax.ShapeDtypeStruct((Mp, N2), out_dtype),
        grid_spec=pltpu.PrefetchScalarGridSpec(
            num_scalar_prefetch=0,
            grid=grid,
            in_specs=[
                pl.BlockSpec((tm, tk), lambda i, k: (i, k)),
                pl.BlockSpec((tk, N1), lambda i, k: (k, 0)),
                pl.BlockSpec((1, N1), lambda i, k: (0, 0)),
                pl.BlockSpec((tm, N1), lambda i, k: (i, 0)),
                pl.BlockSpec((N1, N2), lambda i, k: (0, 0)),
                pl.BlockSpec((1, N2), lambda i, k: (0, 0)),
            ],
            out_specs=pl.BlockSpec((tm, N2), lambda i, k: (i, 0)),
            scratch_shapes=[pltpu.VMEM((tm, N1), jnp.float32)]),
        compiler_params=pltpu.CompilerParams(
            dimension_semantics=("parallel", "arbitrary"),
            vmem_limit_bytes=_VMEM_LIMIT),
    )(x, w1, b1_, r, w2, b2_)

    if Mp != M:
        out = out[:M]
    return out


# ----------------------------------------------------------------------------
# im2col helpers (pure data rearrangement, stays in plain JAX)
# ----------------------------------------------------------------------------
def im2col_k2s2(x):
    B, H, W, C = x.shape
    Ho, Wo = H // 2, W // 2
    p = x.reshape(B, Ho, 2, Wo, 2, C).transpose(0, 1, 3, 2, 4, 5)
    return p.reshape(B * Ho * Wo, 4 * C), (B, Ho, Wo)


def im2col_k3s1p1(x):
    B, H, W, C = x.shape
    xp = jnp.pad(x, ((0, 0), (1, 1), (1, 1), (0, 0)))
    patches = jnp.stack(
        [xp[:, dh:dh + H, dw:dw + W, :] for dh in range(3) for dw in range(3)],
        axis=3)                                   # (B, H, W, 9, C)
    return patches.reshape(B * H * W, 9 * C), (B, H, W)


def im2col_k1s1(x):
    B, H, W, C = x.shape
    return x.reshape(B * H * W, C), (B, H, W)


def conv_block(x, w_hwio, b, *, kind, residual=None, prebias=None,
               out_dtype=jnp.bfloat16):
    """relu(conv(x) [+ prebias]) [+ residual], via im2col + Pallas GEMM."""
    if kind == "k2s2":
        cols, (B, Ho, Wo) = im2col_k2s2(x)
    elif kind == "k3s1p1":
        cols, (B, Ho, Wo) = im2col_k3s1p1(x)
    elif kind == "k1s1":
        cols, (B, Ho, Wo) = im2col_k1s1(x)
    else:
        raise ValueError(kind)
    kh, kw, cin, cout = w_hwio.shape
    wmat = w_hwio.reshape(kh * kw * cin, cout)
    res = None if residual is None else residual.reshape(B * Ho * Wo, cout)
    pre = None if prebias is None else prebias.reshape(B * Ho * Wo, cout)
    out = conv_gemm(cols, wmat, b, res=res, prebias=pre, out_dtype=out_dtype)
    return out.reshape(B, Ho, Wo, cout)


def conv7_conv8_block(x, w7, b7, residual, w8, b8):
    """relu(conv8(relu(conv7(x)) + residual)) with conv8 fused in-kernel."""
    cols, (B, Ho, Wo) = im2col_k3s1p1(x)
    kh, kw, cin, n1 = w7.shape
    w7m = w7.reshape(kh * kw * cin, n1)
    w8m = w8.reshape(w8.shape[2], w8.shape[3])      # 1x1 conv -> (Cin, Cout)
    res = residual.reshape(B * Ho * Wo, n1)
    out = fused_res_proj_gemm(cols, w7m, b7, res, w8m, b8,
                              out_dtype=jnp.float32)
    return out.reshape(B, Ho, Wo, w8.shape[3])


def _pose_pre(v_map, w_full):
    """Exact contribution of the (spatially constant, zero-padded) pose
    channels through a 3x3/pad=1 conv; tiny, computed in plain JAX (f32)."""
    w_pose = w_full[:, :, -POSE_DIM:, :].astype(jnp.float32)
    return jax.lax.conv_general_dilated(
        v_map, w_pose, (1, 1), [(1, 1), (1, 1)],
        dimension_numbers=("NHWC", "HWIO", "NHWC"))


def _pose_pre_fused(v_map, w_list):
    """Same as _pose_pre but for several convs sharing the input, with their
    output channels concatenated (conv5 || conv6)."""
    w_pose = jnp.concatenate(
        [w[:, :, -POSE_DIM:, :] for w in w_list], axis=-1).astype(jnp.float32)
    return jax.lax.conv_general_dilated(
        v_map, w_pose, (1, 1), [(1, 1), (1, 1)],
        dimension_numbers=("NHWC", "HWIO", "NHWC"))


# ----------------------------------------------------------------------------
# Tower forward (matches the PyTorch module, NHWC layout)
# ----------------------------------------------------------------------------
def tower_forward(params, x, v):
    # x: (B, H, W, 1) NHWC ; v: (B, POSE_DIM)
    skip_in = conv_block(x, params["w1"], params["b1"], kind="k2s2")
    skip_out = conv_block(skip_in, params["w2"], params["b2"], kind="k2s2")
    r = conv_block(skip_in, params["w3"], params["b3"], kind="k3s1p1")
    r = conv_block(r, params["w4"], params["b4"], kind="k2s2",
                   residual=skip_out)

    B, Ho, Wo, _ = r.shape
    v_map = jnp.broadcast_to(
        v[:, None, None, :].astype(jnp.float32), (B, Ho, Wo, POSE_DIM))
    c_sp = params["w5"].shape[2] - POSE_DIM        # 256 spatial channels
    n5 = params["w5"].shape[3]                     # 256

    # conv5 + conv6 share the same im2col'd input -> fuse into one GEMM
    # (spatial part through Pallas, K = 2304 lane aligned; pose part folded
    #  in exactly as a pre-activation bias).
    w56 = jnp.concatenate([params["w5"][:, :, :c_sp, :],
                           params["w6"][:, :, :c_sp, :]], axis=-1)
    b56 = jnp.concatenate([params["b5"], params["b6"]])
    pre56 = _pose_pre_fused(v_map, [params["w5"], params["w6"]])
    out56 = conv_block(r, w56, b56, kind="k3s1p1", prebias=pre56)
    skip_out = out56[..., :n5]       # conv5 output
    r6 = out56[..., n5:]             # conv6 output

    # conv7 (+residual) with conv8 (1x1) fused into its epilogue.
    out = conv7_conv8_block(r6, params["w7"], params["b7"], skip_out,
                            params["w8"], params["b8"])
    return out  # (B, H/4, W/4, 256) NHWC


# ----------------------------------------------------------------------------
# References
# ----------------------------------------------------------------------------
def _ref_conv_f32(x, w, b, stride, pad):
    y = jax.lax.conv_general_dilated(
        x, w, (stride, stride), pad,
        dimension_numbers=("NHWC", "HWIO", "NHWC"))
    return y + b


def tower_reference_f32(params, x, v):
    """Straight f32 translation of the PyTorch module (independent ground
    truth)."""
    relu = jax.nn.relu
    skip_in = relu(_ref_conv_f32(x, params["w1"], params["b1"], 2, "VALID"))
    skip_out = relu(_ref_conv_f32(skip_in, params["w2"], params["b2"], 2, "VALID"))
    r = relu(_ref_conv_f32(skip_in, params["w3"], params["b3"], 1, [(1, 1), (1, 1)]))
    r = relu(_ref_conv_f32(r, params["w4"], params["b4"], 2, "VALID")) + skip_out
    B, Ho, Wo, _ = r.shape
    v_map = jnp.broadcast_to(v[:, None, None, :], (B, Ho, Wo, POSE_DIM))
    skip_in = jnp.concatenate([r, v_map], axis=-1)
    skip_out = relu(_ref_conv_f32(skip_in, params["w5"], params["b5"], 1, [(1, 1), (1, 1)]))
    r = relu(_ref_conv_f32(skip_in, params["w6"], params["b6"], 1, [(1, 1), (1, 1)]))
    r = relu(_ref_conv_f32(r, params["w7"], params["b7"], 1, [(1, 1), (1, 1)])) + skip_out
    r = relu(_ref_conv_f32(r, params["w8"], params["b8"], 1, "VALID"))
    return r


def tower_reference_bf16(params, x, v):
    """Reference with the same bf16-operand / f32-accumulate / bf16-storage
    arithmetic as the kernel path (tight comparison target)."""
    bf16 = jnp.bfloat16

    def conv(a, w, b, stride, pad, prebias=None, res=None, out_dtype=bf16):
        y = jax.lax.conv_general_dilated(
            a.astype(bf16), w.astype(bf16), (stride, stride), pad,
            dimension_numbers=("NHWC", "HWIO", "NHWC"),
            preferred_element_type=jnp.float32)
        y = y + b.astype(jnp.float32)
        if prebias is not None:
            y = y + prebias
        y = jnp.maximum(y, 0.0)
        if res is not None:
            y = y + res.astype(jnp.float32)
        return y.astype(out_dtype)

    skip_in = conv(x, params["w1"], params["b1"], 2, "VALID")
    skip_out = conv(skip_in, params["w2"], params["b2"], 2, "VALID")
    r = conv(skip_in, params["w3"], params["b3"], 1, [(1, 1), (1, 1)])
    r = conv(r, params["w4"], params["b4"], 2, "VALID", res=skip_out)
    B, Ho, Wo, _ = r.shape
    v_map = jnp.broadcast_to(
        v[:, None, None, :].astype(jnp.float32), (B, Ho, Wo, POSE_DIM))
    c_sp = params["w5"].shape[2] - POSE_DIM
    skip_out = conv(r, params["w5"][:, :, :c_sp, :], params["b5"], 1,
                    [(1, 1), (1, 1)], prebias=_pose_pre(v_map, params["w5"]))
    r2 = conv(r, params["w6"][:, :, :c_sp, :], params["b6"], 1,
              [(1, 1), (1, 1)], prebias=_pose_pre(v_map, params["w6"]))
    r2 = conv(r2, params["w7"], params["b7"], 1, [(1, 1), (1, 1)], res=skip_out)
    r2 = conv(r2, params["w8"], params["b8"], 1, "VALID", out_dtype=jnp.float32)
    return r2


# ----------------------------------------------------------------------------
# Deterministic parameter init (HWIO weights, matching Conv2d shapes)
# ----------------------------------------------------------------------------
def init_params(key):
    shapes = {
        "w1": (2, 2, 1, 256),
        "w2": (2, 2, 256, 256),
        "w3": (3, 3, 256, 128),
        "w4": (2, 2, 128, 256),
        "w5": (3, 3, 256 + POSE_DIM, 256),
        "w6": (3, 3, 256 + POSE_DIM, 128),
        "w7": (3, 3, 128, 256),
        "w8": (1, 1, 256, 256),
    }
    params = {}
    keys = jax.random.split(key, 2 * len(shapes))
    for i, (name, shp) in enumerate(shapes.items()):
        fan_in = shp[0] * shp[1] * shp[2]
        scale = 1.0 / jnp.sqrt(jnp.float32(fan_in))
        params[name] = scale * jax.random.normal(keys[2 * i], shp, jnp.float32)
        params["b" + name[1:]] = 0.1 * jax.random.normal(
            keys[2 * i + 1], (shp[3],), jnp.float32)
    return params


if __name__ == "__main__":
    key = jax.random.PRNGKey(0)
    kp, kx, kv = jax.random.split(key, 3)

    params = init_params(kp)

    B, H, W = 2, 16, 16
    x_nchw = jax.random.normal(kx, (B, 1, H, W), jnp.float32)   # PyTorch layout
    v = jax.random.normal(kv, (B, POSE_DIM), jnp.float32)
    x_nhwc = jnp.transpose(x_nchw, (0, 2, 3, 1))                # kernel layout

    tower = jax.jit(tower_forward)
    out = jax.block_until_ready(tower(params, x_nhwc, v))
    assert out.shape == (B, H // 4, W // 4, 256), out.shape

    ref_bf16 = jax.block_until_ready(tower_reference_bf16(params, x_nhwc, v))
    ref_f32 = jax.block_until_ready(tower_reference_f32(params, x_nhwc, v))

    err_bf16 = float(jnp.max(jnp.abs(out - ref_bf16)))
    err_f32 = float(jnp.max(jnp.abs(out - ref_f32)))
    if err_bf16 > 2e-2:
        raise AssertionError(
            f"mismatch vs bf16-arithmetic reference, max|err|={err_bf16}")
    if err_f32 > 0.3:
        raise AssertionError(
            f"mismatch vs f32 reference (beyond bf16 tolerance), max|err|={err_f32}")

    print("KERNEL_OK")
</pallas_src>

<mosaic_0001>
module attributes {stable_mosaic.version = 11 : i64} {
  func.func @_kernel_plain(%arg0: i32, %arg1: i32, %arg2: i32, %arg3: memref<128x4xbf16, #tpu.memory_space<vmem>>, %arg4: memref<4x256xbf16, #tpu.memory_space<vmem>>, %arg5: memref<1x256xf32, #tpu.memory_space<vmem>>, %arg6: memref<128x256xbf16, #tpu.memory_space<vmem>>, %arg7: memref<128x256xf32, #tpu.memory_space<vmem>>) attributes {dimension_semantics = [#tpu.dimension_semantics<parallel>, #tpu.dimension_semantics<parallel>, #tpu.dimension_semantics<arbitrary>], iteration_bounds = array<i64: 1, 1, 1>, scalar_prefetch = 0 : i64, scratch_operands = 1 : i64, tpu.core_type = #tpu.core_type<tc>, window_params = [{transform_indices = @transform_0, window_bounds = array<i64: 128, 4>}, {transform_indices = @transform_1, window_bounds = array<i64: 4, 256>}, {transform_indices = @transform_2, window_bounds = array<i64: 1, 256>}, {transform_indices = @transform_3, window_bounds = array<i64: 128, 256>}]} {
    %c0_i32 = arith.constant 0 : i32
    %0 = arith.cmpi eq, %arg2, %c0_i32 : i32
    %1 = arith.extui %0 : i1 to i32
    %c0_i32_0 = arith.constant 0 : i32
    %2 = arith.cmpi ne, %1, %c0_i32_0 : i32
    scf.if %2 {
      %cst_10 = arith.constant 0.000000e+00 : f32
      %12 = vector.broadcast %cst_10 : f32 to vector<128x256xf32>
      %c0_11 = arith.constant 0 : index
      %c0_12 = arith.constant 0 : index
      %13 = vector.load %arg7[%c0_11, %c0_12] : memref<128x256xf32, #tpu.memory_space<vmem>>, vector<128x256xf32>
      tpu.vector_store %arg7[%c0_11, %c0_12], %12 {strides = array<i32>} : memref<128x256xf32, #tpu.memory_space<vmem>>, vector<128x256xf32>,
    } else {
    }
    %c0 = arith.constant 0 : index
    %c0_1 = arith.constant 0 : index
    %3 = vector.load %arg7[%c0, %c0_1] : memref<128x256xf32, #tpu.memory_space<vmem>>, vector<128x256xf32>
    %c0_2 = arith.constant 0 : index
    %c0_3 = arith.constant 0 : index
    %4 = vector.load %arg3[%c0_2, %c0_3] : memref<128x4xbf16, #tpu.memory_space<vmem>>, vector<128x4xbf16>
    %c0_4 = arith.constant 0 : index
    %c0_5 = arith.constant 0 : index
    %5 = vector.load %arg4[%c0_4, %c0_5] : memref<4x256xbf16, #tpu.memory_space<vmem>>, vector<4x256xbf16>
    %cst = arith.constant dense<0.000000e+00> : vector<128x256xf32>
    %6 = tpu.matmul %4, %5, %cst {dimension_numbers = #tpu.dot_dimension_numbers<[1], [0], [0], [1], [0, 0, 1, 1], [], []>} : vector<128x4xbf16>, vector<4x256xbf16>, vector<128x256xf32> -> vector<128x256xf32>
    %7 = arith.addf %3, %6 : vector<128x256xf32>
    %c0_6 = arith.constant 0 : index
    %c0_7 = arith.constant 0 : index
    %8 = vector.load %arg7[%c0_6, %c0_7] : memref<128x256xf32, #tpu.memory_space<vmem>>, vector<128x256xf32>
    tpu.vector_store %arg7[%c0_6, %c0_7], %7 {strides = array<i32>} : memref<128x256xf32, #tpu.memory_space<vmem>>, vector<128x256xf32>,
    %c0_i32_8 = arith.constant 0 : i32
    %9 = arith.cmpi eq, %arg2, %c0_i32_8 : i32
    %10 = arith.extui %9 : i1 to i32
    %c0_i32_9 = arith.constant 0 : i32
    %11 = arith.cmpi ne, %10, %c0_i32_9 : i32
    scf.if %11 {
      %c0_10 = arith.constant 0 : index
      %c0_11 = arith.constant 0 : index
      %12 = vector.load %arg7[%c0_10, %c0_11] : memref<128x256xf32, #tpu.memory_space<vmem>>, vector<128x256xf32>
      %c0_12 = arith.constant 0 : index
      %c0_13 = arith.constant 0 : index
      %13 = vector.load %arg5[%c0_12, %c0_13] : memref<1x256xf32, #tpu.memory_space<vmem>>, vector<1x256xf32>
      %14 = vector.broadcast %13 : vector<1x256xf32> to vector<128x256xf32>
      %15 = arith.addf %12, %14 : vector<128x256xf32>
      %cst_14 = arith.constant 0.000000e+00 : f32
      %16 = vector.broadcast %cst_14 : f32 to vector<128x256xf32>
      %17 = arith.maximumf %15, %16 : vector<128x256xf32>
      %18 = arith.truncf %17 : vector<128x256xf32> to vector<128x256xbf16>
      %c0_15 = arith.constant 0 : index
      %c0_16 = arith.constant 0 : index
      %19 = vector.load %arg6[%c0_15, %c0_16] : memref<128x256xbf16, #tpu.memory_space<vmem>>, vector<128x256xbf16>
      tpu.vector_store %arg6[%c0_15, %c0_16], %18 {strides = array<i32>} : memref<128x256xbf16, #tpu.memory_space<vmem>>, vector<128x256xbf16>,
    } else {
    }
    return
  }
  func.func @transform_0(%arg0: i32, %arg1: i32, %arg2: i32) -> (i32, i32) {
    %c0_i32 = arith.constant 0 : i32
    return %arg1, %arg2 : i32, i32
  }
  func.func @transform_1(%arg0: i32, %arg1: i32, %arg2: i32) -> (i32, i32) {
    %c0_i32 = arith.constant 0 : i32
    return %arg2, %arg0 : i32, i32
  }
  func.func @transform_2(%arg0: i32, %arg1: i32, %arg2: i32) -> (i32, i32) {
    %c0_i32 = arith.constant 0 : i32
    %c0_i32_0 = arith.constant 0 : i32
    return %c0_i32, %arg0 : i32, i32
  }
  func.func @transform_3(%arg0: i32, %arg1: i32, %arg2: i32) -> (i32, i32) {
    %c0_i32 = arith.constant 0 : i32
    return %arg1, %arg0 : i32, i32
  }
}

module attributes {stable_mosaic.version = 11 : i64} {
  func.func @_kernel_plain(%arg0: i32, %arg1: i32, %arg2: i32, %arg3: memref<128x768xbf16, #tpu.memory_space<vmem>>, %arg4: memref<768x128xbf16, #tpu.memory_space<vmem>>, %arg5: memref<1x128xf32, #tpu.memory_space<vmem>>, %arg6: memref<128x128xbf16, #tpu.memory_space<vmem>>, %arg7: memref<128x128xf32, #tpu.memory_space<vmem>>) attributes {dimension_semantics = [#tpu.dimension_semantics<parallel>, #tpu.dimension_semantics<parallel>, #tpu.dimension_semantics<arbitrary>], iteration_bounds = array<i64: 1, 1, 3>, scalar_prefetch = 0 : i64, scratch_operands = 1 : i64, tpu.core_type = #tpu.core_type<tc>, window_params = [{transform_indices = @transform_0, window_bounds = array<i64: 128, 768>}, {transform_indices = @transform_1, window_bounds = array<i64: 768, 128>}, {transform_indices = @transform_2, window_bounds = array<i64: 1, 128>}, {transform_indices = @transform_3, window_bounds = array<i64: 128, 128>}]} {
    %c0_i32 = arith.constant 0 : i32
    %0 = arith.cmpi eq, %arg2, %c0_i32 : i32
    %1 = arith.extui %0 : i1 to i32
    %c0_i32_0 = arith.constant 0 : i32
    %2 = arith.cmpi ne, %1, %c0_i32_0 : i32
    scf.if %2 {
      %cst_9 = arith.constant 0.000000e+00 : f32
      %12 = vector.broadcast %cst_9 : f32 to vector<128x128xf32>
      %c0_10 = arith.constant 0 : index
      %c0_11 = arith.constant 0 : index
      %13 = vector.load %arg7[%c0_10, %c0_11] : memref<128x128xf32, #tpu.memory_space<vmem>>, vector<128x128xf32>
      tpu.vector_store %arg7[%c0_10, %c0_11], %12 {strides = array<i32>} : memref<128x128xf32, #tpu.memory_space<vmem>>, vector<128x128xf32>,
    } else {
    }
    %c0 = arith.constant 0 : index
    %c0_1 = arith.constant 0 : index
    %3 = vector.load %arg7[%c0, %c0_1] : memref<128x128xf32, #tpu.memory_space<vmem>>, vector<128x128xf32>
    %c0_2 = arith.constant 0 : index
    %c0_3 = arith.constant 0 : index
    %4 = vector.load %arg3[%c0_2, %c0_3] : memref<128x768xbf16, #tpu.memory_space<vmem>>, vector<128x768xbf16>
    %c0_4 = arith.constant 0 : index
    %c0_5 = arith.constant 0 : index
    %5 = vector.load %arg4[%c0_4, %c0_5] : memref<768x128xbf16, #tpu.memory_space<vmem>>, vector<768x128xbf16>
    %cst = arith.constant dense<0.000000e+00> : vector<128x128xf32>
    %6 = tpu.matmul %4, %5, %cst {dimension_numbers = #tpu.dot_dimension_numbers<[1], [0], [0], [1], [0, 0, 1, 1], [], []>} : vector<128x768xbf16>, vector<768x128xbf16>, vector<128x128xf32> -> vector<128x128xf32>
    %7 = arith.addf %3, %6 : vector<128x128xf32>
    %c0_6 = arith.constant 0 : index
    %c0_7 = arith.constant 0 : index
    %8 = vector.load %arg7[%c0_6, %c0_7] : memref<128x128xf32, #tpu.memory_space<vmem>>, vector<128x128xf32>
    tpu.vector_store %arg7[%c0_6, %c0_7], %7 {strides = array<i32>} : memref<128x128xf32, #tpu.memory_space<vmem>>, vector<128x128xf32>,
    %c2_i32 = arith.constant 2 : i32
    %9 = arith.cmpi eq, %arg2, %c2_i32 : i32
    %10 = arith.extui %9 : i1 to i32
    %c0_i32_8 = arith.constant 0 : i32
    %11 = arith.cmpi ne, %10, %c0_i32_8 : i32
    scf.if %11 {
      %c0_9 = arith.constant 0 : index
      %c0_10 = arith.constant 0 : index
      %12 = vector.load %arg7[%c0_9, %c0_10] : memref<128x128xf32, #tpu.memory_space<vmem>>, vector<128x128xf32>
      %c0_11 = arith.constant 0 : index
      %c0_12 = arith.constant 0 : index
      %13 = vector.load %arg5[%c0_11, %c0_12] : memref<1x128xf32, #tpu.memory_space<vmem>>, vector<1x128xf32>
      %14 = vector.broadcast %13 : vector<1x128xf32> to vector<128x128xf32>
      %15 = arith.addf %12, %14 : vector<128x128xf32>
      %cst_13 = arith.constant 0.000000e+00 : f32
      %16 = vector.broadcast %cst_13 : f32 to vector<128x128xf32>
      %17 = arith.maximumf %15, %16 : vector<128x128xf32>
      %18 = arith.truncf %17 : vector<128x128xf32> to vector<128x128xbf16>
      %c0_14 = arith.constant 0 : index
      %c0_15 = arith.constant 0 : index
      %19 = vector.load %arg6[%c0_14, %c0_15] : memref<128x128xbf16, #tpu.memory_space<vmem>>, vector<128x128xbf16>
      tpu.vector_store %arg6[%c0_14, %c0_15], %18 {strides = array<i32>} : memref<128x128xbf16, #tpu.memory_space<vmem>>, vector<128x128xbf16>,
    } else {
    }
    return
  }
  func.func @transform_0(%arg0: i32, %arg1: i32, %arg2: i32) -> (i32, i32) {
    %c0_i32 = arith.constant 0 : i32
    return %arg1, %arg2 : i32, i32
  }
  func.func @transform_1(%arg0: i32, %arg1: i32, %arg2: i32) -> (i32, i32) {
    %c0_i32 = arith.constant 0 : i32
    return %arg2, %arg0 : i32, i32
  }
  func.func @transform_2(%arg0: i32, %arg1: i32, %arg2: i32) -> (i32, i32) {
    %c0_i32 = arith.constant 0 : i32
    %c0_i32_0 = arith.constant 0 : i32
    return %c0_i32, %arg0 : i32, i32
  }
  func.func @transform_3(%arg0: i32, %arg1: i32, %arg2: i32) -> (i32, i32) {
    %c0_i32 = arith.constant 0 : i32
    return %arg1, %arg0 : i32, i32
  }
}

module attributes {stable_mosaic.version = 11 : i64} {
  func.func @_kernel_plain(%arg0: i32, %arg1: i32, %arg2: i32, %arg3: memref<32x512xbf16, #tpu.memory_space<vmem>>, %arg4: memref<512x256xbf16, #tpu.memory_space<vmem>>, %arg5: memref<1x256xf32, #tpu.memory_space<vmem>>, %arg6: memref<32x256xbf16, #tpu.memory_space<vmem>>, %arg7: memref<32x256xf32, #tpu.memory_space<vmem>>) attributes {dimension_semantics = [#tpu.dimension_semantics<parallel>, #tpu.dimension_semantics<parallel>, #tpu.dimension_semantics<arbitrary>], iteration_bounds = array<i64: 1, 1, 2>, scalar_prefetch = 0 : i64, scratch_operands = 1 : i64, tpu.core_type = #tpu.core_type<tc>, window_params = [{transform_indices = @transform_0, window_bounds = array<i64: 32, 512>}, {transform_indices = @transform_1, window_bounds = array<i64: 512, 256>}, {transform_indices = @transform_2, window_bounds = array<i64: 1, 256>}, {transform_indices = @transform_3, window_bounds = array<i64: 32, 256>}]} {
    %c0_i32 = arith.constant 0 : i32
    %0 = arith.cmpi eq, %arg2, %c0_i32 : i32
    %1 = arith.extui %0 : i1 to i32
    %c0_i32_0 = arith.constant 0 : i32
    %2 = arith.cmpi ne, %1, %c0_i32_0 : i32
    scf.if %2 {
      %cst_9 = arith.constant 0.000000e+00 : f32
      %12 = vector.broadcast %cst_9 : f32 to vector<32x256xf32>
      %c0_10 = arith.constant 0 : index
      %c0_11 = arith.constant 0 : index
      %13 = vector.load %arg7[%c0_10, %c0_11] : memref<32x256xf32, #tpu.memory_space<vmem>>, vector<32x256xf32>
      tpu.vector_store %arg7[%c0_10, %c0_11], %12 {strides = array<i32>} : memref<32x256xf32, #tpu.memory_space<vmem>>, vector<32x256xf32>,
    } else {
    }
    %c0 = arith.constant 0 : index
    %c0_1 = arith.constant 0 : index
    %3 = vector.load %arg7[%c0, %c0_1] : memref<32x256xf32, #tpu.memory_space<vmem>>, vector<32x256xf32>
    %c0_2 = arith.constant 0 : index
    %c0_3 = arith.constant 0 : index
    %4 = vector.load %arg3[%c0_2, %c0_3] : memref<32x512xbf16, #tpu.memory_space<vmem>>, vector<32x512xbf16>
    %c0_4 = arith.constant 0 : index
    %c0_5 = arith.constant 0 : index
    %5 = vector.load %arg4[%c0_4, %c0_5] : memref<512x256xbf16, #tpu.memory_space<vmem>>, vector<512x256xbf16>
    %cst = arith.constant dense<0.000000e+00> : vector<32x256xf32>
    %6 = tpu.matmul %4, %5, %cst {dimension_numbers = #tpu.dot_dimension_numbers<[1], [0], [0], [1], [0, 0, 1, 1], [], []>} : vector<32x512xbf16>, vector<512x256xbf16>, vector<32x256xf32> -> vector<32x256xf32>
    %7 = arith.addf %3, %6 : vector<32x256xf32>
    %c0_6 = arith.constant 0 : index
    %c0_7 = arith.constant 0 : index
    %8 = vector.load %arg7[%c0_6, %c0_7] : memref<32x256xf32, #tpu.memory_space<vmem>>, vector<32x256xf32>
    tpu.vector_store %arg7[%c0_6, %c0_7], %7 {strides = array<i32>} : memref<32x256xf32, #tpu.memory_space<vmem>>, vector<32x256xf32>,
    %c1_i32 = arith.constant 1 : i32
    %9 = arith.cmpi eq, %arg2, %c1_i32 : i32
    %10 = arith.extui %9 : i1 to i32
    %c0_i32_8 = arith.constant 0 : i32
    %11 = arith.cmpi ne, %10, %c0_i32_8 : i32
    scf.if %11 {
      %c0_9 = arith.constant 0 : index
      %c0_10 = arith.constant 0 : index
      %12 = vector.load %arg7[%c0_9, %c0_10] : memref<32x256xf32, #tpu.memory_space<vmem>>, vector<32x256xf32>
      %c0_11 = arith.constant 0 : index
      %c0_12 = arith.constant 0 : index
      %13 = vector.load %arg5[%c0_11, %c0_12] : memref<1x256xf32, #tpu.memory_space<vmem>>, vector<1x256xf32>
      %14 = vector.broadcast %13 : vector<1x256xf32> to vector<32x256xf32>
      %15 = arith.addf %12, %14 : vector<32x256xf32>
      %cst_13 = arith.constant 0.000000e+00 : f32
      %16 = vector.broadcast %cst_13 : f32 to vector<32x256xf32>
      %17 = arith.maximumf %15, %16 : vector<32x256xf32>
      %18 = arith.truncf %17 : vector<32x256xf32> to vector<32x256xbf16>
      %c0_14 = arith.constant 0 : index
      %c0_15 = arith.constant 0 : index
      %19 = vector.load %arg6[%c0_14, %c0_15] : memref<32x256xbf16, #tpu.memory_space<vmem>>, vector<32x256xbf16>
      tpu.vector_store %arg6[%c0_14, %c0_15], %18 {strides = array<i32>} : memref<32x256xbf16, #tpu.memory_space<vmem>>, vector<32x256xbf16>,
    } else {
    }
    return
  }
  func.func @transform_0(%arg0: i32, %arg1: i32, %arg2: i32) -> (i32, i32) {
    %c0_i32 = arith.constant 0 : i32
    return %arg1, %arg2 : i32, i32
  }
  func.func @transform_1(%arg0: i32, %arg1: i32, %arg2: i32) -> (i32, i32) {
    %c0_i32 = arith.constant 0 : i32
    return %arg2, %arg0 : i32, i32
  }
  func.func @transform_2(%arg0: i32, %arg1: i32, %arg2: i32) -> (i32, i32) {
    %c0_i32 = arith.constant 0 : i32
    %c0_i32_0 = arith.constant 0 : i32
    return %c0_i32, %arg0 : i32, i32
  }
  func.func @transform_3(%arg0: i32, %arg1: i32, %arg2: i32) -> (i32, i32) {
    %c0_i32 = arith.constant 0 : i32
    return %arg1, %arg0 : i32, i32
  }
}

module attributes {stable_mosaic.version = 11 : i64} {
  func.func @_kernel_res(%arg0: i32, %arg1: i32, %arg2: i32, %arg3: memref<32x512xbf16, #tpu.memory_space<vmem>>, %arg4: memref<512x256xbf16, #tpu.memory_space<vmem>>, %arg5: memref<1x256xf32, #tpu.memory_space<vmem>>, %arg6: memref<32x256xbf16, #tpu.memory_space<vmem>>, %arg7: memref<32x256xbf16, #tpu.memory_space<vmem>>, %arg8: memref<32x256xf32, #tpu.memory_space<vmem>>) attributes {dimension_semantics = [#tpu.dimension_semantics<parallel>, #tpu.dimension_semantics<parallel>, #tpu.dimension_semantics<arbitrary>], iteration_bounds = array<i64: 1, 1, 1>, scalar_prefetch = 0 : i64, scratch_operands = 1 : i64, tpu.core_type = #tpu.core_type<tc>, window_params = [{transform_indices = @transform_0, window_bounds = array<i64: 32, 512>}, {transform_indices = @transform_1, window_bounds = array<i64: 512, 256>}, {transform_indices = @transform_2, window_bounds = array<i64: 1, 256>}, {transform_indices = @transform_3, window_bounds = array<i64: 32, 256>}, {transform_indices = @transform_4, window_bounds = array<i64: 32, 256>}]} {
    %c0_i32 = arith.constant 0 : i32
    %0 = arith.cmpi eq, %arg2, %c0_i32 : i32
    %1 = arith.extui %0 : i1 to i32
    %c0_i32_0 = arith.constant 0 : i32
    %2 = arith.cmpi ne, %1, %c0_i32_0 : i32
    scf.if %2 {
      %cst_10 = arith.constant 0.000000e+00 : f32
      %12 = vector.broadcast %cst_10 : f32 to vector<32x256xf32>
      %c0_11 = arith.constant 0 : index
      %c0_12 = arith.constant 0 : index
      %13 = vector.load %arg8[%c0_11, %c0_12] : memref<32x256xf32, #tpu.memory_space<vmem>>, vector<32x256xf32>
      tpu.vector_store %arg8[%c0_11, %c0_12], %12 {strides = array<i32>} : memref<32x256xf32, #tpu.memory_space<vmem>>, vector<32x256xf32>,
    } else {
    }
    %c0 = arith.constant 0 : index
    %c0_1 = arith.constant 0 : index
    %3 = vector.load %arg8[%c0, %c0_1] : memref<32x256xf32, #tpu.memory_space<vmem>>, vector<32x256xf32>
    %c0_2 = arith.constant 0 : index
    %c0_3 = arith.constant 0 : index
    %4 = vector.load %arg3[%c0_2, %c0_3] : memref<32x512xbf16, #tpu.memory_space<vmem>>, vector<32x512xbf16>
    %c0_4 = arith.constant 0 : index
    %c0_5 = arith.constant 0 : index
    %5 = vector.load %arg4[%c0_4, %c0_5] : memref<512x256xbf16, #tpu.memory_space<vmem>>, vector<512x256xbf16>
    %cst = arith.constant dense<0.000000e+00> : vector<32x256xf32>
    %6 = tpu.matmul %4, %5, %cst {dimension_numbers = #tpu.dot_dimension_numbers<[1], [0], [0], [1], [0, 0, 1, 1], [], []>} : vector<32x512xbf16>, vector<512x256xbf16>, vector<32x256xf32> -> vector<32x256xf32>
    %7 = arith.addf %3, %6 : vector<32x256xf32>
    %c0_6 = arith.constant 0 : index
    %c0_7 = arith.constant 0 : index
    %8 = vector.load %arg8[%c0_6, %c0_7] : memref<32x256xf32, #tpu.memory_space<vmem>>, vector<32x256xf32>
    tpu.vector_store %arg8[%c0_6, %c0_7], %7 {strides = array<i32>} : memref<32x256xf32, #tpu.memory_space<vmem>>, vector<32x256xf32>,
    %c0_i32_8 = arith.constant 0 : i32
    %9 = arith.cmpi eq, %arg2, %c0_i32_8 : i32
    %10 = arith.extui %9 : i1 to i32
    %c0_i32_9 = arith.constant 0 : i32
    %11 = arith.cmpi ne, %10, %c0_i32_9 : i32
    scf.if %11 {
      %c0_10 = arith.constant 0 : index
      %c0_11 = arith.constant 0 : index
      %12 = vector.load %arg8[%c0_10, %c0_11] : memref<32x256xf32, #tpu.memory_space<vmem>>, vector<32x256xf32>
      %c0_12 = arith.constant 0 : index
      %c0_13 = arith.constant 0 : index
      %13 = vector.load %arg5[%c0_12, %c0_13] : memref<1x256xf32, #tpu.memory_space<vmem>>, vector<1x256xf32>
      %14 = vector.broadcast %13 : vector<1x256xf32> to vector<32x256xf32>
      %15 = arith.addf %12, %14 : vector<32x256xf32>
      %cst_14 = arith.constant 0.000000e+00 : f32
      %16 = vector.broadcast %cst_14 : f32 to vector<32x256xf32>
      %17 = arith.maximumf %15, %16 : vector<32x256xf32>
      %c0_15 = arith.constant 0 : index
      %c0_16 = arith.constant 0 : index
      %18 = vector.load %arg6[%c0_15, %c0_16] : memref<32x256xbf16, #tpu.memory_space<vmem>>, vector<32x256xbf16>
      %19 = arith.extf %18 : vector<32x256xbf16> to vector<32x256xf32>
      %20 = arith.addf %17, %19 : vector<32x256xf32>
      %21 = arith.truncf %20 : vector<32x256xf32> to vector<32x256xbf16>
      %c0_17 = arith.constant 0 : index
      %c0_18 = arith.constant 0 : index
      %22 = vector.load %arg7[%c0_17, %c0_18] : memref<32x256xbf16, #tpu.memory_space<vmem>>, vector<32x256xbf16>
      tpu.vector_store %arg7[%c0_17, %c0_18], %21 {strides = array<i32>} : memref<32x256xbf16, #tpu.memory_space<vmem>>, vector<32x256xbf16>,
    } else {
    }
    return
  }
  func.func @transform_0(%arg0: i32, %arg1: i32, %arg2: i32) -> (i32, i32) {
    %c0_i32 = arith.constant 0 : i32
    return %arg1, %arg2 : i32, i32
  }
  func.func @transform_1(%arg0: i32, %arg1: i32, %arg2: i32) -> (i32, i32) {
    %c0_i32 = arith.constant 0 : i32
    return %arg2, %arg0 : i32, i32
  }
  func.func @transform_2(%arg0: i32, %arg1: i32, %arg2: i32) -> (i32, i32) {
    %c0_i32 = arith.constant 0 : i32
    %c0_i32_0 = arith.constant 0 : i32
    return %c0_i32, %arg0 : i32, i32
  }
  func.func @transform_3(%arg0: i32, %arg1: i32, %arg2: i32) -> (i32, i32) {
    %c0_i32 = arith.constant 0 : i32
    return %arg1, %arg0 : i32, i32
  }
  func.func @transform_4(%arg0: i32, %arg1: i32, %arg2: i32) -> (i32, i32) {
    %c0_i32 = arith.constant 0 : i32
    return %arg1, %arg0 : i32, i32
  }
}

module attributes {stable_mosaic.version = 11 : i64} {
  func.func @_kernel_prebias(%arg0: i32, %arg1: i32, %arg2: i32, %arg3: memref<32x768xbf16, #tpu.memory_space<vmem>>, %arg4: memref<768x128xbf16, #tpu.memory_space<vmem>>, %arg5: memref<1x128xf32, #tpu.memory_space<vmem>>, %arg6: memref<32x128xf32, #tpu.memory_space<vmem>>, %arg7: memref<32x128xbf16, #tpu.memory_space<vmem>>, %arg8: memref<32x128xf32, #tpu.memory_space<vmem>>) attributes {dimension_semantics = [#tpu.dimension_semantics<parallel>, #tpu.dimension_semantics<parallel>, #tpu.dimension_semantics<arbitrary>], iteration_bounds = array<i64: 3, 1, 3>, scalar_prefetch = 0 : i64, scratch_operands = 1 : i64, tpu.core_type = #tpu.core_type<tc>, window_params = [{transform_indices = @transform_0, window_bounds = array<i64: 32, 768>}, {transform_indices = @transform_1, window_bounds = array<i64: 768, 128>}, {transform_indices = @transform_2, window_bounds = array<i64: 1, 128>}, {transform_indices = @transform_3, window_bounds = array<i64: 32, 128>}, {transform_indices = @transform_4, window_bounds = array<i64: 32, 128>}]} {
    %c0_i32 = arith.constant 0 : i32
    %0 = arith.cmpi eq, %arg2, %c0_i32 : i32
    %1 = arith.extui %0 : i1 to i32
    %c0_i32_0 = arith.constant 0 : i32
    %2 = arith.cmpi ne, %1, %c0_i32_0 : i32
    scf.if %2 {
      %cst_9 = arith.constant 0.000000e+00 : f32
      %12 = vector.broadcast %cst_9 : f32 to vector<32x128xf32>
      %c0_10 = arith.constant 0 : index
      %c0_11 = arith.constant 0 : index
      %13 = vector.load %arg8[%c0_10, %c0_11] : memref<32x128xf32, #tpu.memory_space<vmem>>, vector<32x128xf32>
      tpu.vector_store %arg8[%c0_10, %c0_11], %12 {strides = array<i32>} : memref<32x128xf32, #tpu.memory_space<vmem>>, vector<32x128xf32>,
    } else {
    }
    %c0 = arith.constant 0 : index
    %c0_1 = arith.constant 0 : index
    %3 = vector.load %arg8[%c0, %c0_1] : memref<32x128xf32, #tpu.memory_space<vmem>>, vector<32x128xf32>
    %c0_2 = arith.constant 0 : index
    %c0_3 = arith.constant 0 : index
    %4 = vector.load %arg3[%c0_2, %c0_3] : memref<32x768xbf16, #tpu.memory_space<vmem>>, vector<32x768xbf16>
    %c0_4 = arith.constant 0 : index
    %c0_5 = arith.constant 0 : index
    %5 = vector.load %arg4[%c0_4, %c0_5] : memref<768x128xbf16, #tpu.memory_space<vmem>>, vector<768x128xbf16>
    %cst = arith.constant dense<0.000000e+00> : vector<32x128xf32>
    %6 = tpu.matmul %4, %5, %cst {dimension_numbers = #tpu.dot_dimension_numbers<[1], [0], [0], [1], [0, 0, 1, 1], [], []>} : vector<32x768xbf16>, vector<768x128xbf16>, vector<32x128xf32> -> vector<32x128xf32>
    %7 = arith.addf %3, %6 : vector<32x128xf32>
    %c0_6 = arith.constant 0 : index
    %c0_7 = arith.constant 0 : index
    %8 = vector.load %arg8[%c0_6, %c0_7] : memref<32x128xf32, #tpu.memory_space<vmem>>, vector<32x128xf32>
    tpu.vector_store %arg8[%c0_6, %c0_7], %7 {strides = array<i32>} : memref<32x128xf32, #tpu.memory_space<vmem>>, vector<32x128xf32>,
    %c2_i32 = arith.constant 2 : i32
    %9 = arith.cmpi eq, %arg2, %c2_i32 : i32
    %10 = arith.extui %9 : i1 to i32
    %c0_i32_8 = arith.constant 0 : i32
    %11 = arith.cmpi ne, %10, %c0_i32_8 : i32
    scf.if %11 {
      %c0_9 = arith.constant 0 : index
      %c0_10 = arith.constant 0 : index
      %12 = vector.load %arg8[%c0_9, %c0_10] : memref<32x128xf32, #tpu.memory_space<vmem>>, vector<32x128xf32>
      %c0_11 = arith.constant 0 : index
      %c0_12 = arith.constant 0 : index
      %13 = vector.load %arg5[%c0_11, %c0_12] : memref<1x128xf32, #tpu.memory_space<vmem>>, vector<1x128xf32>
      %14 = vector.broadcast %13 : vector<1x128xf32> to vector<32x128xf32>
      %15 = arith.addf %12, %14 : vector<32x128xf32>
      %c0_13 = arith.constant 0 : index
      %c0_14 = arith.constant 0 : index
      %16 = vector.load %arg6[%c0_13, %c0_14] : memref<32x128xf32, #tpu.memory_space<vmem>>, vector<32x128xf32>
      %17 = arith.addf %15, %16 : vector<32x128xf32>
      %cst_15 = arith.constant 0.000000e+00 : f32
      %18 = vector.broadcast %cst_15 : f32 to vector<32x128xf32>
      %19 = arith.maximumf %17, %18 : vector<32x128xf32>
      %20 = arith.truncf %19 : vector<32x128xf32> to vector<32x128xbf16>
      %c0_16 = arith.constant 0 : index
      %c0_17 = arith.constant 0 : index
      %21 = vector.load %arg7[%c0_16, %c0_17] : memref<32x128xbf16, #tpu.memory_space<vmem>>, vector<32x128xbf16>
      tpu.vector_store %arg7[%c0_16, %c0_17], %20 {strides = array<i32>} : memref<32x128xbf16, #tpu.memory_space<vmem>>, vector<32x128xbf16>,
    } else {
    }
    return
  }
  func.func @transform_0(%arg0: i32, %arg1: i32, %arg2: i32) -> (i32, i32) {
    %c0_i32 = arith.constant 0 : i32
    return %arg1, %arg2 : i32, i32
  }
  func.func @transform_1(%arg0: i32, %arg1: i32, %arg2: i32) -> (i32, i32) {
    %c0_i32 = arith.constant 0 : i32
    return %arg2, %arg0 : i32, i32
  }
  func.func @transform_2(%arg0: i32, %arg1: i32, %arg2: i32) -> (i32, i32) {
    %c0_i32 = arith.constant 0 : i32
    %c0_i32_0 = arith.constant 0 : i32
    return %c0_i32, %arg0 : i32, i32
  }
  func.func @transform_3(%arg0: i32, %arg1: i32, %arg2: i32) -> (i32, i32) {
    %c0_i32 = arith.constant 0 : i32
    return %arg1, %arg0 : i32, i32
  }
  func.func @transform_4(%arg0: i32, %arg1: i32, %arg2: i32) -> (i32, i32) {
    %c0_i32 = arith.constant 0 : i32
    return %arg1, %arg0 : i32, i32
  }
}

module attributes {stable_mosaic.version = 11 : i64} {
  func.func @_kernel_res_proj(%arg0: i32, %arg1: i32, %arg2: memref<32x384xbf16, #tpu.memory_space<vmem>>, %arg3: memref<384x256xbf16, #tpu.memory_space<vmem>>, %arg4: memref<1x256xf32, #tpu.memory_space<vmem>>, %arg5: memref<32x256xbf16, #tpu.memory_space<vmem>>, %arg6: memref<256x256xbf16, #tpu.memory_space<vmem>>, %arg7: memref<1x256xf32, #tpu.memory_space<vmem>>, %arg8: memref<32x256xf32, #tpu.memory_space<vmem>>, %arg9: memref<32x256xf32, #tpu.memory_space<vmem>>) attributes {dimension_semantics = [#tpu.dimension_semantics<parallel>, #tpu.dimension_semantics<arbitrary>], iteration_bounds = array<i64: 1, 3>, scalar_prefetch = 0 : i64, scratch_operands = 1 : i64, tpu.core_type = #tpu.core_type<tc>, window_params = [{transform_indices = @transform_0, window_bounds = array<i64: 32, 384>}, {transform_indices = @transform_1, window_bounds = array<i64: 384, 256>}, {pipeline_mode = #tpu.pipeline_mode<synchronous>, transform_indices = @transform_2, window_bounds = array<i64: 1, 256>}, {transform_indices = @transform_3, window_bounds = array<i64: 32, 256>}, {pipeline_mode = #tpu.pipeline_mode<synchronous>, transform_indices = @transform_4, window_bounds = array<i64: 256, 256>}, {pipeline_mode = #tpu.pipeline_mode<synchronous>, transform_indices = @transform_5, window_bounds = array<i64: 1, 256>}, {transform_indices = @transform_6, window_bounds = array<i64: 32, 256>}]} {
    %c0_i32 = arith.constant 0 : i32
    %0 = arith.cmpi eq, %arg1, %c0_i32 : i32
    %1 = arith.extui %0 : i1 to i32
    %c0_i32_0 = arith.constant 0 : i32
    %2 = arith.cmpi ne, %1, %c0_i32_0 : i32
    scf.if %2 {
      %cst_9 = arith.constant 0.000000e+00 : f32
      %12 = vector.broadcast %cst_9 : f32 to vector<32x256xf32>
      %c0_10 = arith.constant 0 : index
      %c0_11 = arith.constant 0 : index
      %13 = vector.load %arg9[%c0_10, %c0_11] : memref<32x256xf32, #tpu.memory_space<vmem>>, vector<32x256xf32>
      tpu.vector_store %arg9[%c0_10, %c0_11], %12 {strides = array<i32>} : memref<32x256xf32, #tpu.memory_space<vmem>>, vector<32x256xf32>,
    } else {
    }
    %c0 = arith.constant 0 : index
    %c0_1 = arith.constant 0 : index
    %3 = vector.load %arg9[%c0, %c0_1] : memref<32x256xf32, #tpu.memory_space<vmem>>, vector<32x256xf32>
    %c0_2 = arith.constant 0 : index
    %c0_3 = arith.constant 0 : index
    %4 = vector.load %arg2[%c0_2, %c0_3] : memref<32x384xbf16, #tpu.memory_space<vmem>>, vector<32x384xbf16>
    %c0_4 = arith.constant 0 : index
    %c0_5 = arith.constant 0 : index
    %5 = vector.load %arg3[%c0_4, %c0_5] : memref<384x256xbf16, #tpu.memory_space<vmem>>, vector<384x256xbf16>
    %cst = arith.constant dense<0.000000e+00> : vector<32x256xf32>
    %6 = tpu.matmul %4, %5, %cst {dimension_numbers = #tpu.dot_dimension_numbers<[1], [0], [0], [1], [0, 0, 1, 1], [], []>} : vector<32x384xbf16>, vector<384x256xbf16>, vector<32x256xf32> -> vector<32x256xf32>
    %7 = arith.addf %3, %6 : vector<32x256xf32>
    %c0_6 = arith.constant 0 : index
    %c0_7 = arith.constant 0 : index
    %8 = vector.load %arg9[%c0_6, %c0_7] : memref<32x256xf32, #tpu.memory_space<vmem>>, vector<32x256xf32>
    tpu.vector_store %arg9[%c0_6, %c0_7], %7 {strides = array<i32>} : memref<32x256xf32, #tpu.memory_space<vmem>>, vector<32x256xf32>,
    %c2_i32 = arith.constant 2 : i32
    %9 = arith.cmpi eq, %arg1, %c2_i32 : i32
    %10 = arith.extui %9 : i1 to i32
    %c0_i32_8 = arith.constant 0 : i32
    %11 = arith.cmpi ne, %10, %c0_i32_8 : i32
    scf.if %11 {
      %c0_9 = arith.constant 0 : index
      %c0_10 = arith.constant 0 : index
      %12 = vector.load %arg9[%c0_9, %c0_10] : memref<32x256xf32, #tpu.memory_space<vmem>>, vector<32x256xf32>
      %c0_11 = arith.constant 0 : index
      %c0_12 = arith.constant 0 : index
      %13 = vector.load %arg4[%c0_11, %c0_12] : memref<1x256xf32, #tpu.memory_space<vmem>>, vector<1x256xf32>
      %14 = vector.broadcast %13 : vector<1x256xf32> to vector<32x256xf32>
      %15 = arith.addf %12, %14 : vector<32x256xf32>
      %cst_13 = arith.constant 0.000000e+00 : f32
      %16 = vector.broadcast %cst_13 : f32 to vector<32x256xf32>
      %17 = arith.maximumf %15, %16 : vector<32x256xf32>
      %c0_14 = arith.constant 0 : index
      %c0_15 = arith.constant 0 : index
      %18 = vector.load %arg5[%c0_14, %c0_15] : memref<32x256xbf16, #tpu.memory_space<vmem>>, vector<32x256xbf16>
      %19 = arith.extf %18 : vector<32x256xbf16> to vector<32x256xf32>
      %20 = arith.addf %17, %19 : vector<32x256xf32>
      %21 = arith.truncf %20 : vector<32x256xf32> to vector<32x256xbf16>
      %c0_16 = arith.constant 0 : index
      %c0_17 = arith.constant 0 : index
      %22 = vector.load %arg6[%c0_16, %c0_17] : memref<256x256xbf16, #tpu.memory_space<vmem>>, vector<256x256xbf16>
      %cst_18 = arith.constant dense<0.000000e+00> : vector<32x256xf32>
      %23 = tpu.matmul %21, %22, %cst_18 {dimension_numbers = #tpu.dot_dimension_numbers<[1], [0], [0], [1], [0, 0, 1, 1], [], []>} : vector<32x256xbf16>, vector<256x256xbf16>, vector<32x256xf32> -> vector<32x256xf32>
      %c0_19 = arith.constant 0 : index
      %c0_20 = arith.constant 0 : index
      %24 = vector.load %arg7[%c0_19, %c0_20] : memref<1x256xf32, #tpu.memory_space<vmem>>, vector<1x256xf32>
      %25 = vector.broadcast %24 : vector<1x256xf32> to vector<32x256xf32>
      %26 = arith.addf %23, %25 : vector<32x256xf32>
      %cst_21 = arith.constant 0.000000e+00 : f32
      %27 = vector.broadcast %cst_21 : f32 to vector<32x256xf32>
      %28 = arith.maximumf %26, %27 : vector<32x256xf32>
      %c0_22 = arith.constant 0 : index
      %c0_23 = arith.constant 0 : index
      %29 = vector.load %arg8[%c0_22, %c0_23] : memref<32x256xf32, #tpu.memory_space<vmem>>, vector<32x256xf32>
      tpu.vector_store %arg8[%c0_22, %c0_23], %28 {strides = array<i32>} : memref<32x256xf32, #tpu.memory_space<vmem>>, vector<32x256xf32>,
    } else {
    }
    return
  }
  func.func @transform_0(%arg0: i32, %arg1: i32) -> (i32, i32) {
    %c0_i32 = arith.constant 0 : i32
    return %arg0, %arg1 : i32, i32
  }
  func.func @transform_1(%arg0: i32, %arg1: i32) -> (i32, i32) {
    %c0_i32 = arith.constant 0 : i32
    %c0_i32_0 = arith.constant 0 : i32
    return %arg1, %c0_i32 : i32, i32
  }
  func.func @transform_2(%arg0: i32, %arg1: i32) -> (i32, i32) {
    %c0_i32 = arith.constant 0 : i32
    %c0_i32_0 = arith.constant 0 : i32
    %c0_i32_1 = arith.constant 0 : i32
    return %c0_i32, %c0_i32_0 : i32, i32
  }
  func.func @transform_3(%arg0: i32, %arg1: i32) -> (i32, i32) {
    %c0_i32 = arith.constant 0 : i32
    %c0_i32_0 = arith.constant 0 : i32
    return %arg0, %c0_i32 : i32, i32
  }
  func.func @transform_4(%arg0: i32, %arg1: i32) -> (i32, i32) {
    %c0_i32 = arith.constant 0 : i32
    %c0_i32_0 = arith.constant 0 : i32
    %c0_i32_1 = arith.constant 0 : i32
    return %c0_i32, %c0_i32_0 : i32, i32
  }
  func.func @transform_5(%arg0: i32, %arg1: i32) -> (i32, i32) {
    %c0_i32 = arith.constant 0 : i32
    %c0_i32_0 = arith.constant 0 : i32
    %c0_i32_1 = arith.constant 0 : i32
    return %c0_i32, %c0_i32_0 : i32, i32
  }
  func.func @transform_6(%arg0: i32, %arg1: i32) -> (i32, i32) {
    %c0_i32 = arith.constant 0 : i32
    %c0_i32_0 = arith.constant 0 : i32
    return %arg0, %c0_i32 : i32, i32
  }
}

</mosaic_0001>

<llo_original>
// kernel: tower_forward.6
$region0: #{tower_forward.6}
  #allocation0 [shape = 'u32[]', space=smem, size = 0x4, offset = 0x4, fixed_abs, tag = 'smem constant byte address 0x4 - core index']
  #allocation1 [shape = 'u32[144,128]{1,0:T(1,128)}', space=vmem, size = 0x12000, scoped, tag = 'internal scratch']
  #allocation2 [shape = 'f32[128,256]{1,0:T(8,128)}', space=vmem, size = 0x20000, scoped, tag = 'scratch operand']
  %s0 = inlined_call_operand.vmem [shape: bf16[128,4], index: 0, kind: input, shape index: {}]
  %s1 = inlined_call_operand.vmem [shape: bf16[4,256], index: 1, kind: input, shape index: {}]
  %s2 = inlined_call_operand.hbm [shape: f32[1,256], index: 2, kind: input, shape index: {}]
  %s3 = inlined_call_operand.vmem [shape: bf16[128,256], index: 3, kind: output, shape index: {}]
  %s4 = sld [smem:[#allocation0]]
  $region34: #{tower_forward.6} parent=0
    _
  %s6 = ssub.s32 1, %s4
  %s7 = scalar_select 0, %s6, %s4
  $region1: #{tower_forward.6} parent=0
    #allocation3 [shape = 'u8[1024]{0}', space=vmem, size = 0x400, scoped, tag = 'input window, operand 2, single buffered']
    #allocation4 [shape = 's32[1]{0}', space=sflag, size = 0x4, scoped, tag = 'scoped memory for tower_forward.6']
    %8 = vsyncpa [#allocation4], 0
    // Predicated region
    $region2: #{tower_forward.6} parent=1 // pred_check
      _
    $region3: #{tower_forward.6} parent=1 // pred_check_branch
      %10 = sbr.rel (0) target = $region5
    $region4: #{tower_forward.6} parent=1 // pred_region
      _
    $region5: #{tower_forward.6} parent=1 // pred_fallthru
      _
    // Predicated region
    $region6: #{tower_forward.6} parent=1 // pred_check
      _
    $region7: #{tower_forward.6} parent=1 // pred_check_branch
      %12 = sbr.rel (0) target = $region9
    $region8: #{tower_forward.6} parent=1 // pred_region
      _
    $region9: #{tower_forward.6} parent=1 // pred_fallthru
      _
    // Predicated region
    $region10: #{tower_forward.6} parent=1 // pred_check
      _
    $region11: #{tower_forward.6} parent=1 // pred_check_branch
      %14 = sbr.rel (0) target = $region13
    $region12: #{tower_forward.6} parent=1 // pred_region
      %s16 = ssub.s32 32, 32
      %17 = vsyncadd [#allocation4], %s16
      %s19 = sshll.u32 [#allocation3], 4
      %s20 = int_to_ptr.vmem [resolvable:$true] %s19
      %22 = dma.hbm_to_vmem [thread:$0]  %s2, 32, %s20, [#allocation4]
    $region13: #{tower_forward.6} parent=1 // pred_fallthru
      _
    // Predicated region
    $region14: #{tower_forward.6} parent=1 // pred_check
      _
    $region15: #{tower_forward.6} parent=1 // pred_check_branch
      %24 = sbr.rel (0) target = $region17
    $region16: #{tower_forward.6} parent=1 // pred_region
      %25 = dma.done [#allocation4], 32
    $region17: #{tower_forward.6} parent=1 // pred_fallthru
      _
    %p27 = scmp.eq.s32.totalorder 0, 0
    // Predicated region
    $region18: #{tower_forward.6} parent=1 // pred_check
      %p28 = pneg %p27
    $region19: #{tower_forward.6} parent=1 // pred_check_branch
      %30 = sbr.rel (%p28) target = $region21
    $region20: #{tower_forward.6} parent=1 // pred_region
      %31 = vst [vmem:[#allocation2] sm:$0xff] 0.0
      %32 = vst [vmem:[#allocation2 + $0x8] sm:$0xff] 0.0
      %33 = vst [vmem:[#allocation2 + $0x10] sm:$0xff] 0.0
      %34 = vst [vmem:[#allocation2 + $0x18] sm:$0xff] 0.0
      %35 = vst [vmem:[#allocation2 + $0x20] sm:$0xff] 0.0
      %36 = vst [vmem:[#allocation2 + $0x28] sm:$0xff] 0.0
      %37 = vst [vmem:[#allocation2 + $0x30] sm:$0xff] 0.0
      %38 = vst [vmem:[#allocation2 + $0x38] sm:$0xff] 0.0
      %39 = vst [vmem:[#allocation2 + $0x40] sm:$0xff] 0.0
      %40 = vst [vmem:[#allocation2 + $0x48] sm:$0xff] 0.0
      %41 = vst [vmem:[#allocation2 + $0x50] sm:$0xff] 0.0
      %42 = vst [vmem:[#allocation2 + $0x58] sm:$0xff] 0.0
      %43 = vst [vmem:[#allocation2 + $0x60] sm:$0xff] 0.0
      %44 = vst [vmem:[#allocation2 + $0x68] sm:$0xff] 0.0
      %45 = vst [vmem:[#allocation2 + $0x70] sm:$0xff] 0.0
      %46 = vst [vmem:[#allocation2 + $0x78] sm:$0xff] 0.0
      %47 = vst [vmem:[#allocation2 + $0x80] sm:$0xff] 0.0
      %48 = vst [vmem:[#allocation2 + $0x88] sm:$0xff] 0.0
      %49 = vst [vmem:[#allocation2 + $0x90] sm:$0xff] 0.0
      %50 = vst [vmem:[#allocation2 + $0x98] sm:$0xff] 0.0
      %51 = vst [vmem:[#allocation2 + $0xa0] sm:$0xff] 0.0
      %52 = vst [vmem:[#allocation2 + $0xa8] sm:$0xff] 0.0
      %53 = vst [vmem:[#allocation2 + $0xb0] sm:$0xff] 0.0
      %54 = vst [vmem:[#allocation2 + $0xb8] sm:$0xff] 0.0
      %55 = vst [vmem:[#allocation2 + $0xc0] sm:$0xff] 0.0
      %56 = vst [vmem:[#allocation2 + $0xc8] sm:$0xff] 0.0
      %57 = vst [vmem:[#allocation2 + $0xd0] sm:$0xff] 0.0
      %58 = vst [vmem:[#allocation2 + $0xd8] sm:$0xff] 0.0
      %59 = vst [vmem:[#allocation2 + $0xe0] sm:$0xff] 0.0
      %60 = vst [vmem:[#allocation2 + $0xe8] sm:$0xff] 0.0
      %61 = vst [vmem:[#allocation2 + $0xf0] sm:$0xff] 0.0
      %62 = vst [vmem:[#allocation2 + $0xf8] sm:$0xff] 0.0
    $region21: #{tower_forward.6} parent=1 // pred_fallthru
      _
    %v63 = vld [vmem:[#allocation2] sm:$0xff]
    %v64 = vld [vmem:[#allocation2 + $0x8] sm:$0xff]
    %v65 = vld [vmem:[#allocation2 + $0x10] sm:$0xff]
    %v66 = vld [vmem:[#allocation2 + $0x18] sm:$0xff]
    %v67 = vld [vmem:[#allocation2 + $0x20] sm:$0xff]
    %v68 = vld [vmem:[#allocation2 + $0x28] sm:$0xff]
    %v69 = vld [vmem:[#allocation2 + $0x30] sm:$0xff]
    %v70 = vld [vmem:[#allocation2 + $0x38] sm:$0xff]
    %v71 = vld [vmem:[#allocation2 + $0x40] sm:$0xff]
    %v72 = vld [vmem:[#allocation2 + $0x48] sm:$0xff]
    %v73 = vld [vmem:[#allocation2 + $0x50] sm:$0xff]
    %v74 = vld [vmem:[#allocation2 + $0x58] sm:$0xff]
    %v75 = vld [vmem:[#allocation2 + $0x60] sm:$0xff]
    %v76 = vld [vmem:[#allocation2 + $0x68] sm:$0xff]
    %v77 = vld [vmem:[#allocation2 + $0x70] sm:$0xff]
    %v78 = vld [vmem:[#allocation2 + $0x78] sm:$0xff]
    %v79 = vld [vmem:[#allocation2 + $0x80] sm:$0xff]
    %v80 = vld [vmem:[#allocation2 + $0x88] sm:$0xff]
    %v81 = vld [vmem:[#allocation2 + $0x90] sm:$0xff]
    %v82 = vld [vmem:[#allocation2 + $0x98] sm:$0xff]
    %v83 = vld [vmem:[#allocation2 + $0xa0] sm:$0xff]
    %v84 = vld [vmem:[#allocation2 + $0xa8] sm:$0xff]
    %v85 = vld [vmem:[#allocation2 + $0xb0] sm:$0xff]
    %v86 = vld [vmem:[#allocation2 + $0xb8] sm:$0xff]
    %v87 = vld [vmem:[#allocation2 + $0xc0] sm:$0xff]
    %v88 = vld [vmem:[#allocation2 + $0xc8] sm:$0xff]
    %v89 = vld [vmem:[#allocation2 + $0xd0] sm:$0xff]
    %v90 = vld [vmem:[#allocation2 + $0xd8] sm:$0xff]
    %v91 = vld [vmem:[#allocation2 + $0xe0] sm:$0xff]
    %v92 = vld [vmem:[#allocation2 + $0xe8] sm:$0xff]
    %v93 = vld [vmem:[#allocation2 + $0xf0] sm:$0xff]
    %v94 = vld [vmem:[#allocation2 + $0xf8] sm:$0xff]
    %v95 = vld [vmem:[%s0] sm:$0xf]
    %v96 = vld [vmem:[%s0 + $0x4] sm:$0xf]
    %v97 = vld [vmem:[%s0 + $0x8] sm:$0xf]
    %v98 = vld [vmem:[%s0 + $0xc] sm:$0xf]
    %v99 = vld [vmem:[%s0 + $0x10] sm:$0xf]
    %v100 = vld [vmem:[%s0 + $0x14] sm:$0xf]
    %v101 = vld [vmem:[%s0 + $0x18] sm:$0xf]
    %v102 = vld [vmem:[%s0 + $0x1c] sm:$0xf]
    %v103 = vld [vmem:[%s0 + $0x20] sm:$0xf]
    %v104 = vld [vmem:[%s0 + $0x24] sm:$0xf]
    %v105 = vld [vmem:[%s0 + $0x28] sm:$0xf]
    %v106 = vld [vmem:[%s0 + $0x2c] sm:$0xf]
    %v107 = vld [vmem:[%s0 + $0x30] sm:$0xf]
    %v108 = vld [vmem:[%s0 + $0x34] sm:$0xf]
    %v109 = vld [vmem:[%s0 + $0x38] sm:$0xf]
    %v110 = vld [vmem:[%s0 + $0x3c] sm:$0xf]
    %v111 = vld [vmem:[%s1] sm:$0xf]
    %v128 = vunpack.c.l.b16 %v95
    %v129 = vunpack.c.l.b16 %v96
    %v130 = vunpack.c.l.b16 %v97
    %v131 = vunpack.c.l.b16 %v98
    %v132 = vunpack.c.l.b16 %v99
    %v133 = vunpack.c.l.b16 %v100
    %v134 = vunpack.c.l.b16 %v101
    %v135 = vunpack.c.l.b16 %v102
    %v136 = vunpack.c.l.b16 %v103
    %v137 = vunpack.c.l.b16 %v104
    %v138 = vunpack.c.l.b16 %v105
    %v139 = vunpack.c.l.b16 %v106
    %v140 = vunpack.c.l.b16 %v107
    %v141 = vunpack.c.l.b16 %v108
    %v142 = vunpack.c.l.b16 %v109
    %v143 = vunpack.c.l.b16 %v110
    %v144 = vpack.c.b16 %v129, %v128
    %v145 = vpack.c.b16 %v131, %v130
    %v146 = vpack.c.b16 %v133, %v132
    %v147 = vpack.c.b16 %v135, %v134
    %v148 = vpack.c.b16 %v137, %v136
    %v149 = vpack.c.b16 %v139, %v138
    %v150 = vpack.c.b16 %v141, %v140
    %v151 = vpack.c.b16 %v143, %v142
    %v154 = vunpack.c.l.s4 1983009808
    %v155 = vunpack.c.0.s8 %v154
    %v156 = vlaneseq
    %v157 = vshrl.u32 %v156, 7
    %v158 = vsub.s32 %v155, %v157
    %v159 = vrot.slane %v111, %v158
    %v160 = vcombine.high %v159, %v159
    %vm161 = vcmask 31744
    %v163 = vsel %vm161, %v144, 0
    %v166 = vsel %vm161, %v145, 0
    %v169 = vsel %vm161, %v146, 0
    %v172 = vsel %vm161, %v147, 0
    %v175 = vsel %vm161, %v148, 0
    %v178 = vsel %vm161, %v149, 0
    %v181 = vsel %vm161, %v150, 0
    %v184 = vsel %vm161, %v151, 0
    %vm186 = vcmask 1041408
    %v188 = vsel %vm186, %v159, 0
    %v191 = vsel %vm186, %v160, 0
    %193 = vmatprep.subr.bf16.mxu0 %v191
    %194 = vmatpush1.bf16.msra.mxu0 %v188
    %195 = vmatprep.subr.bf16.mxu0 0
    %196 = vmatpush1.bf16.msra.mxu0 0
    %197 = vmatprep.subr.bf16.mxu0 0
    %198 = vmatpush1.bf16.msra.mxu0 0
    %199 = vmatprep.subr.bf16.mxu0 0
    %200 = vmatpush1.bf16.msra.mxu0 0
    %201 = vmatprep.subr.bf16.mxu0 0
    %202 = vmatpush1.bf16.msra.mxu0 0
    %203 = vmatprep.subr.bf16.mxu0 0
    %204 = vmatpush1.bf16.msra.mxu0 0
    %205 = vmatprep.subr.bf16.mxu0 0
    %206 = vmatpush1.bf16.msra.mxu0 0
    %207 = vmatprep.subr.bf16.mxu0 0
    %208 = vmatpush1.bf16.msra.mxu0 0
    %209 = vmatprep.subr.bf16.mxu0 0
    %210 = vmatpush1.bf16.msra.mxu0 0
    %211 = vmatprep.subr.bf16.mxu0 0
    %212 = vmatpush1.bf16.msra.mxu0 0
    %213 = vmatprep.subr.bf16.mxu0 0
    %214 = vmatpush1.bf16.msra.mxu0 0
    %215 = vmatprep.subr.bf16.mxu0 0
    %216 = vmatpush1.bf16.msra.mxu0 0
    %217 = vmatprep.subr.bf16.mxu0 0
    %218 = vmatpush1.bf16.msra.mxu0 0
    %219 = vmatprep.subr.bf16.mxu0 0
    %220 = vmatpush1.bf16.msra.mxu0 0
    %221 = vmatprep.subr.bf16.mxu0 0
    %222 = vmatpush1.bf16.msra.mxu0 0
    %223 = vmatprep.subr.bf16.mxu0 0
    %224 = vmatpush1.bf16.msra.mxu0 0
    %225 = vmatprep.mubr.bf16.mxu0 0
    %226 = vmatmul.mubr.bf16.gmra.mrb[0].mxu0 %v163
    %v227 = vpop.f32.mrb[0].mxu0
    %v228 = vadd.f32 0.0, %v227
    %v229 = vpop.f32.mrb[0].mxu0
    %v230 = vadd.f32 0.0, %v229
    %v231 = vpop.f32.mrb[0].mxu0
    %v232 = vadd.f32 0.0, %v231
    %v233 = vpop.f32.mrb[0].mxu0
    %v234 = vadd.f32 0.0, %v233
    %235 = vmatprep.mubr.bf16.mxu0 0
    %236 = vmatmul.mubr.bf16.gmra.mrb[0].mxu0 %v166
    %v237 = vpop.f32.mrb[0].mxu0
    %v238 = vadd.f32 0.0, %v237
    %v239 = vpop.f32.mrb[0].mxu0
    %v240 = vadd.f32 0.0, %v239
    %v241 = vpop.f32.mrb[0].mxu0
    %v242 = vadd.f32 0.0, %v241
    %v243 = vpop.f32.mrb[0].mxu0
    %v244 = vadd.f32 0.0, %v243
    %245 = vmatprep.mubr.bf16.mxu0 0
    %246 = vmatmul.mubr.bf16.gmra.mrb[0].mxu0 %v169
    %v247 = vpop.f32.mrb[0].mxu0
    %v248 = vadd.f32 0.0, %v247
    %v249 = vpop.f32.mrb[0].mxu0
    %v250 = vadd.f32 0.0, %v249
    %v251 = vpop.f32.mrb[0].mxu0
    %v252 = vadd.f32 0.0, %v251
    %v253 = vpop.f32.mrb[0].mxu0
    %v254 = vadd.f32 0.0, %v253
    %255 = vmatprep.mubr.bf16.mxu0 0
    %256 = vmatmul.mubr.bf16.gmra.mrb[0].mxu0 %v172
    %v257 = vpop.f32.mrb[0].mxu0
    %v258 = vadd.f32 0.0, %v257
    %v259 = vpop.f32.mrb[0].mxu0
    %v260 = vadd.f32 0.0, %v259
    %v261 = vpop.f32.mrb[0].mxu0
    %v262 = vadd.f32 0.0, %v261
    %v263 = vpop.f32.mrb[0].mxu0
    %v264 = vadd.f32 0.0, %v263
    %265 = vmatprep.mubr.bf16.mxu0 0
    %266 = vmatmul.mubr.bf16.gmra.mrb[0].mxu0 %v175
    %v267 = vpop.f32.mrb[0].mxu0
    %v268 = vadd.f32 0.0, %v267
    %v269 = vpop.f32.mrb[0].mxu0
    %v270 = vadd.f32 0.0, %v269
    %v271 = vpop.f32.mrb[0].mxu0
    %v272 = vadd.f32 0.0, %v271
    %v273 = vpop.f32.mrb[0].mxu0
    %v274 = vadd.f32 0.0, %v273
    %275 = vmatprep.mubr.bf16.mxu0 0
    %276 = vmatmul.mubr.bf16.gmra.mrb[0].mxu0 %v178
    %v277 = vpop.f32.mrb[0].mxu0
    %v278 = vadd.f32 0.0, %v277
    %v279 = vpop.f32.mrb[0].mxu0
    %v280 = vadd.f32 0.0, %v279
    %v281 = vpop.f32.mrb[0].mxu0
    %v282 = vadd.f32 0.0, %v281
    %v283 = vpop.f32.mrb[0].mxu0
    %v284 = vadd.f32 0.0, %v283
    %285 = vmatprep.mubr.bf16.mxu0 0
    %286 = vmatmul.mubr.bf16.gmra.mrb[0].mxu0 %v181
    %v287 = vpop.f32.mrb[0].mxu0
    %v288 = vadd.f32 0.0, %v287
    %v289 = vpop.f32.mrb[0].mxu0
    %v290 = vadd.f32 0.0, %v289
    %v291 = vpop.f32.mrb[0].mxu0
    %v292 = vadd.f32 0.0, %v291
    %v293 = vpop.f32.mrb[0].mxu0
    %v294 = vadd.f32 0.0, %v293
    %295 = vmatprep.mubr.bf16.mxu0 0
    %296 = vmatmul.mubr.bf16.gmra.mrb[0].mxu0 %v184
    %v297 = vpop.f32.mrb[0].mxu0
    %v298 = vadd.f32 0.0, %v297
    %v299 = vpop.f32.mrb[0].mxu0
    %v300 = vadd.f32 0.0, %v299
    %v301 = vpop.f32.mrb[0].mxu0
    %v302 = vadd.f32 0.0, %v301
    %v303 = vpop.f32.mrb[0].mxu0
    %v304 = vadd.f32 0.0, %v303
    %305 = vdwg.mxu0
    %v306 = vadd.f32 %v63, %v228
    %v307 = vadd.f32 %v64, %v230
    %v308 = vadd.f32 %v65, %v232
    %v309 = vadd.f32 %v66, %v234
    %v310 = vadd.f32 %v67, %v238
    %v311 = vadd.f32 %v68, %v240
    %v312 = vadd.f32 %v69, %v242
    %v313 = vadd.f32 %v70, %v244
    %v314 = vadd.f32 %v71, %v248
    %v315 = vadd.f32 %v72, %v250
    %v316 = vadd.f32 %v73, %v252
    %v317 = vadd.f32 %v74, %v254
    %v318 = vadd.f32 %v75, %v258
    %v319 = vadd.f32 %v76, %v260
    %v320 = vadd.f32 %v77, %v262
    %v321 = vadd.f32 %v78, %v264
    %v322 = vadd.f32 %v79, %v268
    %v323 = vadd.f32 %v80, %v270
    %v324 = vadd.f32 %v81, %v272
    %v325 = vadd.f32 %v82, %v274
    %v326 = vadd.f32 %v83, %v278
    %v327 = vadd.f32 %v84, %v280
    %v328 = vadd.f32 %v85, %v282
    %v329 = vadd.f32 %v86, %v284
    %v330 = vadd.f32 %v87, %v288
    %v331 = vadd.f32 %v88, %v290
    %v332 = vadd.f32 %v89, %v292
    %v333 = vadd.f32 %v90, %v294
    %v334 = vadd.f32 %v91, %v298
    %v335 = vadd.f32 %v92, %v300
    %v336 = vadd.f32 %v93, %v302
    %v337 = vadd.f32 %v94, %v304
    %338 = vst [vmem:[#allocation2] sm:$0xff] %v306
    %339 = vst [vmem:[#allocation2 + $0x8] sm:$0xff] %v307
    %340 = vst [vmem:[#allocation2 + $0x10] sm:$0xff] %v308
    %341 = vst [vmem:[#allocation2 + $0x18] sm:$0xff] %v309
    %342 = vst [vmem:[#allocation2 + $0x20] sm:$0xff] %v310
    %343 = vst [vmem:[#allocation2 + $0x28] sm:$0xff] %v311
    %344 = vst [vmem:[#allocation2 + $0x30] sm:$0xff] %v312
    %345 = vst [vmem:[#allocation2 + $0x38] sm:$0xff] %v313
    %346 = vst [vmem:[#allocation2 + $0x40] sm:$0xff] %v314
    %347 = vst [vmem:[#allocation2 + $0x48] sm:$0xff] %v315
    %348 = vst [vmem:[#allocation2 + $0x50] sm:$0xff] %v316
    %349 = vst [vmem:[#allocation2 + $0x58] sm:$0xff] %v317
    %350 = vst [vmem:[#allocation2 + $0x60] sm:$0xff] %v318
    %351 = vst [vmem:[#allocation2 + $0x68] sm:$0xff] %v319
    %352 = vst [vmem:[#allocation2 + $0x70] sm:$0xff] %v320
    %353 = vst [vmem:[#allocation2 + $0x78] sm:$0xff] %v321
    %354 = vst [vmem:[#allocation2 + $0x80] sm:$0xff] %v322
    %355 = vst [vmem:[#allocation2 + $0x88] sm:$0xff] %v323
    %356 = vst [vmem:[#allocation2 + $0x90] sm:$0xff] %v324
    %357 = vst [vmem:[#allocation2 + $0x98] sm:$0xff] %v325
    %358 = vst [vmem:[#allocation2 + $0xa0] sm:$0xff] %v326
    %359 = vst [vmem:[#allocation2 + $0xa8] sm:$0xff] %v327
    %360 = vst [vmem:[#allocation2 + $0xb0] sm:$0xff] %v328
    %361 = vst [vmem:[#allocation2 + $0xb8] sm:$0xff] %v329
    %362 = vst [vmem:[#allocation2 + $0xc0] sm:$0xff] %v330
    %363 = vst [vmem:[#allocation2 + $0xc8] sm:$0xff] %v331
    %364 = vst [vmem:[#allocation2 + $0xd0] sm:$0xff] %v332
    %365 = vst [vmem:[#allocation2 + $0xd8] sm:$0xff] %v333
    %366 = vst [vmem:[#allocation2 + $0xe0] sm:$0xff] %v334
    %367 = vst [vmem:[#allocation2 + $0xe8] sm:$0xff] %v335
    %368 = vst [vmem:[#allocation2 + $0xf0] sm:$0xff] %v336
    %369 = vst [vmem:[#allocation2 + $0xf8] sm:$0xff] %v337
    // Predicated region
    $region22: #{tower_forward.6} parent=1 // pred_check
      %p370 = pneg %p27
    $region23: #{tower_forward.6} parent=1 // pred_check_branch
      %372 = sbr.rel (%p370) target = $region25
    $region24: #{tower_forward.6} parent=1 // pred_region
      %v373 = vld [vmem:[#allocation2] sm:$0xff]
      %v374 = vld [vmem:[#allocation2 + $0x8] sm:$0xff]
      %v375 = vld [vmem:[#allocation2 + $0x10] sm:$0xff]
      %v376 = vld [vmem:[#allocation2 + $0x18] sm:$0xff]
      %v377 = vld [vmem:[#allocation2 + $0x20] sm:$0xff]
      %v378 = vld [vmem:[#allocation2 + $0x28] sm:$0xff]
      %v379 = vld [vmem:[#allocation2 + $0x30] sm:$0xff]
      %v380 = vld [vmem:[#allocation2 + $0x38] sm:$0xff]
      %v381 = vld [vmem:[#allocation2 + $0x40] sm:$0xff]
      %v382 = vld [vmem:[#allocation2 + $0x48] sm:$0xff]
      %v383 = vld [vmem:[#allocation2 + $0x50] sm:$0xff]
      %v384 = vld [vmem:[#allocation2 + $0x58] sm:$0xff]
      %v385 = vld [vmem:[#allocation2 + $0x60] sm:$0xff]
      %v386 = vld [vmem:[#allocation2 + $0x68] sm:$0xff]
      %v387 = vld [vmem:[#allocation2 + $0x70] sm:$0xff]
      %v388 = vld [vmem:[#allocation2 + $0x78] sm:$0xff]
      %v389 = vld [vmem:[#allocation2 + $0x80] sm:$0xff]
      %v390 = vld [vmem:[#allocation2 + $0x88] sm:$0xff]
      %v391 = vld [vmem:[#allocation2 + $0x90] sm:$0xff]
      %v392 = vld [vmem:[#allocation2 + $0x98] sm:$0xff]
      %v393 = vld [vmem:[#allocation2 + $0xa0] sm:$0xff]
      %v394 = vld [vmem:[#allocation2 + $0xa8] sm:$0xff]
      %v395 = vld [vmem:[#allocation2 + $0xb0] sm:$0xff]
      %v396 = vld [vmem:[#allocation2 + $0xb8] sm:$0xff]
      %v397 = vld [vmem:[#allocation2 + $0xc0] sm:$0xff]
      %v398 = vld [vmem:[#allocation2 + $0xc8] sm:$0xff]
      %v399 = vld [vmem:[#allocation2 + $0xd0] sm:$0xff]
      %v400 = vld [vmem:[#allocation2 + $0xd8] sm:$0xff]
      %v401 = vld [vmem:[#allocation2 + $0xe0] sm:$0xff]
      %v402 = vld [vmem:[#allocation2 + $0xe8] sm:$0xff]
      %v403 = vld [vmem:[#allocation2 + $0xf0] sm:$0xff]
      %v404 = vld [vmem:[#allocation2 + $0xf8] sm:$0xff]
      %v405 = vld [vmem:[#allocation3] sm:$0x3]
      %v407 = vlaneseq
      %v408 = vshrl.u32 %v407, 7
      %v409 = vsub.s32 0, %v408
      %v410 = vrot.slane %v405, %v409
      %v411 = vlaneseq
      %v412 = vshrl.u32 %v411, 7
      %v413 = vsub.s32 1, %v412
      %v414 = vrot.slane %v405, %v413
      %v417 = vadd.f32 %v373, %v410
      %v418 = vadd.f32 %v374, %v414
      %v419 = vadd.f32 %v375, %v410
      %v420 = vadd.f32 %v376, %v414
      %v421 = vadd.f32 %v377, %v410
      %v422 = vadd.f32 %v378, %v414
      %v423 = vadd.f32 %v379, %v410
      %v424 = vadd.f32 %v380, %v414
      %v425 = vadd.f32 %v381, %v410
      %v426 = vadd.f32 %v382, %v414
      %v427 = vadd.f32 %v383, %v410
      %v428 = vadd.f32 %v384, %v414
      %v429 = vadd.f32 %v385, %v410
      %v430 = vadd.f32 %v386, %v414
      %v431 = vadd.f32 %v387, %v410
      %v432 = vadd.f32 %v388, %v414
      %v433 = vadd.f32 %v389, %v410
      %v434 = vadd.f32 %v390, %v414
      %v435 = vadd.f32 %v391, %v410
      %v436 = vadd.f32 %v392, %v414
      %v437 = vadd.f32 %v393, %v410
      %v438 = vadd.f32 %v394, %v414
      %v439 = vadd.f32 %v395, %v410
      %v440 = vadd.f32 %v396, %v414
      %v441 = vadd.f32 %v397, %v410
      %v442 = vadd.f32 %v398, %v414
      %v443 = vadd.f32 %v399, %v410
      %v444 = vadd.f32 %v400, %v414
      %v445 = vadd.f32 %v401, %v410
      %v446 = vadd.f32 %v402, %v414
      %v447 = vadd.f32 %v403, %v410
      %v448 = vadd.f32 %v404, %v414
      %v449 = vmax.f32 %v417, 0.0
      %v450 = vmax.f32 %v418, 0.0
      %v451 = vmax.f32 %v419, 0.0
      %v452 = vmax.f32 %v420, 0.0
      %v453 = vmax.f32 %v421, 0.0
      %v454 = vmax.f32 %v422, 0.0
      %v455 = vmax.f32 %v423, 0.0
      %v456 = vmax.f32 %v424, 0.0
      %v457 = vmax.f32 %v425, 0.0
      %v458 = vmax.f32 %v426, 0.0
      %v459 = vmax.f32 %v427, 0.0
      %v460 = vmax.f32 %v428, 0.0
      %v461 = vmax.f32 %v429, 0.0
      %v462 = vmax.f32 %v430, 0.0
      %v463 = vmax.f32 %v431, 0.0
      %v464 = vmax.f32 %v432, 0.0
      %v465 = vmax.f32 %v433, 0.0
      %v466 = vmax.f32 %v434, 0.0
      %v467 = vmax.f32 %v435, 0.0
      %v468 = vmax.f32 %v436, 0.0
      %v469 = vmax.f32 %v437, 0.0
      %v470 = vmax.f32 %v438, 0.0
      %v471 = vmax.f32 %v439, 0.0
      %v472 = vmax.f32 %v440, 0.0
      %v473 = vmax.f32 %v441, 0.0
      %v474 = vmax.f32 %v442, 0.0
      %v475 = vmax.f32 %v443, 0.0
      %v476 = vmax.f32 %v444, 0.0
      %v477 = vmax.f32 %v445, 0.0
      %v478 = vmax.f32 %v446, 0.0
      %v479 = vmax.f32 %v447, 0.0
      %v480 = vmax.f32 %v448, 0.0
      %v481 = vpack.c.bf16 %v451, %v449
      %v482 = vpack.c.bf16 %v452, %v450
      %v483 = vpack.c.bf16 %v455, %v453
      %v484 = vpack.c.bf16 %v456, %v454
      %v485 = vpack.c.bf16 %v459, %v457
      %v486 = vpack.c.bf16 %v460, %v458
      %v487 = vpack.c.bf16 %v463, %v461
      %v488 = vpack.c.bf16 %v464, %v462
      %v489 = vpack.c.bf16 %v467, %v465
      %v490 = vpack.c.bf16 %v468, %v466
      %v491 = vpack.c.bf16 %v471, %v469
      %v492 = vpack.c.bf16 %v472, %v470
      %v493 = vpack.c.bf16 %v475, %v473
      %v494 = vpack.c.bf16 %v476, %v474
      %v495 = vpack.c.bf16 %v479, %v477
      %v496 = vpack.c.bf16 %v480, %v478
      %v513 = vunpack.c.l.b16 %v481
      %v514 = vunpack.c.l.b16 %v482
      %v515 = vunpack.c.h.b16 %v481
      %v516 = vunpack.c.h.b16 %v482
      %v517 = vunpack.c.l.b16 %v483
      %v518 = vunpack.c.l.b16 %v484
      %v519 = vunpack.c.h.b16 %v483
      %v520 = vunpack.c.h.b16 %v484
      %v521 = vunpack.c.l.b16 %v485
      %v522 = vunpack.c.l.b16 %v486
      %v523 = vunpack.c.h.b16 %v485
      %v524 = vunpack.c.h.b16 %v486
      %v525 = vunpack.c.l.b16 %v487
      %v526 = vunpack.c.l.b16 %v488
      %v527 = vunpack.c.h.b16 %v487
      %v528 = vunpack.c.h.b16 %v488
      %v529 = vunpack.c.l.b16 %v489
      %v530 = vunpack.c.l.b16 %v490
      %v531 = vunpack.c.h.b16 %v489
      %v532 = vunpack.c.h.b16 %v490
      %v533 = vunpack.c.l.b16 %v491
      %v534 = vunpack.c.l.b16 %v492
      %v535 = vunpack.c.h.b16 %v491
      %v536 = vunpack.c.h.b16 %v492
      %v537 = vunpack.c.l.b16 %v493
      %v538 = vunpack.c.l.b16 %v494
      %v539 = vunpack.c.h.b16 %v493
      %v540 = vunpack.c.h.b16 %v494
      %v541 = vunpack.c.l.b16 %v495
      %v542 = vunpack.c.l.b16 %v496
      %v543 = vunpack.c.h.b16 %v495
      %v544 = vunpack.c.h.b16 %v496
      %v545 = vpack.c.b16 %v514, %v513
      %v546 = vpack.c.b16 %v516, %v515
      %v547 = vpack.c.b16 %v518, %v517
      %v548 = vpack.c.b16 %v520, %v519
      %v549 = vpack.c.b16 %v522, %v521
      %v550 = vpack.c.b16 %v524, %v523
      %v551 = vpack.c.b16 %v526, %v525
      %v552 = vpack.c.b16 %v528, %v527
      %v553 = vpack.c.b16 %v530, %v529
      %v554 = vpack.c.b16 %v532, %v531
      %v555 = vpack.c.b16 %v534, %v533
      %v556 = vpack.c.b16 %v536, %v535
      %v557 = vpack.c.b16 %v538, %v537
      %v558 = vpack.c.b16 %v540, %v539
      %v559 = vpack.c.b16 %v542, %v541
      %v560 = vpack.c.b16 %v544, %v543
      %577 = vst [vmem:[%s3] sm:$0xff] %v545
      %578 = vst [vmem:[%s3 + $0x8] sm:$0xff] %v546
      %579 = vst [vmem:[%s3 + $0x10] sm:$0xff] %v547
      %580 = vst [vmem:[%s3 + $0x18] sm:$0xff] %v548
      %581 = vst [vmem:[%s3 + $0x20] sm:$0xff] %v549
      %582 = vst [vmem:[%s3 + $0x28] sm:$0xff] %v550
      %583 = vst [vmem:[%s3 + $0x30] sm:$0xff] %v551
      %584 = vst [vmem:[%s3 + $0x38] sm:$0xff] %v552
      %585 = vst [vmem:[%s3 + $0x40] sm:$0xff] %v553
      %586 = vst [vmem:[%s3 + $0x48] sm:$0xff] %v554
      %587 = vst [vmem:[%s3 + $0x50] sm:$0xff] %v555
      %588 = vst [vmem:[%s3 + $0x58] sm:$0xff] %v556
      %589 = vst [vmem:[%s3 + $0x60] sm:$0xff] %v557
      %590 = vst [vmem:[%s3 + $0x68] sm:$0xff] %v558
      %591 = vst [vmem:[%s3 + $0x70] sm:$0xff] %v559
      %592 = vst [vmem:[%s3 + $0x78] sm:$0xff] %v560
    $region25: #{tower_forward.6} parent=1 // pred_fallthru
      _
    // Predicated region
    $region26: #{tower_forward.6} parent=1 // pred_check
      _
    $region27: #{tower_forward.6} parent=1 // pred_check_branch
      %594 = sbr.rel (0) target = $region29
    $region28: #{tower_forward.6} parent=1 // pred_region
      _
    $region29: #{tower_forward.6} parent=1 // pred_fallthru
      _
    // Predicated region
    $region30: #{tower_forward.6} parent=1 // pred_check
      _
    $region31: #{tower_forward.6} parent=1 // pred_check_branch
      %596 = sbr.rel (0) target = $region33
    $region32: #{tower_forward.6} parent=1 // pred_region
      _
    $region33: #{tower_forward.6} parent=1 // pred_fallthru
      _
    %597 = vsyncpa [#allocation4], 1

// kernel: tower_forward.8
$region0: #{tower_forward.8}
  #allocation0 [shape = 'u32[]', space=smem, size = 0x4, offset = 0x4, fixed_abs, tag = 'smem constant byte address 0x4 - core index']
  #allocation1 [shape = 'u32[144,128]{1,0:T(1,128)}', space=vmem, size = 0x12000, scoped, tag = 'internal scratch']
  #allocation2 [shape = 'f32[128,128]{1,0:T(8,128)}', space=vmem, size = 0x10000, scoped, tag = 'scratch operand']
  %s0 = inlined_call_operand.vmem [shape: bf16[128,2304], index: 0, kind: input, shape index: {}]
  %s1 = inlined_call_operand.vmem [shape: bf16[2304,128], index: 1, kind: input, shape index: {}]
  %s2 = inlined_call_operand.vmem [shape: f32[1,128], index: 2, kind: input, shape index: {}]
  %s3 = inlined_call_operand.vmem [shape: bf16[128,128], index: 3, kind: output, shape index: {}]
  %s4 = sld [smem:[#allocation0]]
  $region76: #{tower_forward.8} parent=0
    _
  %s6 = ssub.s32 1, %s4
  %s7 = scalar_select 0, %s6, %s4
  $region1: #{tower_forward.8} parent=0
    #allocation3 [shape = 'u8[393216]{0}', space=vmem, size = 0x60000, scoped, tag = 'input window, operand 0']
    loop: start=0, step=1, limit=5
    $region2: #{tower_forward.8} parent=1 // loop_pre_header
      _
    $region3: #{tower_forward.8} parent=1 // loop_header
      %s9 = sphi 0, %s13
      %p10 = scmp.ge.s32.totalorder %s9, 5
      %s16 = sphi 0, %s35
      %s17 = sphi 0, %s31
      %s18 = sphi 0, %s27
      %s19 = sphi 0, %s16
      %s20 = sphi 0, %s17
      %s21 = sphi 0, %s18
      %s22 = sphi 0, %s19
      %s23 = sphi 0, %s20
      %s24 = sphi 0, %s21
      %s40 = sphi 0, %s42
      %s43 = sphi 0, %s40
      %s44 = sphi 0, %s43
      %s60 = sphi 0, %s44
      %s68 = sphi 0, %s70
      %s71 = sphi 0, %s68
      %s72 = sphi 0, %s71
      %s88 = sphi 0, %s72
      %s94 = sphi 0, %s96
      %s97 = sphi 0, %s94
      %s98 = sphi 0, %s97
      %s114 = sphi 0, %s98
      %s122 = sphi 0, %s124
      %s125 = sphi 0, %s122
      %s126 = sphi 0, %s125
      %s142 = sphi 0, %s126
    $region4: #{tower_forward.8} parent=1 // loop_header_branch
      %12 = sbr.rel (%p10) target = $region8
    $region5: #{tower_forward.8} parent=1 // loop_body
      %s14 = ssub.s32 %s9, 1
      %s15 = ssub.s32 %s9, 2
      %s25 = sadd.s32 1, %s18
      %p26 = scmp.ge.s32.totalorder %s25, 3
      %s27 = scalar_select %p26, 0, %s25
      %s28 = sadd.s32 1, %s17
      %s29 = scalar_select %p26, %s28, %s17
      %p30 = scmp.ge.s32.totalorder %s29, 1
      %s31 = scalar_select %p30, 0, %s29
      %s32 = sadd.s32 1, %s16
      %s33 = scalar_select %p30, %s32, %s16
      %p34 = scmp.ge.s32.totalorder %s33, 1
      %s35 = scalar_select %p34, 0, %s33
      %s36 = ssub.s32 %s17, %s31
      %s37 = ssub.s32 %s18, %s27
      %s38 = sor.u32 %s36, %s37
      %p39 = scmp.eq.s32.totalorder %s38, 0
      %s41 = sadd.s32 %s40, 1
      %s42 = scalar_select %p39, %s40, %s41
      %p45 = pneg %p39
      %p46 = scmp.eq.s32.totalorder %s9, 2
      %p47 = por %p45, %p46
      %p48 = scmp.ne.s32.totalorder %s40, %s43
      %p49 = scmp.eq.s32.totalorder %s9, 0
      %p50 = por %p48, %p49
      %p51 = scmp.ne.s32.totalorder %s40, %s43
      %p52 = scmp.eq.s32.totalorder %s14, 2
      %p53 = por %p51, %p52
      %p54 = scmp.ne.s32.totalorder %s43, %s44
      %p55 = scmp.eq.s32.totalorder %s14, 0
      %p56 = por %p54, %p55
      %p57 = scmp.ne.s32.totalorder %s43, %s44
      %p58 = scmp.eq.s32.totalorder %s15, 2
      %p59 = por %p57, %p58
      %p61 = scmp.ne.s32.totalorder %s44, %s60
      %p62 = scmp.eq.s32.totalorder %s15, 0
      %p63 = por %p61, %p62
      %s64 = ssub.s32 %s18, %s27
      %s65 = ssub.s32 %s16, %s35
      %s66 = sor.u32 %s64, %s65
      %p67 = scmp.eq.s32.totalorder %s66, 0
      %s69 = sadd.s32 %s68, 1
      %s70 = scalar_select %p67, %s68, %s69
      %p73 = pneg %p67
      %p74 = scmp.eq.s32.totalorder %s9, 2
      %p75 = por %p73, %p74
      %p76 = scmp.ne.s32.totalorder %s68, %s71
      %p77 = scmp.eq.s32.totalorder %s9, 0
      %p78 = por %p76, %p77
      %p79 = scmp.ne.s32.totalorder %s68, %s71
      %p80 = scmp.eq.s32.totalorder %s14, 2
      %p81 = por %p79, %p80
      %p82 = scmp.ne.s32.totalorder %s71, %s72
      %p83 = scmp.eq.s32.totalorder %s14, 0
      %p84 = por %p82, %p83
      %p85 = scmp.ne.s32.totalorder %s71, %s72
      %p86 = scmp.eq.s32.totalorder %s15, 2
      %p87 = por %p85, %p86
      %p89 = scmp.ne.s32.totalorder %s72, %s88
      %p90 = scmp.eq.s32.totalorder %s15, 0
      %p91 = por %p89, %p90
      %s92 = ssub.s32 %s16, %s35
      %p93 = scmp.eq.s32.totalorder %s92, 0
      %s95 = sadd.s32 %s94, 1
      %s96 = scalar_select %p93, %s94, %s95
      %p99 = pneg %p93
      %p100 = scmp.eq.s32.totalorder %s9, 2
      %p101 = por %p99, %p100
      %p102 = scmp.ne.s32.totalorder %s94, %s97
      %p103 = scmp.eq.s32.totalorder %s9, 0
      %p104 = por %p102, %p103
      %p105 = scmp.ne.s32.totalorder %s94, %s97
      %p106 = scmp.eq.s32.totalorder %s14, 2
      %p107 = por %p105, %p106
      %p108 = scmp.ne.s32.totalorder %s97, %s98
      %p109 = scmp.eq.s32.totalorder %s14, 0
      %p110 = por %p108, %p109
      %p111 = scmp.ne.s32.totalorder %s97, %s98
      %p112 = scmp.eq.s32.totalorder %s15, 2
      %p113 = por %p111, %p112
      %p115 = scmp.ne.s32.totalorder %s98, %s114
      %p116 = scmp.eq.s32.totalorder %s15, 0
      %p117 = por %p115, %p116
      %s118 = ssub.s32 %s17, %s31
      %s119 = ssub.s32 %s16, %s35
      %s120 = sor.u32 %s118, %s119
      %p121 = scmp.eq.s32.totalorder %s120, 0
      %s123 = sadd.s32 %s122, 1
      %s124 = scalar_select %p121, %s122, %s123
      %p127 = pneg %p121
      %p128 = scmp.eq.s32.totalorder %s9, 2
      %p129 = por %p127, %p128
      %p130 = scmp.ne.s32.totalorder %s122, %s125
      %p131 = scmp.eq.s32.totalorder %s9, 0
      %p132 = por %p130, %p131
      %p133 = scmp.ne.s32.totalorder %s122, %s125
      %p134 = scmp.eq.s32.totalorder %s14, 2
      %p135 = por %p133, %p134
      %p136 = scmp.ne.s32.totalorder %s125, %s126
      %p137 = scmp.eq.s32.totalorder %s14, 0
      %p138 = por %p136, %p137
      %p139 = scmp.ne.s32.totalorder %s125, %s126
      %p140 = scmp.eq.s32.totalorder %s15, 2
      %p141 = por %p139, %p140
      %p143 = scmp.ne.s32.totalorder %s126, %s142
      %p144 = scmp.eq.s32.totalorder %s15, 0
      %p145 = por %p143, %p144
      %p146 = scmp.le.s32.totalorder 1, %s9
      %p147 = scmp.lt.s32.totalorder %s9, 4
      %p148 = pnand %p146, %p147
      %p149 = pneg %p148
      // Predicated region
      $region9: #{tower_forward.8} parent=5 // pred_check
        _
      $region10: #{tower_forward.8} parent=5 // pred_check_branch
        %151 = sbr.rel (%p148) target = $region12
      $region11: #{tower_forward.8} parent=5 // pred_region
        %s152 = ssub.s32 %s9, 1
        // Predicated region
        $region13: #{tower_forward.8} parent=11 // pred_check
          %p153 = pneg %p110
        $region14: #{tower_forward.8} parent=11 // pred_check_branch
          %155 = sbr.rel (%p153) target = $region16
        $region15: #{tower_forward.8} parent=11 // pred_region
          %p156 = scmp.lt.s32.totalorder %s19, 0
          %s157 = scalar_select %p156, %s19, 0
          %s158 = scalar_lea.vmem %s2, %s157
        $region16: #{tower_forward.8} parent=11 // pred_fallthru
          _
      $region12: #{tower_forward.8} parent=5 // pred_fallthru
        _
      %p159 = scmp.lt.s32.totalorder %s9, 3
      // Predicated region
      $region17: #{tower_forward.8} parent=5 // pred_check
        %p160 = pneg %p159
      $region18: #{tower_forward.8} parent=5 // pred_check_branch
        %162 = sbr.rel (%p160) target = $region20
      $region19: #{tower_forward.8} parent=5 // pred_region
        // Predicated region
        $region21: #{tower_forward.8} parent=19 // pred_check
          %p163 = pneg %p50
        $region22: #{tower_forward.8} parent=19 // pred_check_branch
          %165 = sbr.rel (%p163) target = $region24
        $region23: #{tower_forward.8} parent=19 // pred_region
          %s166 = sand.u32 %s40, 1
          %s167 = sand.u32 %s40, 1
          %s168 = smul.addr %s167, 384
          %s169 = scalar_lea.vmem [#allocation3], %s168
          %s170 = smul.u32 16, %s17
          %s171 = smul.u32 6, %s18
          %s172 = smul.addr %s170, 18
          %s173 = sadd.s32 %s171, %s172
          %s174 = smul.addr %s173, 4
          %s175 = scalar_lea.vmem %s0, %s174
          // Predicated region
          $region25: #{tower_forward.8} parent=23 // pred_check
            _
          $region26: #{tower_forward.8} parent=23 // pred_check_branch
            %177 = sbr.rel (0) target = $region28
          $region27: #{tower_forward.8} parent=23 // pred_region
            // Predicated region
            $region29: #{tower_forward.8} parent=27 // pred_check
              _
            $region30: #{tower_forward.8} parent=27 // pred_check_branch
              %179 = sbr.rel (0) target = $region32
            $region31: #{tower_forward.8} parent=27 // pred_region
              loop: start=0, step=1, limit=1
              $region33: #{tower_forward.8} parent=31 // loop_pre_header
                _
              $region34: #{tower_forward.8} parent=31 // loop_header
                %s181 = sphi 0, %s185
                %p182 = scmp.ge.s32.totalorder %s181, 1
                %s186 = sphi %s175, %s175
                %s187 = sphi %s169, %s169
              $region35: #{tower_forward.8} parent=31 // loop_header_branch
                %184 = sbr.rel (%p182) target = $region39
              $region36: #{tower_forward.8} parent=31 // loop_body
                %v188 = vld [vmem:[%s186] sm:$0xff]
                %189 = vst [vmem:[%s187] sm:$0xff] %v188
                %v190 = vld [vmem:[%s186 + $0x8] sm:$0xff]
                %191 = vst [vmem:[%s187 + $0x8] sm:$0xff] %v190
                %v192 = vld [vmem:[%s186 + $0x10] sm:$0xff]
                %193 = vst [vmem:[%s187 + $0x10] sm:$0xff] %v192
                %v194 = vld [vmem:[%s186 + $0x48] sm:$0xff]
                %195 = vst [vmem:[%s187 + $0x18] sm:$0xff] %v194
                %v196 = vld [vmem:[%s186 + $0x50] sm:$0xff]
                %197 = vst [vmem:[%s187 + $0x20] sm:$0xff] %v196
                %v198 = vld [vmem:[%s186 + $0x58] sm:$0xff]
                %199 = vst [vmem:[%s187 + $0x28] sm:$0xff] %v198
                %v200 = vld [vmem:[%s186 + $0x90] sm:$0xff]
                %201 = vst [vmem:[%s187 + $0x30] sm:$0xff] %v200
                %v202 = vld [vmem:[%s186 + $0x98] sm:$0xff]
                %203 = vst [vmem:[%s187 + $0x38] sm:$0xff] %v202
                %v204 = vld [vmem:[%s186 + $0xa0] sm:$0xff]
                %205 = vst [vmem:[%s187 + $0x40] sm:$0xff] %v204
                %v206 = vld [vmem:[%s186 + $0xd8] sm:$0xff]
                %207 = vst [vmem:[%s187 + $0x48] sm:$0xff] %v206
                %v208 = vld [vmem:[%s186 + $0xe0] sm:$0xff]
                %209 = vst [vmem:[%s187 + $0x50] sm:$0xff] %v208
                %v210 = vld [vmem:[%s186 + $0xe8] sm:$0xff]
                %211 = vst [vmem:[%s187 + $0x58] sm:$0xff] %v210
                %v212 = vld [vmem:[%s186 + $0x120] sm:$0xff]
                %213 = vst [vmem:[%s187 + $0x60] sm:$0xff] %v212
                %v214 = vld [vmem:[%s186 + $0x128] sm:$0xff]
                %215 = vst [vmem:[%s187 + $0x68] sm:$0xff] %v214
                %v216 = vld [vmem:[%s186 + $0x130] sm:$0xff]
                %217 = vst [vmem:[%s187 + $0x70] sm:$0xff] %v216
                %v218 = vld [vmem:[%s186 + $0x168] sm:$0xff]
                %219 = vst [vmem:[%s187 + $0x78] sm:$0xff] %v218
                %v220 = vld [vmem:[%s186 + $0x170] sm:$0xff]
                %221 = vst [vmem:[%s187 + $0x80] sm:$0xff] %v220
                %v222 = vld [vmem:[%s186 + $0x178] sm:$0xff]
                %223 = vst [vmem:[%s187 + $0x88] sm:$0xff] %v222
                %v224 = vld [vmem:[%s186 + $0x1b0] sm:$0xff]
                %225 = vst [vmem:[%s187 + $0x90] sm:$0xff] %v224
                %v226 = vld [vmem:[%s186 + $0x1b8] sm:$0xff]
                %227 = vst [vmem:[%s187 + $0x98] sm:$0xff] %v226
                %v228 = vld [vmem:[%s186 + $0x1c0] sm:$0xff]
                %229 = vst [vmem:[%s187 + $0xa0] sm:$0xff] %v228
                %v230 = vld [vmem:[%s186 + $0x1f8] sm:$0xff]
                %231 = vst [vmem:[%s187 + $0xa8] sm:$0xff] %v230
                %v232 = vld [vmem:[%s186 + $0x200] sm:$0xff]
                %233 = vst [vmem:[%s187 + $0xb0] sm:$0xff] %v232
                %v234 = vld [vmem:[%s186 + $0x208] sm:$0xff]
                %235 = vst [vmem:[%s187 + $0xb8] sm:$0xff] %v234
                %v236 = vld [vmem:[%s186 + $0x240] sm:$0xff]
                %237 = vst [vmem:[%s187 + $0xc0] sm:$0xff] %v236
                %v238 = vld [vmem:[%s186 + $0x248] sm:$0xff]
                %239 = vst [vmem:[%s187 + $0xc8] sm:$0xff] %v238
                %v240 = vld [vmem:[%s186 + $0x250] sm:$0xff]
                %241 = vst [vmem:[%s187 + $0xd0] sm:$0xff] %v240
                %v242 = vld [vmem:[%s186 + $0x288] sm:$0xff]
                %243 = vst [vmem:[%s187 + $0xd8] sm:$0xff] %v242
                %v244 = vld [vmem:[%s186 + $0x290] sm:$0xff]
                %245 = vst [vmem:[%s187 + $0xe0] sm:$0xff] %v244
                %v246 = vld [vmem:[%s186 + $0x298] sm:$0xff]
                %247 = vst [vmem:[%s187 + $0xe8] sm:$0xff] %v246
                %v248 = vld [vmem:[%s186 + $0x2d0] sm:$0xff]
                %249 = vst [vmem:[%s187 + $0xf0] sm:$0xff] %v248
                %v250 = vld [vmem:[%s186 + $0x2d8] sm:$0xff]
                %251 = vst [vmem:[%s187 + $0xf8] sm:$0xff] %v250
                %v252 = vld [vmem:[%s186 + $0x2e0] sm:$0xff]
                %253 = vst [vmem:[%s187 + $0x100] sm:$0xff] %v252
                %v254 = vld [vmem:[%s186 + $0x318] sm:$0xff]
                %255 = vst [vmem:[%s187 + $0x108] sm:$0xff] %v254
                %v256 = vld [vmem:[%s186 + $0x320] sm:$0xff]
                %257 = vst [vmem:[%s187 + $0x110] sm:$0xff] %v256
                %v258 = vld [vmem:[%s186 + $0x328] sm:$0xff]
                %259 = vst [vmem:[%s187 + $0x118] sm:$0xff] %v258
                %v260 = vld [vmem:[%s186 + $0x360] sm:$0xff]
                %261 = vst [vmem:[%s187 + $0x120] sm:$0xff] %v260
                %v262 = vld [vmem:[%s186 + $0x368] sm:$0xff]
                %263 = vst [vmem:[%s187 + $0x128] sm:$0xff] %v262
                %v264 = vld [vmem:[%s186 + $0x370] sm:$0xff]
                %265 = vst [vmem:[%s187 + $0x130] sm:$0xff] %v264
                %v266 = vld [vmem:[%s186 + $0x3a8] sm:$0xff]
                %267 = vst [vmem:[%s187 + $0x138] sm:$0xff] %v266
                %v268 = vld [vmem:[%s186 + $0x3b0] sm:$0xff]
                %269 = vst [vmem:[%s187 + $0x140] sm:$0xff] %v268
                %v270 = vld [vmem:[%s186 + $0x3b8] sm:$0xff]
                %271 = vst [vmem:[%s187 + $0x148] sm:$0xff] %v270
                %v272 = vld [vmem:[%s186 + $0x3f0] sm:$0xff]
                %273 = vst [vmem:[%s187 + $0x150] sm:$0xff] %v272
                %v274 = vld [vmem:[%s186 + $0x3f8] sm:$0xff]
                %275 = vst [vmem:[%s187 + $0x158] sm:$0xff] %v274
                %v276 = vld [vmem:[%s186 + $0x400] sm:$0xff]
                %277 = vst [vmem:[%s187 + $0x160] sm:$0xff] %v276
                %v278 = vld [vmem:[%s186 + $0x438] sm:$0xff]
                %279 = vst [vmem:[%s187 + $0x168] sm:$0xff] %v278
                %v280 = vld [vmem:[%s186 + $0x440] sm:$0xff]
                %281 = vst [vmem:[%s187 + $0x170] sm:$0xff] %v280
                %v282 = vld [vmem:[%s186 + $0x448] sm:$0xff]
                %283 = vst [vmem:[%s187 + $0x178] sm:$0xff] %v282
              $region37: #{tower_forward.8} parent=31 // loop_footer
                %s185 = sadd.s32 1, %s181
              $region38: #{tower_forward.8} parent=31 // loop_footer_branch
                %180 = sbr.rel target = $region34
              $region39: #{tower_forward.8} parent=31 // loop_exit
                _
            $region32: #{tower_forward.8} parent=27 // pred_fallthru
              _
            // Predicated region
            $region40: #{tower_forward.8} parent=27 // pred_check
              _
            $region41: #{tower_forward.8} parent=27 // pred_check_branch
              %285 = sbr.rel target = $region43
            $region42: #{tower_forward.8} parent=27 // pred_region
              _
            $region43: #{tower_forward.8} parent=27 // pred_fallthru
              _
          $region28: #{tower_forward.8} parent=23 // pred_fallthru
            _
          %286 = vnop
        $region24: #{tower_forward.8} parent=19 // pred_fallthru
          _
        // Predicated region
        $region44: #{tower_forward.8} parent=19 // pred_check
          %p287 = pneg %p78
        $region45: #{tower_forward.8} parent=19 // pred_check_branch
          %289 = sbr.rel (%p287) target = $region47
        $region46: #{tower_forward.8} parent=19 // pred_region
          %s290 = smul.u32 96, %s18
          %p291 = scmp.lt.s32.totalorder %s290, 287
          %s292 = scalar_select %p291, %s290, 287
          %p293 = scmp.lt.s32.totalorder %s16, 0
          %s294 = scalar_select %p293, %s16, 0
          %s295 = sadd.s32 %s294, %s292
          %s296 = smul.addr %s295, 4
          %s297 = scalar_lea.vmem %s1, %s296
          %s298 = smul.u32 96, %s18
        $region47: #{tower_forward.8} parent=19 // pred_fallthru
          _
      $region20: #{tower_forward.8} parent=5 // pred_fallthru
        _
      %p299 = scmp.le.s32.totalorder 1, %s9
      %p300 = scmp.lt.s32.totalorder %s9, 4
      %p301 = pnand %p299, %p300
      %p302 = pneg %p301
      // Predicated region
      $region48: #{tower_forward.8} parent=5 // pred_check
        _
      $region49: #{tower_forward.8} parent=5 // pred_check_branch
        %304 = sbr.rel (%p301) target = $region51
      $region50: #{tower_forward.8} parent=5 // pred_region
        %s305 = ssub.s32 %s9, 1
        %s306 = sand.u32 %s43, 1
        %s307 = sand.u32 %s43, 1
        %s308 = smul.addr %s307, 384
        %s309 = scalar_lea.vmem [#allocation3], %s308
        // Predicated region
        $region52: #{tower_forward.8} parent=50 // pred_check
          %p310 = pneg %p56
        $region53: #{tower_forward.8} parent=50 // pred_check_branch
          %312 = sbr.rel (%p310) target = $region55
        $region54: #{tower_forward.8} parent=50 // pred_region
          _
        $region55: #{tower_forward.8} parent=50 // pred_fallthru
          _
        %s313 = sand.u32 %s43, 1
        %s314 = sand.u32 %s43, 1
        %s315 = smul.addr %s314, 384
        %s316 = scalar_lea.vmem [#allocation3], %s315
        %p317 = pneg %p56
        %p318 = pneg %p53
        %s319 = smul.u32 96, %s21
        %p320 = scmp.lt.s32.totalorder %s319, 287
        %s321 = scalar_select %p320, %s319, 287
        %p322 = scmp.lt.s32.totalorder %s19, 0
        %s323 = scalar_select %p322, %s19, 0
        %s324 = sadd.s32 %s323, %s321
        %s325 = smul.addr %s324, 4
        %s326 = scalar_lea.vmem %s1, %s325
        %p327 = pneg %p84
        %p328 = pneg %p81
        %p329 = scmp.lt.s32.totalorder %s19, 0
        %s330 = scalar_select %p329, %s19, 0
        %s331 = scalar_lea.vmem %s2, %s330
        %p332 = pneg %p110
        %p333 = pneg %p107
        %p334 = pneg %p138
        %p335 = pneg %p135
        %s336 = smul.u32 16, %s20
        %p337 = scmp.lt.s32.totalorder %s336, 15
        %s338 = scalar_select %p337, %s336, 15
        %p339 = scmp.lt.s32.totalorder %s19, 0
        %s340 = scalar_select %p339, %s19, 0
        %s341 = sadd.s32 %s340, %s338
        %s342 = smul.addr %s341, 4
        %s343 = scalar_lea.vmem %s3, %s342
        %s344 = smul.u32 16, %s20
        %s345 = smul.u32 6, %s21
        %s346 = smul.u32 96, %s21
        %p347 = scmp.lt.s32.totalorder %s346, 287
        %s348 = scalar_select %p347, %s346, 287
        %p349 = scmp.lt.s32.totalorder %s19, 0
        %s350 = scalar_select %p349, %s19, 0
        %s351 = sadd.s32 %s350, %s348
        %s352 = smul.addr %s351, 4
        %s353 = scalar_lea.vmem %s1, %s352
        %s354 = smul.u32 96, %s21
        %p355 = scmp.lt.s32.totalorder %s19, 0
        %s356 = scalar_select %p355, %s19, 0
        %s357 = scalar_lea.vmem %s2, %s356
        %s358 = smul.u32 16, %s20
        %p359 = scmp.lt.s32.totalorder %s358, 15
        %s360 = scalar_select %p359, %s358, 15
        %p361 = scmp.lt.s32.totalorder %s19, 0
        %s362 = scalar_select %p361, %s19, 0
        %s363 = sadd.s32 %s362, %s360
        %s364 = smul.addr %s363, 4
        %s365 = scalar_lea.vmem %s3, %s364
        %s366 = smul.u32 16, %s20
        %p368 = scmp.eq.s32.totalorder %s21, 0
        // Predicated region
        $region56: #{tower_forward.8} parent=50 // pred_check
          %p369 = pneg %p368
        $region57: #{tower_forward.8} parent=50 // pred_check_branch
          %371 = sbr.rel (%p369) target = $region59
        $region58: #{tower_forward.8} parent=50 // pred_region
          %372 = vst [vmem:[#allocation2] sm:$0xff] 0.0
          %373 = vst [vmem:[#allocation2 + $0x8] sm:$0xff] 0.0
          %374 = vst [vmem:[#allocation2 + $0x10] sm:$0xff] 0.0
          %375 = vst [vmem:[#allocation2 + $0x18] sm:$0xff] 0.0
          %376 = vst [vmem:[#allocation2 + $0x20] sm:$0xff] 0.0
          %377 = vst [vmem:[#allocation2 + $0x28] sm:$0xff] 0.0
          %378 = vst [vmem:[#allocation2 + $0x30] sm:$0xff] 0.0
          %379 = vst [vmem:[#allocation2 + $0x38] sm:$0xff] 0.0
          %380 = vst [vmem:[#allocation2 + $0x40] sm:$0xff] 0.0
          %381 = vst [vmem:[#allocation2 + $0x48] sm:$0xff] 0.0
          %382 = vst [vmem:[#allocation2 + $0x50] sm:$0xff] 0.0
          %383 = vst [vmem:[#allocation2 + $0x58] sm:$0xff] 0.0
          %384 = vst [vmem:[#allocation2 + $0x60] sm:$0xff] 0.0
          %385 = vst [vmem:[#allocation2 + $0x68] sm:$0xff] 0.0
          %386 = vst [vmem:[#allocation2 + $0x70] sm:$0xff] 0.0
          %387 = vst [vmem:[#allocation2 + $0x78] sm:$0xff] 0.0
        $region59: #{tower_forward.8} parent=50 // pred_fallthru
          _
        %v388 = vld [vmem:[#allocation2] sm:$0xff]
        %v389 = vld [vmem:[#allocation2 + $0x8] sm:$0xff]
        %v390 = vld [vmem:[#allocation2 + $0x10] sm:$0xff]
        %v391 = vld [vmem:[#allocation2 + $0x18] sm:$0xff]
        %v392 = vld [vmem:[#allocation2 + $0x20] sm:$0xff]
        %v393 = vld [vmem:[#allocation2 + $0x28] sm:$0xff]
        %v394 = vld [vmem:[#allocation2 + $0x30] sm:$0xff]
        %v395 = vld [vmem:[#allocation2 + $0x38] sm:$0xff]
        %v396 = vld [vmem:[#allocation2 + $0x40] sm:$0xff]
        %v397 = vld [vmem:[#allocation2 + $0x48] sm:$0xff]
        %v398 = vld [vmem:[#allocation2 + $0x50] sm:$0xff]
        %v399 = vld [vmem:[#allocation2 + $0x58] sm:$0xff]
        %v400 = vld [vmem:[#allocation2 + $0x60] sm:$0xff]
        %v401 = vld [vmem:[#allocation2 + $0x68] sm:$0xff]
        %v402 = vld [vmem:[#allocation2 + $0x70] sm:$0xff]
        %v403 = vld [vmem:[#allocation2 + $0x78] sm:$0xff]
        %v404 = vld [vmem:[%s309] sm:$0xff]
        %v405 = vld [vmem:[%s309 + $0x8] sm:$0xff]
        %v406 = vld [vmem:[%s309 + $0x10] sm:$0xff]
        %v407 = vld [vmem:[%s309 + $0x18] sm:$0xff]
        %v408 = vld [vmem:[%s309 + $0x20] sm:$0xff]
        %v409 = vld [vmem:[%s309 + $0x28] sm:$0xff]
        %v410 = vld [vmem:[%s309 + $0x30] sm:$0xff]
        %v411 = vld [vmem:[%s309 + $0x38] sm:$0xff]
        %v412 = vld [vmem:[%s309 + $0x40] sm:$0xff]
        %v413 = vld [vmem:[%s309 + $0x48] sm:$0xff]
        %v414 = vld [vmem:[%s309 + $0x50] sm:$0xff]
        %v415 = vld [vmem:[%s309 + $0x58] sm:$0xff]
        %v416 = vld [vmem:[%s309 + $0x60] sm:$0xff]
        %v417 = vld [vmem:[%s309 + $0x68] sm:$0xff]
        %v418 = vld [vmem:[%s309 + $0x70] sm:$0xff]
        %v419 = vld [vmem:[%s309 + $0x78] sm:$0xff]
        %v420 = vld [vmem:[%s309 + $0x80] sm:$0xff]
        %v421 = vld [vmem:[%s309 + $0x88] sm:$0xff]
        %v422 = vld [vmem:[%s309 + $0x90] sm:$0xff]
        %v423 = vld [vmem:[%s309 + $0x98] sm:$0xff]
        %v424 = vld [vmem:[%s309 + $0xa0] sm:$0xff]
        %v425 = vld [vmem:[%s309 + $0xa8] sm:$0xff]
        %v426 = vld [vmem:[%s309 + $0xb0] sm:$0xff]
        %v427 = vld [vmem:[%s309 + $0xb8] sm:$0xff]
        %v428 = vld [vmem:[%s309 + $0xc0] sm:$0xff]
        %v429 = vld [vmem:[%s309 + $0xc8] sm:$0xff]
        %v430 = vld [vmem:[%s309 + $0xd0] sm:$0xff]
        %v431 = vld [vmem:[%s309 + $0xd8] sm:$0xff]
        %v432 = vld [vmem:[%s309 + $0xe0] sm:$0xff]
        %v433 = vld [vmem:[%s309 + $0xe8] sm:$0xff]
        %v434 = vld [vmem:[%s309 + $0xf0] sm:$0xff]
        %v435 = vld [vmem:[%s309 + $0xf8] sm:$0xff]
        %v436 = vld [vmem:[%s309 + $0x100] sm:$0xff]
        %v437 = vld [vmem:[%s309 + $0x108] sm:$0xff]
        %v438 = vld [vmem:[%s309 + $0x110] sm:$0xff]
        %v439 = vld [vmem:[%s309 + $0x118] sm:$0xff]
        %v440 = vld [vmem:[%s309 + $0x120] sm:$0xff]
        %v441 = vld [vmem:[%s309 + $0x128] sm:$0xff]
        %v442 = vld [vmem:[%s309 + $0x130] sm:$0xff]
        %v443 = vld [vmem:[%s309 + $0x138] sm:$0xff]
        %v444 = vld [vmem:[%s309 + $0x140] sm:$0xff]
        %v445 = vld [vmem:[%s309 + $0x148] sm:$0xff]
        %v446 = vld [vmem:[%s309 + $0x150] sm:$0xff]
        %v447 = vld [vmem:[%s309 + $0x158] sm:$0xff]
        %v448 = vld [vmem:[%s309 + $0x160] sm:$0xff]
        %v449 = vld [vmem:[%s309 + $0x168] sm:$0xff]
        %v450 = vld [vmem:[%s309 + $0x170] sm:$0xff]
        %v451 = vld [vmem:[%s309 + $0x178] sm:$0xff]
        %v452 = vld [vmem:[%s353] sm:$0xf]
        %v453 = vld [vmem:[%s353 + $0x4] sm:$0xf]
        %v454 = vld [vmem:[%s353 + $0x8] sm:$0xf]
        %v455 = vld [vmem:[%s353 + $0xc] sm:$0xf]
        %v456 = vld [vmem:[%s353 + $0x10] sm:$0xf]
        %v457 = vld [vmem:[%s353 + $0x14] sm:$0xf]
        %v458 = vld [vmem:[%s353 + $0x18] sm:$0xf]
        %v459 = vld [vmem:[%s353 + $0x1c] sm:$0xf]
        %v460 = vld [vmem:[%s353 + $0x20] sm:$0xf]
        %v461 = vld [vmem:[%s353 + $0x24] sm:$0xf]
        %v462 = vld [vmem:[%s353 + $0x28] sm:$0xf]
        %v463 = vld [vmem:[%s353 + $0x2c] sm:$0xf]
        %v464 = vld [vmem:[%s353 + $0x30] sm:$0xf]
        %v465 = vld [vmem:[%s353 + $0x34] sm:$0xf]
        %v466 = vld [vmem:[%s353 + $0x38] sm:$0xf]
        %v467 = vld [vmem:[%s353 + $0x3c] sm:$0xf]
        %v468 = vld [vmem:[%s353 + $0x40] sm:$0xf]
        %v469 = vld [vmem:[%s353 + $0x44] sm:$0xf]
        %v470 = vld [vmem:[%s353 + $0x48] sm:$0xf]
        %v471 = vld [vmem:[%s353 + $0x4c] sm:$0xf]
        %v472 = vld [vmem:[%s353 + $0x50] sm:$0xf]
        %v473 = vld [vmem:[%s353 + $0x54] sm:$0xf]
        %v474 = vld [vmem:[%s353 + $0x58] sm:$0xf]
        %v475 = vld [vmem:[%s353 + $0x5c] sm:$0xf]
        %v476 = vld [vmem:[%s353 + $0x60] sm:$0xf]
        %v477 = vld [vmem:[%s353 + $0x64] sm:$0xf]
        %v478 = vld [vmem:[%s353 + $0x68] sm:$0xf]
        %v479 = vld [vmem:[%s353 + $0x6c] sm:$0xf]
        %v480 = vld [vmem:[%s353 + $0x70] sm:$0xf]
        %v481 = vld [vmem:[%s353 + $0x74] sm:$0xf]
        %v482 = vld [vmem:[%s353 + $0x78] sm:$0xf]
        %v483 = vld [vmem:[%s353 + $0x7c] sm:$0xf]
        %v484 = vld [vmem:[%s353 + $0x80] sm:$0xf]
        %v485 = vld [vmem:[%s353 + $0x84] sm:$0xf]
        %v486 = vld [vmem:[%s353 + $0x88] sm:$0xf]
        %v487 = vld [vmem:[%s353 + $0x8c] sm:$0xf]
        %v488 = vld [vmem:[%s353 + $0x90] sm:$0xf]
        %v489 = vld [vmem:[%s353 + $0x94] sm:$0xf]
        %v490 = vld [vmem:[%s353 + $0x98] sm:$0xf]
        %v491 = vld [vmem:[%s353 + $0x9c] sm:$0xf]
        %v492 = vld [vmem:[%s353 + $0xa0] sm:$0xf]
        %v493 = vld [vmem:[%s353 + $0xa4] sm:$0xf]
        %v494 = vld [vmem:[%s353 + $0xa8] sm:$0xf]
        %v495 = vld [vmem:[%s353 + $0xac] sm:$0xf]
        %v496 = vld [vmem:[%s353 + $0xb0] sm:$0xf]
        %v497 = vld [vmem:[%s353 + $0xb4] sm:$0xf]
        %v498 = vld [vmem:[%s353 + $0xb8] sm:$0xf]
        %v499 = vld [vmem:[%s353 + $0xbc] sm:$0xf]
        %v500 = vld [vmem:[%s353 + $0xc0] sm:$0xf]
        %v501 = vld [vmem:[%s353 + $0xc4] sm:$0xf]
        %v502 = vld [vmem:[%s353 + $0xc8] sm:$0xf]
        %v503 = vld [vmem:[%s353 + $0xcc] sm:$0xf]
        %v504 = vld [vmem:[%s353 + $0xd0] sm:$0xf]
        %v505 = vld [vmem:[%s353 + $0xd4] sm:$0xf]
        %v506 = vld [vmem:[%s353 + $0xd8] sm:$0xf]
        %v507 = vld [vmem:[%s353 + $0xdc] sm:$0xf]
        %v508 = vld [vmem:[%s353 + $0xe0] sm:$0xf]
        %v509 = vld [vmem:[%s353 + $0xe4] sm:$0xf]
        %v510 = vld [vmem:[%s353 + $0xe8] sm:$0xf]
        %v511 = vld [vmem:[%s353 + $0xec] sm:$0xf]
        %v512 = vld [vmem:[%s353 + $0xf0] sm:$0xf]
        %v513 = vld [vmem:[%s353 + $0xf4] sm:$0xf]
        %v514 = vld [vmem:[%s353 + $0xf8] sm:$0xf]
        %v515 = vld [vmem:[%s353 + $0xfc] sm:$0xf]
        %v516 = vld [vmem:[%s353 + $0x100] sm:$0xf]
        %v517 = vld [vmem:[%s353 + $0x104] sm:$0xf]
        %v518 = vld [vmem:[%s353 + $0x108] sm:$0xf]
        %v519 = vld [vmem:[%s353 + $0x10c] sm:$0xf]
        %v520 = vld [vmem:[%s353 + $0x110] sm:$0xf]
        %v521 = vld [vmem:[%s353 + $0x114] sm:$0xf]
        %v522 = vld [vmem:[%s353 + $0x118] sm:$0xf]
        %v523 = vld [vmem:[%s353 + $0x11c] sm:$0xf]
        %v524 = vld [vmem:[%s353 + $0x120] sm:$0xf]
        %v525 = vld [vmem:[%s353 + $0x124] sm:$0xf]
        %v526 = vld [vmem:[%s353 + $0x128] sm:$0xf]
        %v527 = vld [vmem:[%s353 + $0x12c] sm:$0xf]
        %v528 = vld [vmem:[%s353 + $0x130] sm:$0xf]
        %v529 = vld [vmem:[%s353 + $0x134] sm:$0xf]
        %v530 = vld [vmem:[%s353 + $0x138] sm:$0xf]
        %v531 = vld [vmem:[%s353 + $0x13c] sm:$0xf]
        %v532 = vld [vmem:[%s353 + $0x140] sm:$0xf]
        %v533 = vld [vmem:[%s353 + $0x144] sm:$0xf]
        %v534 = vld [vmem:[%s353 + $0x148] sm:$0xf]
        %v535 = vld [vmem:[%s353 + $0x14c] sm:$0xf]
        %v536 = vld [vmem:[%s353 + $0x150] sm:$0xf]
        %v537 = vld [vmem:[%s353 + $0x154] sm:$0xf]
        %v538 = vld [vmem:[%s353 + $0x158] sm:$0xf]
        %v539 = vld [vmem:[%s353 + $0x15c] sm:$0xf]
        %v540 = vld [vmem:[%s353 + $0x160] sm:$0xf]
        %v541 = vld [vmem:[%s353 + $0x164] sm:$0xf]
        %v542 = vld [vmem:[%s353 + $0x168] sm:$0xf]
        %v543 = vld [vmem:[%s353 + $0x16c] sm:$0xf]
        %v544 = vld [vmem:[%s353 + $0x170] sm:$0xf]
        %v545 = vld [vmem:[%s353 + $0x174] sm:$0xf]
        %v546 = vld [vmem:[%s353 + $0x178] sm:$0xf]
        %v547 = vld [vmem:[%s353 + $0x17c] sm:$0xf]
        %v596 = vunpack.c.l.b16 %v404
        %v597 = vunpack.c.h.b16 %v404
        %v598 = vunpack.c.l.b16 %v405
        %v599 = vunpack.c.h.b16 %v405
        %v600 = vunpack.c.l.b16 %v406
        %v601 = vunpack.c.h.b16 %v406
        %v602 = vunpack.c.l.b16 %v407
        %v603 = vunpack.c.h.b16 %v407
        %v604 = vunpack.c.l.b16 %v408
        %v605 = vunpack.c.h.b16 %v408
        %v606 = vunpack.c.l.b16 %v409
        %v607 = vunpack.c.h.b16 %v409
        %v608 = vunpack.c.l.b16 %v410
        %v609 = vunpack.c.h.b16 %v410
        %v610 = vunpack.c.l.b16 %v411
        %v611 = vunpack.c.h.b16 %v411
        %v612 = vunpack.c.l.b16 %v412
        %v613 = vunpack.c.h.b16 %v412
        %v614 = vunpack.c.l.b16 %v413
        %v615 = vunpack.c.h.b16 %v413
        %v616 = vunpack.c.l.b16 %v414
        %v617 = vunpack.c.h.b16 %v414
        %v618 = vunpack.c.l.b16 %v415
        %v619 = vunpack.c.h.b16 %v415
        %v620 = vunpack.c.l.b16 %v416
        %v621 = vunpack.c.h.b16 %v416
        %v622 = vunpack.c.l.b16 %v417
        %v623 = vunpack.c.h.b16 %v417
        %v624 = vunpack.c.l.b16 %v418
        %v625 = vunpack.c.h.b16 %v418
        %v626 = vunpack.c.l.b16 %v419
        %v627 = vunpack.c.h.b16 %v419
        %v628 = vunpack.c.l.b16 %v420
        %v629 = vunpack.c.h.b16 %v420
        %v630 = vunpack.c.l.b16 %v421
        %v631 = vunpack.c.h.b16 %v421
        %v632 = vunpack.c.l.b16 %v422
        %v633 = vunpack.c.h.b16 %v422
        %v634 = vunpack.c.l.b16 %v423
        %v635 = vunpack.c.h.b16 %v423
        %v636 = vunpack.c.l.b16 %v424
        %v637 = vunpack.c.h.b16 %v424
        %v638 = vunpack.c.l.b16 %v425
        %v639 = vunpack.c.h.b16 %v425
        %v640 = vunpack.c.l.b16 %v426
        %v641 = vunpack.c.h.b16 %v426
        %v642 = vunpack.c.l.b16 %v427
        %v643 = vunpack.c.h.b16 %v427
        %v644 = vunpack.c.l.b16 %v428
        %v645 = vunpack.c.h.b16 %v428
        %v646 = vunpack.c.l.b16 %v429
        %v647 = vunpack.c.h.b16 %v429
        %v648 = vunpack.c.l.b16 %v430
        %v649 = vunpack.c.h.b16 %v430
        %v650 = vunpack.c.l.b16 %v431
        %v651 = vunpack.c.h.b16 %v431
        %v652 = vunpack.c.l.b16 %v432
        %v653 = vunpack.c.h.b16 %v432
        %v654 = vunpack.c.l.b16 %v433
        %v655 = vunpack.c.h.b16 %v433
        %v656 = vunpack.c.l.b16 %v434
        %v657 = vunpack.c.h.b16 %v434
        %v658 = vunpack.c.l.b16 %v435
        %v659 = vunpack.c.h.b16 %v435
        %v660 = vunpack.c.l.b16 %v436
        %v661 = vunpack.c.h.b16 %v436
        %v662 = vunpack.c.l.b16 %v437
        %v663 = vunpack.c.h.b16 %v437
        %v664 = vunpack.c.l.b16 %v438
        %v665 = vunpack.c.h.b16 %v438
        %v666 = vunpack.c.l.b16 %v439
        %v667 = vunpack.c.h.b16 %v439
        %v668 = vunpack.c.l.b16 %v440
        %v669 = vunpack.c.h.b16 %v440
        %v670 = vunpack.c.l.b16 %v441
        %v671 = vunpack.c.h.b16 %v441
        %v672 = vunpack.c.l.b16 %v442
        %v673 = vunpack.c.h.b16 %v442
        %v674 = vunpack.c.l.b16 %v443
        %v675 = vunpack.c.h.b16 %v443
        %v676 = vunpack.c.l.b16 %v444
        %v677 = vunpack.c.h.b16 %v444
        %v678 = vunpack.c.l.b16 %v445
        %v679 = vunpack.c.h.b16 %v445
        %v680 = vunpack.c.l.b16 %v446
        %v681 = vunpack.c.h.b16 %v446
        %v682 = vunpack.c.l.b16 %v447
        %v683 = vunpack.c.h.b16 %v447
        %v684 = vunpack.c.l.b16 %v448
        %v685 = vunpack.c.h.b16 %v448
        %v686 = vunpack.c.l.b16 %v449
        %v687 = vunpack.c.h.b16 %v449
        %v688 = vunpack.c.l.b16 %v450
        %v689 = vunpack.c.h.b16 %v450
        %v690 = vunpack.c.l.b16 %v451
        %v691 = vunpack.c.h.b16 %v451
        %v692 = vpack.c.b16 %v602, %v596
        %v693 = vpack.c.b16 %v603, %v597
        %v694 = vpack.c.b16 %v604, %v598
        %v695 = vpack.c.b16 %v605, %v599
        %v696 = vpack.c.b16 %v606, %v600
        %v697 = vpack.c.b16 %v607, %v601
        %v698 = vpack.c.b16 %v614, %v608
        %v699 = vpack.c.b16 %v615, %v609
        %v700 = vpack.c.b16 %v616, %v610
        %v701 = vpack.c.b16 %v617, %v611
        %v702 = vpack.c.b16 %v618, %v612
        %v703 = vpack.c.b16 %v619, %v613
        %v704 = vpack.c.b16 %v626, %v620
        %v705 = vpack.c.b16 %v627, %v621
        %v706 = vpack.c.b16 %v628, %v622
        %v707 = vpack.c.b16 %v629, %v623
        %v708 = vpack.c.b16 %v630, %v624
        %v709 = vpack.c.b16 %v631, %v625
        %v710 = vpack.c.b16 %v638, %v632
        %v711 = vpack.c.b16 %v639, %v633
        %v712 = vpack.c.b16 %v640, %v634
        %v713 = vpack.c.b16 %v641, %v635
        %v714 = vpack.c.b16 %v642, %v636
        %v715 = vpack.c.b16 %v643, %v637
        %v716 = vpack.c.b16 %v650, %v644
        %v717 = vpack.c.b16 %v651, %v645
        %v718 = vpack.c.b16 %v652, %v646
        %v719 = vpack.c.b16 %v653, %v647
        %v720 = vpack.c.b16 %v654, %v648
        %v721 = vpack.c.b16 %v655, %v649
        %v722 = vpack.c.b16 %v662, %v656
        %v723 = vpack.c.b16 %v663, %v657
        %v724 = vpack.c.b16 %v664, %v658
        %v725 = vpack.c.b16 %v665, %v659
        %v726 = vpack.c.b16 %v666, %v660
        %v727 = vpack.c.b16 %v667, %v661
        %v728 = vpack.c.b16 %v674, %v668
        %v729 = vpack.c.b16 %v675, %v669
        %v730 = vpack.c.b16 %v676, %v670
        %v731 = vpack.c.b16 %v677, %v671
        %v732 = vpack.c.b16 %v678, %v672
        %v733 = vpack.c.b16 %v679, %v673
        %v734 = vpack.c.b16 %v686, %v680
        %v735 = vpack.c.b16 %v687, %v681
        %v736 = vpack.c.b16 %v688, %v682
        %v737 = vpack.c.b16 %v689, %v683
        %v738 = vpack.c.b16 %v690, %v684
        %v739 = vpack.c.b16 %v691, %v685
        %v884 = vunpack.c.l.b16 %v452
        %v885 = vunpack.c.l.b16 %v453
        %v886 = vunpack.c.l.b16 %v454
        %v887 = vunpack.c.l.b16 %v455
        %v888 = vunpack.c.l.b16 %v456
        %v889 = vunpack.c.l.b16 %v457
        %v890 = vunpack.c.l.b16 %v458
        %v891 = vunpack.c.l.b16 %v459
        %v892 = vunpack.c.l.b16 %v460
        %v893 = vunpack.c.l.b16 %v461
        %v894 = vunpack.c.l.b16 %v462
        %v895 = vunpack.c.l.b16 %v463
        %v896 = vunpack.c.l.b16 %v464
        %v897 = vunpack.c.l.b16 %v465
        %v898 = vunpack.c.l.b16 %v466
        %v899 = vunpack.c.l.b16 %v467
        %v900 = vunpack.c.l.b16 %v468
        %v901 = vunpack.c.l.b16 %v469
        %v902 = vunpack.c.l.b16 %v470
        %v903 = vunpack.c.l.b16 %v471
        %v904 = vunpack.c.l.b16 %v472
        %v905 = vunpack.c.l.b16 %v473
        %v906 = vunpack.c.l.b16 %v474
        %v907 = vunpack.c.l.b16 %v475
        %v908 = vunpack.c.l.b16 %v476
        %v909 = vunpack.c.l.b16 %v477
        %v910 = vunpack.c.l.b16 %v478
        %v911 = vunpack.c.l.b16 %v479
        %v912 = vunpack.c.l.b16 %v480
        %v913 = vunpack.c.l.b16 %v481
        %v914 = vunpack.c.l.b16 %v482
        %v915 = vunpack.c.l.b16 %v483
        %v916 = vunpack.c.l.b16 %v484
        %v917 = vunpack.c.l.b16 %v485
        %v918 = vunpack.c.l.b16 %v486
        %v919 = vunpack.c.l.b16 %v487
        %v920 = vunpack.c.l.b16 %v488
        %v921 = vunpack.c.l.b16 %v489
        %v922 = vunpack.c.l.b16 %v490
        %v923 = vunpack.c.l.b16 %v491
        %v924 = vunpack.c.l.b16 %v492
        %v925 = vunpack.c.l.b16 %v493
        %v926 = vunpack.c.l.b16 %v494
        %v927 = vunpack.c.l.b16 %v495
        %v928 = vunpack.c.l.b16 %v496
        %v929 = vunpack.c.l.b16 %v497
        %v930 = vunpack.c.l.b16 %v498
        %v931 = vunpack.c.l.b16 %v499
        %v932 = vunpack.c.l.b16 %v500
        %v933 = vunpack.c.l.b16 %v501
        %v934 = vunpack.c.l.b16 %v502
        %v935 = vunpack.c.l.b16 %v503
        %v936 = vunpack.c.l.b16 %v504
        %v937 = vunpack.c.l.b16 %v505
        %v938 = vunpack.c.l.b16 %v506
        %v939 = vunpack.c.l.b16 %v507
        %v940 = vunpack.c.l.b16 %v508
        %v941 = vunpack.c.l.b16 %v509
        %v942 = vunpack.c.l.b16 %v510
        %v943 = vunpack.c.l.b16 %v511
        %v944 = vunpack.c.l.b16 %v512
        %v945 = vunpack.c.l.b16 %v513
        %v946 = vunpack.c.l.b16 %v514
        %v947 = vunpack.c.l.b16 %v515
        %v948 = vunpack.c.l.b16 %v516
        %v949 = vunpack.c.l.b16 %v517
        %v950 = vunpack.c.l.b16 %v518
        %v951 = vunpack.c.l.b16 %v519
        %v952 = vunpack.c.l.b16 %v520
        %v953 = vunpack.c.l.b16 %v521
        %v954 = vunpack.c.l.b16 %v522
        %v955 = vunpack.c.l.b16 %v523
        %v956 = vunpack.c.l.b16 %v524
        %v957 = vunpack.c.l.b16 %v525
        %v958 = vunpack.c.l.b16 %v526
        %v959 = vunpack.c.l.b16 %v527
        %v960 = vunpack.c.l.b16 %v528
        %v961 = vunpack.c.l.b16 %v529
        %v962 = vunpack.c.l.b16 %v530
        %v963 = vunpack.c.l.b16 %v531
        %v964 = vunpack.c.l.b16 %v532
        %v965 = vunpack.c.l.b16 %v533
        %v966 = vunpack.c.l.b16 %v534
        %v967 = vunpack.c.l.b16 %v535
        %v968 = vunpack.c.l.b16 %v536
        %v969 = vunpack.c.l.b16 %v537
        %v970 = vunpack.c.l.b16 %v538
        %v971 = vunpack.c.l.b16 %v539
        %v972 = vunpack.c.l.b16 %v540
        %v973 = vunpack.c.l.b16 %v541
        %v974 = vunpack.c.l.b16 %v542
        %v975 = vunpack.c.l.b16 %v543
        %v976 = vunpack.c.l.b16 %v544
        %v977 = vunpack.c.l.b16 %v545
        %v978 = vunpack.c.l.b16 %v546
        %v979 = vunpack.c.l.b16 %v547
        %v980 = vpack.c.b16 %v885, %v884
        %v981 = vpack.c.b16 %v887, %v886
        %v982 = vpack.c.b16 %v889, %v888
        %v983 = vpack.c.b16 %v891, %v890
        %v984 = vpack.c.b16 %v893, %v892
        %v985 = vpack.c.b16 %v895, %v894
        %v986 = vpack.c.b16 %v897, %v896
        %v987 = vpack.c.b16 %v899, %v898
        %v988 = vpack.c.b16 %v901, %v900
        %v989 = vpack.c.b16 %v903, %v902
        %v990 = vpack.c.b16 %v905, %v904
        %v991 = vpack.c.b16 %v907, %v906
        %v992 = vpack.c.b16 %v909, %v908
        %v993 = vpack.c.b16 %v911, %v910
        %v994 = vpack.c.b16 %v913, %v912
        %v995 = vpack.c.b16 %v915, %v914
        %v996 = vpack.c.b16 %v917, %v916
        %v997 = vpack.c.b16 %v919, %v918
        %v998 = vpack.c.b16 %v921, %v920
        %v999 = vpack.c.b16 %v923, %v922
        %v1000 = vpack.c.b16 %v925, %v924
        %v1001 = vpack.c.b16 %v927, %v926
        %v1002 = vpack.c.b16 %v929, %v928
        %v1003 = vpack.c.b16 %v931, %v930
        %v1004 = vpack.c.b16 %v933, %v932
        %v1005 = vpack.c.b16 %v935, %v934
        %v1006 = vpack.c.b16 %v937, %v936
        %v1007 = vpack.c.b16 %v939, %v938
        %v1008 = vpack.c.b16 %v941, %v940
        %v1009 = vpack.c.b16 %v943, %v942
        %v1010 = vpack.c.b16 %v945, %v944
        %v1011 = vpack.c.b16 %v947, %v946
        %v1012 = vpack.c.b16 %v949, %v948
        %v1013 = vpack.c.b16 %v951, %v950
        %v1014 = vpack.c.b16 %v953, %v952
        %v1015 = vpack.c.b16 %v955, %v954
        %v1016 = vpack.c.b16 %v957, %v956
        %v1017 = vpack.c.b16 %v959, %v958
        %v1018 = vpack.c.b16 %v961, %v960
        %v1019 = vpack.c.b16 %v963, %v962
        %v1020 = vpack.c.b16 %v965, %v964
        %v1021 = vpack.c.b16 %v967, %v966
        %v1022 = vpack.c.b16 %v969, %v968
        %v1023 = vpack.c.b16 %v971, %v970
        %v1024 = vpack.c.b16 %v973, %v972
        %v1025 = vpack.c.b16 %v975, %v974
        %v1026 = vpack.c.b16 %v977, %v976
        %v1027 = vpack.c.b16 %v979, %v978
        %1076 = vmatprep.subr.bf16.mxu0 0
        %1077 = vmatpush1.bf16.msra.mxu0 %v980
        %1078 = vmatprep.subr.bf16.mxu0 0
        %1079 = vmatpush1.bf16.msra.mxu0 %v981
        %1080 = vmatprep.subr.bf16.mxu0 0
        %1081 = vmatpush1.bf16.msra.mxu0 %v982
        %1082 = vmatprep.subr.bf16.mxu0 0
        %1083 = vmatpush1.bf16.msra.mxu0 %v983
        %1084 = vmatprep.subr.bf16.mxu0 0
        %1085 = vmatpush1.bf16.msra.mxu0 %v984
        %1086 = vmatprep.subr.bf16.mxu0 0
        %1087 = vmatpush1.bf16.msra.mxu0 %v985
        %1088 = vmatprep.subr.bf16.mxu0 0
        %1089 = vmatpush1.bf16.msra.mxu0 %v986
        %1090 = vmatprep.subr.bf16.mxu0 0
        %1091 = vmatpush1.bf16.msra.mxu0 %v987
        %1092 = vmatprep.subr.bf16.mxu0 0
        %1093 = vmatpush1.bf16.msra.mxu0 %v988
        %1094 = vmatprep.subr.bf16.mxu0 0
        %1095 = vmatpush1.bf16.msra.mxu0 %v989
        %1096 = vmatprep.subr.bf16.mxu0 0
        %1097 = vmatpush1.bf16.msra.mxu0 %v990
        %1098 = vmatprep.subr.bf16.mxu0 0
        %1099 = vmatpush1.bf16.msra.mxu0 %v991
        %1100 = vmatprep.subr.bf16.mxu0 0
        %1101 = vmatpush1.bf16.msra.mxu0 %v992
        %1102 = vmatprep.subr.bf16.mxu0 0
        %1103 = vmatpush1.bf16.msra.mxu0 %v993
        %1104 = vmatprep.subr.bf16.mxu0 0
        %1105 = vmatpush1.bf16.msra.mxu0 %v994
        %1106 = vmatprep.subr.bf16.mxu0 0
        %1107 = vmatpush1.bf16.msra.mxu0 %v995
        %1108 = vmatprep.mubr.bf16.mxu0 %v693
        %1109 = vmatmul.mubr.bf16.gmra.mrb[0].mxu0 %v692
        %v1110 = vpop.f32.mrb[0].mxu0
        %v1111 = vadd.f32 0.0, %v1110
        %v1112 = vpop.f32.mrb[0].mxu0
        %v1113 = vpop.f32.mrb[0].mxu0
        %v1114 = vadd.f32 0.0, %v1113
        %v1115 = vpop.f32.mrb[0].mxu0
        %1116 = vmatprep.mubr.bf16.mxu0 %v699
        %1117 = vmatmul.mubr.bf16.gmra.mrb[0].mxu0 %v698
        %v1118 = vpop.f32.mrb[0].mxu0
        %v1119 = vadd.f32 0.0, %v1118
        %v1120 = vpop.f32.mrb[0].mxu0
        %v1121 = vpop.f32.mrb[0].mxu0
        %v1122 = vadd.f32 0.0, %v1121
        %v1123 = vpop.f32.mrb[0].mxu0
        %1124 = vmatprep.mubr.bf16.mxu0 %v705
        %1125 = vmatmul.mubr.bf16.gmra.mrb[0].mxu0 %v704
        %v1126 = vpop.f32.mrb[0].mxu0
        %v1127 = vadd.f32 0.0, %v1126
        %v1128 = vpop.f32.mrb[0].mxu0
        %v1129 = vpop.f32.mrb[0].mxu0
        %v1130 = vadd.f32 0.0, %v1129
        %v1131 = vpop.f32.mrb[0].mxu0
        %1132 = vmatprep.mubr.bf16.mxu0 %v711
        %1133 = vmatmul.mubr.bf16.gmra.mrb[0].mxu0 %v710
        %v1134 = vpop.f32.mrb[0].mxu0
        %v1135 = vadd.f32 0.0, %v1134
        %v1136 = vpop.f32.mrb[0].mxu0
        %v1137 = vpop.f32.mrb[0].mxu0
        %v1138 = vadd.f32 0.0, %v1137
        %v1139 = vpop.f32.mrb[0].mxu0
        %1140 = vmatprep.mubr.bf16.mxu0 %v717
        %1141 = vmatmul.mubr.bf16.gmra.mrb[0].mxu0 %v716
        %v1142 = vpop.f32.mrb[0].mxu0
        %v1143 = vadd.f32 0.0, %v1142
        %v1144 = vpop.f32.mrb[0].mxu0
        %v1145 = vpop.f32.mrb[0].mxu0
        %v1146 = vadd.f32 0.0, %v1145
        %v1147 = vpop.f32.mrb[0].mxu0
        %1148 = vmatprep.mubr.bf16.mxu0 %v723
        %1149 = vmatmul.mubr.bf16.gmra.mrb[0].mxu0 %v722
        %v1150 = vpop.f32.mrb[0].mxu0
        %v1151 = vadd.f32 0.0, %v1150
        %v1152 = vpop.f32.mrb[0].mxu0
        %v1153 = vpop.f32.mrb[0].mxu0
        %v1154 = vadd.f32 0.0, %v1153
        %v1155 = vpop.f32.mrb[0].mxu0
        %1156 = vmatprep.mubr.bf16.mxu0 %v729
        %1157 = vmatmul.mubr.bf16.gmra.mrb[0].mxu0 %v728
        %v1158 = vpop.f32.mrb[0].mxu0
        %v1159 = vadd.f32 0.0, %v1158
        %v1160 = vpop.f32.mrb[0].mxu0
        %v1161 = vpop.f32.mrb[0].mxu0
        %v1162 = vadd.f32 0.0, %v1161
        %v1163 = vpop.f32.mrb[0].mxu0
        %1164 = vmatprep.mubr.bf16.mxu0 %v735
        %1165 = vmatmul.mubr.bf16.gmra.mrb[0].mxu0 %v734
        %v1166 = vpop.f32.mrb[0].mxu0
        %v1167 = vadd.f32 0.0, %v1166
        %v1168 = vpop.f32.mrb[0].mxu0
        %v1169 = vpop.f32.mrb[0].mxu0
        %v1170 = vadd.f32 0.0, %v1169
        %v1171 = vpop.f32.mrb[0].mxu0
        %1172 = vdwg.mxu0
        %1173 = vmatprep.subr.bf16.mxu0 0
        %1174 = vmatpush1.bf16.msra.mxu0 %v996
        %1175 = vmatprep.subr.bf16.mxu0 0
        %1176 = vmatpush1.bf16.msra.mxu0 %v997
        %1177 = vmatprep.subr.bf16.mxu0 0
        %1178 = vmatpush1.bf16.msra.mxu0 %v998
        %1179 = vmatprep.subr.bf16.mxu0 0
        %1180 = vmatpush1.bf16.msra.mxu0 %v999
        %1181 = vmatprep.subr.bf16.mxu0 0
        %1182 = vmatpush1.bf16.msra.mxu0 %v1000
        %1183 = vmatprep.subr.bf16.mxu0 0
        %1184 = vmatpush1.bf16.msra.mxu0 %v1001
        %1185 = vmatprep.subr.bf16.mxu0 0
        %1186 = vmatpush1.bf16.msra.mxu0 %v1002
        %1187 = vmatprep.subr.bf16.mxu0 0
        %1188 = vmatpush1.bf16.msra.mxu0 %v1003
        %1189 = vmatprep.subr.bf16.mxu0 0
        %1190 = vmatpush1.bf16.msra.mxu0 %v1004
        %1191 = vmatprep.subr.bf16.mxu0 0
        %1192 = vmatpush1.bf16.msra.mxu0 %v1005
        %1193 = vmatprep.subr.bf16.mxu0 0
        %1194 = vmatpush1.bf16.msra.mxu0 %v1006
        %1195 = vmatprep.subr.bf16.mxu0 0
        %1196 = vmatpush1.bf16.msra.mxu0 %v1007
        %1197 = vmatprep.subr.bf16.mxu0 0
        %1198 = vmatpush1.bf16.msra.mxu0 %v1008
        %1199 = vmatprep.subr.bf16.mxu0 0
        %1200 = vmatpush1.bf16.msra.mxu0 %v1009
        %1201 = vmatprep.subr.bf16.mxu0 0
        %1202 = vmatpush1.bf16.msra.mxu0 %v1010
        %1203 = vmatprep.subr.bf16.mxu0 0
        %1204 = vmatpush1.bf16.msra.mxu0 %v1011
        %1205 = vmatprep.mubr.bf16.mxu0 %v695
        %1206 = vmatmul.mubr.bf16.gmra.mrb[0].mxu0 %v694
        %v1207 = vpop.f32.mrb[0].mxu0
        %v1208 = vadd.f32 %v1111, %v1207
        %v1209 = vpop.f32.mrb[0].mxu0
        %v1210 = vpop.f32.mrb[0].mxu0
        %v1211 = vadd.f32 %v1114, %v1210
        %v1212 = vpop.f32.mrb[0].mxu0
        %1213 = vmatprep.mubr.bf16.mxu0 %v701
        %1214 = vmatmul.mubr.bf16.gmra.mrb[0].mxu0 %v700
        %v1215 = vpop.f32.mrb[0].mxu0
        %v1216 = vadd.f32 %v1119, %v1215
        %v1217 = vpop.f32.mrb[0].mxu0
        %v1218 = vpop.f32.mrb[0].mxu0
        %v1219 = vadd.f32 %v1122, %v1218
        %v1220 = vpop.f32.mrb[0].mxu0
        %1221 = vmatprep.mubr.bf16.mxu0 %v707
        %1222 = vmatmul.mubr.bf16.gmra.mrb[0].mxu0 %v706
        %v1223 = vpop.f32.mrb[0].mxu0
        %v1224 = vadd.f32 %v1127, %v1223
        %v1225 = vpop.f32.mrb[0].mxu0
        %v1226 = vpop.f32.mrb[0].mxu0
        %v1227 = vadd.f32 %v1130, %v1226
        %v1228 = vpop.f32.mrb[0].mxu0
        %1229 = vmatprep.mubr.bf16.mxu0 %v713
        %1230 = vmatmul.mubr.bf16.gmra.mrb[0].mxu0 %v712
        %v1231 = vpop.f32.mrb[0].mxu0
        %v1232 = vadd.f32 %v1135, %v1231
        %v1233 = vpop.f32.mrb[0].mxu0
        %v1234 = vpop.f32.mrb[0].mxu0
        %v1235 = vadd.f32 %v1138, %v1234
        %v1236 = vpop.f32.mrb[0].mxu0
        %1237 = vmatprep.mubr.bf16.mxu0 %v719
        %1238 = vmatmul.mubr.bf16.gmra.mrb[0].mxu0 %v718
        %v1239 = vpop.f32.mrb[0].mxu0
        %v1240 = vadd.f32 %v1143, %v1239
        %v1241 = vpop.f32.mrb[0].mxu0
        %v1242 = vpop.f32.mrb[0].mxu0
        %v1243 = vadd.f32 %v1146, %v1242
        %v1244 = vpop.f32.mrb[0].mxu0
        %1245 = vmatprep.mubr.bf16.mxu0 %v725
        %1246 = vmatmul.mubr.bf16.gmra.mrb[0].mxu0 %v724
        %v1247 = vpop.f32.mrb[0].mxu0
        %v1248 = vadd.f32 %v1151, %v1247
        %v1249 = vpop.f32.mrb[0].mxu0
        %v1250 = vpop.f32.mrb[0].mxu0
        %v1251 = vadd.f32 %v1154, %v1250
        %v1252 = vpop.f32.mrb[0].mxu0
        %1253 = vmatprep.mubr.bf16.mxu0 %v731
        %1254 = vmatmul.mubr.bf16.gmra.mrb[0].mxu0 %v730
        %v1255 = vpop.f32.mrb[0].mxu0
        %v1256 = vadd.f32 %v1159, %v1255
        %v1257 = vpop.f32.mrb[0].mxu0
        %v1258 = vpop.f32.mrb[0].mxu0
        %v1259 = vadd.f32 %v1162, %v1258
        %v1260 = vpop.f32.mrb[0].mxu0
        %1261 = vmatprep.mubr.bf16.mxu0 %v737
        %1262 = vmatmul.mubr.bf16.gmra.mrb[0].mxu0 %v736
        %v1263 = vpop.f32.mrb[0].mxu0
        %v1264 = vadd.f32 %v1167, %v1263
        %v1265 = vpop.f32.mrb[0].mxu0
        %v1266 = vpop.f32.mrb[0].mxu0
        %v1267 = vadd.f32 %v1170, %v1266
        %v1268 = vpop.f32.mrb[0].mxu0
        %1269 = vdwg.mxu0
        %1270 = vmatprep.subr.bf16.mxu0 0
        %1271 = vmatpush1.bf16.msra.mxu0 %v1012
        %1272 = vmatprep.subr.bf16.mxu0 0
        %1273 = vmatpush1.bf16.msra.mxu0 %v1013
        %1274 = vmatprep.subr.bf16.mxu0 0
        %1275 = vmatpush1.bf16.msra.mxu0 %v1014
        %1276 = vmatprep.subr.bf16.mxu0 0
        %1277 = vmatpush1.bf16.msra.mxu0 %v1015
        %1278 = vmatprep.subr.bf16.mxu0 0
        %1279 = vmatpush1.bf16.msra.mxu0 %v1016
        %1280 = vmatprep.subr.bf16.mxu0 0
        %1281 = vmatpush1.bf16.msra.mxu0 %v1017
        %1282 = vmatprep.subr.bf16.mxu0 0
        %1283 = vmatpush1.bf16.msra.mxu0 %v1018
        %1284 = vmatprep.subr.bf16.mxu0 0
        %1285 = vmatpush1.bf16.msra.mxu0 %v1019
        %1286 = vmatprep.subr.bf16.mxu0 0
        %1287 = vmatpush1.bf16.msra.mxu0 %v1020
        %1288 = vmatprep.subr.bf16.mxu0 0
        %1289 = vmatpush1.bf16.msra.mxu0 %v1021
        %1290 = vmatprep.subr.bf16.mxu0 0
        %1291 = vmatpush1.bf16.msra.mxu0 %v1022
        %1292 = vmatprep.subr.bf16.mxu0 0
        %1293 = vmatpush1.bf16.msra.mxu0 %v1023
        %1294 = vmatprep.subr.bf16.mxu0 0
        %1295 = vmatpush1.bf16.msra.mxu0 %v1024
        %1296 = vmatprep.subr.bf16.mxu0 0
        %1297 = vmatpush1.bf16.msra.mxu0 %v1025
        %1298 = vmatprep.subr.bf16.mxu0 0
        %1299 = vmatpush1.bf16.msra.mxu0 %v1026
        %1300 = vmatprep.subr.bf16.mxu0 0
        %1301 = vmatpush1.bf16.msra.mxu0 %v1027
        %1302 = vmatprep.mubr.bf16.mxu0 %v697
        %1303 = vmatmul.mubr.bf16.gmra.mrb[0].mxu0 %v696
        %v1304 = vpop.f32.mrb[0].mxu0
        %v1305 = vadd.f32 %v1208, %v1304
        %v1306 = vpop.f32.mrb[0].mxu0
        %v1307 = vpop.f32.mrb[0].mxu0
        %v1308 = vadd.f32 %v1211, %v1307
        %v1309 = vpop.f32.mrb[0].mxu0
        %1310 = vmatprep.mubr.bf16.mxu0 %v703
        %1311 = vmatmul.mubr.bf16.gmra.mrb[0].mxu0 %v702
        %v1312 = vpop.f32.mrb[0].mxu0
        %v1313 = vadd.f32 %v1216, %v1312
        %v1314 = vpop.f32.mrb[0].mxu0
        %v1315 = vpop.f32.mrb[0].mxu0
        %v1316 = vadd.f32 %v1219, %v1315
        %v1317 = vpop.f32.mrb[0].mxu0
        %1318 = vmatprep.mubr.bf16.mxu0 %v709
        %1319 = vmatmul.mubr.bf16.gmra.mrb[0].mxu0 %v708
        %v1320 = vpop.f32.mrb[0].mxu0
        %v1321 = vadd.f32 %v1224, %v1320
        %v1322 = vpop.f32.mrb[0].mxu0
        %v1323 = vpop.f32.mrb[0].mxu0
        %v1324 = vadd.f32 %v1227, %v1323
        %v1325 = vpop.f32.mrb[0].mxu0
        %1326 = vmatprep.mubr.bf16.mxu0 %v715
        %1327 = vmatmul.mubr.bf16.gmra.mrb[0].mxu0 %v714
        %v1328 = vpop.f32.mrb[0].mxu0
        %v1329 = vadd.f32 %v1232, %v1328
        %v1330 = vpop.f32.mrb[0].mxu0
        %v1331 = vpop.f32.mrb[0].mxu0
        %v1332 = vadd.f32 %v1235, %v1331
        %v1333 = vpop.f32.mrb[0].mxu0
        %1334 = vmatprep.mubr.bf16.mxu0 %v721
        %1335 = vmatmul.mubr.bf16.gmra.mrb[0].mxu0 %v720
        %v1336 = vpop.f32.mrb[0].mxu0
        %v1337 = vadd.f32 %v1240, %v1336
        %v1338 = vpop.f32.mrb[0].mxu0
        %v1339 = vpop.f32.mrb[0].mxu0
        %v1340 = vadd.f32 %v1243, %v1339
        %v1341 = vpop.f32.mrb[0].mxu0
        %1342 = vmatprep.mubr.bf16.mxu0 %v727
        %1343 = vmatmul.mubr.bf16.gmra.mrb[0].mxu0 %v726
        %v1344 = vpop.f32.mrb[0].mxu0
        %v1345 = vadd.f32 %v1248, %v1344
        %v1346 = vpop.f32.mrb[0].mxu0
        %v1347 = vpop.f32.mrb[0].mxu0
        %v1348 = vadd.f32 %v1251, %v1347
        %v1349 = vpop.f32.mrb[0].mxu0
        %1350 = vmatprep.mubr.bf16.mxu0 %v733
        %1351 = vmatmul.mubr.bf16.gmra.mrb[0].mxu0 %v732
        %v1352 = vpop.f32.mrb[0].mxu0
        %v1353 = vadd.f32 %v1256, %v1352
        %v1354 = vpop.f32.mrb[0].mxu0
        %v1355 = vpop.f32.mrb[0].mxu0
        %v1356 = vadd.f32 %v1259, %v1355
        %v1357 = vpop.f32.mrb[0].mxu0
        %1358 = vmatprep.mubr.bf16.mxu0 %v739
        %1359 = vmatmul.mubr.bf16.gmra.mrb[0].mxu0 %v738
        %v1360 = vpop.f32.mrb[0].mxu0
        %v1361 = vadd.f32 %v1264, %v1360
        %v1362 = vpop.f32.mrb[0].mxu0
        %v1363 = vpop.f32.mrb[0].mxu0
        %v1364 = vadd.f32 %v1267, %v1363
        %v1365 = vpop.f32.mrb[0].mxu0
        %1366 = vdwg.mxu0
        %v1367 = vadd.f32 %v388, %v1305
        %v1368 = vadd.f32 %v389, %v1308
        %v1369 = vadd.f32 %v390, %v1313
        %v1370 = vadd.f32 %v391, %v1316
        %v1371 = vadd.f32 %v392, %v1321
        %v1372 = vadd.f32 %v393, %v1324
        %v1373 = vadd.f32 %v394, %v1329
        %v1374 = vadd.f32 %v395, %v1332
        %v1375 = vadd.f32 %v396, %v1337
        %v1376 = vadd.f32 %v397, %v1340
        %v1377 = vadd.f32 %v398, %v1345
        %v1378 = vadd.f32 %v399, %v1348
        %v1379 = vadd.f32 %v400, %v1353
        %v1380 = vadd.f32 %v401, %v1356
        %v1381 = vadd.f32 %v402, %v1361
        %v1382 = vadd.f32 %v403, %v1364
        %1383 = vst [vmem:[#allocation2] sm:$0xff] %v1367
        %1384 = vst [vmem:[#allocation2 + $0x8] sm:$0xff] %v1368
        %1385 = vst [vmem:[#allocation2 + $0x10] sm:$0xff] %v1369
        %1386 = vst [vmem:[#allocation2 + $0x18] sm:$0xff] %v1370
        %1387 = vst [vmem:[#allocation2 + $0x20] sm:$0xff] %v1371
        %1388 = vst [vmem:[#allocation2 + $0x28] sm:$0xff] %v1372
        %1389 = vst [vmem:[#allocation2 + $0x30] sm:$0xff] %v1373
        %1390 = vst [vmem:[#allocation2 + $0x38] sm:$0xff] %v1374
        %1391 = vst [vmem:[#allocation2 + $0x40] sm:$0xff] %v1375
        %1392 = vst [vmem:[#allocation2 + $0x48] sm:$0xff] %v1376
        %1393 = vst [vmem:[#allocation2 + $0x50] sm:$0xff] %v1377
        %1394 = vst [vmem:[#allocation2 + $0x58] sm:$0xff] %v1378
        %1395 = vst [vmem:[#allocation2 + $0x60] sm:$0xff] %v1379
        %1396 = vst [vmem:[#allocation2 + $0x68] sm:$0xff] %v1380
        %1397 = vst [vmem:[#allocation2 + $0x70] sm:$0xff] %v1381
        %1398 = vst [vmem:[#allocation2 + $0x78] sm:$0xff] %v1382
        %p1399 = scmp.eq.s32.totalorder %s21, 2
        // Predicated region
        $region60: #{tower_forward.8} parent=50 // pred_check
          %p1400 = pneg %p1399
        $region61: #{tower_forward.8} parent=50 // pred_check_branch
          %1402 = sbr.rel (%p1400) target = $region63
        $region62: #{tower_forward.8} parent=50 // pred_region
          %v1403 = vld [vmem:[#allocation2] sm:$0xff]
          %v1404 = vld [vmem:[#allocation2 + $0x8] sm:$0xff]
          %v1405 = vld [vmem:[#allocation2 + $0x10] sm:$0xff]
          %v1406 = vld [vmem:[#allocation2 + $0x18] sm:$0xff]
          %v1407 = vld [vmem:[#allocation2 + $0x20] sm:$0xff]
          %v1408 = vld [vmem:[#allocation2 + $0x28] sm:$0xff]
          %v1409 = vld [vmem:[#allocation2 + $0x30] sm:$0xff]
          %v1410 = vld [vmem:[#allocation2 + $0x38] sm:$0xff]
          %v1411 = vld [vmem:[#allocation2 + $0x40] sm:$0xff]
          %v1412 = vld [vmem:[#allocation2 + $0x48] sm:$0xff]
          %v1413 = vld [vmem:[#allocation2 + $0x50] sm:$0xff]
          %v1414 = vld [vmem:[#allocation2 + $0x58] sm:$0xff]
          %v1415 = vld [vmem:[#allocation2 + $0x60] sm:$0xff]
          %v1416 = vld [vmem:[#allocation2 + $0x68] sm:$0xff]
          %v1417 = vld [vmem:[#allocation2 + $0x70] sm:$0xff]
          %v1418 = vld [vmem:[#allocation2 + $0x78] sm:$0xff]
          %v1419 = vld [vmem:[%s357] sm:$0x1]
          %v1421 = vlaneseq
          %v1422 = vshrl.u32 %v1421, 7
          %v1423 = vsub.s32 0, %v1422
          %v1424 = vrot.slane %v1419, %v1423
          %v1426 = vadd.f32 %v1403, %v1424
          %v1427 = vadd.f32 %v1404, %v1424
          %v1428 = vadd.f32 %v1405, %v1424
          %v1429 = vadd.f32 %v1406, %v1424
          %v1430 = vadd.f32 %v1407, %v1424
          %v1431 = vadd.f32 %v1408, %v1424
          %v1432 = vadd.f32 %v1409, %v1424
          %v1433 = vadd.f32 %v1410, %v1424
          %v1434 = vadd.f32 %v1411, %v1424
          %v1435 = vadd.f32 %v1412, %v1424
          %v1436 = vadd.f32 %v1413, %v1424
          %v1437 = vadd.f32 %v1414, %v1424
          %v1438 = vadd.f32 %v1415, %v1424
          %v1439 = vadd.f32 %v1416, %v1424
          %v1440 = vadd.f32 %v1417, %v1424
          %v1441 = vadd.f32 %v1418, %v1424
          %v1442 = vmax.f32 %v1426, 0.0
          %v1443 = vmax.f32 %v1427, 0.0
          %v1444 = vmax.f32 %v1428, 0.0
          %v1445 = vmax.f32 %v1429, 0.0
          %v1446 = vmax.f32 %v1430, 0.0
          %v1447 = vmax.f32 %v1431, 0.0
          %v1448 = vmax.f32 %v1432, 0.0
          %v1449 = vmax.f32 %v1433, 0.0
          %v1450 = vmax.f32 %v1434, 0.0
          %v1451 = vmax.f32 %v1435, 0.0
          %v1452 = vmax.f32 %v1436, 0.0
          %v1453 = vmax.f32 %v1437, 0.0
          %v1454 = vmax.f32 %v1438, 0.0
          %v1455 = vmax.f32 %v1439, 0.0
          %v1456 = vmax.f32 %v1440, 0.0
          %v1457 = vmax.f32 %v1441, 0.0
          %v1458 = vpack.c.bf16 %v1443, %v1442
          %v1459 = vpack.c.bf16 %v1445, %v1444
          %v1460 = vpack.c.bf16 %v1447, %v1446
          %v1461 = vpack.c.bf16 %v1449, %v1448
          %v1462 = vpack.c.bf16 %v1451, %v1450
          %v1463 = vpack.c.bf16 %v1453, %v1452
          %v1464 = vpack.c.bf16 %v1455, %v1454
          %v1465 = vpack.c.bf16 %v1457, %v1456
          %v1474 = vunpack.c.l.b16 %v1458
          %v1475 = vunpack.c.h.b16 %v1458
          %v1476 = vunpack.c.l.b16 %v1459
          %v1477 = vunpack.c.h.b16 %v1459
          %v1478 = vunpack.c.l.b16 %v1460
          %v1479 = vunpack.c.h.b16 %v1460
          %v1480 = vunpack.c.l.b16 %v1461
          %v1481 = vunpack.c.h.b16 %v1461
          %v1482 = vunpack.c.l.b16 %v1462
          %v1483 = vunpack.c.h.b16 %v1462
          %v1484 = vunpack.c.l.b16 %v1463
          %v1485 = vunpack.c.h.b16 %v1463
          %v1486 = vunpack.c.l.b16 %v1464
          %v1487 = vunpack.c.h.b16 %v1464
          %v1488 = vunpack.c.l.b16 %v1465
          %v1489 = vunpack.c.h.b16 %v1465
          %v1490 = vpack.c.b16 %v1474, %v1474
          %v1491 = vpack.c.b16 %v1475, %v1475
          %v1492 = vpack.c.b16 %v1476, %v1476
          %v1493 = vpack.c.b16 %v1477, %v1477
          %v1494 = vpack.c.b16 %v1478, %v1478
          %v1495 = vpack.c.b16 %v1479, %v1479
          %v1496 = vpack.c.b16 %v1480, %v1480
          %v1497 = vpack.c.b16 %v1481, %v1481
          %v1498 = vpack.c.b16 %v1482, %v1482
          %v1499 = vpack.c.b16 %v1483, %v1483
          %v1500 = vpack.c.b16 %v1484, %v1484
          %v1501 = vpack.c.b16 %v1485, %v1485
          %v1502 = vpack.c.b16 %v1486, %v1486
          %v1503 = vpack.c.b16 %v1487, %v1487
          %v1504 = vpack.c.b16 %v1488, %v1488
          %v1505 = vpack.c.b16 %v1489, %v1489
          %1522 = vst [vmem:[%s365] sm:$0xf] %v1490
          %1523 = vst [vmem:[%s365 + $0x4] sm:$0xf] %v1491
          %1524 = vst [vmem:[%s365 + $0x8] sm:$0xf] %v1492
          %1525 = vst [vmem:[%s365 + $0xc] sm:$0xf] %v1493
          %1526 = vst [vmem:[%s365 + $0x10] sm:$0xf] %v1494
          %1527 = vst [vmem:[%s365 + $0x14] sm:$0xf] %v1495
          %1528 = vst [vmem:[%s365 + $0x18] sm:$0xf] %v1496
          %1529 = vst [vmem:[%s365 + $0x1c] sm:$0xf] %v1497
          %1530 = vst [vmem:[%s365 + $0x20] sm:$0xf] %v1498
          %1531 = vst [vmem:[%s365 + $0x24] sm:$0xf] %v1499
          %1532 = vst [vmem:[%s365 + $0x28] sm:$0xf] %v1500
          %1533 = vst [vmem:[%s365 + $0x2c] sm:$0xf] %v1501
          %1534 = vst [vmem:[%s365 + $0x30] sm:$0xf] %v1502
          %1535 = vst [vmem:[%s365 + $0x34] sm:$0xf] %v1503
          %1536 = vst [vmem:[%s365 + $0x38] sm:$0xf] %v1504
          %1537 = vst [vmem:[%s365 + $0x3c] sm:$0xf] %v1505
        $region63: #{tower_forward.8} parent=50 // pred_fallthru
          _
        %s1538 = smul.u32 16, %s20
        %p1539 = scmp.lt.s32.totalorder %s1538, 15
        %s1540 = scalar_select %p1539, %s1538, 15
        %p1541 = scmp.lt.s32.totalorder %s19, 0
        %s1542 = scalar_select %p1541, %s19, 0
        %s1543 = sadd.s32 %s1542, %s1540
        %s1544 = smul.addr %s1543, 4
        %s1545 = scalar_lea.vmem %s3, %s1544
        // Predicated region
        $region64: #{tower_forward.8} parent=50 // pred_check
          %p1546 = pneg %p135
        $region65: #{tower_forward.8} parent=50 // pred_check_branch
          %1548 = sbr.rel (%p1546) target = $region67
        $region66: #{tower_forward.8} parent=50 // pred_region
          %s1549 = smul.u32 16, %s20
        $region67: #{tower_forward.8} parent=50 // pred_fallthru
          _
        // Predicated region
        $region68: #{tower_forward.8} parent=50 // pred_check
          %p1550 = pneg %p135
        $region69: #{tower_forward.8} parent=50 // pred_check_branch
          %1552 = sbr.rel (%p1550) target = $region71
        $region70: #{tower_forward.8} parent=50 // pred_region
          %s1553 = smul.u32 16, %s20
          %p1554 = scmp.lt.s32.totalorder %s1553, 15
          %s1555 = scalar_select %p1554, %s1553, 15
          %p1556 = scmp.lt.s32.totalorder %s19, 0
          %s1557 = scalar_select %p1556, %s19, 0
          %s1558 = sadd.s32 %s1557, %s1555
          %s1559 = smul.addr %s1558, 4
          %s1560 = scalar_lea.vmem %s3, %s1559
        $region71: #{tower_forward.8} parent=50 // pred_fallthru
          _
      $region51: #{tower_forward.8} parent=5 // pred_fallthru
        _
      %p1561 = scmp.le.s32.totalorder 2, %s9
      // Predicated region
      $region72: #{tower_forward.8} parent=5 // pred_check
        %p1562 = pneg %p1561
      $region73: #{tower_forward.8} parent=5 // pred_check_branch
        %1564 = sbr.rel (%p1562) target = $region75
      $region74: #{tower_forward.8} parent=5 // pred_region
        %s1565 = ssub.s32 %s9, 2
      $region75: #{tower_forward.8} parent=5 // pred_fallthru
        _
    $region6: #{tower_forward.8} parent=1 // loop_footer
      %s13 = sadd.s32 1, %s9
    $region7: #{tower_forward.8} parent=1 // loop_footer_branch
      %8 = sbr.rel target = $region3
    $region8: #{tower_forward.8} parent=1 // loop_exit
      _

// kernel: tower_forward.7
$region0: #{tower_forward.7}
  #allocation0 [shape = 'u32[]', space=smem, size = 0x4, offset = 0x4, fixed_abs, tag = 'smem constant byte address 0x4 - core index']
  #allocation1 [shape = 'u32[144,128]{1,0:T(1,128)}', space=vmem, size = 0x12000, scoped, tag = 'internal scratch']
  #allocation2 [shape = 'f32[32,256]{1,0:T(8,128)}', space=vmem, size = 0x8000, scoped, tag = 'scratch operand']
  %s0 = inlined_call_operand.vmem [shape: bf16[32,1024], index: 0, kind: input, shape index: {}]
  %s1 = inlined_call_operand.vmem [shape: bf16[1024,256], index: 1, kind: input, shape index: {}]
  %s2 = inlined_call_operand.vmem [shape: f32[1,256], index: 2, kind: input, shape index: {}]
  %s3 = inlined_call_operand.vmem [shape: bf16[32,256], index: 3, kind: output, shape index: {}]
  %s4 = sld [smem:[#allocation0]]
  $region76: #{tower_forward.7} parent=0
    _
  %s6 = ssub.s32 1, %s4
  %s7 = scalar_select 0, %s6, %s4
  $region1: #{tower_forward.7} parent=0
    #allocation3 [shape = 'u8[65536]{0}', space=vmem, size = 0x10000, scoped, tag = 'input window, operand 0']
    loop: start=0, step=1, limit=4
    $region2: #{tower_forward.7} parent=1 // loop_pre_header
      _
    $region3: #{tower_forward.7} parent=1 // loop_header
      %s9 = sphi 0, %s13
      %p10 = scmp.ge.s32.totalorder %s9, 4
      %s16 = sphi 0, %s35
      %s17 = sphi 0, %s31
      %s18 = sphi 0, %s27
      %s19 = sphi 0, %s16
      %s20 = sphi 0, %s17
      %s21 = sphi 0, %s18
      %s22 = sphi 0, %s19
      %s23 = sphi 0, %s20
      %s24 = sphi 0, %s21
      %s40 = sphi 0, %s42
      %s43 = sphi 0, %s40
      %s44 = sphi 0, %s43
      %s60 = sphi 0, %s44
      %s68 = sphi 0, %s70
      %s71 = sphi 0, %s68
      %s72 = sphi 0, %s71
      %s88 = sphi 0, %s72
      %s94 = sphi 0, %s96
      %s97 = sphi 0, %s94
      %s98 = sphi 0, %s97
      %s114 = sphi 0, %s98
      %s122 = sphi 0, %s124
      %s125 = sphi 0, %s122
      %s126 = sphi 0, %s125
      %s142 = sphi 0, %s126
    $region4: #{tower_forward.7} parent=1 // loop_header_branch
      %12 = sbr.rel (%p10) target = $region8
    $region5: #{tower_forward.7} parent=1 // loop_body
      %s14 = ssub.s32 %s9, 1
      %s15 = ssub.s32 %s9, 2
      %s25 = sadd.s32 1, %s18
      %p26 = scmp.ge.s32.totalorder %s25, 2
      %s27 = scalar_select %p26, 0, %s25
      %s28 = sadd.s32 1, %s17
      %s29 = scalar_select %p26, %s28, %s17
      %p30 = scmp.ge.s32.totalorder %s29, 1
      %s31 = scalar_select %p30, 0, %s29
      %s32 = sadd.s32 1, %s16
      %s33 = scalar_select %p30, %s32, %s16
      %p34 = scmp.ge.s32.totalorder %s33, 1
      %s35 = scalar_select %p34, 0, %s33
      %s36 = ssub.s32 %s17, %s31
      %s37 = ssub.s32 %s18, %s27
      %s38 = sor.u32 %s36, %s37
      %p39 = scmp.eq.s32.totalorder %s38, 0
      %s41 = sadd.s32 %s40, 1
      %s42 = scalar_select %p39, %s40, %s41
      %p45 = pneg %p39
      %p46 = scmp.eq.s32.totalorder %s9, 1
      %p47 = por %p45, %p46
      %p48 = scmp.ne.s32.totalorder %s40, %s43
      %p49 = scmp.eq.s32.totalorder %s9, 0
      %p50 = por %p48, %p49
      %p51 = scmp.ne.s32.totalorder %s40, %s43
      %p52 = scmp.eq.s32.totalorder %s14, 1
      %p53 = por %p51, %p52
      %p54 = scmp.ne.s32.totalorder %s43, %s44
      %p55 = scmp.eq.s32.totalorder %s14, 0
      %p56 = por %p54, %p55
      %p57 = scmp.ne.s32.totalorder %s43, %s44
      %p58 = scmp.eq.s32.totalorder %s15, 1
      %p59 = por %p57, %p58
      %p61 = scmp.ne.s32.totalorder %s44, %s60
      %p62 = scmp.eq.s32.totalorder %s15, 0
      %p63 = por %p61, %p62
      %s64 = ssub.s32 %s18, %s27
      %s65 = ssub.s32 %s16, %s35
      %s66 = sor.u32 %s64, %s65
      %p67 = scmp.eq.s32.totalorder %s66, 0
      %s69 = sadd.s32 %s68, 1
      %s70 = scalar_select %p67, %s68, %s69
      %p73 = pneg %p67
      %p74 = scmp.eq.s32.totalorder %s9, 1
      %p75 = por %p73, %p74
      %p76 = scmp.ne.s32.totalorder %s68, %s71
      %p77 = scmp.eq.s32.totalorder %s9, 0
      %p78 = por %p76, %p77
      %p79 = scmp.ne.s32.totalorder %s68, %s71
      %p80 = scmp.eq.s32.totalorder %s14, 1
      %p81 = por %p79, %p80
      %p82 = scmp.ne.s32.totalorder %s71, %s72
      %p83 = scmp.eq.s32.totalorder %s14, 0
      %p84 = por %p82, %p83
      %p85 = scmp.ne.s32.totalorder %s71, %s72
      %p86 = scmp.eq.s32.totalorder %s15, 1
      %p87 = por %p85, %p86
      %p89 = scmp.ne.s32.totalorder %s72, %s88
      %p90 = scmp.eq.s32.totalorder %s15, 0
      %p91 = por %p89, %p90
      %s92 = ssub.s32 %s16, %s35
      %p93 = scmp.eq.s32.totalorder %s92, 0
      %s95 = sadd.s32 %s94, 1
      %s96 = scalar_select %p93, %s94, %s95
      %p99 = pneg %p93
      %p100 = scmp.eq.s32.totalorder %s9, 1
      %p101 = por %p99, %p100
      %p102 = scmp.ne.s32.totalorder %s94, %s97
      %p103 = scmp.eq.s32.totalorder %s9, 0
      %p104 = por %p102, %p103
      %p105 = scmp.ne.s32.totalorder %s94, %s97
      %p106 = scmp.eq.s32.totalorder %s14, 1
      %p107 = por %p105, %p106
      %p108 = scmp.ne.s32.totalorder %s97, %s98
      %p109 = scmp.eq.s32.totalorder %s14, 0
      %p110 = por %p108, %p109
      %p111 = scmp.ne.s32.totalorder %s97, %s98
      %p112 = scmp.eq.s32.totalorder %s15, 1
      %p113 = por %p111, %p112
      %p115 = scmp.ne.s32.totalorder %s98, %s114
      %p116 = scmp.eq.s32.totalorder %s15, 0
      %p117 = por %p115, %p116
      %s118 = ssub.s32 %s17, %s31
      %s119 = ssub.s32 %s16, %s35
      %s120 = sor.u32 %s118, %s119
      %p121 = scmp.eq.s32.totalorder %s120, 0
      %s123 = sadd.s32 %s122, 1
      %s124 = scalar_select %p121, %s122, %s123
      %p127 = pneg %p121
      %p128 = scmp.eq.s32.totalorder %s9, 1
      %p129 = por %p127, %p128
      %p130 = scmp.ne.s32.totalorder %s122, %s125
      %p131 = scmp.eq.s32.totalorder %s9, 0
      %p132 = por %p130, %p131
      %p133 = scmp.ne.s32.totalorder %s122, %s125
      %p134 = scmp.eq.s32.totalorder %s14, 1
      %p135 = por %p133, %p134
      %p136 = scmp.ne.s32.totalorder %s125, %s126
      %p137 = scmp.eq.s32.totalorder %s14, 0
      %p138 = por %p136, %p137
      %p139 = scmp.ne.s32.totalorder %s125, %s126
      %p140 = scmp.eq.s32.totalorder %s15, 1
      %p141 = por %p139, %p140
      %p143 = scmp.ne.s32.totalorder %s126, %s142
      %p144 = scmp.eq.s32.totalorder %s15, 0
      %p145 = por %p143, %p144
      %p146 = scmp.le.s32.totalorder 1, %s9
      %p147 = scmp.lt.s32.totalorder %s9, 3
      %p148 = pnand %p146, %p147
      %p149 = pneg %p148
      // Predicated region
      $region9: #{tower_forward.7} parent=5 // pred_check
        _
      $region10: #{tower_forward.7} parent=5 // pred_check_branch
        %151 = sbr.rel (%p148) target = $region12
      $region11: #{tower_forward.7} parent=5 // pred_region
        %s152 = ssub.s32 %s9, 1
        // Predicated region
        $region13: #{tower_forward.7} parent=11 // pred_check
          %p153 = pneg %p110
        $region14: #{tower_forward.7} parent=11 // pred_check_branch
          %155 = sbr.rel (%p153) target = $region16
        $region15: #{tower_forward.7} parent=11 // pred_region
          %s156 = smul.u32 2, %s19
          %p157 = scmp.lt.s32.totalorder %s156, 1
          %s158 = scalar_select %p157, %s156, 1
          %s159 = scalar_lea.vmem %s2, %s158
          %s160 = smul.u32 2, %s19
        $region16: #{tower_forward.7} parent=11 // pred_fallthru
          _
      $region12: #{tower_forward.7} parent=5 // pred_fallthru
        _
      %p161 = scmp.lt.s32.totalorder %s9, 2
      // Predicated region
      $region17: #{tower_forward.7} parent=5 // pred_check
        %p162 = pneg %p161
      $region18: #{tower_forward.7} parent=5 // pred_check_branch
        %164 = sbr.rel (%p162) target = $region20
      $region19: #{tower_forward.7} parent=5 // pred_region
        // Predicated region
        $region21: #{tower_forward.7} parent=19 // pred_check
          %p165 = pneg %p50
        $region22: #{tower_forward.7} parent=19 // pred_check_branch
          %167 = sbr.rel (%p165) target = $region24
        $region23: #{tower_forward.7} parent=19 // pred_region
          %s168 = sand.u32 %s40, 1
          %s169 = sand.u32 %s40, 1
          %s170 = smul.addr %s169, 64
          %s171 = scalar_lea.vmem [#allocation3], %s170
          %s172 = smul.u32 4, %s17
          %s173 = smul.u32 4, %s18
          %s174 = smul.addr %s172, 8
          %s175 = sadd.s32 %s173, %s174
          %s176 = smul.addr %s175, 4
          %s177 = scalar_lea.vmem %s0, %s176
          // Predicated region
          $region25: #{tower_forward.7} parent=23 // pred_check
            _
          $region26: #{tower_forward.7} parent=23 // pred_check_branch
            %179 = sbr.rel (0) target = $region28
          $region27: #{tower_forward.7} parent=23 // pred_region
            // Predicated region
            $region29: #{tower_forward.7} parent=27 // pred_check
              _
            $region30: #{tower_forward.7} parent=27 // pred_check_branch
              %181 = sbr.rel (0) target = $region32
            $region31: #{tower_forward.7} parent=27 // pred_region
              loop: start=0, step=1, limit=1
              $region33: #{tower_forward.7} parent=31 // loop_pre_header
                _
              $region34: #{tower_forward.7} parent=31 // loop_header
                %s183 = sphi 0, %s187
                %p184 = scmp.ge.s32.totalorder %s183, 1
                %s188 = sphi %s177, %s177
                %s189 = sphi %s171, %s171
              $region35: #{tower_forward.7} parent=31 // loop_header_branch
                %186 = sbr.rel (%p184) target = $region39
              $region36: #{tower_forward.7} parent=31 // loop_body
                %v190 = vld [vmem:[%s188] sm:$0xff]
                %191 = vst [vmem:[%s189] sm:$0xff] %v190
                %v192 = vld [vmem:[%s188 + $0x8] sm:$0xff]
                %193 = vst [vmem:[%s189 + $0x8] sm:$0xff] %v192
                %v194 = vld [vmem:[%s188 + $0x20] sm:$0xff]
                %195 = vst [vmem:[%s189 + $0x10] sm:$0xff] %v194
                %v196 = vld [vmem:[%s188 + $0x28] sm:$0xff]
                %197 = vst [vmem:[%s189 + $0x18] sm:$0xff] %v196
                %v198 = vld [vmem:[%s188 + $0x40] sm:$0xff]
                %199 = vst [vmem:[%s189 + $0x20] sm:$0xff] %v198
                %v200 = vld [vmem:[%s188 + $0x48] sm:$0xff]
                %201 = vst [vmem:[%s189 + $0x28] sm:$0xff] %v200
                %v202 = vld [vmem:[%s188 + $0x60] sm:$0xff]
                %203 = vst [vmem:[%s189 + $0x30] sm:$0xff] %v202
                %v204 = vld [vmem:[%s188 + $0x68] sm:$0xff]
                %205 = vst [vmem:[%s189 + $0x38] sm:$0xff] %v204
              $region37: #{tower_forward.7} parent=31 // loop_footer
                %s187 = sadd.s32 1, %s183
              $region38: #{tower_forward.7} parent=31 // loop_footer_branch
                %182 = sbr.rel target = $region34
              $region39: #{tower_forward.7} parent=31 // loop_exit
                _
            $region32: #{tower_forward.7} parent=27 // pred_fallthru
              _
            // Predicated region
            $region40: #{tower_forward.7} parent=27 // pred_check
              _
            $region41: #{tower_forward.7} parent=27 // pred_check_branch
              %207 = sbr.rel target = $region43
            $region42: #{tower_forward.7} parent=27 // pred_region
              _
            $region43: #{tower_forward.7} parent=27 // pred_fallthru
              _
          $region28: #{tower_forward.7} parent=23 // pred_fallthru
            _
          %208 = vnop
        $region24: #{tower_forward.7} parent=19 // pred_fallthru
          _
        // Predicated region
        $region44: #{tower_forward.7} parent=19 // pred_check
          %p209 = pneg %p78
        $region45: #{tower_forward.7} parent=19 // pred_check_branch
          %211 = sbr.rel (%p209) target = $region47
        $region46: #{tower_forward.7} parent=19 // pred_region
          %s212 = smul.u32 64, %s18
          %s213 = smul.u32 2, %s16
          %p214 = scmp.lt.s32.totalorder %s212, 127
          %s215 = scalar_select %p214, %s212, 127
          %p216 = scmp.lt.s32.totalorder %s213, 1
          %s217 = scalar_select %p216, %s213, 1
          %s218 = smul.addr %s215, 2
          %s219 = sadd.s32 %s217, %s218
          %s220 = smul.addr %s219, 4
          %s221 = scalar_lea.vmem %s1, %s220
          %s222 = smul.u32 64, %s18
          %s223 = smul.u32 2, %s16
        $region47: #{tower_forward.7} parent=19 // pred_fallthru
          _
      $region20: #{tower_forward.7} parent=5 // pred_fallthru
        _
      %p224 = scmp.le.s32.totalorder 1, %s9
      %p225 = scmp.lt.s32.totalorder %s9, 3
      %p226 = pnand %p224, %p225
      %p227 = pneg %p226
      // Predicated region
      $region48: #{tower_forward.7} parent=5 // pred_check
        _
      $region49: #{tower_forward.7} parent=5 // pred_check_branch
        %229 = sbr.rel (%p226) target = $region51
      $region50: #{tower_forward.7} parent=5 // pred_region
        %s230 = ssub.s32 %s9, 1
        %s231 = sand.u32 %s43, 1
        %s232 = sand.u32 %s43, 1
        %s233 = smul.addr %s232, 64
        %s234 = scalar_lea.vmem [#allocation3], %s233
        // Predicated region
        $region52: #{tower_forward.7} parent=50 // pred_check
          %p235 = pneg %p56
        $region53: #{tower_forward.7} parent=50 // pred_check_branch
          %237 = sbr.rel (%p235) target = $region55
        $region54: #{tower_forward.7} parent=50 // pred_region
          _
        $region55: #{tower_forward.7} parent=50 // pred_fallthru
          _
        %s238 = sand.u32 %s43, 1
        %s239 = sand.u32 %s43, 1
        %s240 = smul.addr %s239, 64
        %s241 = scalar_lea.vmem [#allocation3], %s240
        %p242 = pneg %p56
        %p243 = pneg %p53
        %s244 = smul.u32 64, %s21
        %s245 = smul.u32 2, %s19
        %p246 = scmp.lt.s32.totalorder %s244, 127
        %s247 = scalar_select %p246, %s244, 127
        %p248 = scmp.lt.s32.totalorder %s245, 1
        %s249 = scalar_select %p248, %s245, 1
        %s250 = smul.addr %s247, 2
        %s251 = sadd.s32 %s249, %s250
        %s252 = smul.addr %s251, 4
        %s253 = scalar_lea.vmem %s1, %s252
        %p254 = pneg %p84
        %p255 = pneg %p81
        %s256 = smul.u32 2, %s19
        %p257 = scmp.lt.s32.totalorder %s256, 1
        %s258 = scalar_select %p257, %s256, 1
        %s259 = scalar_lea.vmem %s2, %s258
        %p260 = pneg %p110
        %p261 = pneg %p107
        %p262 = pneg %p138
        %p263 = pneg %p135
        %s264 = smul.u32 4, %s20
        %s265 = smul.u32 2, %s19
        %p266 = scmp.lt.s32.totalorder %s264, 3
        %s267 = scalar_select %p266, %s264, 3
        %p268 = scmp.lt.s32.totalorder %s265, 1
        %s269 = scalar_select %p268, %s265, 1
        %s270 = smul.addr %s267, 2
        %s271 = sadd.s32 %s269, %s270
        %s272 = smul.addr %s271, 4
        %s273 = scalar_lea.vmem %s3, %s272
        %s274 = smul.u32 4, %s20
        %s275 = smul.u32 4, %s21
        %s276 = smul.u32 64, %s21
        %s277 = smul.u32 2, %s19
        %p278 = scmp.lt.s32.totalorder %s276, 127
        %s279 = scalar_select %p278, %s276, 127
        %p280 = scmp.lt.s32.totalorder %s277, 1
        %s281 = scalar_select %p280, %s277, 1
        %s282 = smul.addr %s279, 2
        %s283 = sadd.s32 %s281, %s282
        %s284 = smul.addr %s283, 4
        %s285 = scalar_lea.vmem %s1, %s284
        %s286 = smul.u32 64, %s21
        %s287 = smul.u32 2, %s19
        %s288 = smul.u32 2, %s19
        %p289 = scmp.lt.s32.totalorder %s288, 1
        %s290 = scalar_select %p289, %s288, 1
        %s291 = scalar_lea.vmem %s2, %s290
        %s292 = smul.u32 2, %s19
        %s293 = smul.u32 4, %s20
        %s294 = smul.u32 2, %s19
        %p295 = scmp.lt.s32.totalorder %s293, 3
        %s296 = scalar_select %p295, %s293, 3
        %p297 = scmp.lt.s32.totalorder %s294, 1
        %s298 = scalar_select %p297, %s294, 1
        %s299 = smul.addr %s296, 2
        %s300 = sadd.s32 %s298, %s299
        %s301 = smul.addr %s300, 4
        %s302 = scalar_lea.vmem %s3, %s301
        %s303 = smul.u32 4, %s20
        %s304 = smul.u32 2, %s19
        %p305 = scmp.eq.s32.totalorder %s21, 0
        // Predicated region
        $region56: #{tower_forward.7} parent=50 // pred_check
          %p306 = pneg %p305
        $region57: #{tower_forward.7} parent=50 // pred_check_branch
          %308 = sbr.rel (%p306) target = $region59
        $region58: #{tower_forward.7} parent=50 // pred_region
          %309 = vst [vmem:[#allocation2] sm:$0xff] 0.0
          %310 = vst [vmem:[#allocation2 + $0x8] sm:$0xff] 0.0
          %311 = vst [vmem:[#allocation2 + $0x10] sm:$0xff] 0.0
          %312 = vst [vmem:[#allocation2 + $0x18] sm:$0xff] 0.0
          %313 = vst [vmem:[#allocation2 + $0x20] sm:$0xff] 0.0
          %314 = vst [vmem:[#allocation2 + $0x28] sm:$0xff] 0.0
          %315 = vst [vmem:[#allocation2 + $0x30] sm:$0xff] 0.0
          %316 = vst [vmem:[#allocation2 + $0x38] sm:$0xff] 0.0
        $region59: #{tower_forward.7} parent=50 // pred_fallthru
          _
        %v317 = vld [vmem:[#allocation2] sm:$0xff]
        %v318 = vld [vmem:[#allocation2 + $0x8] sm:$0xff]
        %v319 = vld [vmem:[#allocation2 + $0x10] sm:$0xff]
        %v320 = vld [vmem:[#allocation2 + $0x18] sm:$0xff]
        %v321 = vld [vmem:[#allocation2 + $0x20] sm:$0xff]
        %v322 = vld [vmem:[#allocation2 + $0x28] sm:$0xff]
        %v323 = vld [vmem:[#allocation2 + $0x30] sm:$0xff]
        %v324 = vld [vmem:[#allocation2 + $0x38] sm:$0xff]
        %v325 = vld [vmem:[%s234] sm:$0xff]
        %v326 = vld [vmem:[%s234 + $0x8] sm:$0xff]
        %v327 = vld [vmem:[%s234 + $0x10] sm:$0xff]
        %v328 = vld [vmem:[%s234 + $0x18] sm:$0xff]
        %v329 = vld [vmem:[%s234 + $0x20] sm:$0xff]
        %v330 = vld [vmem:[%s234 + $0x28] sm:$0xff]
        %v331 = vld [vmem:[%s234 + $0x30] sm:$0xff]
        %v332 = vld [vmem:[%s234 + $0x38] sm:$0xff]
        %v333 = vld [vmem:[%s285] sm:$0xff]
        %v334 = vld [vmem:[%s285 + $0x8] sm:$0xff]
        %v335 = vld [vmem:[%s285 + $0x10] sm:$0xff]
        %v336 = vld [vmem:[%s285 + $0x18] sm:$0xff]
        %v337 = vld [vmem:[%s285 + $0x20] sm:$0xff]
        %v338 = vld [vmem:[%s285 + $0x28] sm:$0xff]
        %v339 = vld [vmem:[%s285 + $0x30] sm:$0xff]
        %v340 = vld [vmem:[%s285 + $0x38] sm:$0xff]
        %v341 = vld [vmem:[%s285 + $0x40] sm:$0xff]
        %v342 = vld [vmem:[%s285 + $0x48] sm:$0xff]
        %v343 = vld [vmem:[%s285 + $0x50] sm:$0xff]
        %v344 = vld [vmem:[%s285 + $0x58] sm:$0xff]
        %v345 = vld [vmem:[%s285 + $0x60] sm:$0xff]
        %v346 = vld [vmem:[%s285 + $0x68] sm:$0xff]
        %v347 = vld [vmem:[%s285 + $0x70] sm:$0xff]
        %v348 = vld [vmem:[%s285 + $0x78] sm:$0xff]
        %v349 = vld [vmem:[%s285 + $0x80] sm:$0xff]
        %v350 = vld [vmem:[%s285 + $0x88] sm:$0xff]
        %v351 = vld [vmem:[%s285 + $0x90] sm:$0xff]
        %v352 = vld [vmem:[%s285 + $0x98] sm:$0xff]
        %v353 = vld [vmem:[%s285 + $0xa0] sm:$0xff]
        %v354 = vld [vmem:[%s285 + $0xa8] sm:$0xff]
        %v355 = vld [vmem:[%s285 + $0xb0] sm:$0xff]
        %v356 = vld [vmem:[%s285 + $0xb8] sm:$0xff]
        %v357 = vld [vmem:[%s285 + $0xc0] sm:$0xff]
        %v358 = vld [vmem:[%s285 + $0xc8] sm:$0xff]
        %v359 = vld [vmem:[%s285 + $0xd0] sm:$0xff]
        %v360 = vld [vmem:[%s285 + $0xd8] sm:$0xff]
        %v361 = vld [vmem:[%s285 + $0xe0] sm:$0xff]
        %v362 = vld [vmem:[%s285 + $0xe8] sm:$0xff]
        %v363 = vld [vmem:[%s285 + $0xf0] sm:$0xff]
        %v364 = vld [vmem:[%s285 + $0xf8] sm:$0xff]
        %v365 = vld [vmem:[%s285 + $0x100] sm:$0xff]
        %v366 = vld [vmem:[%s285 + $0x108] sm:$0xff]
        %v367 = vld [vmem:[%s285 + $0x110] sm:$0xff]
        %v368 = vld [vmem:[%s285 + $0x118] sm:$0xff]
        %v369 = vld [vmem:[%s285 + $0x120] sm:$0xff]
        %v370 = vld [vmem:[%s285 + $0x128] sm:$0xff]
        %v371 = vld [vmem:[%s285 + $0x130] sm:$0xff]
        %v372 = vld [vmem:[%s285 + $0x138] sm:$0xff]
        %v373 = vld [vmem:[%s285 + $0x140] sm:$0xff]
        %v374 = vld [vmem:[%s285 + $0x148] sm:$0xff]
        %v375 = vld [vmem:[%s285 + $0x150] sm:$0xff]
        %v376 = vld [vmem:[%s285 + $0x158] sm:$0xff]
        %v377 = vld [vmem:[%s285 + $0x160] sm:$0xff]
        %v378 = vld [vmem:[%s285 + $0x168] sm:$0xff]
        %v379 = vld [vmem:[%s285 + $0x170] sm:$0xff]
        %v380 = vld [vmem:[%s285 + $0x178] sm:$0xff]
        %v381 = vld [vmem:[%s285 + $0x180] sm:$0xff]
        %v382 = vld [vmem:[%s285 + $0x188] sm:$0xff]
        %v383 = vld [vmem:[%s285 + $0x190] sm:$0xff]
        %v384 = vld [vmem:[%s285 + $0x198] sm:$0xff]
        %v385 = vld [vmem:[%s285 + $0x1a0] sm:$0xff]
        %v386 = vld [vmem:[%s285 + $0x1a8] sm:$0xff]
        %v387 = vld [vmem:[%s285 + $0x1b0] sm:$0xff]
        %v388 = vld [vmem:[%s285 + $0x1b8] sm:$0xff]
        %v389 = vld [vmem:[%s285 + $0x1c0] sm:$0xff]
        %v390 = vld [vmem:[%s285 + $0x1c8] sm:$0xff]
        %v391 = vld [vmem:[%s285 + $0x1d0] sm:$0xff]
        %v392 = vld [vmem:[%s285 + $0x1d8] sm:$0xff]
        %v393 = vld [vmem:[%s285 + $0x1e0] sm:$0xff]
        %v394 = vld [vmem:[%s285 + $0x1e8] sm:$0xff]
        %v395 = vld [vmem:[%s285 + $0x1f0] sm:$0xff]
        %v396 = vld [vmem:[%s285 + $0x1f8] sm:$0xff]
        %v405 = vunpack.c.l.b16 %v325
        %v406 = vunpack.c.h.b16 %v325
        %v407 = vunpack.c.l.b16 %v326
        %v408 = vunpack.c.h.b16 %v326
        %v409 = vunpack.c.l.b16 %v327
        %v410 = vunpack.c.h.b16 %v327
        %v411 = vunpack.c.l.b16 %v328
        %v412 = vunpack.c.h.b16 %v328
        %v413 = vunpack.c.l.b16 %v329
        %v414 = vunpack.c.h.b16 %v329
        %v415 = vunpack.c.l.b16 %v330
        %v416 = vunpack.c.h.b16 %v330
        %v417 = vunpack.c.l.b16 %v331
        %v418 = vunpack.c.h.b16 %v331
        %v419 = vunpack.c.l.b16 %v332
        %v420 = vunpack.c.h.b16 %v332
        %v421 = vpack.c.b16 %v409, %v405
        %v422 = vpack.c.b16 %v410, %v406
        %v423 = vpack.c.b16 %v411, %v407
        %v424 = vpack.c.b16 %v412, %v408
        %v425 = vpack.c.b16 %v417, %v413
        %v426 = vpack.c.b16 %v418, %v414
        %v427 = vpack.c.b16 %v419, %v415
        %v428 = vpack.c.b16 %v420, %v416
        %v501 = vunpack.c.l.b16 %v333
        %v502 = vunpack.c.h.b16 %v333
        %v503 = vunpack.c.l.b16 %v334
        %v504 = vunpack.c.h.b16 %v334
        %v505 = vunpack.c.l.b16 %v335
        %v506 = vunpack.c.h.b16 %v335
        %v507 = vunpack.c.l.b16 %v336
        %v508 = vunpack.c.h.b16 %v336
        %v509 = vunpack.c.l.b16 %v337
        %v510 = vunpack.c.h.b16 %v337
        %v511 = vunpack.c.l.b16 %v338
        %v512 = vunpack.c.h.b16 %v338
        %v513 = vunpack.c.l.b16 %v339
        %v514 = vunpack.c.h.b16 %v339
        %v515 = vunpack.c.l.b16 %v340
        %v516 = vunpack.c.h.b16 %v340
        %v517 = vunpack.c.l.b16 %v341
        %v518 = vunpack.c.h.b16 %v341
        %v519 = vunpack.c.l.b16 %v342
        %v520 = vunpack.c.h.b16 %v342
        %v521 = vunpack.c.l.b16 %v343
        %v522 = vunpack.c.h.b16 %v343
        %v523 = vunpack.c.l.b16 %v344
        %v524 = vunpack.c.h.b16 %v344
        %v525 = vunpack.c.l.b16 %v345
        %v526 = vunpack.c.h.b16 %v345
        %v527 = vunpack.c.l.b16 %v346
        %v528 = vunpack.c.h.b16 %v346
        %v529 = vunpack.c.l.b16 %v347
        %v530 = vunpack.c.h.b16 %v347
        %v531 = vunpack.c.l.b16 %v348
        %v532 = vunpack.c.h.b16 %v348
        %v533 = vunpack.c.l.b16 %v349
        %v534 = vunpack.c.h.b16 %v349
        %v535 = vunpack.c.l.b16 %v350
        %v536 = vunpack.c.h.b16 %v350
        %v537 = vunpack.c.l.b16 %v351
        %v538 = vunpack.c.h.b16 %v351
        %v539 = vunpack.c.l.b16 %v352
        %v540 = vunpack.c.h.b16 %v352
        %v541 = vunpack.c.l.b16 %v353
        %v542 = vunpack.c.h.b16 %v353
        %v543 = vunpack.c.l.b16 %v354
        %v544 = vunpack.c.h.b16 %v354
        %v545 = vunpack.c.l.b16 %v355
        %v546 = vunpack.c.h.b16 %v355
        %v547 = vunpack.c.l.b16 %v356
        %v548 = vunpack.c.h.b16 %v356
        %v549 = vunpack.c.l.b16 %v357
        %v550 = vunpack.c.h.b16 %v357
        %v551 = vunpack.c.l.b16 %v358
        %v552 = vunpack.c.h.b16 %v358
        %v553 = vunpack.c.l.b16 %v359
        %v554 = vunpack.c.h.b16 %v359
        %v555 = vunpack.c.l.b16 %v360
        %v556 = vunpack.c.h.b16 %v360
        %v557 = vunpack.c.l.b16 %v361
        %v558 = vunpack.c.h.b16 %v361
        %v559 = vunpack.c.l.b16 %v362
        %v560 = vunpack.c.h.b16 %v362
        %v561 = vunpack.c.l.b16 %v363
        %v562 = vunpack.c.h.b16 %v363
        %v563 = vunpack.c.l.b16 %v364
        %v564 = vunpack.c.h.b16 %v364
        %v565 = vunpack.c.l.b16 %v365
        %v566 = vunpack.c.h.b16 %v365
        %v567 = vunpack.c.l.b16 %v366
        %v568 = vunpack.c.h.b16 %v366
        %v569 = vunpack.c.l.b16 %v367
        %v570 = vunpack.c.h.b16 %v367
        %v571 = vunpack.c.l.b16 %v368
        %v572 = vunpack.c.h.b16 %v368
        %v573 = vunpack.c.l.b16 %v369
        %v574 = vunpack.c.h.b16 %v369
        %v575 = vunpack.c.l.b16 %v370
        %v576 = vunpack.c.h.b16 %v370
        %v577 = vunpack.c.l.b16 %v371
        %v578 = vunpack.c.h.b16 %v371
        %v579 = vunpack.c.l.b16 %v372
        %v580 = vunpack.c.h.b16 %v372
        %v581 = vunpack.c.l.b16 %v373
        %v582 = vunpack.c.h.b16 %v373
        %v583 = vunpack.c.l.b16 %v374
        %v584 = vunpack.c.h.b16 %v374
        %v585 = vunpack.c.l.b16 %v375
        %v586 = vunpack.c.h.b16 %v375
        %v587 = vunpack.c.l.b16 %v376
        %v588 = vunpack.c.h.b16 %v376
        %v589 = vunpack.c.l.b16 %v377
        %v590 = vunpack.c.h.b16 %v377
        %v591 = vunpack.c.l.b16 %v378
        %v592 = vunpack.c.h.b16 %v378
        %v593 = vunpack.c.l.b16 %v379
        %v594 = vunpack.c.h.b16 %v379
        %v595 = vunpack.c.l.b16 %v380
        %v596 = vunpack.c.h.b16 %v380
        %v597 = vunpack.c.l.b16 %v381
        %v598 = vunpack.c.h.b16 %v381
        %v599 = vunpack.c.l.b16 %v382
        %v600 = vunpack.c.h.b16 %v382
        %v601 = vunpack.c.l.b16 %v383
        %v602 = vunpack.c.h.b16 %v383
        %v603 = vunpack.c.l.b16 %v384
        %v604 = vunpack.c.h.b16 %v384
        %v605 = vunpack.c.l.b16 %v385
        %v606 = vunpack.c.h.b16 %v385
        %v607 = vunpack.c.l.b16 %v386
        %v608 = vunpack.c.h.b16 %v386
        %v609 = vunpack.c.l.b16 %v387
        %v610 = vunpack.c.h.b16 %v387
        %v611 = vunpack.c.l.b16 %v388
        %v612 = vunpack.c.h.b16 %v388
        %v613 = vunpack.c.l.b16 %v389
        %v614 = vunpack.c.h.b16 %v389
        %v615 = vunpack.c.l.b16 %v390
        %v616 = vunpack.c.h.b16 %v390
        %v617 = vunpack.c.l.b16 %v391
        %v618 = vunpack.c.h.b16 %v391
        %v619 = vunpack.c.l.b16 %v392
        %v620 = vunpack.c.h.b16 %v392
        %v621 = vunpack.c.l.b16 %v393
        %v622 = vunpack.c.h.b16 %v393
        %v623 = vunpack.c.l.b16 %v394
        %v624 = vunpack.c.h.b16 %v394
        %v625 = vunpack.c.l.b16 %v395
        %v626 = vunpack.c.h.b16 %v395
        %v627 = vunpack.c.l.b16 %v396
        %v628 = vunpack.c.h.b16 %v396
        %v629 = vpack.c.b16 %v503, %v501
        %v630 = vpack.c.b16 %v504, %v502
        %v631 = vpack.c.b16 %v507, %v505
        %v632 = vpack.c.b16 %v508, %v506
        %v633 = vpack.c.b16 %v511, %v509
        %v634 = vpack.c.b16 %v512, %v510
        %v635 = vpack.c.b16 %v515, %v513
        %v636 = vpack.c.b16 %v516, %v514
        %v637 = vpack.c.b16 %v519, %v517
        %v638 = vpack.c.b16 %v520, %v518
        %v639 = vpack.c.b16 %v523, %v521
        %v640 = vpack.c.b16 %v524, %v522
        %v641 = vpack.c.b16 %v527, %v525
        %v642 = vpack.c.b16 %v528, %v526
        %v643 = vpack.c.b16 %v531, %v529
        %v644 = vpack.c.b16 %v532, %v530
        %v645 = vpack.c.b16 %v535, %v533
        %v646 = vpack.c.b16 %v536, %v534
        %v647 = vpack.c.b16 %v539, %v537
        %v648 = vpack.c.b16 %v540, %v538
        %v649 = vpack.c.b16 %v543, %v541
        %v650 = vpack.c.b16 %v544, %v542
        %v651 = vpack.c.b16 %v547, %v545
        %v652 = vpack.c.b16 %v548, %v546
        %v653 = vpack.c.b16 %v551, %v549
        %v654 = vpack.c.b16 %v552, %v550
        %v655 = vpack.c.b16 %v555, %v553
        %v656 = vpack.c.b16 %v556, %v554
        %v657 = vpack.c.b16 %v559, %v557
        %v658 = vpack.c.b16 %v560, %v558
        %v659 = vpack.c.b16 %v563, %v561
        %v660 = vpack.c.b16 %v564, %v562
        %v661 = vpack.c.b16 %v567, %v565
        %v662 = vpack.c.b16 %v568, %v566
        %v663 = vpack.c.b16 %v571, %v569
        %v664 = vpack.c.b16 %v572, %v570
        %v665 = vpack.c.b16 %v575, %v573
        %v666 = vpack.c.b16 %v576, %v574
        %v667 = vpack.c.b16 %v579, %v577
        %v668 = vpack.c.b16 %v580, %v578
        %v669 = vpack.c.b16 %v583, %v581
        %v670 = vpack.c.b16 %v584, %v582
        %v671 = vpack.c.b16 %v587, %v585
        %v672 = vpack.c.b16 %v588, %v586
        %v673 = vpack.c.b16 %v591, %v589
        %v674 = vpack.c.b16 %v592, %v590
        %v675 = vpack.c.b16 %v595, %v593
        %v676 = vpack.c.b16 %v596, %v594
        %v677 = vpack.c.b16 %v599, %v597
        %v678 = vpack.c.b16 %v600, %v598
        %v679 = vpack.c.b16 %v603, %v601
        %v680 = vpack.c.b16 %v604, %v602
        %v681 = vpack.c.b16 %v607, %v605
        %v682 = vpack.c.b16 %v608, %v606
        %v683 = vpack.c.b16 %v611, %v609
        %v684 = vpack.c.b16 %v612, %v610
        %v685 = vpack.c.b16 %v615, %v613
        %v686 = vpack.c.b16 %v616, %v614
        %v687 = vpack.c.b16 %v619, %v617
        %v688 = vpack.c.b16 %v620, %v618
        %v689 = vpack.c.b16 %v623, %v621
        %v690 = vpack.c.b16 %v624, %v622
        %v691 = vpack.c.b16 %v627, %v625
        %v692 = vpack.c.b16 %v628, %v626
        %757 = vmatprep.subr.bf16.mxu0 %v630
        %758 = vmatpush1.bf16.msra.mxu0 %v629
        %759 = vmatprep.subr.bf16.mxu0 %v632
        %760 = vmatpush1.bf16.msra.mxu0 %v631
        %761 = vmatprep.subr.bf16.mxu0 %v634
        %762 = vmatpush1.bf16.msra.mxu0 %v633
        %763 = vmatprep.subr.bf16.mxu0 %v636
        %764 = vmatpush1.bf16.msra.mxu0 %v635
        %765 = vmatprep.subr.bf16.mxu0 %v638
        %766 = vmatpush1.bf16.msra.mxu0 %v637
        %767 = vmatprep.subr.bf16.mxu0 %v640
        %768 = vmatpush1.bf16.msra.mxu0 %v639
        %769 = vmatprep.subr.bf16.mxu0 %v642
        %770 = vmatpush1.bf16.msra.mxu0 %v641
        %771 = vmatprep.subr.bf16.mxu0 %v644
        %772 = vmatpush1.bf16.msra.mxu0 %v643
        %773 = vmatprep.subr.bf16.mxu0 %v646
        %774 = vmatpush1.bf16.msra.mxu0 %v645
        %775 = vmatprep.subr.bf16.mxu0 %v648
        %776 = vmatpush1.bf16.msra.mxu0 %v647
        %777 = vmatprep.subr.bf16.mxu0 %v650
        %778 = vmatpush1.bf16.msra.mxu0 %v649
        %779 = vmatprep.subr.bf16.mxu0 %v652
        %780 = vmatpush1.bf16.msra.mxu0 %v651
        %781 = vmatprep.subr.bf16.mxu0 %v654
        %782 = vmatpush1.bf16.msra.mxu0 %v653
        %783 = vmatprep.subr.bf16.mxu0 %v656
        %784 = vmatpush1.bf16.msra.mxu0 %v655
        %785 = vmatprep.subr.bf16.mxu0 %v658
        %786 = vmatpush1.bf16.msra.mxu0 %v657
        %787 = vmatprep.subr.bf16.mxu0 %v660
        %788 = vmatpush1.bf16.msra.mxu0 %v659
        %789 = vmatprep.mubr.bf16.mxu0 %v422
        %790 = vmatmul.mubr.bf16.gmra.mrb[0].mxu0 %v421
        %v791 = vpop.f32.mrb[0].mxu0
        %v792 = vadd.f32 0.0, %v791
        %v793 = vpop.f32.mrb[0].mxu0
        %v794 = vadd.f32 0.0, %v793
        %v795 = vpop.f32.mrb[0].mxu0
        %v796 = vadd.f32 0.0, %v795
        %v797 = vpop.f32.mrb[0].mxu0
        %v798 = vadd.f32 0.0, %v797
        %799 = vmatprep.mubr.bf16.mxu0 %v426
        %800 = vmatmul.mubr.bf16.gmra.mrb[0].mxu0 %v425
        %v801 = vpop.f32.mrb[0].mxu0
        %v802 = vadd.f32 0.0, %v801
        %v803 = vpop.f32.mrb[0].mxu0
        %v804 = vadd.f32 0.0, %v803
        %v805 = vpop.f32.mrb[0].mxu0
        %v806 = vadd.f32 0.0, %v805
        %v807 = vpop.f32.mrb[0].mxu0
        %v808 = vadd.f32 0.0, %v807
        %809 = vdwg.mxu0
        %810 = vmatprep.subr.bf16.mxu0 %v662
        %811 = vmatpush1.bf16.msra.mxu0 %v661
        %812 = vmatprep.subr.bf16.mxu0 %v664
        %813 = vmatpush1.bf16.msra.mxu0 %v663
        %814 = vmatprep.subr.bf16.mxu0 %v666
        %815 = vmatpush1.bf16.msra.mxu0 %v665
        %816 = vmatprep.subr.bf16.mxu0 %v668
        %817 = vmatpush1.bf16.msra.mxu0 %v667
        %818 = vmatprep.subr.bf16.mxu0 %v670
        %819 = vmatpush1.bf16.msra.mxu0 %v669
        %820 = vmatprep.subr.bf16.mxu0 %v672
        %821 = vmatpush1.bf16.msra.mxu0 %v671
        %822 = vmatprep.subr.bf16.mxu0 %v674
        %823 = vmatpush1.bf16.msra.mxu0 %v673
        %824 = vmatprep.subr.bf16.mxu0 %v676
        %825 = vmatpush1.bf16.msra.mxu0 %v675
        %826 = vmatprep.subr.bf16.mxu0 %v678
        %827 = vmatpush1.bf16.msra.mxu0 %v677
        %828 = vmatprep.subr.bf16.mxu0 %v680
        %829 = vmatpush1.bf16.msra.mxu0 %v679
        %830 = vmatprep.subr.bf16.mxu0 %v682
        %831 = vmatpush1.bf16.msra.mxu0 %v681
        %832 = vmatprep.subr.bf16.mxu0 %v684
        %833 = vmatpush1.bf16.msra.mxu0 %v683
        %834 = vmatprep.subr.bf16.mxu0 %v686
        %835 = vmatpush1.bf16.msra.mxu0 %v685
        %836 = vmatprep.subr.bf16.mxu0 %v688
        %837 = vmatpush1.bf16.msra.mxu0 %v687
        %838 = vmatprep.subr.bf16.mxu0 %v690
        %839 = vmatpush1.bf16.msra.mxu0 %v689
        %840 = vmatprep.subr.bf16.mxu0 %v692
        %841 = vmatpush1.bf16.msra.mxu0 %v691
        %842 = vmatprep.mubr.bf16.mxu0 %v424
        %843 = vmatmul.mubr.bf16.gmra.mrb[0].mxu0 %v423
        %v844 = vpop.f32.mrb[0].mxu0
        %v845 = vadd.f32 %v792, %v844
        %v846 = vpop.f32.mrb[0].mxu0
        %v847 = vadd.f32 %v794, %v846
        %v848 = vpop.f32.mrb[0].mxu0
        %v849 = vadd.f32 %v796, %v848
        %v850 = vpop.f32.mrb[0].mxu0
        %v851 = vadd.f32 %v798, %v850
        %852 = vmatprep.mubr.bf16.mxu0 %v428
        %853 = vmatmul.mubr.bf16.gmra.mrb[0].mxu0 %v427
        %v854 = vpop.f32.mrb[0].mxu0
        %v855 = vadd.f32 %v802, %v854
        %v856 = vpop.f32.mrb[0].mxu0
        %v857 = vadd.f32 %v804, %v856
        %v858 = vpop.f32.mrb[0].mxu0
        %v859 = vadd.f32 %v806, %v858
        %v860 = vpop.f32.mrb[0].mxu0
        %v861 = vadd.f32 %v808, %v860
        %862 = vdwg.mxu0
        %v863 = vadd.f32 %v317, %v845
        %v864 = vadd.f32 %v318, %v847
        %v865 = vadd.f32 %v319, %v849
        %v866 = vadd.f32 %v320, %v851
        %v867 = vadd.f32 %v321, %v855
        %v868 = vadd.f32 %v322, %v857
        %v869 = vadd.f32 %v323, %v859
        %v870 = vadd.f32 %v324, %v861
        %871 = vst [vmem:[#allocation2] sm:$0xff] %v863
        %872 = vst [vmem:[#allocation2 + $0x8] sm:$0xff] %v864
        %873 = vst [vmem:[#allocation2 + $0x10] sm:$0xff] %v865
        %874 = vst [vmem:[#allocation2 + $0x18] sm:$0xff] %v866
        %875 = vst [vmem:[#allocation2 + $0x20] sm:$0xff] %v867
        %876 = vst [vmem:[#allocation2 + $0x28] sm:$0xff] %v868
        %877 = vst [vmem:[#allocation2 + $0x30] sm:$0xff] %v869
        %878 = vst [vmem:[#allocation2 + $0x38] sm:$0xff] %v870
        %p879 = scmp.eq.s32.totalorder %s21, 1
        // Predicated region
        $region60: #{tower_forward.7} parent=50 // pred_check
          %p880 = pneg %p879
        $region61: #{tower_forward.7} parent=50 // pred_check_branch
          %882 = sbr.rel (%p880) target = $region63
        $region62: #{tower_forward.7} parent=50 // pred_region
          %v883 = vld [vmem:[#allocation2] sm:$0xff]
          %v884 = vld [vmem:[#allocation2 + $0x8] sm:$0xff]
          %v885 = vld [vmem:[#allocation2 + $0x10] sm:$0xff]
          %v886 = vld [vmem:[#allocation2 + $0x18] sm:$0xff]
          %v887 = vld [vmem:[#allocation2 + $0x20] sm:$0xff]
          %v888 = vld [vmem:[#allocation2 + $0x28] sm:$0xff]
          %v889 = vld [vmem:[#allocation2 + $0x30] sm:$0xff]
          %v890 = vld [vmem:[#allocation2 + $0x38] sm:$0xff]
          %v891 = vld [vmem:[%s291] sm:$0x3]
          %v893 = vlaneseq
          %v894 = vshrl.u32 %v893, 7
          %v895 = vsub.s32 0, %v894
          %v896 = vrot.slane %v891, %v895
          %v897 = vlaneseq
          %v898 = vshrl.u32 %v897, 7
          %v899 = vsub.s32 1, %v898
          %v900 = vrot.slane %v891, %v899
          %v903 = vadd.f32 %v883, %v896
          %v904 = vadd.f32 %v884, %v900
          %v905 = vadd.f32 %v885, %v896
          %v906 = vadd.f32 %v886, %v900
          %v907 = vadd.f32 %v887, %v896
          %v908 = vadd.f32 %v888, %v900
          %v909 = vadd.f32 %v889, %v896
          %v910 = vadd.f32 %v890, %v900
          %v911 = vmax.f32 %v903, 0.0
          %v912 = vmax.f32 %v904, 0.0
          %v913 = vmax.f32 %v905, 0.0
          %v914 = vmax.f32 %v906, 0.0
          %v915 = vmax.f32 %v907, 0.0
          %v916 = vmax.f32 %v908, 0.0
          %v917 = vmax.f32 %v909, 0.0
          %v918 = vmax.f32 %v910, 0.0
          %v919 = vpack.c.bf16 %v913, %v911
          %v920 = vpack.c.bf16 %v914, %v912
          %v921 = vpack.c.bf16 %v917, %v915
          %v922 = vpack.c.bf16 %v918, %v916
          %v927 = vunpack.c.l.b16 %v919
          %v928 = vunpack.c.l.b16 %v920
          %v929 = vunpack.c.h.b16 %v919
          %v930 = vunpack.c.h.b16 %v920
          %v931 = vunpack.c.l.b16 %v921
          %v932 = vunpack.c.l.b16 %v922
          %v933 = vunpack.c.h.b16 %v921
          %v934 = vunpack.c.h.b16 %v922
          %v935 = vpack.c.b16 %v928, %v927
          %v936 = vpack.c.b16 %v930, %v929
          %v937 = vpack.c.b16 %v932, %v931
          %v938 = vpack.c.b16 %v934, %v933
          %943 = vst [vmem:[%s302] sm:$0xff] %v935
          %944 = vst [vmem:[%s302 + $0x8] sm:$0xff] %v936
          %945 = vst [vmem:[%s302 + $0x10] sm:$0xff] %v937
          %946 = vst [vmem:[%s302 + $0x18] sm:$0xff] %v938
        $region63: #{tower_forward.7} parent=50 // pred_fallthru
          _
        %s947 = smul.u32 4, %s20
        %s948 = smul.u32 2, %s19
        %p949 = scmp.lt.s32.totalorder %s947, 3
        %s950 = scalar_select %p949, %s947, 3
        %p951 = scmp.lt.s32.totalorder %s948, 1
        %s952 = scalar_select %p951, %s948, 1
        %s953 = smul.addr %s950, 2
        %s954 = sadd.s32 %s952, %s953
        %s955 = smul.addr %s954, 4
        %s956 = scalar_lea.vmem %s3, %s955
        // Predicated region
        $region64: #{tower_forward.7} parent=50 // pred_check
          %p957 = pneg %p135
        $region65: #{tower_forward.7} parent=50 // pred_check_branch
          %959 = sbr.rel (%p957) target = $region67
        $region66: #{tower_forward.7} parent=50 // pred_region
          %s960 = smul.u32 4, %s20
          %s961 = smul.u32 2, %s19
        $region67: #{tower_forward.7} parent=50 // pred_fallthru
          _
        // Predicated region
        $region68: #{tower_forward.7} parent=50 // pred_check
          %p962 = pneg %p135
        $region69: #{tower_forward.7} parent=50 // pred_check_branch
          %964 = sbr.rel (%p962) target = $region71
        $region70: #{tower_forward.7} parent=50 // pred_region
          %s965 = smul.u32 4, %s20
          %s966 = smul.u32 2, %s19
          %p967 = scmp.lt.s32.totalorder %s965, 3
          %s968 = scalar_select %p967, %s965, 3
          %p969 = scmp.lt.s32.totalorder %s966, 1
          %s970 = scalar_select %p969, %s966, 1
          %s971 = smul.addr %s968, 2
          %s972 = sadd.s32 %s970, %s971
          %s973 = smul.addr %s972, 4
          %s974 = scalar_lea.vmem %s3, %s973
        $region71: #{tower_forward.7} parent=50 // pred_fallthru
          _
      $region51: #{tower_forward.7} parent=5 // pred_fallthru
        _
      %p975 = scmp.le.s32.totalorder 2, %s9
      // Predicated region
      $region72: #{tower_forward.7} parent=5 // pred_check
        %p976 = pneg %p975
      $region73: #{tower_forward.7} parent=5 // pred_check_branch
        %978 = sbr.rel (%p976) target = $region75
      $region74: #{tower_forward.7} parent=5 // pred_region
        %s979 = ssub.s32 %s9, 2
      $region75: #{tower_forward.7} parent=5 // pred_fallthru
        _
    $region6: #{tower_forward.7} parent=1 // loop_footer
      %s13 = sadd.s32 1, %s9
    $region7: #{tower_forward.7} parent=1 // loop_footer_branch
      %8 = sbr.rel target = $region3
    $region8: #{tower_forward.7} parent=1 // loop_exit
      _

// kernel: tower_forward.9
$region0: #{tower_forward.9}
  #allocation0 [shape = 'u32[]', space=smem, size = 0x4, offset = 0x4, fixed_abs, tag = 'smem constant byte address 0x4 - core index']
  #allocation1 [shape = 'u32[144,128]{1,0:T(1,128)}', space=vmem, size = 0x12000, scoped, tag = 'internal scratch']
  #allocation2 [shape = 'f32[32,256]{1,0:T(8,128)}', space=vmem, size = 0x8000, scoped, tag = 'scratch operand']
  %s0 = inlined_call_operand.vmem [shape: bf16[32,512], index: 0, kind: input, shape index: {}]
  %s1 = inlined_call_operand.vmem [shape: bf16[512,256], index: 1, kind: input, shape index: {}]
  %s2 = inlined_call_operand.vmem [shape: f32[1,256], index: 2, kind: input, shape index: {}]
  %s3 = inlined_call_operand.vmem [shape: bf16[32,256], index: 3, kind: input, shape index: {}]
  %s4 = inlined_call_operand.vmem [shape: bf16[32,256], index: 4, kind: output, shape index: {}]
  %s5 = sld [smem:[#allocation0]]
  $region34: #{tower_forward.9} parent=0
    _
  %s7 = ssub.s32 1, %s5
  %s8 = scalar_select 0, %s7, %s5
  // Predicated region
  $region2: #{tower_forward.9} parent=0 // pred_check
    _
  $region3: #{tower_forward.9} parent=0 // pred_check_branch
    %10 = sbr.rel (0) target = $region5
  $region4: #{tower_forward.9} parent=0 // pred_region
    _
  $region5: #{tower_forward.9} parent=0 // pred_fallthru
    _
  // Predicated region
  $region6: #{tower_forward.9} parent=0 // pred_check
    _
  $region7: #{tower_forward.9} parent=0 // pred_check_branch
    %12 = sbr.rel (0) target = $region9
  $region8: #{tower_forward.9} parent=0 // pred_region
    _
  $region9: #{tower_forward.9} parent=0 // pred_fallthru
    _
  // Predicated region
  $region10: #{tower_forward.9} parent=0 // pred_check
    _
  $region11: #{tower_forward.9} parent=0 // pred_check_branch
    %14 = sbr.rel (0) target = $region13
  $region12: #{tower_forward.9} parent=0 // pred_region
    _
  $region13: #{tower_forward.9} parent=0 // pred_fallthru
    _
  // Predicated region
  $region14: #{tower_forward.9} parent=0 // pred_check
    _
  $region15: #{tower_forward.9} parent=0 // pred_check_branch
    %16 = sbr.rel (0) target = $region17
  $region16: #{tower_forward.9} parent=0 // pred_region
    _
  $region17: #{tower_forward.9} parent=0 // pred_fallthru
    _
  %p17 = scmp.eq.s32.totalorder 0, 0
  // Predicated region
  $region18: #{tower_forward.9} parent=0 // pred_check
    %p18 = pneg %p17
  $region19: #{tower_forward.9} parent=0 // pred_check_branch
    %20 = sbr.rel (%p18) target = $region21
  $region20: #{tower_forward.9} parent=0 // pred_region
    %21 = vst [vmem:[#allocation2] sm:$0xff] 0.0
    %22 = vst [vmem:[#allocation2 + $0x8] sm:$0xff] 0.0
    %23 = vst [vmem:[#allocation2 + $0x10] sm:$0xff] 0.0
    %24 = vst [vmem:[#allocation2 + $0x18] sm:$0xff] 0.0
    %25 = vst [vmem:[#allocation2 + $0x20] sm:$0xff] 0.0
    %26 = vst [vmem:[#allocation2 + $0x28] sm:$0xff] 0.0
    %27 = vst [vmem:[#allocation2 + $0x30] sm:$0xff] 0.0
    %28 = vst [vmem:[#allocation2 + $0x38] sm:$0xff] 0.0
  $region21: #{tower_forward.9} parent=0 // pred_fallthru
    _
  %v29 = vld [vmem:[#allocation2] sm:$0xff]
  %v30 = vld [vmem:[#allocation2 + $0x8] sm:$0xff]
  %v31 = vld [vmem:[#allocation2 + $0x10] sm:$0xff]
  %v32 = vld [vmem:[#allocation2 + $0x18] sm:$0xff]
  %v33 = vld [vmem:[#allocation2 + $0x20] sm:$0xff]
  %v34 = vld [vmem:[#allocation2 + $0x28] sm:$0xff]
  %v35 = vld [vmem:[#allocation2 + $0x30] sm:$0xff]
  %v36 = vld [vmem:[#allocation2 + $0x38] sm:$0xff]
  %v37 = vld [vmem:[%s0] sm:$0xff]
  %v38 = vld [vmem:[%s0 + $0x8] sm:$0xff]
  %v39 = vld [vmem:[%s0 + $0x10] sm:$0xff]
  %v40 = vld [vmem:[%s0 + $0x18] sm:$0xff]
  %v41 = vld [vmem:[%s0 + $0x20] sm:$0xff]
  %v42 = vld [vmem:[%s0 + $0x28] sm:$0xff]
  %v43 = vld [vmem:[%s0 + $0x30] sm:$0xff]
  %v44 = vld [vmem:[%s0 + $0x38] sm:$0xff]
  %v45 = vld [vmem:[%s1] sm:$0xff]
  %v46 = vld [vmem:[%s1 + $0x8] sm:$0xff]
  %v47 = vld [vmem:[%s1 + $0x10] sm:$0xff]
  %v48 = vld [vmem:[%s1 + $0x18] sm:$0xff]
  %v49 = vld [vmem:[%s1 + $0x20] sm:$0xff]
  %v50 = vld [vmem:[%s1 + $0x28] sm:$0xff]
  %v51 = vld [vmem:[%s1 + $0x30] sm:$0xff]
  %v52 = vld [vmem:[%s1 + $0x38] sm:$0xff]
  %v53 = vld [vmem:[%s1 + $0x40] sm:$0xff]
  %v54 = vld [vmem:[%s1 + $0x48] sm:$0xff]
  %v55 = vld [vmem:[%s1 + $0x50] sm:$0xff]
  %v56 = vld [vmem:[%s1 + $0x58] sm:$0xff]
  %v57 = vld [vmem:[%s1 + $0x60] sm:$0xff]
  %v58 = vld [vmem:[%s1 + $0x68] sm:$0xff]
  %v59 = vld [vmem:[%s1 + $0x70] sm:$0xff]
  %v60 = vld [vmem:[%s1 + $0x78] sm:$0xff]
  %v61 = vld [vmem:[%s1 + $0x80] sm:$0xff]
  %v62 = vld [vmem:[%s1 + $0x88] sm:$0xff]
  %v63 = vld [vmem:[%s1 + $0x90] sm:$0xff]
  %v64 = vld [vmem:[%s1 + $0x98] sm:$0xff]
  %v65 = vld [vmem:[%s1 + $0xa0] sm:$0xff]
  %v66 = vld [vmem:[%s1 + $0xa8] sm:$0xff]
  %v67 = vld [vmem:[%s1 + $0xb0] sm:$0xff]
  %v68 = vld [vmem:[%s1 + $0xb8] sm:$0xff]
  %v69 = vld [vmem:[%s1 + $0xc0] sm:$0xff]
  %v70 = vld [vmem:[%s1 + $0xc8] sm:$0xff]
  %v71 = vld [vmem:[%s1 + $0xd0] sm:$0xff]
  %v72 = vld [vmem:[%s1 + $0xd8] sm:$0xff]
  %v73 = vld [vmem:[%s1 + $0xe0] sm:$0xff]
  %v74 = vld [vmem:[%s1 + $0xe8] sm:$0xff]
  %v75 = vld [vmem:[%s1 + $0xf0] sm:$0xff]
  %v76 = vld [vmem:[%s1 + $0xf8] sm:$0xff]
  %v77 = vld [vmem:[%s1 + $0x100] sm:$0xff]
  %v78 = vld [vmem:[%s1 + $0x108] sm:$0xff]
  %v79 = vld [vmem:[%s1 + $0x110] sm:$0xff]
  %v80 = vld [vmem:[%s1 + $0x118] sm:$0xff]
  %v81 = vld [vmem:[%s1 + $0x120] sm:$0xff]
  %v82 = vld [vmem:[%s1 + $0x128] sm:$0xff]
  %v83 = vld [vmem:[%s1 + $0x130] sm:$0xff]
  %v84 = vld [vmem:[%s1 + $0x138] sm:$0xff]
  %v85 = vld [vmem:[%s1 + $0x140] sm:$0xff]
  %v86 = vld [vmem:[%s1 + $0x148] sm:$0xff]
  %v87 = vld [vmem:[%s1 + $0x150] sm:$0xff]
  %v88 = vld [vmem:[%s1 + $0x158] sm:$0xff]
  %v89 = vld [vmem:[%s1 + $0x160] sm:$0xff]
  %v90 = vld [vmem:[%s1 + $0x168] sm:$0xff]
  %v91 = vld [vmem:[%s1 + $0x170] sm:$0xff]
  %v92 = vld [vmem:[%s1 + $0x178] sm:$0xff]
  %v93 = vld [vmem:[%s1 + $0x180] sm:$0xff]
  %v94 = vld [vmem:[%s1 + $0x188] sm:$0xff]
  %v95 = vld [vmem:[%s1 + $0x190] sm:$0xff]
  %v96 = vld [vmem:[%s1 + $0x198] sm:$0xff]
  %v97 = vld [vmem:[%s1 + $0x1a0] sm:$0xff]
  %v98 = vld [vmem:[%s1 + $0x1a8] sm:$0xff]
  %v99 = vld [vmem:[%s1 + $0x1b0] sm:$0xff]
  %v100 = vld [vmem:[%s1 + $0x1b8] sm:$0xff]
  %v101 = vld [vmem:[%s1 + $0x1c0] sm:$0xff]
  %v102 = vld [vmem:[%s1 + $0x1c8] sm:$0xff]
  %v103 = vld [vmem:[%s1 + $0x1d0] sm:$0xff]
  %v104 = vld [vmem:[%s1 + $0x1d8] sm:$0xff]
  %v105 = vld [vmem:[%s1 + $0x1e0] sm:$0xff]
  %v106 = vld [vmem:[%s1 + $0x1e8] sm:$0xff]
  %v107 = vld [vmem:[%s1 + $0x1f0] sm:$0xff]
  %v108 = vld [vmem:[%s1 + $0x1f8] sm:$0xff]
  %v117 = vunpack.c.l.b16 %v37
  %v118 = vunpack.c.h.b16 %v37
  %v119 = vunpack.c.l.b16 %v38
  %v120 = vunpack.c.h.b16 %v38
  %v121 = vunpack.c.l.b16 %v39
  %v122 = vunpack.c.h.b16 %v39
  %v123 = vunpack.c.l.b16 %v40
  %v124 = vunpack.c.h.b16 %v40
  %v125 = vunpack.c.l.b16 %v41
  %v126 = vunpack.c.h.b16 %v41
  %v127 = vunpack.c.l.b16 %v42
  %v128 = vunpack.c.h.b16 %v42
  %v129 = vunpack.c.l.b16 %v43
  %v130 = vunpack.c.h.b16 %v43
  %v131 = vunpack.c.l.b16 %v44
  %v132 = vunpack.c.h.b16 %v44
  %v133 = vpack.c.b16 %v121, %v117
  %v134 = vpack.c.b16 %v122, %v118
  %v135 = vpack.c.b16 %v123, %v119
  %v136 = vpack.c.b16 %v124, %v120
  %v137 = vpack.c.b16 %v129, %v125
  %v138 = vpack.c.b16 %v130, %v126
  %v139 = vpack.c.b16 %v131, %v127
  %v140 = vpack.c.b16 %v132, %v128
  %v213 = vunpack.c.l.b16 %v45
  %v214 = vunpack.c.h.b16 %v45
  %v215 = vunpack.c.l.b16 %v46
  %v216 = vunpack.c.h.b16 %v46
  %v217 = vunpack.c.l.b16 %v47
  %v218 = vunpack.c.h.b16 %v47
  %v219 = vunpack.c.l.b16 %v48
  %v220 = vunpack.c.h.b16 %v48
  %v221 = vunpack.c.l.b16 %v49
  %v222 = vunpack.c.h.b16 %v49
  %v223 = vunpack.c.l.b16 %v50
  %v224 = vunpack.c.h.b16 %v50
  %v225 = vunpack.c.l.b16 %v51
  %v226 = vunpack.c.h.b16 %v51
  %v227 = vunpack.c.l.b16 %v52
  %v228 = vunpack.c.h.b16 %v52
  %v229 = vunpack.c.l.b16 %v53
  %v230 = vunpack.c.h.b16 %v53
  %v231 = vunpack.c.l.b16 %v54
  %v232 = vunpack.c.h.b16 %v54
  %v233 = vunpack.c.l.b16 %v55
  %v234 = vunpack.c.h.b16 %v55
  %v235 = vunpack.c.l.b16 %v56
  %v236 = vunpack.c.h.b16 %v56
  %v237 = vunpack.c.l.b16 %v57
  %v238 = vunpack.c.h.b16 %v57
  %v239 = vunpack.c.l.b16 %v58
  %v240 = vunpack.c.h.b16 %v58
  %v241 = vunpack.c.l.b16 %v59
  %v242 = vunpack.c.h.b16 %v59
  %v243 = vunpack.c.l.b16 %v60
  %v244 = vunpack.c.h.b16 %v60
  %v245 = vunpack.c.l.b16 %v61
  %v246 = vunpack.c.h.b16 %v61
  %v247 = vunpack.c.l.b16 %v62
  %v248 = vunpack.c.h.b16 %v62
  %v249 = vunpack.c.l.b16 %v63
  %v250 = vunpack.c.h.b16 %v63
  %v251 = vunpack.c.l.b16 %v64
  %v252 = vunpack.c.h.b16 %v64
  %v253 = vunpack.c.l.b16 %v65
  %v254 = vunpack.c.h.b16 %v65
  %v255 = vunpack.c.l.b16 %v66
  %v256 = vunpack.c.h.b16 %v66
  %v257 = vunpack.c.l.b16 %v67
  %v258 = vunpack.c.h.b16 %v67
  %v259 = vunpack.c.l.b16 %v68
  %v260 = vunpack.c.h.b16 %v68
  %v261 = vunpack.c.l.b16 %v69
  %v262 = vunpack.c.h.b16 %v69
  %v263 = vunpack.c.l.b16 %v70
  %v264 = vunpack.c.h.b16 %v70
  %v265 = vunpack.c.l.b16 %v71
  %v266 = vunpack.c.h.b16 %v71
  %v267 = vunpack.c.l.b16 %v72
  %v268 = vunpack.c.h.b16 %v72
  %v269 = vunpack.c.l.b16 %v73
  %v270 = vunpack.c.h.b16 %v73
  %v271 = vunpack.c.l.b16 %v74
  %v272 = vunpack.c.h.b16 %v74
  %v273 = vunpack.c.l.b16 %v75
  %v274 = vunpack.c.h.b16 %v75
  %v275 = vunpack.c.l.b16 %v76
  %v276 = vunpack.c.h.b16 %v76
  %v277 = vunpack.c.l.b16 %v77
  %v278 = vunpack.c.h.b16 %v77
  %v279 = vunpack.c.l.b16 %v78
  %v280 = vunpack.c.h.b16 %v78
  %v281 = vunpack.c.l.b16 %v79
  %v282 = vunpack.c.h.b16 %v79
  %v283 = vunpack.c.l.b16 %v80
  %v284 = vunpack.c.h.b16 %v80
  %v285 = vunpack.c.l.b16 %v81
  %v286 = vunpack.c.h.b16 %v81
  %v287 = vunpack.c.l.b16 %v82
  %v288 = vunpack.c.h.b16 %v82
  %v289 = vunpack.c.l.b16 %v83
  %v290 = vunpack.c.h.b16 %v83
  %v291 = vunpack.c.l.b16 %v84
  %v292 = vunpack.c.h.b16 %v84
  %v293 = vunpack.c.l.b16 %v85
  %v294 = vunpack.c.h.b16 %v85
  %v295 = vunpack.c.l.b16 %v86
  %v296 = vunpack.c.h.b16 %v86
  %v297 = vunpack.c.l.b16 %v87
  %v298 = vunpack.c.h.b16 %v87
  %v299 = vunpack.c.l.b16 %v88
  %v300 = vunpack.c.h.b16 %v88
  %v301 = vunpack.c.l.b16 %v89
  %v302 = vunpack.c.h.b16 %v89
  %v303 = vunpack.c.l.b16 %v90
  %v304 = vunpack.c.h.b16 %v90
  %v305 = vunpack.c.l.b16 %v91
  %v306 = vunpack.c.h.b16 %v91
  %v307 = vunpack.c.l.b16 %v92
  %v308 = vunpack.c.h.b16 %v92
  %v309 = vunpack.c.l.b16 %v93
  %v310 = vunpack.c.h.b16 %v93
  %v311 = vunpack.c.l.b16 %v94
  %v312 = vunpack.c.h.b16 %v94
  %v313 = vunpack.c.l.b16 %v95
  %v314 = vunpack.c.h.b16 %v95
  %v315 = vunpack.c.l.b16 %v96
  %v316 = vunpack.c.h.b16 %v96
  %v317 = vunpack.c.l.b16 %v97
  %v318 = vunpack.c.h.b16 %v97
  %v319 = vunpack.c.l.b16 %v98
  %v320 = vunpack.c.h.b16 %v98
  %v321 = vunpack.c.l.b16 %v99
  %v322 = vunpack.c.h.b16 %v99
  %v323 = vunpack.c.l.b16 %v100
  %v324 = vunpack.c.h.b16 %v100
  %v325 = vunpack.c.l.b16 %v101
  %v326 = vunpack.c.h.b16 %v101
  %v327 = vunpack.c.l.b16 %v102
  %v328 = vunpack.c.h.b16 %v102
  %v329 = vunpack.c.l.b16 %v103
  %v330 = vunpack.c.h.b16 %v103
  %v331 = vunpack.c.l.b16 %v104
  %v332 = vunpack.c.h.b16 %v104
  %v333 = vunpack.c.l.b16 %v105
  %v334 = vunpack.c.h.b16 %v105
  %v335 = vunpack.c.l.b16 %v106
  %v336 = vunpack.c.h.b16 %v106
  %v337 = vunpack.c.l.b16 %v107
  %v338 = vunpack.c.h.b16 %v107
  %v339 = vunpack.c.l.b16 %v108
  %v340 = vunpack.c.h.b16 %v108
  %v341 = vpack.c.b16 %v215, %v213
  %v342 = vpack.c.b16 %v216, %v214
  %v343 = vpack.c.b16 %v219, %v217
  %v344 = vpack.c.b16 %v220, %v218
  %v345 = vpack.c.b16 %v223, %v221
  %v346 = vpack.c.b16 %v224, %v222
  %v347 = vpack.c.b16 %v227, %v225
  %v348 = vpack.c.b16 %v228, %v226
  %v349 = vpack.c.b16 %v231, %v229
  %v350 = vpack.c.b16 %v232, %v230
  %v351 = vpack.c.b16 %v235, %v233
  %v352 = vpack.c.b16 %v236, %v234
  %v353 = vpack.c.b16 %v239, %v237
  %v354 = vpack.c.b16 %v240, %v238
  %v355 = vpack.c.b16 %v243, %v241
  %v356 = vpack.c.b16 %v244, %v242
  %v357 = vpack.c.b16 %v247, %v245
  %v358 = vpack.c.b16 %v248, %v246
  %v359 = vpack.c.b16 %v251, %v249
  %v360 = vpack.c.b16 %v252, %v250
  %v361 = vpack.c.b16 %v255, %v253
  %v362 = vpack.c.b16 %v256, %v254
  %v363 = vpack.c.b16 %v259, %v257
  %v364 = vpack.c.b16 %v260, %v258
  %v365 = vpack.c.b16 %v263, %v261
  %v366 = vpack.c.b16 %v264, %v262
  %v367 = vpack.c.b16 %v267, %v265
  %v368 = vpack.c.b16 %v268, %v266
  %v369 = vpack.c.b16 %v271, %v269
  %v370 = vpack.c.b16 %v272, %v270
  %v371 = vpack.c.b16 %v275, %v273
  %v372 = vpack.c.b16 %v276, %v274
  %v373 = vpack.c.b16 %v279, %v277
  %v374 = vpack.c.b16 %v280, %v278
  %v375 = vpack.c.b16 %v283, %v281
  %v376 = vpack.c.b16 %v284, %v282
  %v377 = vpack.c.b16 %v287, %v285
  %v378 = vpack.c.b16 %v288, %v286
  %v379 = vpack.c.b16 %v291, %v289
  %v380 = vpack.c.b16 %v292, %v290
  %v381 = vpack.c.b16 %v295, %v293
  %v382 = vpack.c.b16 %v296, %v294
  %v383 = vpack.c.b16 %v299, %v297
  %v384 = vpack.c.b16 %v300, %v298
  %v385 = vpack.c.b16 %v303, %v301
  %v386 = vpack.c.b16 %v304, %v302
  %v387 = vpack.c.b16 %v307, %v305
  %v388 = vpack.c.b16 %v308, %v306
  %v389 = vpack.c.b16 %v311, %v309
  %v390 = vpack.c.b16 %v312, %v310
  %v391 = vpack.c.b16 %v315, %v313
  %v392 = vpack.c.b16 %v316, %v314
  %v393 = vpack.c.b16 %v319, %v317
  %v394 = vpack.c.b16 %v320, %v318
  %v395 = vpack.c.b16 %v323, %v321
  %v396 = vpack.c.b16 %v324, %v322
  %v397 = vpack.c.b16 %v327, %v325
  %v398 = vpack.c.b16 %v328, %v326
  %v399 = vpack.c.b16 %v331, %v329
  %v400 = vpack.c.b16 %v332, %v330
  %v401 = vpack.c.b16 %v335, %v333
  %v402 = vpack.c.b16 %v336, %v334
  %v403 = vpack.c.b16 %v339, %v337
  %v404 = vpack.c.b16 %v340, %v338
  %469 = vmatprep.subr.bf16.mxu0 %v342
  %470 = vmatpush1.bf16.msra.mxu0 %v341
  %471 = vmatprep.subr.bf16.mxu0 %v344
  %472 = vmatpush1.bf16.msra.mxu0 %v343
  %473 = vmatprep.subr.bf16.mxu0 %v346
  %474 = vmatpush1.bf16.msra.mxu0 %v345
  %475 = vmatprep.subr.bf16.mxu0 %v348
  %476 = vmatpush1.bf16.msra.mxu0 %v347
  %477 = vmatprep.subr.bf16.mxu0 %v350
  %478 = vmatpush1.bf16.msra.mxu0 %v349
  %479 = vmatprep.subr.bf16.mxu0 %v352
  %480 = vmatpush1.bf16.msra.mxu0 %v351
  %481 = vmatprep.subr.bf16.mxu0 %v354
  %482 = vmatpush1.bf16.msra.mxu0 %v353
  %483 = vmatprep.subr.bf16.mxu0 %v356
  %484 = vmatpush1.bf16.msra.mxu0 %v355
  %485 = vmatprep.subr.bf16.mxu0 %v358
  %486 = vmatpush1.bf16.msra.mxu0 %v357
  %487 = vmatprep.subr.bf16.mxu0 %v360
  %488 = vmatpush1.bf16.msra.mxu0 %v359
  %489 = vmatprep.subr.bf16.mxu0 %v362
  %490 = vmatpush1.bf16.msra.mxu0 %v361
  %491 = vmatprep.subr.bf16.mxu0 %v364
  %492 = vmatpush1.bf16.msra.mxu0 %v363
  %493 = vmatprep.subr.bf16.mxu0 %v366
  %494 = vmatpush1.bf16.msra.mxu0 %v365
  %495 = vmatprep.subr.bf16.mxu0 %v368
  %496 = vmatpush1.bf16.msra.mxu0 %v367
  %497 = vmatprep.subr.bf16.mxu0 %v370
  %498 = vmatpush1.bf16.msra.mxu0 %v369
  %499 = vmatprep.subr.bf16.mxu0 %v372
  %500 = vmatpush1.bf16.msra.mxu0 %v371
  %501 = vmatprep.mubr.bf16.mxu0 %v134
  %502 = vmatmul.mubr.bf16.gmra.mrb[0].mxu0 %v133
  %v503 = vpop.f32.mrb[0].mxu0
  %v504 = vadd.f32 0.0, %v503
  %v505 = vpop.f32.mrb[0].mxu0
  %v506 = vadd.f32 0.0, %v505
  %v507 = vpop.f32.mrb[0].mxu0
  %v508 = vadd.f32 0.0, %v507
  %v509 = vpop.f32.mrb[0].mxu0
  %v510 = vadd.f32 0.0, %v509
  %511 = vmatprep.mubr.bf16.mxu0 %v138
  %512 = vmatmul.mubr.bf16.gmra.mrb[0].mxu0 %v137
  %v513 = vpop.f32.mrb[0].mxu0
  %v514 = vadd.f32 0.0, %v513
  %v515 = vpop.f32.mrb[0].mxu0
  %v516 = vadd.f32 0.0, %v515
  %v517 = vpop.f32.mrb[0].mxu0
  %v518 = vadd.f32 0.0, %v517
  %v519 = vpop.f32.mrb[0].mxu0
  %v520 = vadd.f32 0.0, %v519
  %521 = vdwg.mxu0
  %522 = vmatprep.subr.bf16.mxu0 %v374
  %523 = vmatpush1.bf16.msra.mxu0 %v373
  %524 = vmatprep.subr.bf16.mxu0 %v376
  %525 = vmatpush1.bf16.msra.mxu0 %v375
  %526 = vmatprep.subr.bf16.mxu0 %v378
  %527 = vmatpush1.bf16.msra.mxu0 %v377
  %528 = vmatprep.subr.bf16.mxu0 %v380
  %529 = vmatpush1.bf16.msra.mxu0 %v379
  %530 = vmatprep.subr.bf16.mxu0 %v382
  %531 = vmatpush1.bf16.msra.mxu0 %v381
  %532 = vmatprep.subr.bf16.mxu0 %v384
  %533 = vmatpush1.bf16.msra.mxu0 %v383
  %534 = vmatprep.subr.bf16.mxu0 %v386
  %535 = vmatpush1.bf16.msra.mxu0 %v385
  %536 = vmatprep.subr.bf16.mxu0 %v388
  %537 = vmatpush1.bf16.msra.mxu0 %v387
  %538 = vmatprep.subr.bf16.mxu0 %v390
  %539 = vmatpush1.bf16.msra.mxu0 %v389
  %540 = vmatprep.subr.bf16.mxu0 %v392
  %541 = vmatpush1.bf16.msra.mxu0 %v391
  %542 = vmatprep.subr.bf16.mxu0 %v394
  %543 = vmatpush1.bf16.msra.mxu0 %v393
  %544 = vmatprep.subr.bf16.mxu0 %v396
  %545 = vmatpush1.bf16.msra.mxu0 %v395
  %546 = vmatprep.subr.bf16.mxu0 %v398
  %547 = vmatpush1.bf16.msra.mxu0 %v397
  %548 = vmatprep.subr.bf16.mxu0 %v400
  %549 = vmatpush1.bf16.msra.mxu0 %v399
  %550 = vmatprep.subr.bf16.mxu0 %v402
  %551 = vmatpush1.bf16.msra.mxu0 %v401
  %552 = vmatprep.subr.bf16.mxu0 %v404
  %553 = vmatpush1.bf16.msra.mxu0 %v403
  %554 = vmatprep.mubr.bf16.mxu0 %v136
  %555 = vmatmul.mubr.bf16.gmra.mrb[0].mxu0 %v135
  %v556 = vpop.f32.mrb[0].mxu0
  %v557 = vadd.f32 %v504, %v556
  %v558 = vpop.f32.mrb[0].mxu0
  %v559 = vadd.f32 %v506, %v558
  %v560 = vpop.f32.mrb[0].mxu0
  %v561 = vadd.f32 %v508, %v560
  %v562 = vpop.f32.mrb[0].mxu0
  %v563 = vadd.f32 %v510, %v562
  %564 = vmatprep.mubr.bf16.mxu0 %v140
  %565 = vmatmul.mubr.bf16.gmra.mrb[0].mxu0 %v139
  %v566 = vpop.f32.mrb[0].mxu0
  %v567 = vadd.f32 %v514, %v566
  %v568 = vpop.f32.mrb[0].mxu0
  %v569 = vadd.f32 %v516, %v568
  %v570 = vpop.f32.mrb[0].mxu0
  %v571 = vadd.f32 %v518, %v570
  %v572 = vpop.f32.mrb[0].mxu0
  %v573 = vadd.f32 %v520, %v572
  %574 = vdwg.mxu0
  %v575 = vadd.f32 %v29, %v557
  %v576 = vadd.f32 %v30, %v559
  %v577 = vadd.f32 %v31, %v561
  %v578 = vadd.f32 %v32, %v563
  %v579 = vadd.f32 %v33, %v567
  %v580 = vadd.f32 %v34, %v569
  %v581 = vadd.f32 %v35, %v571
  %v582 = vadd.f32 %v36, %v573
  %583 = vst [vmem:[#allocation2] sm:$0xff] %v575
  %584 = vst [vmem:[#allocation2 + $0x8] sm:$0xff] %v576
  %585 = vst [vmem:[#allocation2 + $0x10] sm:$0xff] %v577
  %586 = vst [vmem:[#allocation2 + $0x18] sm:$0xff] %v578
  %587 = vst [vmem:[#allocation2 + $0x20] sm:$0xff] %v579
  %588 = vst [vmem:[#allocation2 + $0x28] sm:$0xff] %v580
  %589 = vst [vmem:[#allocation2 + $0x30] sm:$0xff] %v581
  %590 = vst [vmem:[#allocation2 + $0x38] sm:$0xff] %v582
  // Predicated region
  $region22: #{tower_forward.9} parent=0 // pred_check
    %p591 = pneg %p17
  $region23: #{tower_forward.9} parent=0 // pred_check_branch
    %593 = sbr.rel (%p591) target = $region25
  $region24: #{tower_forward.9} parent=0 // pred_region
    %v594 = vld [vmem:[#allocation2] sm:$0xff]
    %v595 = vld [vmem:[#allocation2 + $0x8] sm:$0xff]
    %v596 = vld [vmem:[#allocation2 + $0x10] sm:$0xff]
    %v597 = vld [vmem:[#allocation2 + $0x18] sm:$0xff]
    %v598 = vld [vmem:[#allocation2 + $0x20] sm:$0xff]
    %v599 = vld [vmem:[#allocation2 + $0x28] sm:$0xff]
    %v600 = vld [vmem:[#allocation2 + $0x30] sm:$0xff]
    %v601 = vld [vmem:[#allocation2 + $0x38] sm:$0xff]
    %v602 = vld [vmem:[%s2] sm:$0x3]
    %v604 = vlaneseq
    %v605 = vshrl.u32 %v604, 7
    %v606 = vsub.s32 0, %v605
    %v607 = vrot.slane %v602, %v606
    %v608 = vlaneseq
    %v609 = vshrl.u32 %v608, 7
    %v610 = vsub.s32 1, %v609
    %v611 = vrot.slane %v602, %v610
    %v614 = vadd.f32 %v594, %v607
    %v615 = vadd.f32 %v595, %v611
    %v616 = vadd.f32 %v596, %v607
    %v617 = vadd.f32 %v597, %v611
    %v618 = vadd.f32 %v598, %v607
    %v619 = vadd.f32 %v599, %v611
    %v620 = vadd.f32 %v600, %v607
    %v621 = vadd.f32 %v601, %v611
    %v622 = vmax.f32 %v614, 0.0
    %v623 = vmax.f32 %v615, 0.0
    %v624 = vmax.f32 %v616, 0.0
    %v625 = vmax.f32 %v617, 0.0
    %v626 = vmax.f32 %v618, 0.0
    %v627 = vmax.f32 %v619, 0.0
    %v628 = vmax.f32 %v620, 0.0
    %v629 = vmax.f32 %v621, 0.0
    %v630 = vld [vmem:[%s3] sm:$0xff]
    %v631 = vld [vmem:[%s3 + $0x8] sm:$0xff]
    %v632 = vld [vmem:[%s3 + $0x10] sm:$0xff]
    %v633 = vld [vmem:[%s3 + $0x18] sm:$0xff]
    %v634 = vunpack.c.l.bf16 %v630
    %v635 = vunpack.c.h.bf16 %v630
    %v636 = vunpack.c.l.bf16 %v631
    %v637 = vunpack.c.h.bf16 %v631
    %v638 = vunpack.c.l.bf16 %v632
    %v639 = vunpack.c.h.bf16 %v632
    %v640 = vunpack.c.l.bf16 %v633
    %v641 = vunpack.c.h.bf16 %v633
    %v642 = vadd.f32 %v622, %v634
    %v643 = vadd.f32 %v623, %v635
    %v644 = vadd.f32 %v624, %v636
    %v645 = vadd.f32 %v625, %v637
    %v646 = vadd.f32 %v626, %v638
    %v647 = vadd.f32 %v627, %v639
    %v648 = vadd.f32 %v628, %v640
    %v649 = vadd.f32 %v629, %v641
    %v650 = vpack.c.bf16 %v644, %v642
    %v651 = vpack.c.bf16 %v645, %v643
    %v652 = vpack.c.bf16 %v648, %v646
    %v653 = vpack.c.bf16 %v649, %v647
    %v658 = vunpack.c.l.b16 %v650
    %v659 = vunpack.c.l.b16 %v651
    %v660 = vunpack.c.h.b16 %v650
    %v661 = vunpack.c.h.b16 %v651
    %v662 = vunpack.c.l.b16 %v652
    %v663 = vunpack.c.l.b16 %v653
    %v664 = vunpack.c.h.b16 %v652
    %v665 = vunpack.c.h.b16 %v653
    %v666 = vpack.c.b16 %v659, %v658
    %v667 = vpack.c.b16 %v661, %v660
    %v668 = vpack.c.b16 %v663, %v662
    %v669 = vpack.c.b16 %v665, %v664
    %674 = vst [vmem:[%s4] sm:$0xff] %v666
    %675 = vst [vmem:[%s4 + $0x8] sm:$0xff] %v667
    %676 = vst [vmem:[%s4 + $0x10] sm:$0xff] %v668
    %677 = vst [vmem:[%s4 + $0x18] sm:$0xff] %v669
  $region25: #{tower_forward.9} parent=0 // pred_fallthru
    _
  // Predicated region
  $region26: #{tower_forward.9} parent=0 // pred_check
    _
  $region27: #{tower_forward.9} parent=0 // pred_check_branch
    %679 = sbr.rel (0) target = $region29
  $region28: #{tower_forward.9} parent=0 // pred_region
    _
  $region29: #{tower_forward.9} parent=0 // pred_fallthru
    _
  // Predicated region
  $region30: #{tower_forward.9} parent=0 // pred_check
    _
  $region31: #{tower_forward.9} parent=0 // pred_check_branch
    %681 = sbr.rel (0) target = $region33
  $region32: #{tower_forward.9} parent=0 // pred_region
    _
  $region33: #{tower_forward.9} parent=0 // pred_fallthru
    _

// kernel: tower_forward.10
$region0: #{tower_forward.10}
  #allocation0 [shape = 'u32[]', space=smem, size = 0x4, offset = 0x4, fixed_abs, tag = 'smem constant byte address 0x4 - core index']
  #allocation1 [shape = 'u32[144,128]{1,0:T(1,128)}', space=vmem, size = 0x12000, scoped, tag = 'internal scratch']
  #allocation2 [shape = 'f32[32,128]{1,0:T(8,128)}', space=vmem, size = 0x4000, scoped, tag = 'scratch operand']
  %s0 = inlined_call_operand.vmem [shape: bf16[32,2304], index: 0, kind: input, shape index: {}]
  %s1 = inlined_call_operand.vmem [shape: bf16[2304,384], index: 1, kind: input, shape index: {}]
  %s2 = inlined_call_operand.vmem [shape: f32[1,384], index: 2, kind: input, shape index: {}]
  %s3 = inlined_call_operand.vmem [shape: f32[32,384], index: 3, kind: input, shape index: {}]
  %s4 = inlined_call_operand.vmem [shape: bf16[32,384], index: 4, kind: output, shape index: {}]
  %s5 = sld [smem:[#allocation0]]
  $region196: #{tower_forward.10} parent=0
    _
  %s7 = ssub.s32 1, %s5
  %s8 = scalar_select 0, %s7, %s5
  $region1: #{tower_forward.10} parent=0
    #allocation3 [shape = 'u8[98304]{0}', space=vmem, size = 0x18000, scoped, tag = 'input window, operand 0']
    #allocation4 [shape = 'u8[393216]{0}', space=vmem, size = 0x60000, scoped, tag = 'input window, operand 1']
    #allocation5 [shape = 'u8[32768]{0}', space=vmem, size = 0x8000, scoped, tag = 'input window, operand 3']
    #allocation6 [shape = 'u8[16384]{0}', space=vmem, size = 0x4000, scoped, tag = 'output window, operand 0']
    loop: start=0, step=1, limit=11
    $region2: #{tower_forward.10} parent=1 // loop_pre_header
      _
    $region3: #{tower_forward.10} parent=1 // loop_header
      %s10 = sphi 0, %s14
      %p11 = scmp.ge.s32.totalorder %s10, 11
      %s17 = sphi 0, %s36
      %s18 = sphi 0, %s32
      %s19 = sphi 0, %s28
      %s20 = sphi 0, %s17
      %s21 = sphi 0, %s18
      %s22 = sphi 0, %s19
      %s23 = sphi 0, %s20
      %s24 = sphi 0, %s21
      %s25 = sphi 0, %s22
      %s41 = sphi 0, %s43
      %s44 = sphi 0, %s41
      %s45 = sphi 0, %s44
      %s61 = sphi 0, %s45
      %s69 = sphi 0, %s71
      %s72 = sphi 0, %s69
      %s73 = sphi 0, %s72
      %s89 = sphi 0, %s73
      %s95 = sphi 0, %s97
      %s98 = sphi 0, %s95
      %s99 = sphi 0, %s98
      %s115 = sphi 0, %s99
      %s123 = sphi 0, %s125
      %s126 = sphi 0, %s123
      %s127 = sphi 0, %s126
      %s143 = sphi 0, %s127
      %s151 = sphi 0, %s153
      %s154 = sphi 0, %s151
      %s155 = sphi 0, %s154
      %s171 = sphi 0, %s155
    $region4: #{tower_forward.10} parent=1 // loop_header_branch
      %13 = sbr.rel (%p11) target = $region8
    $region5: #{tower_forward.10} parent=1 // loop_body
      %s15 = ssub.s32 %s10, 1
      %s16 = ssub.s32 %s10, 2
      %s26 = sadd.s32 1, %s19
      %p27 = scmp.ge.s32.totalorder %s26, 3
      %s28 = scalar_select %p27, 0, %s26
      %s29 = sadd.s32 1, %s18
      %s30 = scalar_select %p27, %s29, %s18
      %p31 = scmp.ge.s32.totalorder %s30, 1
      %s32 = scalar_select %p31, 0, %s30
      %s33 = sadd.s32 1, %s17
      %s34 = scalar_select %p31, %s33, %s17
      %p35 = scmp.ge.s32.totalorder %s34, 3
      %s36 = scalar_select %p35, 0, %s34
      %s37 = ssub.s32 %s18, %s32
      %s38 = ssub.s32 %s19, %s28
      %s39 = sor.u32 %s37, %s38
      %p40 = scmp.eq.s32.totalorder %s39, 0
      %s42 = sadd.s32 %s41, 1
      %s43 = scalar_select %p40, %s41, %s42
      %p46 = pneg %p40
      %p47 = scmp.eq.s32.totalorder %s10, 8
      %p48 = por %p46, %p47
      %p49 = scmp.ne.s32.totalorder %s41, %s44
      %p50 = scmp.eq.s32.totalorder %s10, 0
      %p51 = por %p49, %p50
      %p52 = scmp.ne.s32.totalorder %s41, %s44
      %p53 = scmp.eq.s32.totalorder %s15, 8
      %p54 = por %p52, %p53
      %p55 = scmp.ne.s32.totalorder %s44, %s45
      %p56 = scmp.eq.s32.totalorder %s15, 0
      %p57 = por %p55, %p56
      %p58 = scmp.ne.s32.totalorder %s44, %s45
      %p59 = scmp.eq.s32.totalorder %s16, 8
      %p60 = por %p58, %p59
      %p62 = scmp.ne.s32.totalorder %s45, %s61
      %p63 = scmp.eq.s32.totalorder %s16, 0
      %p64 = por %p62, %p63
      %s65 = ssub.s32 %s19, %s28
      %s66 = ssub.s32 %s17, %s36
      %s67 = sor.u32 %s65, %s66
      %p68 = scmp.eq.s32.totalorder %s67, 0
      %s70 = sadd.s32 %s69, 1
      %s71 = scalar_select %p68, %s69, %s70
      %p74 = pneg %p68
      %p75 = scmp.eq.s32.totalorder %s10, 8
      %p76 = por %p74, %p75
      %p77 = scmp.ne.s32.totalorder %s69, %s72
      %p78 = scmp.eq.s32.totalorder %s10, 0
      %p79 = por %p77, %p78
      %p80 = scmp.ne.s32.totalorder %s69, %s72
      %p81 = scmp.eq.s32.totalorder %s15, 8
      %p82 = por %p80, %p81
      %p83 = scmp.ne.s32.totalorder %s72, %s73
      %p84 = scmp.eq.s32.totalorder %s15, 0
      %p85 = por %p83, %p84
      %p86 = scmp.ne.s32.totalorder %s72, %s73
      %p87 = scmp.eq.s32.totalorder %s16, 8
      %p88 = por %p86, %p87
      %p90 = scmp.ne.s32.totalorder %s73, %s89
      %p91 = scmp.eq.s32.totalorder %s16, 0
      %p92 = por %p90, %p91
      %s93 = ssub.s32 %s17, %s36
      %p94 = scmp.eq.s32.totalorder %s93, 0
      %s96 = sadd.s32 %s95, 1
      %s97 = scalar_select %p94, %s95, %s96
      %p100 = pneg %p94
      %p101 = scmp.eq.s32.totalorder %s10, 8
      %p102 = por %p100, %p101
      %p103 = scmp.ne.s32.totalorder %s95, %s98
      %p104 = scmp.eq.s32.totalorder %s10, 0
      %p105 = por %p103, %p104
      %p106 = scmp.ne.s32.totalorder %s95, %s98
      %p107 = scmp.eq.s32.totalorder %s15, 8
      %p108 = por %p106, %p107
      %p109 = scmp.ne.s32.totalorder %s98, %s99
      %p110 = scmp.eq.s32.totalorder %s15, 0
      %p111 = por %p109, %p110
      %p112 = scmp.ne.s32.totalorder %s98, %s99
      %p113 = scmp.eq.s32.totalorder %s16, 8
      %p114 = por %p112, %p113
      %p116 = scmp.ne.s32.totalorder %s99, %s115
      %p117 = scmp.eq.s32.totalorder %s16, 0
      %p118 = por %p116, %p117
      %s119 = ssub.s32 %s18, %s32
      %s120 = ssub.s32 %s17, %s36
      %s121 = sor.u32 %s119, %s120
      %p122 = scmp.eq.s32.totalorder %s121, 0
      %s124 = sadd.s32 %s123, 1
      %s125 = scalar_select %p122, %s123, %s124
      %p128 = pneg %p122
      %p129 = scmp.eq.s32.totalorder %s10, 8
      %p130 = por %p128, %p129
      %p131 = scmp.ne.s32.totalorder %s123, %s126
      %p132 = scmp.eq.s32.totalorder %s10, 0
      %p133 = por %p131, %p132
      %p134 = scmp.ne.s32.totalorder %s123, %s126
      %p135 = scmp.eq.s32.totalorder %s15, 8
      %p136 = por %p134, %p135
      %p137 = scmp.ne.s32.totalorder %s126, %s127
      %p138 = scmp.eq.s32.totalorder %s15, 0
      %p139 = por %p137, %p138
      %p140 = scmp.ne.s32.totalorder %s126, %s127
      %p141 = scmp.eq.s32.totalorder %s16, 8
      %p142 = por %p140, %p141
      %p144 = scmp.ne.s32.totalorder %s127, %s143
      %p145 = scmp.eq.s32.totalorder %s16, 0
      %p146 = por %p144, %p145
      %s147 = ssub.s32 %s18, %s32
      %s148 = ssub.s32 %s17, %s36
      %s149 = sor.u32 %s147, %s148
      %p150 = scmp.eq.s32.totalorder %s149, 0
      %s152 = sadd.s32 %s151, 1
      %s153 = scalar_select %p150, %s151, %s152
      %p156 = pneg %p150
      %p157 = scmp.eq.s32.totalorder %s10, 8
      %p158 = por %p156, %p157
      %p159 = scmp.ne.s32.totalorder %s151, %s154
      %p160 = scmp.eq.s32.totalorder %s10, 0
      %p161 = por %p159, %p160
      %p162 = scmp.ne.s32.totalorder %s151, %s154
      %p163 = scmp.eq.s32.totalorder %s15, 8
      %p164 = por %p162, %p163
      %p165 = scmp.ne.s32.totalorder %s154, %s155
      %p166 = scmp.eq.s32.totalorder %s15, 0
      %p167 = por %p165, %p166
      %p168 = scmp.ne.s32.totalorder %s154, %s155
      %p169 = scmp.eq.s32.totalorder %s16, 8
      %p170 = por %p168, %p169
      %p172 = scmp.ne.s32.totalorder %s155, %s171
      %p173 = scmp.eq.s32.totalorder %s16, 0
      %p174 = por %p172, %p173
      %p175 = scmp.le.s32.totalorder 1, %s10
      %p176 = scmp.lt.s32.totalorder %s10, 10
      %p177 = pnand %p175, %p176
      %p178 = pneg %p177
      // Predicated region
      $region9: #{tower_forward.10} parent=5 // pred_check
        _
      $region10: #{tower_forward.10} parent=5 // pred_check_branch
        %180 = sbr.rel (%p177) target = $region12
      $region11: #{tower_forward.10} parent=5 // pred_region
        %s181 = ssub.s32 %s10, 1
      $region12: #{tower_forward.10} parent=5 // pred_fallthru
        _
      %p182 = scmp.lt.s32.totalorder %s10, 9
      // Predicated region
      $region13: #{tower_forward.10} parent=5 // pred_check
        %p183 = pneg %p182
      $region14: #{tower_forward.10} parent=5 // pred_check_branch
        %185 = sbr.rel (%p183) target = $region16
      $region15: #{tower_forward.10} parent=5 // pred_region
        // Predicated region
        $region17: #{tower_forward.10} parent=15 // pred_check
          %p186 = pneg %p51
        $region18: #{tower_forward.10} parent=15 // pred_check_branch
          %188 = sbr.rel (%p186) target = $region20
        $region19: #{tower_forward.10} parent=15 // pred_region
          %s189 = sand.u32 %s41, 1
          %s190 = sand.u32 %s41, 1
          %s191 = smul.addr %s190, 96
          %s192 = scalar_lea.vmem [#allocation3], %s191
          %s193 = smul.u32 4, %s18
          %s194 = smul.u32 6, %s19
          %s195 = smul.addr %s193, 18
          %s196 = sadd.s32 %s194, %s195
          %s197 = smul.addr %s196, 4
          %s198 = scalar_lea.vmem %s0, %s197
          // Predicated region
          $region21: #{tower_forward.10} parent=19 // pred_check
            _
          $region22: #{tower_forward.10} parent=19 // pred_check_branch
            %200 = sbr.rel (0) target = $region24
          $region23: #{tower_forward.10} parent=19 // pred_region
            // Predicated region
            $region25: #{tower_forward.10} parent=23 // pred_check
              _
            $region26: #{tower_forward.10} parent=23 // pred_check_branch
              %202 = sbr.rel (0) target = $region28
            $region27: #{tower_forward.10} parent=23 // pred_region
              loop: start=0, step=1, limit=1
              $region29: #{tower_forward.10} parent=27 // loop_pre_header
                _
              $region30: #{tower_forward.10} parent=27 // loop_header
                %s204 = sphi 0, %s208
                %p205 = scmp.ge.s32.totalorder %s204, 1
                %s209 = sphi %s198, %s198
                %s210 = sphi %s192, %s192
              $region31: #{tower_forward.10} parent=27 // loop_header_branch
                %207 = sbr.rel (%p205) target = $region35
              $region32: #{tower_forward.10} parent=27 // loop_body
                %v211 = vld [vmem:[%s209] sm:$0xff]
                %212 = vst [vmem:[%s210] sm:$0xff] %v211
                %v213 = vld [vmem:[%s209 + $0x8] sm:$0xff]
                %214 = vst [vmem:[%s210 + $0x8] sm:$0xff] %v213
                %v215 = vld [vmem:[%s209 + $0x10] sm:$0xff]
                %216 = vst [vmem:[%s210 + $0x10] sm:$0xff] %v215
                %v217 = vld [vmem:[%s209 + $0x48] sm:$0xff]
                %218 = vst [vmem:[%s210 + $0x18] sm:$0xff] %v217
                %v219 = vld [vmem:[%s209 + $0x50] sm:$0xff]
                %220 = vst [vmem:[%s210 + $0x20] sm:$0xff] %v219
                %v221 = vld [vmem:[%s209 + $0x58] sm:$0xff]
                %222 = vst [vmem:[%s210 + $0x28] sm:$0xff] %v221
                %v223 = vld [vmem:[%s209 + $0x90] sm:$0xff]
                %224 = vst [vmem:[%s210 + $0x30] sm:$0xff] %v223
                %v225 = vld [vmem:[%s209 + $0x98] sm:$0xff]
                %226 = vst [vmem:[%s210 + $0x38] sm:$0xff] %v225
                %v227 = vld [vmem:[%s209 + $0xa0] sm:$0xff]
                %228 = vst [vmem:[%s210 + $0x40] sm:$0xff] %v227
                %v229 = vld [vmem:[%s209 + $0xd8] sm:$0xff]
                %230 = vst [vmem:[%s210 + $0x48] sm:$0xff] %v229
                %v231 = vld [vmem:[%s209 + $0xe0] sm:$0xff]
                %232 = vst [vmem:[%s210 + $0x50] sm:$0xff] %v231
                %v233 = vld [vmem:[%s209 + $0xe8] sm:$0xff]
                %234 = vst [vmem:[%s210 + $0x58] sm:$0xff] %v233
              $region33: #{tower_forward.10} parent=27 // loop_footer
                %s208 = sadd.s32 1, %s204
              $region34: #{tower_forward.10} parent=27 // loop_footer_branch
                %203 = sbr.rel target = $region30
              $region35: #{tower_forward.10} parent=27 // loop_exit
                _
            $region28: #{tower_forward.10} parent=23 // pred_fallthru
              _
            // Predicated region
            $region36: #{tower_forward.10} parent=23 // pred_check
              _
            $region37: #{tower_forward.10} parent=23 // pred_check_branch
              %236 = sbr.rel target = $region39
            $region38: #{tower_forward.10} parent=23 // pred_region
              _
            $region39: #{tower_forward.10} parent=23 // pred_fallthru
              _
          $region24: #{tower_forward.10} parent=19 // pred_fallthru
            _
          %237 = vnop
        $region20: #{tower_forward.10} parent=15 // pred_fallthru
          _
        // Predicated region
        $region40: #{tower_forward.10} parent=15 // pred_check
          %p238 = pneg %p79
        $region41: #{tower_forward.10} parent=15 // pred_check_branch
          %240 = sbr.rel (%p238) target = $region43
        $region42: #{tower_forward.10} parent=15 // pred_region
          %s241 = sand.u32 %s69, 1
          %s242 = sand.u32 %s69, 1
          %s243 = smul.addr %s242, 384
          %s244 = scalar_lea.vmem [#allocation4], %s243
          %s245 = smul.u32 96, %s19
          %s246 = smul.addr %s245, 3
          %s247 = sadd.s32 %s17, %s246
          %s248 = smul.addr %s247, 4
          %s249 = scalar_lea.vmem %s1, %s248
          // Predicated region
          $region44: #{tower_forward.10} parent=42 // pred_check
            _
          $region45: #{tower_forward.10} parent=42 // pred_check_branch
            %251 = sbr.rel (0) target = $region47
          $region46: #{tower_forward.10} parent=42 // pred_region
            // Predicated region
            $region48: #{tower_forward.10} parent=46 // pred_check
              _
            $region49: #{tower_forward.10} parent=46 // pred_check_branch
              %253 = sbr.rel target = $region51
            $region50: #{tower_forward.10} parent=46 // pred_region
              // Predicated region
              $region63: #{tower_forward.10} parent=50 // pred_check
                _
              $region64: #{tower_forward.10} parent=50 // pred_check_branch
                %458 = sbr.rel (0) target = $region66
              $region65: #{tower_forward.10} parent=50 // pred_region
                loop: start=0, step=1, limit=1
                $region67: #{tower_forward.10} parent=65 // loop_pre_header
                  _
                $region68: #{tower_forward.10} parent=65 // loop_header
                  %s460 = sphi 0, %s464
                  %p461 = scmp.ge.s32.totalorder %s460, 1
                  %s465 = sphi %s249, %s249
                  %s466 = sphi %s244, %s244
                $region69: #{tower_forward.10} parent=65 // loop_header_branch
                  %463 = sbr.rel (%p461) target = $region73
                $region70: #{tower_forward.10} parent=65 // loop_body
                  _
                $region71: #{tower_forward.10} parent=65 // loop_footer
                  %s464 = sadd.s32 1, %s460
                $region72: #{tower_forward.10} parent=65 // loop_footer_branch
                  %459 = sbr.rel target = $region68
                $region73: #{tower_forward.10} parent=65 // loop_exit
                  _
                loop: start=0, step=1, limit=1
                $region74: #{tower_forward.10} parent=65 // loop_pre_header
                  _
                $region75: #{tower_forward.10} parent=65 // loop_header
                  %s469 = sphi 0, %s473
                  %p470 = scmp.ge.s32.totalorder %s469, 1
                  %s474 = sphi %s249, %s249
                  %s475 = sphi %s244, %s244
                $region76: #{tower_forward.10} parent=65 // loop_header_branch
                  %472 = sbr.rel (%p470) target = $region80
                $region77: #{tower_forward.10} parent=65 // loop_body
                  %v476 = vld [vmem:[%s474] sm:$0xf]
                  %477 = vst [vmem:[%s475] sm:$0xf] %v476
                  %v478 = vld [vmem:[%s474 + $0xc] sm:$0xf]
                  %479 = vst [vmem:[%s475 + $0x4] sm:$0xf] %v478
                  %v480 = vld [vmem:[%s474 + $0x18] sm:$0xf]
                  %481 = vst [vmem:[%s475 + $0x8] sm:$0xf] %v480
                  %v482 = vld [vmem:[%s474 + $0x24] sm:$0xf]
                  %483 = vst [vmem:[%s475 + $0xc] sm:$0xf] %v482
                  %v484 = vld [vmem:[%s474 + $0x30] sm:$0xf]
                  %485 = vst [vmem:[%s475 + $0x10] sm:$0xf] %v484
                  %v486 = vld [vmem:[%s474 + $0x3c] sm:$0xf]
                  %487 = vst [vmem:[%s475 + $0x14] sm:$0xf] %v486
                  %v488 = vld [vmem:[%s474 + $0x48] sm:$0xf]
                  %489 = vst [vmem:[%s475 + $0x18] sm:$0xf] %v488
                  %v490 = vld [vmem:[%s474 + $0x54] sm:$0xf]
                  %491 = vst [vmem:[%s475 + $0x1c] sm:$0xf] %v490
                  %v492 = vld [vmem:[%s474 + $0x60] sm:$0xf]
                  %493 = vst [vmem:[%s475 + $0x20] sm:$0xf] %v492
                  %v494 = vld [vmem:[%s474 + $0x6c] sm:$0xf]
                  %495 = vst [vmem:[%s475 + $0x24] sm:$0xf] %v494
                  %v496 = vld [vmem:[%s474 + $0x78] sm:$0xf]
                  %497 = vst [vmem:[%s475 + $0x28] sm:$0xf] %v496
                  %v498 = vld [vmem:[%s474 + $0x84] sm:$0xf]
                  %499 = vst [vmem:[%s475 + $0x2c] sm:$0xf] %v498
                  %v500 = vld [vmem:[%s474 + $0x90] sm:$0xf]
                  %501 = vst [vmem:[%s475 + $0x30] sm:$0xf] %v500
                  %v502 = vld [vmem:[%s474 + $0x9c] sm:$0xf]
                  %503 = vst [vmem:[%s475 + $0x34] sm:$0xf] %v502
                  %v504 = vld [vmem:[%s474 + $0xa8] sm:$0xf]
                  %505 = vst [vmem:[%s475 + $0x38] sm:$0xf] %v504
                  %v506 = vld [vmem:[%s474 + $0xb4] sm:$0xf]
                  %507 = vst [vmem:[%s475 + $0x3c] sm:$0xf] %v506
                  %v508 = vld [vmem:[%s474 + $0xc0] sm:$0xf]
                  %509 = vst [vmem:[%s475 + $0x40] sm:$0xf] %v508
                  %v510 = vld [vmem:[%s474 + $0xcc] sm:$0xf]
                  %511 = vst [vmem:[%s475 + $0x44] sm:$0xf] %v510
                  %v512 = vld [vmem:[%s474 + $0xd8] sm:$0xf]
                  %513 = vst [vmem:[%s475 + $0x48] sm:$0xf] %v512
                  %v514 = vld [vmem:[%s474 + $0xe4] sm:$0xf]
                  %515 = vst [vmem:[%s475 + $0x4c] sm:$0xf] %v514
                  %v516 = vld [vmem:[%s474 + $0xf0] sm:$0xf]
                  %517 = vst [vmem:[%s475 + $0x50] sm:$0xf] %v516
                  %v518 = vld [vmem:[%s474 + $0xfc] sm:$0xf]
                  %519 = vst [vmem:[%s475 + $0x54] sm:$0xf] %v518
                  %v520 = vld [vmem:[%s474 + $0x108] sm:$0xf]
                  %521 = vst [vmem:[%s475 + $0x58] sm:$0xf] %v520
                  %v522 = vld [vmem:[%s474 + $0x114] sm:$0xf]
                  %523 = vst [vmem:[%s475 + $0x5c] sm:$0xf] %v522
                  %v524 = vld [vmem:[%s474 + $0x120] sm:$0xf]
                  %525 = vst [vmem:[%s475 + $0x60] sm:$0xf] %v524
                  %v526 = vld [vmem:[%s474 + $0x12c] sm:$0xf]
                  %527 = vst [vmem:[%s475 + $0x64] sm:$0xf] %v526
                  %v528 = vld [vmem:[%s474 + $0x138] sm:$0xf]
                  %529 = vst [vmem:[%s475 + $0x68] sm:$0xf] %v528
                  %v530 = vld [vmem:[%s474 + $0x144] sm:$0xf]
                  %531 = vst [vmem:[%s475 + $0x6c] sm:$0xf] %v530
                  %v532 = vld [vmem:[%s474 + $0x150] sm:$0xf]
                  %533 = vst [vmem:[%s475 + $0x70] sm:$0xf] %v532
                  %v534 = vld [vmem:[%s474 + $0x15c] sm:$0xf]
                  %535 = vst [vmem:[%s475 + $0x74] sm:$0xf] %v534
                  %v536 = vld [vmem:[%s474 + $0x168] sm:$0xf]
                  %537 = vst [vmem:[%s475 + $0x78] sm:$0xf] %v536
                  %v538 = vld [vmem:[%s474 + $0x174] sm:$0xf]
                  %539 = vst [vmem:[%s475 + $0x7c] sm:$0xf] %v538
                  %v540 = vld [vmem:[%s474 + $0x180] sm:$0xf]
                  %541 = vst [vmem:[%s475 + $0x80] sm:$0xf] %v540
                  %v542 = vld [vmem:[%s474 + $0x18c] sm:$0xf]
                  %543 = vst [vmem:[%s475 + $0x84] sm:$0xf] %v542
                  %v544 = vld [vmem:[%s474 + $0x198] sm:$0xf]
                  %545 = vst [vmem:[%s475 + $0x88] sm:$0xf] %v544
                  %v546 = vld [vmem:[%s474 + $0x1a4] sm:$0xf]
                  %547 = vst [vmem:[%s475 + $0x8c] sm:$0xf] %v546
                  %v548 = vld [vmem:[%s474 + $0x1b0] sm:$0xf]
                  %549 = vst [vmem:[%s475 + $0x90] sm:$0xf] %v548
                  %v550 = vld [vmem:[%s474 + $0x1bc] sm:$0xf]
                  %551 = vst [vmem:[%s475 + $0x94] sm:$0xf] %v550
                  %v552 = vld [vmem:[%s474 + $0x1c8] sm:$0xf]
                  %553 = vst [vmem:[%s475 + $0x98] sm:$0xf] %v552
                  %v554 = vld [vmem:[%s474 + $0x1d4] sm:$0xf]
                  %555 = vst [vmem:[%s475 + $0x9c] sm:$0xf] %v554
                  %v556 = vld [vmem:[%s474 + $0x1e0] sm:$0xf]
                  %557 = vst [vmem:[%s475 + $0xa0] sm:$0xf] %v556
                  %v558 = vld [vmem:[%s474 + $0x1ec] sm:$0xf]
                  %559 = vst [vmem:[%s475 + $0xa4] sm:$0xf] %v558
                  %v560 = vld [vmem:[%s474 + $0x1f8] sm:$0xf]
                  %561 = vst [vmem:[%s475 + $0xa8] sm:$0xf] %v560
                  %v562 = vld [vmem:[%s474 + $0x204] sm:$0xf]
                  %563 = vst [vmem:[%s475 + $0xac] sm:$0xf] %v562
                  %v564 = vld [vmem:[%s474 + $0x210] sm:$0xf]
                  %565 = vst [vmem:[%s475 + $0xb0] sm:$0xf] %v564
                  %v566 = vld [vmem:[%s474 + $0x21c] sm:$0xf]
                  %567 = vst [vmem:[%s475 + $0xb4] sm:$0xf] %v566
                  %v568 = vld [vmem:[%s474 + $0x228] sm:$0xf]
                  %569 = vst [vmem:[%s475 + $0xb8] sm:$0xf] %v568
                  %v570 = vld [vmem:[%s474 + $0x234] sm:$0xf]
                  %571 = vst [vmem:[%s475 + $0xbc] sm:$0xf] %v570
                  %v572 = vld [vmem:[%s474 + $0x240] sm:$0xf]
                  %573 = vst [vmem:[%s475 + $0xc0] sm:$0xf] %v572
                  %v574 = vld [vmem:[%s474 + $0x24c] sm:$0xf]
                  %575 = vst [vmem:[%s475 + $0xc4] sm:$0xf] %v574
                  %v576 = vld [vmem:[%s474 + $0x258] sm:$0xf]
                  %577 = vst [vmem:[%s475 + $0xc8] sm:$0xf] %v576
                  %v578 = vld [vmem:[%s474 + $0x264] sm:$0xf]
                  %579 = vst [vmem:[%s475 + $0xcc] sm:$0xf] %v578
                  %v580 = vld [vmem:[%s474 + $0x270] sm:$0xf]
                  %581 = vst [vmem:[%s475 + $0xd0] sm:$0xf] %v580
                  %v582 = vld [vmem:[%s474 + $0x27c] sm:$0xf]
                  %583 = vst [vmem:[%s475 + $0xd4] sm:$0xf] %v582
                  %v584 = vld [vmem:[%s474 + $0x288] sm:$0xf]
                  %585 = vst [vmem:[%s475 + $0xd8] sm:$0xf] %v584
                  %v586 = vld [vmem:[%s474 + $0x294] sm:$0xf]
                  %587 = vst [vmem:[%s475 + $0xdc] sm:$0xf] %v586
                  %v588 = vld [vmem:[%s474 + $0x2a0] sm:$0xf]
                  %589 = vst [vmem:[%s475 + $0xe0] sm:$0xf] %v588
                  %v590 = vld [vmem:[%s474 + $0x2ac] sm:$0xf]
                  %591 = vst [vmem:[%s475 + $0xe4] sm:$0xf] %v590
                  %v592 = vld [vmem:[%s474 + $0x2b8] sm:$0xf]
                  %593 = vst [vmem:[%s475 + $0xe8] sm:$0xf] %v592
                  %v594 = vld [vmem:[%s474 + $0x2c4] sm:$0xf]
                  %595 = vst [vmem:[%s475 + $0xec] sm:$0xf] %v594
                  %v596 = vld [vmem:[%s474 + $0x2d0] sm:$0xf]
                  %597 = vst [vmem:[%s475 + $0xf0] sm:$0xf] %v596
                  %v598 = vld [vmem:[%s474 + $0x2dc] sm:$0xf]
                  %599 = vst [vmem:[%s475 + $0xf4] sm:$0xf] %v598
                  %v600 = vld [vmem:[%s474 + $0x2e8] sm:$0xf]
                  %601 = vst [vmem:[%s475 + $0xf8] sm:$0xf] %v600
                  %v602 = vld [vmem:[%s474 + $0x2f4] sm:$0xf]
                  %603 = vst [vmem:[%s475 + $0xfc] sm:$0xf] %v602
                  %v604 = vld [vmem:[%s474 + $0x300] sm:$0xf]
                  %605 = vst [vmem:[%s475 + $0x100] sm:$0xf] %v604
                  %v606 = vld [vmem:[%s474 + $0x30c] sm:$0xf]
                  %607 = vst [vmem:[%s475 + $0x104] sm:$0xf] %v606
                  %v608 = vld [vmem:[%s474 + $0x318] sm:$0xf]
                  %609 = vst [vmem:[%s475 + $0x108] sm:$0xf] %v608
                  %v610 = vld [vmem:[%s474 + $0x324] sm:$0xf]
                  %611 = vst [vmem:[%s475 + $0x10c] sm:$0xf] %v610
                  %v612 = vld [vmem:[%s474 + $0x330] sm:$0xf]
                  %613 = vst [vmem:[%s475 + $0x110] sm:$0xf] %v612
                  %v614 = vld [vmem:[%s474 + $0x33c] sm:$0xf]
                  %615 = vst [vmem:[%s475 + $0x114] sm:$0xf] %v614
                  %v616 = vld [vmem:[%s474 + $0x348] sm:$0xf]
                  %617 = vst [vmem:[%s475 + $0x118] sm:$0xf] %v616
                  %v618 = vld [vmem:[%s474 + $0x354] sm:$0xf]
                  %619 = vst [vmem:[%s475 + $0x11c] sm:$0xf] %v618
                  %v620 = vld [vmem:[%s474 + $0x360] sm:$0xf]
                  %621 = vst [vmem:[%s475 + $0x120] sm:$0xf] %v620
                  %v622 = vld [vmem:[%s474 + $0x36c] sm:$0xf]
                  %623 = vst [vmem:[%s475 + $0x124] sm:$0xf] %v622
                  %v624 = vld [vmem:[%s474 + $0x378] sm:$0xf]
                  %625 = vst [vmem:[%s475 + $0x128] sm:$0xf] %v624
                  %v626 = vld [vmem:[%s474 + $0x384] sm:$0xf]
                  %627 = vst [vmem:[%s475 + $0x12c] sm:$0xf] %v626
                  %v628 = vld [vmem:[%s474 + $0x390] sm:$0xf]
                  %629 = vst [vmem:[%s475 + $0x130] sm:$0xf] %v628
                  %v630 = vld [vmem:[%s474 + $0x39c] sm:$0xf]
                  %631 = vst [vmem:[%s475 + $0x134] sm:$0xf] %v630
                  %v632 = vld [vmem:[%s474 + $0x3a8] sm:$0xf]
                  %633 = vst [vmem:[%s475 + $0x138] sm:$0xf] %v632
                  %v634 = vld [vmem:[%s474 + $0x3b4] sm:$0xf]
                  %635 = vst [vmem:[%s475 + $0x13c] sm:$0xf] %v634
                  %v636 = vld [vmem:[%s474 + $0x3c0] sm:$0xf]
                  %637 = vst [vmem:[%s475 + $0x140] sm:$0xf] %v636
                  %v638 = vld [vmem:[%s474 + $0x3cc] sm:$0xf]
                  %639 = vst [vmem:[%s475 + $0x144] sm:$0xf] %v638
                  %v640 = vld [vmem:[%s474 + $0x3d8] sm:$0xf]
                  %641 = vst [vmem:[%s475 + $0x148] sm:$0xf] %v640
                  %v642 = vld [vmem:[%s474 + $0x3e4] sm:$0xf]
                  %643 = vst [vmem:[%s475 + $0x14c] sm:$0xf] %v642
                  %v644 = vld [vmem:[%s474 + $0x3f0] sm:$0xf]
                  %645 = vst [vmem:[%s475 + $0x150] sm:$0xf] %v644
                  %v646 = vld [vmem:[%s474 + $0x3fc] sm:$0xf]
                  %647 = vst [vmem:[%s475 + $0x154] sm:$0xf] %v646
                  %v648 = vld [vmem:[%s474 + $0x408] sm:$0xf]
                  %649 = vst [vmem:[%s475 + $0x158] sm:$0xf] %v648
                  %v650 = vld [vmem:[%s474 + $0x414] sm:$0xf]
                  %651 = vst [vmem:[%s475 + $0x15c] sm:$0xf] %v650
                  %v652 = vld [vmem:[%s474 + $0x420] sm:$0xf]
                  %653 = vst [vmem:[%s475 + $0x160] sm:$0xf] %v652
                  %v654 = vld [vmem:[%s474 + $0x42c] sm:$0xf]
                  %655 = vst [vmem:[%s475 + $0x164] sm:$0xf] %v654
                  %v656 = vld [vmem:[%s474 + $0x438] sm:$0xf]
                  %657 = vst [vmem:[%s475 + $0x168] sm:$0xf] %v656
                  %v658 = vld [vmem:[%s474 + $0x444] sm:$0xf]
                  %659 = vst [vmem:[%s475 + $0x16c] sm:$0xf] %v658
                  %v660 = vld [vmem:[%s474 + $0x450] sm:$0xf]
                  %661 = vst [vmem:[%s475 + $0x170] sm:$0xf] %v660
                  %v662 = vld [vmem:[%s474 + $0x45c] sm:$0xf]
                  %663 = vst [vmem:[%s475 + $0x174] sm:$0xf] %v662
                  %v664 = vld [vmem:[%s474 + $0x468] sm:$0xf]
                  %665 = vst [vmem:[%s475 + $0x178] sm:$0xf] %v664
                  %v666 = vld [vmem:[%s474 + $0x474] sm:$0xf]
                  %667 = vst [vmem:[%s475 + $0x17c] sm:$0xf] %v666
                $region78: #{tower_forward.10} parent=65 // loop_footer
                  %s473 = sadd.s32 1, %s469
                $region79: #{tower_forward.10} parent=65 // loop_footer_branch
                  %468 = sbr.rel target = $region75
                $region80: #{tower_forward.10} parent=65 // loop_exit
                  _
              $region66: #{tower_forward.10} parent=50 // pred_fallthru
                _
            $region51: #{tower_forward.10} parent=46 // pred_fallthru
              _
            // Predicated region
            $region52: #{tower_forward.10} parent=46 // pred_check
              _
            $region53: #{tower_forward.10} parent=46 // pred_check_branch
              %255 = sbr.rel (0) target = $region55
            $region54: #{tower_forward.10} parent=46 // pred_region
              loop: start=0, step=1, limit=1
              $region56: #{tower_forward.10} parent=54 // loop_pre_header
                _
              $region57: #{tower_forward.10} parent=54 // loop_header
                %s258 = sphi 0, %s262
                %p259 = scmp.ge.s32.totalorder %s258, 1
                %s263 = sphi %s249, %s249
                %s264 = sphi %s244, %s244
              $region58: #{tower_forward.10} parent=54 // loop_header_branch
                %261 = sbr.rel (%p259) target = $region62
              $region59: #{tower_forward.10} parent=54 // loop_body
                %v265 = vld [vmem:[%s263] sm:$0xf]
                %266 = vst [vmem:[%s264] sm:$0xf] %v265
                %v267 = vld [vmem:[%s263 + $0xc] sm:$0xf]
                %268 = vst [vmem:[%s264 + $0x4] sm:$0xf] %v267
                %v269 = vld [vmem:[%s263 + $0x18] sm:$0xf]
                %270 = vst [vmem:[%s264 + $0x8] sm:$0xf] %v269
                %v271 = vld [vmem:[%s263 + $0x24] sm:$0xf]
                %272 = vst [vmem:[%s264 + $0xc] sm:$0xf] %v271
                %v273 = vld [vmem:[%s263 + $0x30] sm:$0xf]
                %274 = vst [vmem:[%s264 + $0x10] sm:$0xf] %v273
                %v275 = vld [vmem:[%s263 + $0x3c] sm:$0xf]
                %276 = vst [vmem:[%s264 + $0x14] sm:$0xf] %v275
                %v277 = vld [vmem:[%s263 + $0x48] sm:$0xf]
                %278 = vst [vmem:[%s264 + $0x18] sm:$0xf] %v277
                %v279 = vld [vmem:[%s263 + $0x54] sm:$0xf]
                %280 = vst [vmem:[%s264 + $0x1c] sm:$0xf] %v279
                %v281 = vld [vmem:[%s263 + $0x60] sm:$0xf]
                %282 = vst [vmem:[%s264 + $0x20] sm:$0xf] %v281
                %v283 = vld [vmem:[%s263 + $0x6c] sm:$0xf]
                %284 = vst [vmem:[%s264 + $0x24] sm:$0xf] %v283
                %v285 = vld [vmem:[%s263 + $0x78] sm:$0xf]
                %286 = vst [vmem:[%s264 + $0x28] sm:$0xf] %v285
                %v287 = vld [vmem:[%s263 + $0x84] sm:$0xf]
                %288 = vst [vmem:[%s264 + $0x2c] sm:$0xf] %v287
                %v289 = vld [vmem:[%s263 + $0x90] sm:$0xf]
                %290 = vst [vmem:[%s264 + $0x30] sm:$0xf] %v289
                %v291 = vld [vmem:[%s263 + $0x9c] sm:$0xf]
                %292 = vst [vmem:[%s264 + $0x34] sm:$0xf] %v291
                %v293 = vld [vmem:[%s263 + $0xa8] sm:$0xf]
                %294 = vst [vmem:[%s264 + $0x38] sm:$0xf] %v293
                %v295 = vld [vmem:[%s263 + $0xb4] sm:$0xf]
                %296 = vst [vmem:[%s264 + $0x3c] sm:$0xf] %v295
                %v297 = vld [vmem:[%s263 + $0xc0] sm:$0xf]
                %298 = vst [vmem:[%s264 + $0x40] sm:$0xf] %v297
                %v299 = vld [vmem:[%s263 + $0xcc] sm:$0xf]
                %300 = vst [vmem:[%s264 + $0x44] sm:$0xf] %v299
                %v301 = vld [vmem:[%s263 + $0xd8] sm:$0xf]
                %302 = vst [vmem:[%s264 + $0x48] sm:$0xf] %v301
                %v303 = vld [vmem:[%s263 + $0xe4] sm:$0xf]
                %304 = vst [vmem:[%s264 + $0x4c] sm:$0xf] %v303
                %v305 = vld [vmem:[%s263 + $0xf0] sm:$0xf]
                %306 = vst [vmem:[%s264 + $0x50] sm:$0xf] %v305
                %v307 = vld [vmem:[%s263 + $0xfc] sm:$0xf]
                %308 = vst [vmem:[%s264 + $0x54] sm:$0xf] %v307
                %v309 = vld [vmem:[%s263 + $0x108] sm:$0xf]
                %310 = vst [vmem:[%s264 + $0x58] sm:$0xf] %v309
                %v311 = vld [vmem:[%s263 + $0x114] sm:$0xf]
                %312 = vst [vmem:[%s264 + $0x5c] sm:$0xf] %v311
                %v313 = vld [vmem:[%s263 + $0x120] sm:$0xf]
                %314 = vst [vmem:[%s264 + $0x60] sm:$0xf] %v313
                %v315 = vld [vmem:[%s263 + $0x12c] sm:$0xf]
                %316 = vst [vmem:[%s264 + $0x64] sm:$0xf] %v315
                %v317 = vld [vmem:[%s263 + $0x138] sm:$0xf]
                %318 = vst [vmem:[%s264 + $0x68] sm:$0xf] %v317
                %v319 = vld [vmem:[%s263 + $0x144] sm:$0xf]
                %320 = vst [vmem:[%s264 + $0x6c] sm:$0xf] %v319
                %v321 = vld [vmem:[%s263 + $0x150] sm:$0xf]
                %322 = vst [vmem:[%s264 + $0x70] sm:$0xf] %v321
                %v323 = vld [vmem:[%s263 + $0x15c] sm:$0xf]
                %324 = vst [vmem:[%s264 + $0x74] sm:$0xf] %v323
                %v325 = vld [vmem:[%s263 + $0x168] sm:$0xf]
                %326 = vst [vmem:[%s264 + $0x78] sm:$0xf] %v325
                %v327 = vld [vmem:[%s263 + $0x174] sm:$0xf]
                %328 = vst [vmem:[%s264 + $0x7c] sm:$0xf] %v327
                %v329 = vld [vmem:[%s263 + $0x180] sm:$0xf]
                %330 = vst [vmem:[%s264 + $0x80] sm:$0xf] %v329
                %v331 = vld [vmem:[%s263 + $0x18c] sm:$0xf]
                %332 = vst [vmem:[%s264 + $0x84] sm:$0xf] %v331
                %v333 = vld [vmem:[%s263 + $0x198] sm:$0xf]
                %334 = vst [vmem:[%s264 + $0x88] sm:$0xf] %v333
                %v335 = vld [vmem:[%s263 + $0x1a4] sm:$0xf]
                %336 = vst [vmem:[%s264 + $0x8c] sm:$0xf] %v335
                %v337 = vld [vmem:[%s263 + $0x1b0] sm:$0xf]
                %338 = vst [vmem:[%s264 + $0x90] sm:$0xf] %v337
                %v339 = vld [vmem:[%s263 + $0x1bc] sm:$0xf]
                %340 = vst [vmem:[%s264 + $0x94] sm:$0xf] %v339
                %v341 = vld [vmem:[%s263 + $0x1c8] sm:$0xf]
                %342 = vst [vmem:[%s264 + $0x98] sm:$0xf] %v341
                %v343 = vld [vmem:[%s263 + $0x1d4] sm:$0xf]
                %344 = vst [vmem:[%s264 + $0x9c] sm:$0xf] %v343
                %v345 = vld [vmem:[%s263 + $0x1e0] sm:$0xf]
                %346 = vst [vmem:[%s264 + $0xa0] sm:$0xf] %v345
                %v347 = vld [vmem:[%s263 + $0x1ec] sm:$0xf]
                %348 = vst [vmem:[%s264 + $0xa4] sm:$0xf] %v347
                %v349 = vld [vmem:[%s263 + $0x1f8] sm:$0xf]
                %350 = vst [vmem:[%s264 + $0xa8] sm:$0xf] %v349
                %v351 = vld [vmem:[%s263 + $0x204] sm:$0xf]
                %352 = vst [vmem:[%s264 + $0xac] sm:$0xf] %v351
                %v353 = vld [vmem:[%s263 + $0x210] sm:$0xf]
                %354 = vst [vmem:[%s264 + $0xb0] sm:$0xf] %v353
                %v355 = vld [vmem:[%s263 + $0x21c] sm:$0xf]
                %356 = vst [vmem:[%s264 + $0xb4] sm:$0xf] %v355
                %v357 = vld [vmem:[%s263 + $0x228] sm:$0xf]
                %358 = vst [vmem:[%s264 + $0xb8] sm:$0xf] %v357
                %v359 = vld [vmem:[%s263 + $0x234] sm:$0xf]
                %360 = vst [vmem:[%s264 + $0xbc] sm:$0xf] %v359
                %v361 = vld [vmem:[%s263 + $0x240] sm:$0xf]
                %362 = vst [vmem:[%s264 + $0xc0] sm:$0xf] %v361
                %v363 = vld [vmem:[%s263 + $0x24c] sm:$0xf]
                %364 = vst [vmem:[%s264 + $0xc4] sm:$0xf] %v363
                %v365 = vld [vmem:[%s263 + $0x258] sm:$0xf]
                %366 = vst [vmem:[%s264 + $0xc8] sm:$0xf] %v365
                %v367 = vld [vmem:[%s263 + $0x264] sm:$0xf]
                %368 = vst [vmem:[%s264 + $0xcc] sm:$0xf] %v367
                %v369 = vld [vmem:[%s263 + $0x270] sm:$0xf]
                %370 = vst [vmem:[%s264 + $0xd0] sm:$0xf] %v369
                %v371 = vld [vmem:[%s263 + $0x27c] sm:$0xf]
                %372 = vst [vmem:[%s264 + $0xd4] sm:$0xf] %v371
                %v373 = vld [vmem:[%s263 + $0x288] sm:$0xf]
                %374 = vst [vmem:[%s264 + $0xd8] sm:$0xf] %v373
                %v375 = vld [vmem:[%s263 + $0x294] sm:$0xf]
                %376 = vst [vmem:[%s264 + $0xdc] sm:$0xf] %v375
                %v377 = vld [vmem:[%s263 + $0x2a0] sm:$0xf]
                %378 = vst [vmem:[%s264 + $0xe0] sm:$0xf] %v377
                %v379 = vld [vmem:[%s263 + $0x2ac] sm:$0xf]
                %380 = vst [vmem:[%s264 + $0xe4] sm:$0xf] %v379
                %v381 = vld [vmem:[%s263 + $0x2b8] sm:$0xf]
                %382 = vst [vmem:[%s264 + $0xe8] sm:$0xf] %v381
                %v383 = vld [vmem:[%s263 + $0x2c4] sm:$0xf]
                %384 = vst [vmem:[%s264 + $0xec] sm:$0xf] %v383
                %v385 = vld [vmem:[%s263 + $0x2d0] sm:$0xf]
                %386 = vst [vmem:[%s264 + $0xf0] sm:$0xf] %v385
                %v387 = vld [vmem:[%s263 + $0x2dc] sm:$0xf]
                %388 = vst [vmem:[%s264 + $0xf4] sm:$0xf] %v387
                %v389 = vld [vmem:[%s263 + $0x2e8] sm:$0xf]
                %390 = vst [vmem:[%s264 + $0xf8] sm:$0xf] %v389
                %v391 = vld [vmem:[%s263 + $0x2f4] sm:$0xf]
                %392 = vst [vmem:[%s264 + $0xfc] sm:$0xf] %v391
                %v393 = vld [vmem:[%s263 + $0x300] sm:$0xf]
                %394 = vst [vmem:[%s264 + $0x100] sm:$0xf] %v393
                %v395 = vld [vmem:[%s263 + $0x30c] sm:$0xf]
                %396 = vst [vmem:[%s264 + $0x104] sm:$0xf] %v395
                %v397 = vld [vmem:[%s263 + $0x318] sm:$0xf]
                %398 = vst [vmem:[%s264 + $0x108] sm:$0xf] %v397
                %v399 = vld [vmem:[%s263 + $0x324] sm:$0xf]
                %400 = vst [vmem:[%s264 + $0x10c] sm:$0xf] %v399
                %v401 = vld [vmem:[%s263 + $0x330] sm:$0xf]
                %402 = vst [vmem:[%s264 + $0x110] sm:$0xf] %v401
                %v403 = vld [vmem:[%s263 + $0x33c] sm:$0xf]
                %404 = vst [vmem:[%s264 + $0x114] sm:$0xf] %v403
                %v405 = vld [vmem:[%s263 + $0x348] sm:$0xf]
                %406 = vst [vmem:[%s264 + $0x118] sm:$0xf] %v405
                %v407 = vld [vmem:[%s263 + $0x354] sm:$0xf]
                %408 = vst [vmem:[%s264 + $0x11c] sm:$0xf] %v407
                %v409 = vld [vmem:[%s263 + $0x360] sm:$0xf]
                %410 = vst [vmem:[%s264 + $0x120] sm:$0xf] %v409
                %v411 = vld [vmem:[%s263 + $0x36c] sm:$0xf]
                %412 = vst [vmem:[%s264 + $0x124] sm:$0xf] %v411
                %v413 = vld [vmem:[%s263 + $0x378] sm:$0xf]
                %414 = vst [vmem:[%s264 + $0x128] sm:$0xf] %v413
                %v415 = vld [vmem:[%s263 + $0x384] sm:$0xf]
                %416 = vst [vmem:[%s264 + $0x12c] sm:$0xf] %v415
                %v417 = vld [vmem:[%s263 + $0x390] sm:$0xf]
                %418 = vst [vmem:[%s264 + $0x130] sm:$0xf] %v417
                %v419 = vld [vmem:[%s263 + $0x39c] sm:$0xf]
                %420 = vst [vmem:[%s264 + $0x134] sm:$0xf] %v419
                %v421 = vld [vmem:[%s263 + $0x3a8] sm:$0xf]
                %422 = vst [vmem:[%s264 + $0x138] sm:$0xf] %v421
                %v423 = vld [vmem:[%s263 + $0x3b4] sm:$0xf]
                %424 = vst [vmem:[%s264 + $0x13c] sm:$0xf] %v423
                %v425 = vld [vmem:[%s263 + $0x3c0] sm:$0xf]
                %426 = vst [vmem:[%s264 + $0x140] sm:$0xf] %v425
                %v427 = vld [vmem:[%s263 + $0x3cc] sm:$0xf]
                %428 = vst [vmem:[%s264 + $0x144] sm:$0xf] %v427
                %v429 = vld [vmem:[%s263 + $0x3d8] sm:$0xf]
                %430 = vst [vmem:[%s264 + $0x148] sm:$0xf] %v429
                %v431 = vld [vmem:[%s263 + $0x3e4] sm:$0xf]
                %432 = vst [vmem:[%s264 + $0x14c] sm:$0xf] %v431
                %v433 = vld [vmem:[%s263 + $0x3f0] sm:$0xf]
                %434 = vst [vmem:[%s264 + $0x150] sm:$0xf] %v433
                %v435 = vld [vmem:[%s263 + $0x3fc] sm:$0xf]
                %436 = vst [vmem:[%s264 + $0x154] sm:$0xf] %v435
                %v437 = vld [vmem:[%s263 + $0x408] sm:$0xf]
                %438 = vst [vmem:[%s264 + $0x158] sm:$0xf] %v437
                %v439 = vld [vmem:[%s263 + $0x414] sm:$0xf]
                %440 = vst [vmem:[%s264 + $0x15c] sm:$0xf] %v439
                %v441 = vld [vmem:[%s263 + $0x420] sm:$0xf]
                %442 = vst [vmem:[%s264 + $0x160] sm:$0xf] %v441
                %v443 = vld [vmem:[%s263 + $0x42c] sm:$0xf]
                %444 = vst [vmem:[%s264 + $0x164] sm:$0xf] %v443
                %v445 = vld [vmem:[%s263 + $0x438] sm:$0xf]
                %446 = vst [vmem:[%s264 + $0x168] sm:$0xf] %v445
                %v447 = vld [vmem:[%s263 + $0x444] sm:$0xf]
                %448 = vst [vmem:[%s264 + $0x16c] sm:$0xf] %v447
                %v449 = vld [vmem:[%s263 + $0x450] sm:$0xf]
                %450 = vst [vmem:[%s264 + $0x170] sm:$0xf] %v449
                %v451 = vld [vmem:[%s263 + $0x45c] sm:$0xf]
                %452 = vst [vmem:[%s264 + $0x174] sm:$0xf] %v451
                %v453 = vld [vmem:[%s263 + $0x468] sm:$0xf]
                %454 = vst [vmem:[%s264 + $0x178] sm:$0xf] %v453
                %v455 = vld [vmem:[%s263 + $0x474] sm:$0xf]
                %456 = vst [vmem:[%s264 + $0x17c] sm:$0xf] %v455
              $region60: #{tower_forward.10} parent=54 // loop_footer
                %s262 = sadd.s32 1, %s258
              $region61: #{tower_forward.10} parent=54 // loop_footer_branch
                %257 = sbr.rel target = $region57
              $region62: #{tower_forward.10} parent=54 // loop_exit
                _
            $region55: #{tower_forward.10} parent=46 // pred_fallthru
              _
          $region47: #{tower_forward.10} parent=42 // pred_fallthru
            _
          %668 = vnop
        $region43: #{tower_forward.10} parent=15 // pred_fallthru
          _
        // Predicated region
        $region81: #{tower_forward.10} parent=15 // pred_check
          %p669 = pneg %p105
        $region82: #{tower_forward.10} parent=15 // pred_check_branch
          %671 = sbr.rel (%p669) target = $region84
        $region83: #{tower_forward.10} parent=15 // pred_region
          %p672 = scmp.lt.s32.totalorder %s17, 2
          %s673 = scalar_select %p672, %s17, 2
          %s674 = scalar_lea.vmem %s2, %s673
        $region84: #{tower_forward.10} parent=15 // pred_fallthru
          _
        // Predicated region
        $region85: #{tower_forward.10} parent=15 // pred_check
          %p675 = pneg %p133
        $region86: #{tower_forward.10} parent=15 // pred_check_branch
          %677 = sbr.rel (%p675) target = $region88
        $region87: #{tower_forward.10} parent=15 // pred_region
          %s678 = sand.u32 %s123, 1
          %s679 = sand.u32 %s123, 1
          %s680 = smul.addr %s679, 32
          %s681 = scalar_lea.vmem [#allocation5], %s680
          %s682 = smul.u32 4, %s18
          %s683 = smul.addr %s682, 3
          %s684 = sadd.s32 %s17, %s683
          %s685 = smul.addr %s684, 8
          %s686 = scalar_lea.vmem %s3, %s685
          // Predicated region
          $region89: #{tower_forward.10} parent=87 // pred_check
            _
          $region90: #{tower_forward.10} parent=87 // pred_check_branch
            %688 = sbr.rel (0) target = $region92
          $region91: #{tower_forward.10} parent=87 // pred_region
            // Predicated region
            $region93: #{tower_forward.10} parent=91 // pred_check
              _
            $region94: #{tower_forward.10} parent=91 // pred_check_branch
              %690 = sbr.rel (0) target = $region96
            $region95: #{tower_forward.10} parent=91 // pred_region
              // Predicated region
              $region108: #{tower_forward.10} parent=95 // pred_check
                _
              $region109: #{tower_forward.10} parent=95 // pred_check_branch
                %711 = sbr.rel (0) target = $region111
              $region110: #{tower_forward.10} parent=95 // pred_region
                loop: start=0, step=1, limit=1
                $region112: #{tower_forward.10} parent=110 // loop_pre_header
                  _
                $region113: #{tower_forward.10} parent=110 // loop_header
                  %s713 = sphi 0, %s717
                  %p714 = scmp.ge.s32.totalorder %s713, 1
                  %s718 = sphi %s686, %s686
                  %s719 = sphi %s681, %s681
                $region114: #{tower_forward.10} parent=110 // loop_header_branch
                  %716 = sbr.rel (%p714) target = $region118
                $region115: #{tower_forward.10} parent=110 // loop_body
                  %v720 = vld [vmem:[%s718] sm:$0xff]
                  %721 = vst [vmem:[%s719] sm:$0xff] %v720
                  %v722 = vld [vmem:[%s718 + $0x18] sm:$0xff]
                  %723 = vst [vmem:[%s719 + $0x8] sm:$0xff] %v722
                  %v724 = vld [vmem:[%s718 + $0x30] sm:$0xff]
                  %725 = vst [vmem:[%s719 + $0x10] sm:$0xff] %v724
                  %v726 = vld [vmem:[%s718 + $0x48] sm:$0xff]
                  %727 = vst [vmem:[%s719 + $0x18] sm:$0xff] %v726
                $region116: #{tower_forward.10} parent=110 // loop_footer
                  %s717 = sadd.s32 1, %s713
                $region117: #{tower_forward.10} parent=110 // loop_footer_branch
                  %712 = sbr.rel target = $region113
                $region118: #{tower_forward.10} parent=110 // loop_exit
                  _
              $region111: #{tower_forward.10} parent=95 // pred_fallthru
                _
              // Predicated region
              $region119: #{tower_forward.10} parent=95 // pred_check
                _
              $region120: #{tower_forward.10} parent=95 // pred_check_branch
                %729 = sbr.rel target = $region122
              $region121: #{tower_forward.10} parent=95 // pred_region
                _
              $region122: #{tower_forward.10} parent=95 // pred_fallthru
                _
            $region96: #{tower_forward.10} parent=91 // pred_fallthru
              _
            // Predicated region
            $region97: #{tower_forward.10} parent=91 // pred_check
              _
            $region98: #{tower_forward.10} parent=91 // pred_check_branch
              %692 = sbr.rel target = $region100
            $region99: #{tower_forward.10} parent=91 // pred_region
              loop: start=0, step=1, limit=1
              $region101: #{tower_forward.10} parent=99 // loop_pre_header
                _
              $region102: #{tower_forward.10} parent=99 // loop_header
                %s695 = sphi 0, %s699
                %p696 = scmp.ge.s32.totalorder %s695, 1
                %s700 = sphi %s686, %s686
                %s701 = sphi %s681, %s681
              $region103: #{tower_forward.10} parent=99 // loop_header_branch
                %698 = sbr.rel (%p696) target = $region107
              $region104: #{tower_forward.10} parent=99 // loop_body
                %v702 = vld [vmem:[%s700] sm:$0xff]
                %703 = vst [vmem:[%s701] sm:$0xff] %v702
                %v704 = vld [vmem:[%s700 + $0x18] sm:$0xff]
                %705 = vst [vmem:[%s701 + $0x8] sm:$0xff] %v704
                %v706 = vld [vmem:[%s700 + $0x30] sm:$0xff]
                %707 = vst [vmem:[%s701 + $0x10] sm:$0xff] %v706
                %v708 = vld [vmem:[%s700 + $0x48] sm:$0xff]
                %709 = vst [vmem:[%s701 + $0x18] sm:$0xff] %v708
              $region105: #{tower_forward.10} parent=99 // loop_footer
                %s699 = sadd.s32 1, %s695
              $region106: #{tower_forward.10} parent=99 // loop_footer_branch
                %694 = sbr.rel target = $region102
              $region107: #{tower_forward.10} parent=99 // loop_exit
                _
            $region100: #{tower_forward.10} parent=91 // pred_fallthru
              _
          $region92: #{tower_forward.10} parent=87 // pred_fallthru
            _
          %730 = vnop
        $region88: #{tower_forward.10} parent=15 // pred_fallthru
          _
      $region16: #{tower_forward.10} parent=5 // pred_fallthru
        _
      %p731 = scmp.le.s32.totalorder 1, %s10
      %p732 = scmp.lt.s32.totalorder %s10, 10
      %p733 = pnand %p731, %p732
      %p734 = pneg %p733
      // Predicated region
      $region123: #{tower_forward.10} parent=5 // pred_check
        _
      $region124: #{tower_forward.10} parent=5 // pred_check_branch
        %736 = sbr.rel (%p733) target = $region126
      $region125: #{tower_forward.10} parent=5 // pred_region
        %s737 = ssub.s32 %s10, 1
        %s738 = sand.u32 %s44, 1
        %s739 = sand.u32 %s44, 1
        %s740 = smul.addr %s739, 96
        %s741 = scalar_lea.vmem [#allocation3], %s740
        // Predicated region
        $region127: #{tower_forward.10} parent=125 // pred_check
          %p742 = pneg %p57
        $region128: #{tower_forward.10} parent=125 // pred_check_branch
          %744 = sbr.rel (%p742) target = $region130
        $region129: #{tower_forward.10} parent=125 // pred_region
          _
        $region130: #{tower_forward.10} parent=125 // pred_fallthru
          _
        %s745 = sand.u32 %s72, 1
        %s746 = sand.u32 %s72, 1
        %s747 = smul.addr %s746, 384
        %s748 = scalar_lea.vmem [#allocation4], %s747
        // Predicated region
        $region131: #{tower_forward.10} parent=125 // pred_check
          %p749 = pneg %p85
        $region132: #{tower_forward.10} parent=125 // pred_check_branch
          %751 = sbr.rel (%p749) target = $region134
        $region133: #{tower_forward.10} parent=125 // pred_region
          _
        $region134: #{tower_forward.10} parent=125 // pred_fallthru
          _
        %s752 = sand.u32 %s126, 1
        %s753 = sand.u32 %s126, 1
        %s754 = smul.addr %s753, 32
        %s755 = scalar_lea.vmem [#allocation5], %s754
        // Predicated region
        $region135: #{tower_forward.10} parent=125 // pred_check
          %p756 = pneg %p139
        $region136: #{tower_forward.10} parent=125 // pred_check_branch
          %758 = sbr.rel (%p756) target = $region138
        $region137: #{tower_forward.10} parent=125 // pred_region
          _
        $region138: #{tower_forward.10} parent=125 // pred_fallthru
          _
        %s759 = sand.u32 %s44, 1
        %s760 = sand.u32 %s44, 1
        %s761 = smul.addr %s760, 96
        %s762 = scalar_lea.vmem [#allocation3], %s761
        %p763 = pneg %p57
        %p764 = pneg %p54
        %s765 = sand.u32 %s72, 1
        %s766 = sand.u32 %s72, 1
        %s767 = smul.addr %s766, 384
        %s768 = scalar_lea.vmem [#allocation4], %s767
        %p769 = pneg %p85
        %p770 = pneg %p82
        %p771 = scmp.lt.s32.totalorder %s20, 2
        %s772 = scalar_select %p771, %s20, 2
        %s773 = scalar_lea.vmem %s2, %s772
        %p774 = pneg %p111
        %p775 = pneg %p108
        %s776 = sand.u32 %s126, 1
        %s777 = sand.u32 %s126, 1
        %s778 = smul.addr %s777, 32
        %s779 = scalar_lea.vmem [#allocation5], %s778
        %p780 = pneg %p139
        %p781 = pneg %p136
        %p782 = pneg %p167
        %p783 = pneg %p164
        %s784 = sand.u32 %s154, 1
        %s785 = sand.u32 %s154, 1
        %s786 = smul.addr %s785, 16
        %s787 = scalar_lea.vmem [#allocation6], %s786
        %s788 = smul.u32 4, %s21
        %s789 = smul.u32 6, %s22
        %s790 = smul.u32 96, %s22
        %p791 = scmp.lt.s32.totalorder %s20, 2
        %s792 = scalar_select %p791, %s20, 2
        %s793 = scalar_lea.vmem %s2, %s792
        %s794 = smul.u32 4, %s21
        %s795 = smul.u32 4, %s21
        %p797 = scmp.eq.s32.totalorder %s22, 0
        // Predicated region
        $region139: #{tower_forward.10} parent=125 // pred_check
          %p798 = pneg %p797
        $region140: #{tower_forward.10} parent=125 // pred_check_branch
          %800 = sbr.rel (%p798) target = $region142
        $region141: #{tower_forward.10} parent=125 // pred_region
          %801 = vst [vmem:[#allocation2] sm:$0xff] 0.0
          %802 = vst [vmem:[#allocation2 + $0x8] sm:$0xff] 0.0
          %803 = vst [vmem:[#allocation2 + $0x10] sm:$0xff] 0.0
          %804 = vst [vmem:[#allocation2 + $0x18] sm:$0xff] 0.0
        $region142: #{tower_forward.10} parent=125 // pred_fallthru
          _
        %v805 = vld [vmem:[#allocation2] sm:$0xff]
        %v806 = vld [vmem:[#allocation2 + $0x8] sm:$0xff]
        %v807 = vld [vmem:[#allocation2 + $0x10] sm:$0xff]
        %v808 = vld [vmem:[#allocation2 + $0x18] sm:$0xff]
        %v809 = vld [vmem:[%s741] sm:$0xff]
        %v810 = vld [vmem:[%s741 + $0x8] sm:$0xff]
        %v811 = vld [vmem:[%s741 + $0x10] sm:$0xff]
        %v812 = vld [vmem:[%s741 + $0x18] sm:$0xff]
        %v813 = vld [vmem:[%s741 + $0x20] sm:$0xff]
        %v814 = vld [vmem:[%s741 + $0x28] sm:$0xff]
        %v815 = vld [vmem:[%s741 + $0x30] sm:$0xff]
        %v816 = vld [vmem:[%s741 + $0x38] sm:$0xff]
        %v817 = vld [vmem:[%s741 + $0x40] sm:$0xff]
        %v818 = vld [vmem:[%s741 + $0x48] sm:$0xff]
        %v819 = vld [vmem:[%s741 + $0x50] sm:$0xff]
        %v820 = vld [vmem:[%s741 + $0x58] sm:$0xff]
        %v821 = vld [vmem:[%s748] sm:$0xf]
        %v822 = vld [vmem:[%s748 + $0x4] sm:$0xf]
        %v823 = vld [vmem:[%s748 + $0x8] sm:$0xf]
        %v824 = vld [vmem:[%s748 + $0xc] sm:$0xf]
        %v825 = vld [vmem:[%s748 + $0x10] sm:$0xf]
        %v826 = vld [vmem:[%s748 + $0x14] sm:$0xf]
        %v827 = vld [vmem:[%s748 + $0x18] sm:$0xf]
        %v828 = vld [vmem:[%s748 + $0x1c] sm:$0xf]
        %v829 = vld [vmem:[%s748 + $0x20] sm:$0xf]
        %v830 = vld [vmem:[%s748 + $0x24] sm:$0xf]
        %v831 = vld [vmem:[%s748 + $0x28] sm:$0xf]
        %v832 = vld [vmem:[%s748 + $0x2c] sm:$0xf]
        %v833 = vld [vmem:[%s748 + $0x30] sm:$0xf]
        %v834 = vld [vmem:[%s748 + $0x34] sm:$0xf]
        %v835 = vld [vmem:[%s748 + $0x38] sm:$0xf]
        %v836 = vld [vmem:[%s748 + $0x3c] sm:$0xf]
        %v837 = vld [vmem:[%s748 + $0x40] sm:$0xf]
        %v838 = vld [vmem:[%s748 + $0x44] sm:$0xf]
        %v839 = vld [vmem:[%s748 + $0x48] sm:$0xf]
        %v840 = vld [vmem:[%s748 + $0x4c] sm:$0xf]
        %v841 = vld [vmem:[%s748 + $0x50] sm:$0xf]
        %v842 = vld [vmem:[%s748 + $0x54] sm:$0xf]
        %v843 = vld [vmem:[%s748 + $0x58] sm:$0xf]
        %v844 = vld [vmem:[%s748 + $0x5c] sm:$0xf]
        %v845 = vld [vmem:[%s748 + $0x60] sm:$0xf]
        %v846 = vld [vmem:[%s748 + $0x64] sm:$0xf]
        %v847 = vld [vmem:[%s748 + $0x68] sm:$0xf]
        %v848 = vld [vmem:[%s748 + $0x6c] sm:$0xf]
        %v849 = vld [vmem:[%s748 + $0x70] sm:$0xf]
        %v850 = vld [vmem:[%s748 + $0x74] sm:$0xf]
        %v851 = vld [vmem:[%s748 + $0x78] sm:$0xf]
        %v852 = vld [vmem:[%s748 + $0x7c] sm:$0xf]
        %v853 = vld [vmem:[%s748 + $0x80] sm:$0xf]
        %v854 = vld [vmem:[%s748 + $0x84] sm:$0xf]
        %v855 = vld [vmem:[%s748 + $0x88] sm:$0xf]
        %v856 = vld [vmem:[%s748 + $0x8c] sm:$0xf]
        %v857 = vld [vmem:[%s748 + $0x90] sm:$0xf]
        %v858 = vld [vmem:[%s748 + $0x94] sm:$0xf]
        %v859 = vld [vmem:[%s748 + $0x98] sm:$0xf]
        %v860 = vld [vmem:[%s748 + $0x9c] sm:$0xf]
        %v861 = vld [vmem:[%s748 + $0xa0] sm:$0xf]
        %v862 = vld [vmem:[%s748 + $0xa4] sm:$0xf]
        %v863 = vld [vmem:[%s748 + $0xa8] sm:$0xf]
        %v864 = vld [vmem:[%s748 + $0xac] sm:$0xf]
        %v865 = vld [vmem:[%s748 + $0xb0] sm:$0xf]
        %v866 = vld [vmem:[%s748 + $0xb4] sm:$0xf]
        %v867 = vld [vmem:[%s748 + $0xb8] sm:$0xf]
        %v868 = vld [vmem:[%s748 + $0xbc] sm:$0xf]
        %v869 = vld [vmem:[%s748 + $0xc0] sm:$0xf]
        %v870 = vld [vmem:[%s748 + $0xc4] sm:$0xf]
        %v871 = vld [vmem:[%s748 + $0xc8] sm:$0xf]
        %v872 = vld [vmem:[%s748 + $0xcc] sm:$0xf]
        %v873 = vld [vmem:[%s748 + $0xd0] sm:$0xf]
        %v874 = vld [vmem:[%s748 + $0xd4] sm:$0xf]
        %v875 = vld [vmem:[%s748 + $0xd8] sm:$0xf]
        %v876 = vld [vmem:[%s748 + $0xdc] sm:$0xf]
        %v877 = vld [vmem:[%s748 + $0xe0] sm:$0xf]
        %v878 = vld [vmem:[%s748 + $0xe4] sm:$0xf]
        %v879 = vld [vmem:[%s748 + $0xe8] sm:$0xf]
        %v880 = vld [vmem:[%s748 + $0xec] sm:$0xf]
        %v881 = vld [vmem:[%s748 + $0xf0] sm:$0xf]
        %v882 = vld [vmem:[%s748 + $0xf4] sm:$0xf]
        %v883 = vld [vmem:[%s748 + $0xf8] sm:$0xf]
        %v884 = vld [vmem:[%s748 + $0xfc] sm:$0xf]
        %v885 = vld [vmem:[%s748 + $0x100] sm:$0xf]
        %v886 = vld [vmem:[%s748 + $0x104] sm:$0xf]
        %v887 = vld [vmem:[%s748 + $0x108] sm:$0xf]
        %v888 = vld [vmem:[%s748 + $0x10c] sm:$0xf]
        %v889 = vld [vmem:[%s748 + $0x110] sm:$0xf]
        %v890 = vld [vmem:[%s748 + $0x114] sm:$0xf]
        %v891 = vld [vmem:[%s748 + $0x118] sm:$0xf]
        %v892 = vld [vmem:[%s748 + $0x11c] sm:$0xf]
        %v893 = vld [vmem:[%s748 + $0x120] sm:$0xf]
        %v894 = vld [vmem:[%s748 + $0x124] sm:$0xf]
        %v895 = vld [vmem:[%s748 + $0x128] sm:$0xf]
        %v896 = vld [vmem:[%s748 + $0x12c] sm:$0xf]
        %v897 = vld [vmem:[%s748 + $0x130] sm:$0xf]
        %v898 = vld [vmem:[%s748 + $0x134] sm:$0xf]
        %v899 = vld [vmem:[%s748 + $0x138] sm:$0xf]
        %v900 = vld [vmem:[%s748 + $0x13c] sm:$0xf]
        %v901 = vld [vmem:[%s748 + $0x140] sm:$0xf]
        %v902 = vld [vmem:[%s748 + $0x144] sm:$0xf]
        %v903 = vld [vmem:[%s748 + $0x148] sm:$0xf]
        %v904 = vld [vmem:[%s748 + $0x14c] sm:$0xf]
        %v905 = vld [vmem:[%s748 + $0x150] sm:$0xf]
        %v906 = vld [vmem:[%s748 + $0x154] sm:$0xf]
        %v907 = vld [vmem:[%s748 + $0x158] sm:$0xf]
        %v908 = vld [vmem:[%s748 + $0x15c] sm:$0xf]
        %v909 = vld [vmem:[%s748 + $0x160] sm:$0xf]
        %v910 = vld [vmem:[%s748 + $0x164] sm:$0xf]
        %v911 = vld [vmem:[%s748 + $0x168] sm:$0xf]
        %v912 = vld [vmem:[%s748 + $0x16c] sm:$0xf]
        %v913 = vld [vmem:[%s748 + $0x170] sm:$0xf]
        %v914 = vld [vmem:[%s748 + $0x174] sm:$0xf]
        %v915 = vld [vmem:[%s748 + $0x178] sm:$0xf]
        %v916 = vld [vmem:[%s748 + $0x17c] sm:$0xf]
        %v929 = vunpack.c.l.b16 %v809
        %v930 = vunpack.c.h.b16 %v809
        %v931 = vunpack.c.l.b16 %v810
        %v932 = vunpack.c.h.b16 %v810
        %v933 = vunpack.c.l.b16 %v811
        %v934 = vunpack.c.h.b16 %v811
        %v935 = vunpack.c.l.b16 %v812
        %v936 = vunpack.c.h.b16 %v812
        %v937 = vunpack.c.l.b16 %v813
        %v938 = vunpack.c.h.b16 %v813
        %v939 = vunpack.c.l.b16 %v814
        %v940 = vunpack.c.h.b16 %v814
        %v941 = vunpack.c.l.b16 %v815
        %v942 = vunpack.c.h.b16 %v815
        %v943 = vunpack.c.l.b16 %v816
        %v944 = vunpack.c.h.b16 %v816
        %v945 = vunpack.c.l.b16 %v817
        %v946 = vunpack.c.h.b16 %v817
        %v947 = vunpack.c.l.b16 %v818
        %v948 = vunpack.c.h.b16 %v818
        %v949 = vunpack.c.l.b16 %v819
        %v950 = vunpack.c.h.b16 %v819
        %v951 = vunpack.c.l.b16 %v820
        %v952 = vunpack.c.h.b16 %v820
        %v953 = vpack.c.b16 %v935, %v929
        %v954 = vpack.c.b16 %v936, %v930
        %v955 = vpack.c.b16 %v937, %v931
        %v956 = vpack.c.b16 %v938, %v932
        %v957 = vpack.c.b16 %v939, %v933
        %v958 = vpack.c.b16 %v940, %v934
        %v959 = vpack.c.b16 %v947, %v941
        %v960 = vpack.c.b16 %v948, %v942
        %v961 = vpack.c.b16 %v949, %v943
        %v962 = vpack.c.b16 %v950, %v944
        %v963 = vpack.c.b16 %v951, %v945
        %v964 = vpack.c.b16 %v952, %v946
        %v1073 = vunpack.c.l.b16 %v821
        %v1074 = vunpack.c.l.b16 %v822
        %v1075 = vunpack.c.l.b16 %v823
        %v1076 = vunpack.c.l.b16 %v824
        %v1077 = vunpack.c.l.b16 %v825
        %v1078 = vunpack.c.l.b16 %v826
        %v1079 = vunpack.c.l.b16 %v827
        %v1080 = vunpack.c.l.b16 %v828
        %v1081 = vunpack.c.l.b16 %v829
        %v1082 = vunpack.c.l.b16 %v830
        %v1083 = vunpack.c.l.b16 %v831
        %v1084 = vunpack.c.l.b16 %v832
        %v1085 = vunpack.c.l.b16 %v833
        %v1086 = vunpack.c.l.b16 %v834
        %v1087 = vunpack.c.l.b16 %v835
        %v1088 = vunpack.c.l.b16 %v836
        %v1089 = vunpack.c.l.b16 %v837
        %v1090 = vunpack.c.l.b16 %v838
        %v1091 = vunpack.c.l.b16 %v839
        %v1092 = vunpack.c.l.b16 %v840
        %v1093 = vunpack.c.l.b16 %v841
        %v1094 = vunpack.c.l.b16 %v842
        %v1095 = vunpack.c.l.b16 %v843
        %v1096 = vunpack.c.l.b16 %v844
        %v1097 = vunpack.c.l.b16 %v845
        %v1098 = vunpack.c.l.b16 %v846
        %v1099 = vunpack.c.l.b16 %v847
        %v1100 = vunpack.c.l.b16 %v848
        %v1101 = vunpack.c.l.b16 %v849
        %v1102 = vunpack.c.l.b16 %v850
        %v1103 = vunpack.c.l.b16 %v851
        %v1104 = vunpack.c.l.b16 %v852
        %v1105 = vunpack.c.l.b16 %v853
        %v1106 = vunpack.c.l.b16 %v854
        %v1107 = vunpack.c.l.b16 %v855
        %v1108 = vunpack.c.l.b16 %v856
        %v1109 = vunpack.c.l.b16 %v857
        %v1110 = vunpack.c.l.b16 %v858
        %v1111 = vunpack.c.l.b16 %v859
        %v1112 = vunpack.c.l.b16 %v860
        %v1113 = vunpack.c.l.b16 %v861
        %v1114 = vunpack.c.l.b16 %v862
        %v1115 = vunpack.c.l.b16 %v863
        %v1116 = vunpack.c.l.b16 %v864
        %v1117 = vunpack.c.l.b16 %v865
        %v1118 = vunpack.c.l.b16 %v866
        %v1119 = vunpack.c.l.b16 %v867
        %v1120 = vunpack.c.l.b16 %v868
        %v1121 = vunpack.c.l.b16 %v869
        %v1122 = vunpack.c.l.b16 %v870
        %v1123 = vunpack.c.l.b16 %v871
        %v1124 = vunpack.c.l.b16 %v872
        %v1125 = vunpack.c.l.b16 %v873
        %v1126 = vunpack.c.l.b16 %v874
        %v1127 = vunpack.c.l.b16 %v875
        %v1128 = vunpack.c.l.b16 %v876
        %v1129 = vunpack.c.l.b16 %v877
        %v1130 = vunpack.c.l.b16 %v878
        %v1131 = vunpack.c.l.b16 %v879
        %v1132 = vunpack.c.l.b16 %v880
        %v1133 = vunpack.c.l.b16 %v881
        %v1134 = vunpack.c.l.b16 %v882
        %v1135 = vunpack.c.l.b16 %v883
        %v1136 = vunpack.c.l.b16 %v884
        %v1137 = vunpack.c.l.b16 %v885
        %v1138 = vunpack.c.l.b16 %v886
        %v1139 = vunpack.c.l.b16 %v887
        %v1140 = vunpack.c.l.b16 %v888
        %v1141 = vunpack.c.l.b16 %v889
        %v1142 = vunpack.c.l.b16 %v890
        %v1143 = vunpack.c.l.b16 %v891
        %v1144 = vunpack.c.l.b16 %v892
        %v1145 = vunpack.c.l.b16 %v893
        %v1146 = vunpack.c.l.b16 %v894
        %v1147 = vunpack.c.l.b16 %v895
        %v1148 = vunpack.c.l.b16 %v896
        %v1149 = vunpack.c.l.b16 %v897
        %v1150 = vunpack.c.l.b16 %v898
        %v1151 = vunpack.c.l.b16 %v899
        %v1152 = vunpack.c.l.b16 %v900
        %v1153 = vunpack.c.l.b16 %v901
        %v1154 = vunpack.c.l.b16 %v902
        %v1155 = vunpack.c.l.b16 %v903
        %v1156 = vunpack.c.l.b16 %v904
        %v1157 = vunpack.c.l.b16 %v905
        %v1158 = vunpack.c.l.b16 %v906
        %v1159 = vunpack.c.l.b16 %v907
        %v1160 = vunpack.c.l.b16 %v908
        %v1161 = vunpack.c.l.b16 %v909
        %v1162 = vunpack.c.l.b16 %v910
        %v1163 = vunpack.c.l.b16 %v911
        %v1164 = vunpack.c.l.b16 %v912
        %v1165 = vunpack.c.l.b16 %v913
        %v1166 = vunpack.c.l.b16 %v914
        %v1167 = vunpack.c.l.b16 %v915
        %v1168 = vunpack.c.l.b16 %v916
        %v1169 = vpack.c.b16 %v1074, %v1073
        %v1170 = vpack.c.b16 %v1076, %v1075
        %v1171 = vpack.c.b16 %v1078, %v1077
        %v1172 = vpack.c.b16 %v1080, %v1079
        %v1173 = vpack.c.b16 %v1082, %v1081
        %v1174 = vpack.c.b16 %v1084, %v1083
        %v1175 = vpack.c.b16 %v1086, %v1085
        %v1176 = vpack.c.b16 %v1088, %v1087
        %v1177 = vpack.c.b16 %v1090, %v1089
        %v1178 = vpack.c.b16 %v1092, %v1091
        %v1179 = vpack.c.b16 %v1094, %v1093
        %v1180 = vpack.c.b16 %v1096, %v1095
        %v1181 = vpack.c.b16 %v1098, %v1097
        %v1182 = vpack.c.b16 %v1100, %v1099
        %v1183 = vpack.c.b16 %v1102, %v1101
        %v1184 = vpack.c.b16 %v1104, %v1103
        %v1185 = vpack.c.b16 %v1106, %v1105
        %v1186 = vpack.c.b16 %v1108, %v1107
        %v1187 = vpack.c.b16 %v1110, %v1109
        %v1188 = vpack.c.b16 %v1112, %v1111
        %v1189 = vpack.c.b16 %v1114, %v1113
        %v1190 = vpack.c.b16 %v1116, %v1115
        %v1191 = vpack.c.b16 %v1118, %v1117
        %v1192 = vpack.c.b16 %v1120, %v1119
        %v1193 = vpack.c.b16 %v1122, %v1121
        %v1194 = vpack.c.b16 %v1124, %v1123
        %v1195 = vpack.c.b16 %v1126, %v1125
        %v1196 = vpack.c.b16 %v1128, %v1127
        %v1197 = vpack.c.b16 %v1130, %v1129
        %v1198 = vpack.c.b16 %v1132, %v1131
        %v1199 = vpack.c.b16 %v1134, %v1133
        %v1200 = vpack.c.b16 %v1136, %v1135
        %v1201 = vpack.c.b16 %v1138, %v1137
        %v1202 = vpack.c.b16 %v1140, %v1139
        %v1203 = vpack.c.b16 %v1142, %v1141
        %v1204 = vpack.c.b16 %v1144, %v1143
        %v1205 = vpack.c.b16 %v1146, %v1145
        %v1206 = vpack.c.b16 %v1148, %v1147
        %v1207 = vpack.c.b16 %v1150, %v1149
        %v1208 = vpack.c.b16 %v1152, %v1151
        %v1209 = vpack.c.b16 %v1154, %v1153
        %v1210 = vpack.c.b16 %v1156, %v1155
        %v1211 = vpack.c.b16 %v1158, %v1157
        %v1212 = vpack.c.b16 %v1160, %v1159
        %v1213 = vpack.c.b16 %v1162, %v1161
        %v1214 = vpack.c.b16 %v1164, %v1163
        %v1215 = vpack.c.b16 %v1166, %v1165
        %v1216 = vpack.c.b16 %v1168, %v1167
        %1265 = vmatprep.subr.bf16.mxu0 0
        %1266 = vmatpush1.bf16.msra.mxu0 %v1169
        %1267 = vmatprep.subr.bf16.mxu0 0
        %1268 = vmatpush1.bf16.msra.mxu0 %v1170
        %1269 = vmatprep.subr.bf16.mxu0 0
        %1270 = vmatpush1.bf16.msra.mxu0 %v1171
        %1271 = vmatprep.subr.bf16.mxu0 0
        %1272 = vmatpush1.bf16.msra.mxu0 %v1172
        %1273 = vmatprep.subr.bf16.mxu0 0
        %1274 = vmatpush1.bf16.msra.mxu0 %v1173
        %1275 = vmatprep.subr.bf16.mxu0 0
        %1276 = vmatpush1.bf16.msra.mxu0 %v1174
        %1277 = vmatprep.subr.bf16.mxu0 0
        %1278 = vmatpush1.bf16.msra.mxu0 %v1175
        %1279 = vmatprep.subr.bf16.mxu0 0
        %1280 = vmatpush1.bf16.msra.mxu0 %v1176
        %1281 = vmatprep.subr.bf16.mxu0 0
        %1282 = vmatpush1.bf16.msra.mxu0 %v1177
        %1283 = vmatprep.subr.bf16.mxu0 0
        %1284 = vmatpush1.bf16.msra.mxu0 %v1178
        %1285 = vmatprep.subr.bf16.mxu0 0
        %1286 = vmatpush1.bf16.msra.mxu0 %v1179
        %1287 = vmatprep.subr.bf16.mxu0 0
        %1288 = vmatpush1.bf16.msra.mxu0 %v1180
        %1289 = vmatprep.subr.bf16.mxu0 0
        %1290 = vmatpush1.bf16.msra.mxu0 %v1181
        %1291 = vmatprep.subr.bf16.mxu0 0
        %1292 = vmatpush1.bf16.msra.mxu0 %v1182
        %1293 = vmatprep.subr.bf16.mxu0 0
        %1294 = vmatpush1.bf16.msra.mxu0 %v1183
        %1295 = vmatprep.subr.bf16.mxu0 0
        %1296 = vmatpush1.bf16.msra.mxu0 %v1184
        %1297 = vmatprep.mubr.bf16.mxu0 %v954
        %1298 = vmatmul.mubr.bf16.gmra.mrb[0].mxu0 %v953
        %v1299 = vpop.f32.mrb[0].mxu0
        %v1300 = vadd.f32 0.0, %v1299
        %v1301 = vpop.f32.mrb[0].mxu0
        %v1302 = vpop.f32.mrb[0].mxu0
        %v1303 = vadd.f32 0.0, %v1302
        %v1304 = vpop.f32.mrb[0].mxu0
        %1305 = vmatprep.mubr.bf16.mxu0 %v960
        %1306 = vmatmul.mubr.bf16.gmra.mrb[0].mxu0 %v959
        %v1307 = vpop.f32.mrb[0].mxu0
        %v1308 = vadd.f32 0.0, %v1307
        %v1309 = vpop.f32.mrb[0].mxu0
        %v1310 = vpop.f32.mrb[0].mxu0
        %v1311 = vadd.f32 0.0, %v1310
        %v1312 = vpop.f32.mrb[0].mxu0
        %1313 = vdwg.mxu0
        %1314 = vmatprep.subr.bf16.mxu0 0
        %1315 = vmatpush1.bf16.msra.mxu0 %v1185
        %1316 = vmatprep.subr.bf16.mxu0 0
        %1317 = vmatpush1.bf16.msra.mxu0 %v1186
        %1318 = vmatprep.subr.bf16.mxu0 0
        %1319 = vmatpush1.bf16.msra.mxu0 %v1187
        %1320 = vmatprep.subr.bf16.mxu0 0
        %1321 = vmatpush1.bf16.msra.mxu0 %v1188
        %1322 = vmatprep.subr.bf16.mxu0 0
        %1323 = vmatpush1.bf16.msra.mxu0 %v1189
        %1324 = vmatprep.subr.bf16.mxu0 0
        %1325 = vmatpush1.bf16.msra.mxu0 %v1190
        %1326 = vmatprep.subr.bf16.mxu0 0
        %1327 = vmatpush1.bf16.msra.mxu0 %v1191
        %1328 = vmatprep.subr.bf16.mxu0 0
        %1329 = vmatpush1.bf16.msra.mxu0 %v1192
        %1330 = vmatprep.subr.bf16.mxu0 0
        %1331 = vmatpush1.bf16.msra.mxu0 %v1193
        %1332 = vmatprep.subr.bf16.mxu0 0
        %1333 = vmatpush1.bf16.msra.mxu0 %v1194
        %1334 = vmatprep.subr.bf16.mxu0 0
        %1335 = vmatpush1.bf16.msra.mxu0 %v1195
        %1336 = vmatprep.subr.bf16.mxu0 0
        %1337 = vmatpush1.bf16.msra.mxu0 %v1196
        %1338 = vmatprep.subr.bf16.mxu0 0
        %1339 = vmatpush1.bf16.msra.mxu0 %v1197
        %1340 = vmatprep.subr.bf16.mxu0 0
        %1341 = vmatpush1.bf16.msra.mxu0 %v1198
        %1342 = vmatprep.subr.bf16.mxu0 0
        %1343 = vmatpush1.bf16.msra.mxu0 %v1199
        %1344 = vmatprep.subr.bf16.mxu0 0
        %1345 = vmatpush1.bf16.msra.mxu0 %v1200
        %1346 = vmatprep.mubr.bf16.mxu0 %v956
        %1347 = vmatmul.mubr.bf16.gmra.mrb[0].mxu0 %v955
        %v1348 = vpop.f32.mrb[0].mxu0
        %v1349 = vadd.f32 %v1300, %v1348
        %v1350 = vpop.f32.mrb[0].mxu0
        %v1351 = vpop.f32.mrb[0].mxu0
        %v1352 = vadd.f32 %v1303, %v1351
        %v1353 = vpop.f32.mrb[0].mxu0
        %1354 = vmatprep.mubr.bf16.mxu0 %v962
        %1355 = vmatmul.mubr.bf16.gmra.mrb[0].mxu0 %v961
        %v1356 = vpop.f32.mrb[0].mxu0
        %v1357 = vadd.f32 %v1308, %v1356
        %v1358 = vpop.f32.mrb[0].mxu0
        %v1359 = vpop.f32.mrb[0].mxu0
        %v1360 = vadd.f32 %v1311, %v1359
        %v1361 = vpop.f32.mrb[0].mxu0
        %1362 = vdwg.mxu0
        %1363 = vmatprep.subr.bf16.mxu0 0
        %1364 = vmatpush1.bf16.msra.mxu0 %v1201
        %1365 = vmatprep.subr.bf16.mxu0 0
        %1366 = vmatpush1.bf16.msra.mxu0 %v1202
        %1367 = vmatprep.subr.bf16.mxu0 0
        %1368 = vmatpush1.bf16.msra.mxu0 %v1203
        %1369 = vmatprep.subr.bf16.mxu0 0
        %1370 = vmatpush1.bf16.msra.mxu0 %v1204
        %1371 = vmatprep.subr.bf16.mxu0 0
        %1372 = vmatpush1.bf16.msra.mxu0 %v1205
        %1373 = vmatprep.subr.bf16.mxu0 0
        %1374 = vmatpush1.bf16.msra.mxu0 %v1206
        %1375 = vmatprep.subr.bf16.mxu0 0
        %1376 = vmatpush1.bf16.msra.mxu0 %v1207
        %1377 = vmatprep.subr.bf16.mxu0 0
        %1378 = vmatpush1.bf16.msra.mxu0 %v1208
        %1379 = vmatprep.subr.bf16.mxu0 0
        %1380 = vmatpush1.bf16.msra.mxu0 %v1209
        %1381 = vmatprep.subr.bf16.mxu0 0
        %1382 = vmatpush1.bf16.msra.mxu0 %v1210
        %1383 = vmatprep.subr.bf16.mxu0 0
        %1384 = vmatpush1.bf16.msra.mxu0 %v1211
        %1385 = vmatprep.subr.bf16.mxu0 0
        %1386 = vmatpush1.bf16.msra.mxu0 %v1212
        %1387 = vmatprep.subr.bf16.mxu0 0
        %1388 = vmatpush1.bf16.msra.mxu0 %v1213
        %1389 = vmatprep.subr.bf16.mxu0 0
        %1390 = vmatpush1.bf16.msra.mxu0 %v1214
        %1391 = vmatprep.subr.bf16.mxu0 0
        %1392 = vmatpush1.bf16.msra.mxu0 %v1215
        %1393 = vmatprep.subr.bf16.mxu0 0
        %1394 = vmatpush1.bf16.msra.mxu0 %v1216
        %1395 = vmatprep.mubr.bf16.mxu0 %v958
        %1396 = vmatmul.mubr.bf16.gmra.mrb[0].mxu0 %v957
        %v1397 = vpop.f32.mrb[0].mxu0
        %v1398 = vadd.f32 %v1349, %v1397
        %v1399 = vpop.f32.mrb[0].mxu0
        %v1400 = vpop.f32.mrb[0].mxu0
        %v1401 = vadd.f32 %v1352, %v1400
        %v1402 = vpop.f32.mrb[0].mxu0
        %1403 = vmatprep.mubr.bf16.mxu0 %v964
        %1404 = vmatmul.mubr.bf16.gmra.mrb[0].mxu0 %v963
        %v1405 = vpop.f32.mrb[0].mxu0
        %v1406 = vadd.f32 %v1357, %v1405
        %v1407 = vpop.f32.mrb[0].mxu0
        %v1408 = vpop.f32.mrb[0].mxu0
        %v1409 = vadd.f32 %v1360, %v1408
        %v1410 = vpop.f32.mrb[0].mxu0
        %1411 = vdwg.mxu0
        %v1412 = vadd.f32 %v805, %v1398
        %v1413 = vadd.f32 %v806, %v1401
        %v1414 = vadd.f32 %v807, %v1406
        %v1415 = vadd.f32 %v808, %v1409
        %1416 = vst [vmem:[#allocation2] sm:$0xff] %v1412
        %1417 = vst [vmem:[#allocation2 + $0x8] sm:$0xff] %v1413
        %1418 = vst [vmem:[#allocation2 + $0x10] sm:$0xff] %v1414
        %1419 = vst [vmem:[#allocation2 + $0x18] sm:$0xff] %v1415
        %p1420 = scmp.eq.s32.totalorder %s22, 2
        // Predicated region
        $region143: #{tower_forward.10} parent=125 // pred_check
          %p1421 = pneg %p1420
        $region144: #{tower_forward.10} parent=125 // pred_check_branch
          %1423 = sbr.rel (%p1421) target = $region146
        $region145: #{tower_forward.10} parent=125 // pred_region
          %v1424 = vld [vmem:[#allocation2] sm:$0xff]
          %v1425 = vld [vmem:[#allocation2 + $0x8] sm:$0xff]
          %v1426 = vld [vmem:[#allocation2 + $0x10] sm:$0xff]
          %v1427 = vld [vmem:[#allocation2 + $0x18] sm:$0xff]
          %v1428 = vld [vmem:[%s793] sm:$0x1]
          %v1430 = vlaneseq
          %v1431 = vshrl.u32 %v1430, 7
          %v1432 = vsub.s32 0, %v1431
          %v1433 = vrot.slane %v1428, %v1432
          %v1435 = vadd.f32 %v1424, %v1433
          %v1436 = vadd.f32 %v1425, %v1433
          %v1437 = vadd.f32 %v1426, %v1433
          %v1438 = vadd.f32 %v1427, %v1433
          %v1439 = vld [vmem:[%s755] sm:$0xff]
          %v1440 = vld [vmem:[%s755 + $0x8] sm:$0xff]
          %v1441 = vld [vmem:[%s755 + $0x10] sm:$0xff]
          %v1442 = vld [vmem:[%s755 + $0x18] sm:$0xff]
          %v1443 = vadd.f32 %v1435, %v1439
          %v1444 = vadd.f32 %v1436, %v1440
          %v1445 = vadd.f32 %v1437, %v1441
          %v1446 = vadd.f32 %v1438, %v1442
          %v1447 = vmax.f32 %v1443, 0.0
          %v1448 = vmax.f32 %v1444, 0.0
          %v1449 = vmax.f32 %v1445, 0.0
          %v1450 = vmax.f32 %v1446, 0.0
          %v1451 = vpack.c.bf16 %v1448, %v1447
          %v1452 = vpack.c.bf16 %v1450, %v1449
          %v1455 = vunpack.c.l.b16 %v1451
          %v1456 = vunpack.c.h.b16 %v1451
          %v1457 = vunpack.c.l.b16 %v1452
          %v1458 = vunpack.c.h.b16 %v1452
          %v1459 = vpack.c.b16 %v1455, %v1455
          %v1460 = vpack.c.b16 %v1456, %v1456
          %v1461 = vpack.c.b16 %v1457, %v1457
          %v1462 = vpack.c.b16 %v1458, %v1458
          %1467 = vst [vmem:[%s787] sm:$0xf] %v1459
          %1468 = vst [vmem:[%s787 + $0x4] sm:$0xf] %v1460
          %1469 = vst [vmem:[%s787 + $0x8] sm:$0xf] %v1461
          %1470 = vst [vmem:[%s787 + $0xc] sm:$0xf] %v1462
        $region146: #{tower_forward.10} parent=125 // pred_fallthru
          _
        %s1471 = sand.u32 %s154, 1
        %s1472 = sand.u32 %s154, 1
        %s1473 = smul.addr %s1472, 16
        %s1474 = scalar_lea.vmem [#allocation6], %s1473
        // Predicated region
        $region147: #{tower_forward.10} parent=125 // pred_check
          %p1475 = pneg %p164
        $region148: #{tower_forward.10} parent=125 // pred_check_branch
          %1477 = sbr.rel (%p1475) target = $region150
        $region149: #{tower_forward.10} parent=125 // pred_region
          %s1478 = smul.u32 4, %s21
          %s1479 = smul.addr %s1478, 3
          %s1480 = sadd.s32 %s20, %s1479
          %s1481 = smul.addr %s1480, 4
          %s1482 = scalar_lea.vmem %s4, %s1481
          // Predicated region
          $region151: #{tower_forward.10} parent=149 // pred_check
            _
          $region152: #{tower_forward.10} parent=149 // pred_check_branch
            %1484 = sbr.rel (0) target = $region154
          $region153: #{tower_forward.10} parent=149 // pred_region
            // Predicated region
            $region155: #{tower_forward.10} parent=153 // pred_check
              _
            $region156: #{tower_forward.10} parent=153 // pred_check_branch
              %1486 = sbr.rel target = $region158
            $region157: #{tower_forward.10} parent=153 // pred_region
              // Predicated region
              $region170: #{tower_forward.10} parent=157 // pred_check
                _
              $region171: #{tower_forward.10} parent=157 // pred_check_branch
                %1507 = sbr.rel (0) target = $region173
              $region172: #{tower_forward.10} parent=157 // pred_region
                loop: start=0, step=1, limit=1
                $region174: #{tower_forward.10} parent=172 // loop_pre_header
                  _
                $region175: #{tower_forward.10} parent=172 // loop_header
                  %s1509 = sphi 0, %s1513
                  %p1510 = scmp.ge.s32.totalorder %s1509, 1
                  %s1514 = sphi %s1474, %s1474
                  %s1515 = sphi %s1482, %s1482
                $region176: #{tower_forward.10} parent=172 // loop_header_branch
                  %1512 = sbr.rel (%p1510) target = $region180
                $region177: #{tower_forward.10} parent=172 // loop_body
                  _
                $region178: #{tower_forward.10} parent=172 // loop_footer
                  %s1513 = sadd.s32 1, %s1509
                $region179: #{tower_forward.10} parent=172 // loop_footer_branch
                  %1508 = sbr.rel target = $region175
                $region180: #{tower_forward.10} parent=172 // loop_exit
                  _
                loop: start=0, step=1, limit=1
                $region181: #{tower_forward.10} parent=172 // loop_pre_header
                  _
                $region182: #{tower_forward.10} parent=172 // loop_header
                  %s1518 = sphi 0, %s1522
                  %p1519 = scmp.ge.s32.totalorder %s1518, 1
                  %s1523 = sphi %s1474, %s1474
                  %s1524 = sphi %s1482, %s1482
                $region183: #{tower_forward.10} parent=172 // loop_header_branch
                  %1521 = sbr.rel (%p1519) target = $region187
                $region184: #{tower_forward.10} parent=172 // loop_body
                  %v1525 = vld [vmem:[%s1523] sm:$0xf]
                  %1526 = vst [vmem:[%s1524] sm:$0xf] %v1525
                  %v1527 = vld [vmem:[%s1523 + $0x4] sm:$0xf]
                  %1528 = vst [vmem:[%s1524 + $0xc] sm:$0xf] %v1527
                  %v1529 = vld [vmem:[%s1523 + $0x8] sm:$0xf]
                  %1530 = vst [vmem:[%s1524 + $0x18] sm:$0xf] %v1529
                  %v1531 = vld [vmem:[%s1523 + $0xc] sm:$0xf]
                  %1532 = vst [vmem:[%s1524 + $0x24] sm:$0xf] %v1531
                $region185: #{tower_forward.10} parent=172 // loop_footer
                  %s1522 = sadd.s32 1, %s1518
                $region186: #{tower_forward.10} parent=172 // loop_footer_branch
                  %1517 = sbr.rel target = $region182
                $region187: #{tower_forward.10} parent=172 // loop_exit
                  _
              $region173: #{tower_forward.10} parent=157 // pred_fallthru
                _
            $region158: #{tower_forward.10} parent=153 // pred_fallthru
              _
            // Predicated region
            $region159: #{tower_forward.10} parent=153 // pred_check
              _
            $region160: #{tower_forward.10} parent=153 // pred_check_branch
              %1488 = sbr.rel (0) target = $region162
            $region161: #{tower_forward.10} parent=153 // pred_region
              loop: start=0, step=1, limit=1
              $region163: #{tower_forward.10} parent=161 // loop_pre_header
                _
              $region164: #{tower_forward.10} parent=161 // loop_header
                %s1491 = sphi 0, %s1495
                %p1492 = scmp.ge.s32.totalorder %s1491, 1
                %s1496 = sphi %s1474, %s1474
                %s1497 = sphi %s1482, %s1482
              $region165: #{tower_forward.10} parent=161 // loop_header_branch
                %1494 = sbr.rel (%p1492) target = $region169
              $region166: #{tower_forward.10} parent=161 // loop_body
                %v1498 = vld [vmem:[%s1496] sm:$0xf]
                %1499 = vst [vmem:[%s1497] sm:$0xf] %v1498
                %v1500 = vld [vmem:[%s1496 + $0x4] sm:$0xf]
                %1501 = vst [vmem:[%s1497 + $0xc] sm:$0xf] %v1500
                %v1502 = vld [vmem:[%s1496 + $0x8] sm:$0xf]
                %1503 = vst [vmem:[%s1497 + $0x18] sm:$0xf] %v1502
                %v1504 = vld [vmem:[%s1496 + $0xc] sm:$0xf]
                %1505 = vst [vmem:[%s1497 + $0x24] sm:$0xf] %v1504
              $region167: #{tower_forward.10} parent=161 // loop_footer
                %s1495 = sadd.s32 1, %s1491
              $region168: #{tower_forward.10} parent=161 // loop_footer_branch
                %1490 = sbr.rel target = $region164
              $region169: #{tower_forward.10} parent=161 // loop_exit
                _
            $region162: #{tower_forward.10} parent=153 // pred_fallthru
              _
          $region154: #{tower_forward.10} parent=149 // pred_fallthru
            _
          %1533 = vnop
        $region150: #{tower_forward.10} parent=125 // pred_fallthru
          _
      $region126: #{tower_forward.10} parent=5 // pred_fallthru
        _
      %p1534 = scmp.le.s32.totalorder 2, %s10
      // Predicated region
      $region188: #{tower_forward.10} parent=5 // pred_check
        %p1535 = pneg %p1534
      $region189: #{tower_forward.10} parent=5 // pred_check_branch
        %1537 = sbr.rel (%p1535) target = $region191
      $region190: #{tower_forward.10} parent=5 // pred_region
        %s1538 = ssub.s32 %s10, 2
        // Predicated region
        $region192: #{tower_forward.10} parent=190 // pred_check
          %p1539 = pneg %p170
        $region193: #{tower_forward.10} parent=190 // pred_check_branch
          %1541 = sbr.rel (%p1539) target = $region195
        $region194: #{tower_forward.10} parent=190 // pred_region
          %s1542 = sand.u32 %s155, 1
          %s1543 = sand.u32 %s155, 1
          %s1544 = smul.addr %s1543, 16
          %s1545 = scalar_lea.vmem [#allocation6], %s1544
        $region195: #{tower_forward.10} parent=190 // pred_fallthru
          _
      $region191: #{tower_forward.10} parent=5 // pred_fallthru
        _
    $region6: #{tower_forward.10} parent=1 // loop_footer
      %s14 = sadd.s32 1, %s10
    $region7: #{tower_forward.10} parent=1 // loop_footer_branch
      %9 = sbr.rel target = $region3
    $region8: #{tower_forward.10} parent=1 // loop_exit
      _

// kernel: tower_forward.11
$region0: #{tower_forward.11}
  #allocation0 [shape = 'u32[]', space=smem, size = 0x4, offset = 0x4, fixed_abs, tag = 'smem constant byte address 0x4 - core index']
  #allocation1 [shape = 'u32[144,128]{1,0:T(1,128)}', space=vmem, size = 0x12000, scoped, tag = 'internal scratch']
  #allocation2 [shape = 'f32[32,256]{1,0:T(8,128)}', space=vmem, size = 0x8000, scoped, tag = 'scratch operand']
  %s0 = inlined_call_operand.vmem [shape: bf16[32,1152], index: 0, kind: input, shape index: {}]
  %s1 = inlined_call_operand.vmem [shape: bf16[1152,256], index: 1, kind: input, shape index: {}]
  %s2 = inlined_call_operand.vmem [shape: f32[1,256], index: 2, kind: input, shape index: {}]
  %s3 = inlined_call_operand.vmem [shape: bf16[32,256], index: 3, kind: input, shape index: {}]
  %s4 = inlined_call_operand.vmem [shape: bf16[256,256], index: 4, kind: input, shape index: {}]
  %s5 = inlined_call_operand.vmem [shape: f32[1,256], index: 5, kind: input, shape index: {}]
  %s6 = inlined_call_operand.vmem [shape: f32[32,256], index: 6, kind: output, shape index: {}]
  %s7 = sld [smem:[#allocation0]]
  $region91: #{tower_forward.11} parent=0
    _
  %s9 = ssub.s32 1, %s7
  %s10 = scalar_select 0, %s9, %s7
  $region1: #{tower_forward.11} parent=0
    #allocation3 [shape = 'u8[49152]{0}', space=vmem, size = 0xc000, scoped, tag = 'input window, operand 0']
    loop: start=0, step=1, limit=5
    $region2: #{tower_forward.11} parent=1 // loop_pre_header
      _
    $region3: #{tower_forward.11} parent=1 // loop_header
      %s12 = sphi 0, %s16
      %p13 = scmp.ge.s32.totalorder %s12, 5
      %s19 = sphi 0, %s31
      %s20 = sphi 0, %s27
      %s21 = sphi 0, %s19
      %s22 = sphi 0, %s20
      %s23 = sphi 0, %s21
      %s24 = sphi 0, %s22
      %s36 = sphi 0, %s38
      %s39 = sphi 0, %s36
      %s40 = sphi 0, %s39
      %s56 = sphi 0, %s40
      %s62 = sphi 0, %s64
      %s65 = sphi 0, %s62
      %s66 = sphi 0, %s65
      %s82 = sphi 0, %s66
      %s86 = sphi 0, %s86
      %s88 = sphi 0, %s86
      %s89 = sphi 0, %s88
      %s103 = sphi 0, %s89
      %s109 = sphi 0, %s111
      %s112 = sphi 0, %s109
      %s113 = sphi 0, %s112
      %s129 = sphi 0, %s113
      %s133 = sphi 0, %s133
      %s135 = sphi 0, %s133
      %s136 = sphi 0, %s135
      %s150 = sphi 0, %s136
      %s154 = sphi 0, %s154
      %s156 = sphi 0, %s154
      %s157 = sphi 0, %s156
      %s171 = sphi 0, %s157
      %s177 = sphi 0, %s179
      %s180 = sphi 0, %s177
      %s181 = sphi 0, %s180
      %s197 = sphi 0, %s181
    $region4: #{tower_forward.11} parent=1 // loop_header_branch
      %15 = sbr.rel (%p13) target = $region8
    $region5: #{tower_forward.11} parent=1 // loop_body
      %s17 = ssub.s32 %s12, 1
      %s18 = ssub.s32 %s12, 2
      %s25 = sadd.s32 1, %s20
      %p26 = scmp.ge.s32.totalorder %s25, 3
      %s27 = scalar_select %p26, 0, %s25
      %s28 = sadd.s32 1, %s19
      %s29 = scalar_select %p26, %s28, %s19
      %p30 = scmp.ge.s32.totalorder %s29, 1
      %s31 = scalar_select %p30, 0, %s29
      %s32 = ssub.s32 %s19, %s31
      %s33 = ssub.s32 %s20, %s27
      %s34 = sor.u32 %s32, %s33
      %p35 = scmp.eq.s32.totalorder %s34, 0
      %s37 = sadd.s32 %s36, 1
      %s38 = scalar_select %p35, %s36, %s37
      %p41 = pneg %p35
      %p42 = scmp.eq.s32.totalorder %s12, 2
      %p43 = por %p41, %p42
      %p44 = scmp.ne.s32.totalorder %s36, %s39
      %p45 = scmp.eq.s32.totalorder %s12, 0
      %p46 = por %p44, %p45
      %p47 = scmp.ne.s32.totalorder %s36, %s39
      %p48 = scmp.eq.s32.totalorder %s17, 2
      %p49 = por %p47, %p48
      %p50 = scmp.ne.s32.totalorder %s39, %s40
      %p51 = scmp.eq.s32.totalorder %s17, 0
      %p52 = por %p50, %p51
      %p53 = scmp.ne.s32.totalorder %s39, %s40
      %p54 = scmp.eq.s32.totalorder %s18, 2
      %p55 = por %p53, %p54
      %p57 = scmp.ne.s32.totalorder %s40, %s56
      %p58 = scmp.eq.s32.totalorder %s18, 0
      %p59 = por %p57, %p58
      %s60 = ssub.s32 %s20, %s27
      %p61 = scmp.eq.s32.totalorder %s60, 0
      %s63 = sadd.s32 %s62, 1
      %s64 = scalar_select %p61, %s62, %s63
      %p67 = pneg %p61
      %p68 = scmp.eq.s32.totalorder %s12, 2
      %p69 = por %p67, %p68
      %p70 = scmp.ne.s32.totalorder %s62, %s65
      %p71 = scmp.eq.s32.totalorder %s12, 0
      %p72 = por %p70, %p71
      %p73 = scmp.ne.s32.totalorder %s62, %s65
      %p74 = scmp.eq.s32.totalorder %s17, 2
      %p75 = por %p73, %p74
      %p76 = scmp.ne.s32.totalorder %s65, %s66
      %p77 = scmp.eq.s32.totalorder %s17, 0
      %p78 = por %p76, %p77
      %p79 = scmp.ne.s32.totalorder %s65, %s66
      %p80 = scmp.eq.s32.totalorder %s18, 2
      %p81 = por %p79, %p80
      %p83 = scmp.ne.s32.totalorder %s66, %s82
      %p84 = scmp.eq.s32.totalorder %s18, 0
      %p85 = por %p83, %p84
      %s87 = sadd.s32 %s86, 1
      %p90 = scmp.eq.s32.totalorder %s12, 2
      %p91 = scmp.ne.s32.totalorder %s86, %s88
      %p92 = scmp.eq.s32.totalorder %s12, 0
      %p93 = por %p91, %p92
      %p94 = scmp.ne.s32.totalorder %s86, %s88
      %p95 = scmp.eq.s32.totalorder %s17, 2
      %p96 = por %p94, %p95
      %p97 = scmp.ne.s32.totalorder %s88, %s89
      %p98 = scmp.eq.s32.totalorder %s17, 0
      %p99 = por %p97, %p98
      %p100 = scmp.ne.s32.totalorder %s88, %s89
      %p101 = scmp.eq.s32.totalorder %s18, 2
      %p102 = por %p100, %p101
      %p104 = scmp.ne.s32.totalorder %s89, %s103
      %p105 = scmp.eq.s32.totalorder %s18, 0
      %p106 = por %p104, %p105
      %s107 = ssub.s32 %s19, %s31
      %p108 = scmp.eq.s32.totalorder %s107, 0
      %s110 = sadd.s32 %s109, 1
      %s111 = scalar_select %p108, %s109, %s110
      %p114 = pneg %p108
      %p115 = scmp.eq.s32.totalorder %s12, 2
      %p116 = por %p114, %p115
      %p117 = scmp.ne.s32.totalorder %s109, %s112
      %p118 = scmp.eq.s32.totalorder %s12, 0
      %p119 = por %p117, %p118
      %p120 = scmp.ne.s32.totalorder %s109, %s112
      %p121 = scmp.eq.s32.totalorder %s17, 2
      %p122 = por %p120, %p121
      %p123 = scmp.ne.s32.totalorder %s112, %s113
      %p124 = scmp.eq.s32.totalorder %s17, 0
      %p125 = por %p123, %p124
      %p126 = scmp.ne.s32.totalorder %s112, %s113
      %p127 = scmp.eq.s32.totalorder %s18, 2
      %p128 = por %p126, %p127
      %p130 = scmp.ne.s32.totalorder %s113, %s129
      %p131 = scmp.eq.s32.totalorder %s18, 0
      %p132 = por %p130, %p131
      %s134 = sadd.s32 %s133, 1
      %p137 = scmp.eq.s32.totalorder %s12, 2
      %p138 = scmp.ne.s32.totalorder %s133, %s135
      %p139 = scmp.eq.s32.totalorder %s12, 0
      %p140 = por %p138, %p139
      %p141 = scmp.ne.s32.totalorder %s133, %s135
      %p142 = scmp.eq.s32.totalorder %s17, 2
      %p143 = por %p141, %p142
      %p144 = scmp.ne.s32.totalorder %s135, %s136
      %p145 = scmp.eq.s32.totalorder %s17, 0
      %p146 = por %p144, %p145
      %p147 = scmp.ne.s32.totalorder %s135, %s136
      %p148 = scmp.eq.s32.totalorder %s18, 2
      %p149 = por %p147, %p148
      %p151 = scmp.ne.s32.totalorder %s136, %s150
      %p152 = scmp.eq.s32.totalorder %s18, 0
      %p153 = por %p151, %p152
      %s155 = sadd.s32 %s154, 1
      %p158 = scmp.eq.s32.totalorder %s12, 2
      %p159 = scmp.ne.s32.totalorder %s154, %s156
      %p160 = scmp.eq.s32.totalorder %s12, 0
      %p161 = por %p159, %p160
      %p162 = scmp.ne.s32.totalorder %s154, %s156
      %p163 = scmp.eq.s32.totalorder %s17, 2
      %p164 = por %p162, %p163
      %p165 = scmp.ne.s32.totalorder %s156, %s157
      %p166 = scmp.eq.s32.totalorder %s17, 0
      %p167 = por %p165, %p166
      %p168 = scmp.ne.s32.totalorder %s156, %s157
      %p169 = scmp.eq.s32.totalorder %s18, 2
      %p170 = por %p168, %p169
      %p172 = scmp.ne.s32.totalorder %s157, %s171
      %p173 = scmp.eq.s32.totalorder %s18, 0
      %p174 = por %p172, %p173
      %s175 = ssub.s32 %s19, %s31
      %p176 = scmp.eq.s32.totalorder %s175, 0
      %s178 = sadd.s32 %s177, 1
      %s179 = scalar_select %p176, %s177, %s178
      %p182 = pneg %p176
      %p183 = scmp.eq.s32.totalorder %s12, 2
      %p184 = por %p182, %p183
      %p185 = scmp.ne.s32.totalorder %s177, %s180
      %p186 = scmp.eq.s32.totalorder %s12, 0
      %p187 = por %p185, %p186
      %p188 = scmp.ne.s32.totalorder %s177, %s180
      %p189 = scmp.eq.s32.totalorder %s17, 2
      %p190 = por %p188, %p189
      %p191 = scmp.ne.s32.totalorder %s180, %s181
      %p192 = scmp.eq.s32.totalorder %s17, 0
      %p193 = por %p191, %p192
      %p194 = scmp.ne.s32.totalorder %s180, %s181
      %p195 = scmp.eq.s32.totalorder %s18, 2
      %p196 = por %p194, %p195
      %p198 = scmp.ne.s32.totalorder %s181, %s197
      %p199 = scmp.eq.s32.totalorder %s18, 0
      %p200 = por %p198, %p199
      %p201 = scmp.le.s32.totalorder 1, %s12
      %p202 = scmp.lt.s32.totalorder %s12, 4
      %p203 = pnand %p201, %p202
      %p204 = pneg %p203
      // Predicated region
      $region9: #{tower_forward.11} parent=5 // pred_check
        _
      $region10: #{tower_forward.11} parent=5 // pred_check_branch
        %206 = sbr.rel (%p203) target = $region12
      $region11: #{tower_forward.11} parent=5 // pred_region
        %s207 = ssub.s32 %s12, 1
        // Predicated region
        $region13: #{tower_forward.11} parent=11 // pred_check
          %p208 = pneg %p99
        $region14: #{tower_forward.11} parent=11 // pred_check_branch
          %210 = sbr.rel (%p208) target = $region16
        $region15: #{tower_forward.11} parent=11 // pred_region
          _
        $region16: #{tower_forward.11} parent=11 // pred_fallthru
          _
        // Predicated region
        $region17: #{tower_forward.11} parent=11 // pred_check
          %p211 = pneg %p125
        $region18: #{tower_forward.11} parent=11 // pred_check_branch
          %213 = sbr.rel (%p211) target = $region20
        $region19: #{tower_forward.11} parent=11 // pred_region
          %s214 = smul.u32 4, %s21
          %p215 = scmp.lt.s32.totalorder %s214, 3
          %s216 = scalar_select %p215, %s214, 3
          %s217 = smul.addr %s216, 2
          %s218 = smul.addr %s217, 4
          %s219 = scalar_lea.vmem %s3, %s218
          %s220 = smul.u32 4, %s21
        $region20: #{tower_forward.11} parent=11 // pred_fallthru
          _
        // Predicated region
        $region21: #{tower_forward.11} parent=11 // pred_check
          %p221 = pneg %p146
        $region22: #{tower_forward.11} parent=11 // pred_check_branch
          %223 = sbr.rel (%p221) target = $region24
        $region23: #{tower_forward.11} parent=11 // pred_region
          _
        $region24: #{tower_forward.11} parent=11 // pred_fallthru
          _
        // Predicated region
        $region25: #{tower_forward.11} parent=11 // pred_check
          %p224 = pneg %p167
        $region26: #{tower_forward.11} parent=11 // pred_check_branch
          %226 = sbr.rel (%p224) target = $region28
        $region27: #{tower_forward.11} parent=11 // pred_region
          _
        $region28: #{tower_forward.11} parent=11 // pred_fallthru
          _
      $region12: #{tower_forward.11} parent=5 // pred_fallthru
        _
      %p227 = scmp.lt.s32.totalorder %s12, 3
      // Predicated region
      $region29: #{tower_forward.11} parent=5 // pred_check
        %p228 = pneg %p227
      $region30: #{tower_forward.11} parent=5 // pred_check_branch
        %230 = sbr.rel (%p228) target = $region32
      $region31: #{tower_forward.11} parent=5 // pred_region
        // Predicated region
        $region33: #{tower_forward.11} parent=31 // pred_check
          %p231 = pneg %p46
        $region34: #{tower_forward.11} parent=31 // pred_check_branch
          %233 = sbr.rel (%p231) target = $region36
        $region35: #{tower_forward.11} parent=31 // pred_region
          %s234 = sand.u32 %s36, 1
          %s235 = sand.u32 %s36, 1
          %s236 = smul.addr %s235, 48
          %s237 = scalar_lea.vmem [#allocation3], %s236
          %s238 = smul.u32 4, %s19
          %s239 = smul.u32 3, %s20
          %s240 = smul.addr %s238, 9
          %s241 = sadd.s32 %s239, %s240
          %s242 = smul.addr %s241, 4
          %s243 = scalar_lea.vmem %s0, %s242
          // Predicated region
          $region37: #{tower_forward.11} parent=35 // pred_check
            _
          $region38: #{tower_forward.11} parent=35 // pred_check_branch
            %245 = sbr.rel (0) target = $region40
          $region39: #{tower_forward.11} parent=35 // pred_region
            // Predicated region
            $region41: #{tower_forward.11} parent=39 // pred_check
              _
            $region42: #{tower_forward.11} parent=39 // pred_check_branch
              %247 = sbr.rel (0) target = $region44
            $region43: #{tower_forward.11} parent=39 // pred_region
              %s248 = scalar_lea.vmem %s243, 8
              %s249 = scalar_lea.vmem %s237, 8 [#allocation3]
              loop: start=0, step=1, limit=1
              $region45: #{tower_forward.11} parent=43 // loop_pre_header
                _
              $region46: #{tower_forward.11} parent=43 // loop_header
                %s251 = sphi 0, %s255
                %p252 = scmp.ge.s32.totalorder %s251, 1
                %s256 = sphi %s243, %s243
                %s257 = sphi %s237, %s237
              $region47: #{tower_forward.11} parent=43 // loop_header_branch
                %254 = sbr.rel (%p252) target = $region51
              $region48: #{tower_forward.11} parent=43 // loop_body
                %v258 = vld [vmem:[%s256] sm:$0xff]
                %259 = vst [vmem:[%s257] sm:$0xff] %v258
                %v260 = vld [vmem:[%s256 + $0x24] sm:$0xff]
                %261 = vst [vmem:[%s257 + $0xc] sm:$0xff] %v260
                %v262 = vld [vmem:[%s256 + $0x48] sm:$0xff]
                %263 = vst [vmem:[%s257 + $0x18] sm:$0xff] %v262
                %v264 = vld [vmem:[%s256 + $0x6c] sm:$0xff]
                %265 = vst [vmem:[%s257 + $0x24] sm:$0xff] %v264
              $region49: #{tower_forward.11} parent=43 // loop_footer
                %s255 = sadd.s32 1, %s251
              $region50: #{tower_forward.11} parent=43 // loop_footer_branch
                %250 = sbr.rel target = $region46
              $region51: #{tower_forward.11} parent=43 // loop_exit
                _
              loop: start=0, step=1, limit=1
              $region52: #{tower_forward.11} parent=43 // loop_pre_header
                _
              $region53: #{tower_forward.11} parent=43 // loop_header
                %s268 = sphi 0, %s272
                %p269 = scmp.ge.s32.totalorder %s268, 1
                %s273 = sphi %s248, %s248
                %s274 = sphi %s249, %s249
              $region54: #{tower_forward.11} parent=43 // loop_header_branch
                %271 = sbr.rel (%p269) target = $region58
              $region55: #{tower_forward.11} parent=43 // loop_body
                %v275 = vld [vmem:[%s273] sm:$0xf]
                %276 = vst [vmem:[%s274] sm:$0xf] %v275
                %v277 = vld [vmem:[%s273 + $0x24] sm:$0xf]
                %278 = vst [vmem:[%s274 + $0xc] sm:$0xf] %v277
                %v279 = vld [vmem:[%s273 + $0x48] sm:$0xf]
                %280 = vst [vmem:[%s274 + $0x18] sm:$0xf] %v279
                %v281 = vld [vmem:[%s273 + $0x6c] sm:$0xf]
                %282 = vst [vmem:[%s274 + $0x24] sm:$0xf] %v281
              $region56: #{tower_forward.11} parent=43 // loop_footer
                %s272 = sadd.s32 1, %s268
              $region57: #{tower_forward.11} parent=43 // loop_footer_branch
                %267 = sbr.rel target = $region53
              $region58: #{tower_forward.11} parent=43 // loop_exit
                _
            $region44: #{tower_forward.11} parent=39 // pred_fallthru
              _
          $region40: #{tower_forward.11} parent=35 // pred_fallthru
            _
          %283 = vnop
        $region36: #{tower_forward.11} parent=31 // pred_fallthru
          _
        // Predicated region
        $region59: #{tower_forward.11} parent=31 // pred_check
          %p284 = pneg %p72
        $region60: #{tower_forward.11} parent=31 // pred_check_branch
          %286 = sbr.rel (%p284) target = $region62
        $region61: #{tower_forward.11} parent=31 // pred_region
          %s287 = smul.u32 48, %s20
          %p288 = scmp.lt.s32.totalorder %s287, 143
          %s289 = scalar_select %p288, %s287, 143
          %s290 = smul.addr %s289, 2
          %s291 = smul.addr %s290, 4
          %s292 = scalar_lea.vmem %s1, %s291
          %s293 = smul.u32 48, %s20
        $region62: #{tower_forward.11} parent=31 // pred_fallthru
          _
      $region32: #{tower_forward.11} parent=5 // pred_fallthru
        _
      %p294 = scmp.le.s32.totalorder 1, %s12
      %p295 = scmp.lt.s32.totalorder %s12, 4
      %p296 = pnand %p294, %p295
      %p297 = pneg %p296
      // Predicated region
      $region63: #{tower_forward.11} parent=5 // pred_check
        _
      $region64: #{tower_forward.11} parent=5 // pred_check_branch
        %299 = sbr.rel (%p296) target = $region66
      $region65: #{tower_forward.11} parent=5 // pred_region
        %s300 = ssub.s32 %s12, 1
        %s301 = sand.u32 %s39, 1
        %s302 = sand.u32 %s39, 1
        %s303 = smul.addr %s302, 48
        %s304 = scalar_lea.vmem [#allocation3], %s303
        // Predicated region
        $region67: #{tower_forward.11} parent=65 // pred_check
          %p305 = pneg %p52
        $region68: #{tower_forward.11} parent=65 // pred_check_branch
          %307 = sbr.rel (%p305) target = $region70
        $region69: #{tower_forward.11} parent=65 // pred_region
          _
        $region70: #{tower_forward.11} parent=65 // pred_fallthru
          _
        %s308 = sand.u32 %s39, 1
        %s309 = sand.u32 %s39, 1
        %s310 = smul.addr %s309, 48
        %s311 = scalar_lea.vmem [#allocation3], %s310
        %p312 = pneg %p52
        %p313 = pneg %p49
        %s314 = smul.u32 48, %s22
        %p315 = scmp.lt.s32.totalorder %s314, 143
        %s316 = scalar_select %p315, %s314, 143
        %s317 = smul.addr %s316, 2
        %s318 = smul.addr %s317, 4
        %s319 = scalar_lea.vmem %s1, %s318
        %p320 = pneg %p78
        %p321 = pneg %p75
        %p322 = pneg %p99
        %p323 = pneg %p96
        %s324 = smul.u32 4, %s21
        %p325 = scmp.lt.s32.totalorder %s324, 3
        %s326 = scalar_select %p325, %s324, 3
        %s327 = smul.addr %s326, 2
        %s328 = smul.addr %s327, 4
        %s329 = scalar_lea.vmem %s3, %s328
        %p330 = pneg %p125
        %p331 = pneg %p122
        %p332 = pneg %p146
        %p333 = pneg %p143
        %p334 = pneg %p167
        %p335 = pneg %p164
        %p336 = pneg %p193
        %p337 = pneg %p190
        %s338 = smul.u32 4, %s21
        %p339 = scmp.lt.s32.totalorder %s338, 3
        %s340 = scalar_select %p339, %s338, 3
        %s341 = smul.addr %s340, 2
        %s342 = smul.addr %s341, 8
        %s343 = scalar_lea.vmem %s6, %s342
        %s344 = smul.u32 4, %s21
        %s345 = smul.u32 3, %s22
        %s346 = smul.u32 48, %s22
        %p347 = scmp.lt.s32.totalorder %s346, 143
        %s348 = scalar_select %p347, %s346, 143
        %s349 = smul.addr %s348, 2
        %s350 = smul.addr %s349, 4
        %s351 = scalar_lea.vmem %s1, %s350
        %s352 = smul.u32 48, %s22
        %s353 = smul.u32 4, %s21
        %p354 = scmp.lt.s32.totalorder %s353, 3
        %s355 = scalar_select %p354, %s353, 3
        %s356 = smul.addr %s355, 2
        %s357 = smul.addr %s356, 4
        %s358 = scalar_lea.vmem %s3, %s357
        %s359 = smul.u32 4, %s21
        %s360 = smul.u32 4, %s21
        %p361 = scmp.lt.s32.totalorder %s360, 3
        %s362 = scalar_select %p361, %s360, 3
        %s363 = smul.addr %s362, 2
        %s364 = smul.addr %s363, 8
        %s365 = scalar_lea.vmem %s6, %s364
        %s366 = smul.u32 4, %s21
        %p368 = scmp.eq.s32.totalorder %s22, 0
        // Predicated region
        $region71: #{tower_forward.11} parent=65 // pred_check
          %p369 = pneg %p368
        $region72: #{tower_forward.11} parent=65 // pred_check_branch
          %371 = sbr.rel (%p369) target = $region74
        $region73: #{tower_forward.11} parent=65 // pred_region
          %372 = vst [vmem:[#allocation2] sm:$0xff] 0.0
          %373 = vst [vmem:[#allocation2 + $0x8] sm:$0xff] 0.0
          %374 = vst [vmem:[#allocation2 + $0x10] sm:$0xff] 0.0
          %375 = vst [vmem:[#allocation2 + $0x18] sm:$0xff] 0.0
          %376 = vst [vmem:[#allocation2 + $0x20] sm:$0xff] 0.0
          %377 = vst [vmem:[#allocation2 + $0x28] sm:$0xff] 0.0
          %378 = vst [vmem:[#allocation2 + $0x30] sm:$0xff] 0.0
          %379 = vst [vmem:[#allocation2 + $0x38] sm:$0xff] 0.0
        $region74: #{tower_forward.11} parent=65 // pred_fallthru
          _
        %v380 = vld [vmem:[#allocation2] sm:$0xff]
        %v381 = vld [vmem:[#allocation2 + $0x8] sm:$0xff]
        %v382 = vld [vmem:[#allocation2 + $0x10] sm:$0xff]
        %v383 = vld [vmem:[#allocation2 + $0x18] sm:$0xff]
        %v384 = vld [vmem:[#allocation2 + $0x20] sm:$0xff]
        %v385 = vld [vmem:[#allocation2 + $0x28] sm:$0xff]
        %v386 = vld [vmem:[#allocation2 + $0x30] sm:$0xff]
        %v387 = vld [vmem:[#allocation2 + $0x38] sm:$0xff]
        %v388 = vld [vmem:[%s304] sm:$0xff]
        %v389 = vld [vmem:[%s304 + $0x8] sm:$0xf]
        %v390 = vld [vmem:[%s304 + $0xc] sm:$0xff]
        %v391 = vld [vmem:[%s304 + $0x14] sm:$0xf]
        %v392 = vld [vmem:[%s304 + $0x18] sm:$0xff]
        %v393 = vld [vmem:[%s304 + $0x20] sm:$0xf]
        %v394 = vld [vmem:[%s304 + $0x24] sm:$0xff]
        %v395 = vld [vmem:[%s304 + $0x2c] sm:$0xf]
        %v396 = vld [vmem:[%s351] sm:$0xff]
        %v397 = vld [vmem:[%s351 + $0x8] sm:$0xff]
        %v398 = vld [vmem:[%s351 + $0x10] sm:$0xff]
        %v399 = vld [vmem:[%s351 + $0x18] sm:$0xff]
        %v400 = vld [vmem:[%s351 + $0x20] sm:$0xff]
        %v401 = vld [vmem:[%s351 + $0x28] sm:$0xff]
        %v402 = vld [vmem:[%s351 + $0x30] sm:$0xff]
        %v403 = vld [vmem:[%s351 + $0x38] sm:$0xff]
        %v404 = vld [vmem:[%s351 + $0x40] sm:$0xff]
        %v405 = vld [vmem:[%s351 + $0x48] sm:$0xff]
        %v406 = vld [vmem:[%s351 + $0x50] sm:$0xff]
        %v407 = vld [vmem:[%s351 + $0x58] sm:$0xff]
        %v408 = vld [vmem:[%s351 + $0x60] sm:$0xff]
        %v409 = vld [vmem:[%s351 + $0x68] sm:$0xff]
        %v410 = vld [vmem:[%s351 + $0x70] sm:$0xff]
        %v411 = vld [vmem:[%s351 + $0x78] sm:$0xff]
        %v412 = vld [vmem:[%s351 + $0x80] sm:$0xff]
        %v413 = vld [vmem:[%s351 + $0x88] sm:$0xff]
        %v414 = vld [vmem:[%s351 + $0x90] sm:$0xff]
        %v415 = vld [vmem:[%s351 + $0x98] sm:$0xff]
        %v416 = vld [vmem:[%s351 + $0xa0] sm:$0xff]
        %v417 = vld [vmem:[%s351 + $0xa8] sm:$0xff]
        %v418 = vld [vmem:[%s351 + $0xb0] sm:$0xff]
        %v419 = vld [vmem:[%s351 + $0xb8] sm:$0xff]
        %v420 = vld [vmem:[%s351 + $0xc0] sm:$0xff]
        %v421 = vld [vmem:[%s351 + $0xc8] sm:$0xff]
        %v422 = vld [vmem:[%s351 + $0xd0] sm:$0xff]
        %v423 = vld [vmem:[%s351 + $0xd8] sm:$0xff]
        %v424 = vld [vmem:[%s351 + $0xe0] sm:$0xff]
        %v425 = vld [vmem:[%s351 + $0xe8] sm:$0xff]
        %v426 = vld [vmem:[%s351 + $0xf0] sm:$0xff]
        %v427 = vld [vmem:[%s351 + $0xf8] sm:$0xff]
        %v428 = vld [vmem:[%s351 + $0x100] sm:$0xff]
        %v429 = vld [vmem:[%s351 + $0x108] sm:$0xff]
        %v430 = vld [vmem:[%s351 + $0x110] sm:$0xff]
        %v431 = vld [vmem:[%s351 + $0x118] sm:$0xff]
        %v432 = vld [vmem:[%s351 + $0x120] sm:$0xff]
        %v433 = vld [vmem:[%s351 + $0x128] sm:$0xff]
        %v434 = vld [vmem:[%s351 + $0x130] sm:$0xff]
        %v435 = vld [vmem:[%s351 + $0x138] sm:$0xff]
        %v436 = vld [vmem:[%s351 + $0x140] sm:$0xff]
        %v437 = vld [vmem:[%s351 + $0x148] sm:$0xff]
        %v438 = vld [vmem:[%s351 + $0x150] sm:$0xff]
        %v439 = vld [vmem:[%s351 + $0x158] sm:$0xff]
        %v440 = vld [vmem:[%s351 + $0x160] sm:$0xff]
        %v441 = vld [vmem:[%s351 + $0x168] sm:$0xff]
        %v442 = vld [vmem:[%s351 + $0x170] sm:$0xff]
        %v443 = vld [vmem:[%s351 + $0x178] sm:$0xff]
        %v452 = vunpack.c.l.b16 %v388
        %v453 = vunpack.c.h.b16 %v388
        %v454 = vunpack.c.l.b16 %v389
        %v455 = vunpack.c.l.b16 %v390
        %v456 = vunpack.c.h.b16 %v390
        %v457 = vunpack.c.l.b16 %v391
        %v458 = vunpack.c.l.b16 %v392
        %v459 = vunpack.c.h.b16 %v392
        %v460 = vunpack.c.l.b16 %v393
        %v461 = vunpack.c.l.b16 %v394
        %v462 = vunpack.c.h.b16 %v394
        %v463 = vunpack.c.l.b16 %v395
        %v464 = vpack.c.b16 %v455, %v452
        %v465 = vpack.c.b16 %v456, %v453
        %v466 = vpack.c.b16 %v457, %v454
        %v467 = vpack.c.b16 %v461, %v458
        %v468 = vpack.c.b16 %v462, %v459
        %v469 = vpack.c.b16 %v463, %v460
        %v524 = vunpack.c.l.b16 %v396
        %v525 = vunpack.c.h.b16 %v396
        %v526 = vunpack.c.l.b16 %v397
        %v527 = vunpack.c.h.b16 %v397
        %v528 = vunpack.c.l.b16 %v398
        %v529 = vunpack.c.h.b16 %v398
        %v530 = vunpack.c.l.b16 %v399
        %v531 = vunpack.c.h.b16 %v399
        %v532 = vunpack.c.l.b16 %v400
        %v533 = vunpack.c.h.b16 %v400
        %v534 = vunpack.c.l.b16 %v401
        %v535 = vunpack.c.h.b16 %v401
        %v536 = vunpack.c.l.b16 %v402
        %v537 = vunpack.c.h.b16 %v402
        %v538 = vunpack.c.l.b16 %v403
        %v539 = vunpack.c.h.b16 %v403
        %v540 = vunpack.c.l.b16 %v404
        %v541 = vunpack.c.h.b16 %v404
        %v542 = vunpack.c.l.b16 %v405
        %v543 = vunpack.c.h.b16 %v405
        %v544 = vunpack.c.l.b16 %v406
        %v545 = vunpack.c.h.b16 %v406
        %v546 = vunpack.c.l.b16 %v407
        %v547 = vunpack.c.h.b16 %v407
        %v548 = vunpack.c.l.b16 %v408
        %v549 = vunpack.c.h.b16 %v408
        %v550 = vunpack.c.l.b16 %v409
        %v551 = vunpack.c.h.b16 %v409
        %v552 = vunpack.c.l.b16 %v410
        %v553 = vunpack.c.h.b16 %v410
        %v554 = vunpack.c.l.b16 %v411
        %v555 = vunpack.c.h.b16 %v411
        %v556 = vunpack.c.l.b16 %v412
        %v557 = vunpack.c.h.b16 %v412
        %v558 = vunpack.c.l.b16 %v413
        %v559 = vunpack.c.h.b16 %v413
        %v560 = vunpack.c.l.b16 %v414
        %v561 = vunpack.c.h.b16 %v414
        %v562 = vunpack.c.l.b16 %v415
        %v563 = vunpack.c.h.b16 %v415
        %v564 = vunpack.c.l.b16 %v416
        %v565 = vunpack.c.h.b16 %v416
        %v566 = vunpack.c.l.b16 %v417
        %v567 = vunpack.c.h.b16 %v417
        %v568 = vunpack.c.l.b16 %v418
        %v569 = vunpack.c.h.b16 %v418
        %v570 = vunpack.c.l.b16 %v419
        %v571 = vunpack.c.h.b16 %v419
        %v572 = vunpack.c.l.b16 %v420
        %v573 = vunpack.c.h.b16 %v420
        %v574 = vunpack.c.l.b16 %v421
        %v575 = vunpack.c.h.b16 %v421
        %v576 = vunpack.c.l.b16 %v422
        %v577 = vunpack.c.h.b16 %v422
        %v578 = vunpack.c.l.b16 %v423
        %v579 = vunpack.c.h.b16 %v423
        %v580 = vunpack.c.l.b16 %v424
        %v581 = vunpack.c.h.b16 %v424
        %v582 = vunpack.c.l.b16 %v425
        %v583 = vunpack.c.h.b16 %v425
        %v584 = vunpack.c.l.b16 %v426
        %v585 = vunpack.c.h.b16 %v426
        %v586 = vunpack.c.l.b16 %v427
        %v587 = vunpack.c.h.b16 %v427
        %v588 = vunpack.c.l.b16 %v428
        %v589 = vunpack.c.h.b16 %v428
        %v590 = vunpack.c.l.b16 %v429
        %v591 = vunpack.c.h.b16 %v429
        %v592 = vunpack.c.l.b16 %v430
        %v593 = vunpack.c.h.b16 %v430
        %v594 = vunpack.c.l.b16 %v431
        %v595 = vunpack.c.h.b16 %v431
        %v596 = vunpack.c.l.b16 %v432
        %v597 = vunpack.c.h.b16 %v432
        %v598 = vunpack.c.l.b16 %v433
        %v599 = vunpack.c.h.b16 %v433
        %v600 = vunpack.c.l.b16 %v434
        %v601 = vunpack.c.h.b16 %v434
        %v602 = vunpack.c.l.b16 %v435
        %v603 = vunpack.c.h.b16 %v435
        %v604 = vunpack.c.l.b16 %v436
        %v605 = vunpack.c.h.b16 %v436
        %v606 = vunpack.c.l.b16 %v437
        %v607 = vunpack.c.h.b16 %v437
        %v608 = vunpack.c.l.b16 %v438
        %v609 = vunpack.c.h.b16 %v438
        %v610 = vunpack.c.l.b16 %v439
        %v611 = vunpack.c.h.b16 %v439
        %v612 = vunpack.c.l.b16 %v440
        %v613 = vunpack.c.h.b16 %v440
        %v614 = vunpack.c.l.b16 %v441
        %v615 = vunpack.c.h.b16 %v441
        %v616 = vunpack.c.l.b16 %v442
        %v617 = vunpack.c.h.b16 %v442
        %v618 = vunpack.c.l.b16 %v443
        %v619 = vunpack.c.h.b16 %v443
        %v620 = vpack.c.b16 %v526, %v524
        %v621 = vpack.c.b16 %v527, %v525
        %v622 = vpack.c.b16 %v530, %v528
        %v623 = vpack.c.b16 %v531, %v529
        %v624 = vpack.c.b16 %v534, %v532
        %v625 = vpack.c.b16 %v535, %v533
        %v626 = vpack.c.b16 %v538, %v536
        %v627 = vpack.c.b16 %v539, %v537
        %v628 = vpack.c.b16 %v542, %v540
        %v629 = vpack.c.b16 %v543, %v541
        %v630 = vpack.c.b16 %v546, %v544
        %v631 = vpack.c.b16 %v547, %v545
        %v632 = vpack.c.b16 %v550, %v548
        %v633 = vpack.c.b16 %v551, %v549
        %v634 = vpack.c.b16 %v554, %v552
        %v635 = vpack.c.b16 %v555, %v553
        %v636 = vpack.c.b16 %v558, %v556
        %v637 = vpack.c.b16 %v559, %v557
        %v638 = vpack.c.b16 %v562, %v560
        %v639 = vpack.c.b16 %v563, %v561
        %v640 = vpack.c.b16 %v566, %v564
        %v641 = vpack.c.b16 %v567, %v565
        %v642 = vpack.c.b16 %v570, %v568
        %v643 = vpack.c.b16 %v571, %v569
        %v644 = vpack.c.b16 %v574, %v572
        %v645 = vpack.c.b16 %v575, %v573
        %v646 = vpack.c.b16 %v578, %v576
        %v647 = vpack.c.b16 %v579, %v577
        %v648 = vpack.c.b16 %v582, %v580
        %v649 = vpack.c.b16 %v583, %v581
        %v650 = vpack.c.b16 %v586, %v584
        %v651 = vpack.c.b16 %v587, %v585
        %v652 = vpack.c.b16 %v590, %v588
        %v653 = vpack.c.b16 %v591, %v589
        %v654 = vpack.c.b16 %v594, %v592
        %v655 = vpack.c.b16 %v595, %v593
        %v656 = vpack.c.b16 %v598, %v596
        %v657 = vpack.c.b16 %v599, %v597
        %v658 = vpack.c.b16 %v602, %v600
        %v659 = vpack.c.b16 %v603, %v601
        %v660 = vpack.c.b16 %v606, %v604
        %v661 = vpack.c.b16 %v607, %v605
        %v662 = vpack.c.b16 %v610, %v608
        %v663 = vpack.c.b16 %v611, %v609
        %v664 = vpack.c.b16 %v614, %v612
        %v665 = vpack.c.b16 %v615, %v613
        %v666 = vpack.c.b16 %v618, %v616
        %v667 = vpack.c.b16 %v619, %v617
        %716 = vmatprep.subr.bf16.mxu0 %v621
        %717 = vmatpush1.bf16.msra.mxu0 %v620
        %718 = vmatprep.subr.bf16.mxu0 %v623
        %719 = vmatpush1.bf16.msra.mxu0 %v622
        %720 = vmatprep.subr.bf16.mxu0 %v625
        %721 = vmatpush1.bf16.msra.mxu0 %v624
        %722 = vmatprep.subr.bf16.mxu0 %v627
        %723 = vmatpush1.bf16.msra.mxu0 %v626
        %724 = vmatprep.subr.bf16.mxu0 %v629
        %725 = vmatpush1.bf16.msra.mxu0 %v628
        %726 = vmatprep.subr.bf16.mxu0 %v631
        %727 = vmatpush1.bf16.msra.mxu0 %v630
        %728 = vmatprep.subr.bf16.mxu0 %v633
        %729 = vmatpush1.bf16.msra.mxu0 %v632
        %730 = vmatprep.subr.bf16.mxu0 %v635
        %731 = vmatpush1.bf16.msra.mxu0 %v634
        %732 = vmatprep.subr.bf16.mxu0 %v637
        %733 = vmatpush1.bf16.msra.mxu0 %v636
        %734 = vmatprep.subr.bf16.mxu0 %v639
        %735 = vmatpush1.bf16.msra.mxu0 %v638
        %736 = vmatprep.subr.bf16.mxu0 %v641
        %737 = vmatpush1.bf16.msra.mxu0 %v640
        %738 = vmatprep.subr.bf16.mxu0 %v643
        %739 = vmatpush1.bf16.msra.mxu0 %v642
        %740 = vmatprep.subr.bf16.mxu0 %v645
        %741 = vmatpush1.bf16.msra.mxu0 %v644
        %742 = vmatprep.subr.bf16.mxu0 %v647
        %743 = vmatpush1.bf16.msra.mxu0 %v646
        %744 = vmatprep.subr.bf16.mxu0 %v649
        %745 = vmatpush1.bf16.msra.mxu0 %v648
        %746 = vmatprep.subr.bf16.mxu0 %v651
        %747 = vmatpush1.bf16.msra.mxu0 %v650
        %748 = vmatprep.mubr.bf16.mxu0 %v465
        %749 = vmatmul.mubr.bf16.gmra.mrb[0].mxu0 %v464
        %v750 = vpop.f32.mrb[0].mxu0
        %v751 = vadd.f32 0.0, %v750
        %v752 = vpop.f32.mrb[0].mxu0
        %v753 = vadd.f32 0.0, %v752
        %v754 = vpop.f32.mrb[0].mxu0
        %v755 = vadd.f32 0.0, %v754
        %v756 = vpop.f32.mrb[0].mxu0
        %v757 = vadd.f32 0.0, %v756
        %758 = vmatprep.mubr.bf16.mxu0 %v468
        %759 = vmatmul.mubr.bf16.gmra.mrb[0].mxu0 %v467
        %v760 = vpop.f32.mrb[0].mxu0
        %v761 = vadd.f32 0.0, %v760
        %v762 = vpop.f32.mrb[0].mxu0
        %v763 = vadd.f32 0.0, %v762
        %v764 = vpop.f32.mrb[0].mxu0
        %v765 = vadd.f32 0.0, %v764
        %v766 = vpop.f32.mrb[0].mxu0
        %v767 = vadd.f32 0.0, %v766
        %768 = vdwg.mxu0
        %769 = vmatprep.subr.bf16.mxu0 %v653
        %770 = vmatpush1.bf16.msra.mxu0 %v652
        %771 = vmatprep.subr.bf16.mxu0 %v655
        %772 = vmatpush1.bf16.msra.mxu0 %v654
        %773 = vmatprep.subr.bf16.mxu0 %v657
        %774 = vmatpush1.bf16.msra.mxu0 %v656
        %775 = vmatprep.subr.bf16.mxu0 %v659
        %776 = vmatpush1.bf16.msra.mxu0 %v658
        %777 = vmatprep.subr.bf16.mxu0 %v661
        %778 = vmatpush1.bf16.msra.mxu0 %v660
        %779 = vmatprep.subr.bf16.mxu0 %v663
        %780 = vmatpush1.bf16.msra.mxu0 %v662
        %781 = vmatprep.subr.bf16.mxu0 %v665
        %782 = vmatpush1.bf16.msra.mxu0 %v664
        %783 = vmatprep.subr.bf16.mxu0 %v667
        %784 = vmatpush1.bf16.msra.mxu0 %v666
        %785 = vmatprep.subr.bf16.mxu0 0
        %786 = vmatpush1.bf16.msra.mxu0 0
        %787 = vmatprep.subr.bf16.mxu0 0
        %788 = vmatpush1.bf16.msra.mxu0 0
        %789 = vmatprep.subr.bf16.mxu0 0
        %790 = vmatpush1.bf16.msra.mxu0 0
        %791 = vmatprep.subr.bf16.mxu0 0
        %792 = vmatpush1.bf16.msra.mxu0 0
        %793 = vmatprep.subr.bf16.mxu0 0
        %794 = vmatpush1.bf16.msra.mxu0 0
        %795 = vmatprep.subr.bf16.mxu0 0
        %796 = vmatpush1.bf16.msra.mxu0 0
        %797 = vmatprep.subr.bf16.mxu0 0
        %798 = vmatpush1.bf16.msra.mxu0 0
        %799 = vmatprep.subr.bf16.mxu0 0
        %800 = vmatpush1.bf16.msra.mxu0 0
        %801 = vmatprep.mubr.bf16.mxu0 0
        %802 = vmatmul.mubr.bf16.gmra.mrb[0].mxu0 %v466
        %v803 = vpop.f32.mrb[0].mxu0
        %v804 = vadd.f32 %v751, %v803
        %v805 = vpop.f32.mrb[0].mxu0
        %v806 = vadd.f32 %v753, %v805
        %v807 = vpop.f32.mrb[0].mxu0
        %v808 = vadd.f32 %v755, %v807
        %v809 = vpop.f32.mrb[0].mxu0
        %v810 = vadd.f32 %v757, %v809
        %811 = vmatprep.mubr.bf16.mxu0 0
        %812 = vmatmul.mubr.bf16.gmra.mrb[0].mxu0 %v469
        %v813 = vpop.f32.mrb[0].mxu0
        %v814 = vadd.f32 %v761, %v813
        %v815 = vpop.f32.mrb[0].mxu0
        %v816 = vadd.f32 %v763, %v815
        %v817 = vpop.f32.mrb[0].mxu0
        %v818 = vadd.f32 %v765, %v817
        %v819 = vpop.f32.mrb[0].mxu0
        %v820 = vadd.f32 %v767, %v819
        %821 = vdwg.mxu0
        %v822 = vadd.f32 %v380, %v804
        %v823 = vadd.f32 %v381, %v806
        %v824 = vadd.f32 %v382, %v808
        %v825 = vadd.f32 %v383, %v810
        %v826 = vadd.f32 %v384, %v814
        %v827 = vadd.f32 %v385, %v816
        %v828 = vadd.f32 %v386, %v818
        %v829 = vadd.f32 %v387, %v820
        %830 = vst [vmem:[#allocation2] sm:$0xff] %v822
        %831 = vst [vmem:[#allocation2 + $0x8] sm:$0xff] %v823
        %832 = vst [vmem:[#allocation2 + $0x10] sm:$0xff] %v824
        %833 = vst [vmem:[#allocation2 + $0x18] sm:$0xff] %v825
        %834 = vst [vmem:[#allocation2 + $0x20] sm:$0xff] %v826
        %835 = vst [vmem:[#allocation2 + $0x28] sm:$0xff] %v827
        %836 = vst [vmem:[#allocation2 + $0x30] sm:$0xff] %v828
        %837 = vst [vmem:[#allocation2 + $0x38] sm:$0xff] %v829
        %p838 = scmp.eq.s32.totalorder %s22, 2
        // Predicated region
        $region75: #{tower_forward.11} parent=65 // pred_check
          %p839 = pneg %p838
        $region76: #{tower_forward.11} parent=65 // pred_check_branch
          %841 = sbr.rel (%p839) target = $region78
        $region77: #{tower_forward.11} parent=65 // pred_region
          %v842 = vld [vmem:[#allocation2] sm:$0xff]
          %v843 = vld [vmem:[#allocation2 + $0x8] sm:$0xff]
          %v844 = vld [vmem:[#allocation2 + $0x10] sm:$0xff]
          %v845 = vld [vmem:[#allocation2 + $0x18] sm:$0xff]
          %v846 = vld [vmem:[#allocation2 + $0x20] sm:$0xff]
          %v847 = vld [vmem:[#allocation2 + $0x28] sm:$0xff]
          %v848 = vld [vmem:[#allocation2 + $0x30] sm:$0xff]
          %v849 = vld [vmem:[#allocation2 + $0x38] sm:$0xff]
          %v850 = vld [vmem:[%s2] sm:$0x3]
          %v852 = vlaneseq
          %v853 = vshrl.u32 %v852, 7
          %v854 = vsub.s32 0, %v853
          %v855 = vrot.slane %v850, %v854
          %v856 = vlaneseq
          %v857 = vshrl.u32 %v856, 7
          %v858 = vsub.s32 1, %v857
          %v859 = vrot.slane %v850, %v858
          %v862 = vadd.f32 %v842, %v855
          %v863 = vadd.f32 %v843, %v859
          %v864 = vadd.f32 %v844, %v855
          %v865 = vadd.f32 %v845, %v859
          %v866 = vadd.f32 %v846, %v855
          %v867 = vadd.f32 %v847, %v859
          %v868 = vadd.f32 %v848, %v855
          %v869 = vadd.f32 %v849, %v859
          %v870 = vmax.f32 %v862, 0.0
          %v871 = vmax.f32 %v863, 0.0
          %v872 = vmax.f32 %v864, 0.0
          %v873 = vmax.f32 %v865, 0.0
          %v874 = vmax.f32 %v866, 0.0
          %v875 = vmax.f32 %v867, 0.0
          %v876 = vmax.f32 %v868, 0.0
          %v877 = vmax.f32 %v869, 0.0
          %v878 = vld [vmem:[%s358] sm:$0xff]
          %v879 = vld [vmem:[%s358 + $0x8] sm:$0xff]
          %v880 = vld [vmem:[%s358 + $0x10] sm:$0xff]
          %v881 = vld [vmem:[%s358 + $0x18] sm:$0xff]
          %v882 = vunpack.c.l.bf16 %v878
          %v883 = vunpack.c.h.bf16 %v878
          %v884 = vunpack.c.l.bf16 %v879
          %v885 = vunpack.c.h.bf16 %v879
          %v886 = vunpack.c.l.bf16 %v880
          %v887 = vunpack.c.h.bf16 %v880
          %v888 = vunpack.c.l.bf16 %v881
          %v889 = vunpack.c.h.bf16 %v881
          %v890 = vadd.f32 %v870, %v882
          %v891 = vadd.f32 %v871, %v883
          %v892 = vadd.f32 %v872, %v884
          %v893 = vadd.f32 %v873, %v885
          %v894 = vadd.f32 %v874, %v886
          %v895 = vadd.f32 %v875, %v887
          %v896 = vadd.f32 %v876, %v888
          %v897 = vadd.f32 %v877, %v889
          %v898 = vpack.c.bf16 %v892, %v890
          %v899 = vpack.c.bf16 %v893, %v891
          %v900 = vpack.c.bf16 %v896, %v894
          %v901 = vpack.c.bf16 %v897, %v895
          %v902 = vld [vmem:[%s4] sm:$0xff]
          %v903 = vld [vmem:[%s4 + $0x8] sm:$0xff]
          %v904 = vld [vmem:[%s4 + $0x10] sm:$0xff]
          %v905 = vld [vmem:[%s4 + $0x18] sm:$0xff]
          %v906 = vld [vmem:[%s4 + $0x20] sm:$0xff]
          %v907 = vld [vmem:[%s4 + $0x28] sm:$0xff]
          %v908 = vld [vmem:[%s4 + $0x30] sm:$0xff]
          %v909 = vld [vmem:[%s4 + $0x38] sm:$0xff]
          %v910 = vld [vmem:[%s4 + $0x40] sm:$0xff]
          %v911 = vld [vmem:[%s4 + $0x48] sm:$0xff]
          %v912 = vld [vmem:[%s4 + $0x50] sm:$0xff]
          %v913 = vld [vmem:[%s4 + $0x58] sm:$0xff]
          %v914 = vld [vmem:[%s4 + $0x60] sm:$0xff]
          %v915 = vld [vmem:[%s4 + $0x68] sm:$0xff]
          %v916 = vld [vmem:[%s4 + $0x70] sm:$0xff]
          %v917 = vld [vmem:[%s4 + $0x78] sm:$0xff]
          %v918 = vld [vmem:[%s4 + $0x80] sm:$0xff]
          %v919 = vld [vmem:[%s4 + $0x88] sm:$0xff]
          %v920 = vld [vmem:[%s4 + $0x90] sm:$0xff]
          %v921 = vld [vmem:[%s4 + $0x98] sm:$0xff]
          %v922 = vld [vmem:[%s4 + $0xa0] sm:$0xff]
          %v923 = vld [vmem:[%s4 + $0xa8] sm:$0xff]
          %v924 = vld [vmem:[%s4 + $0xb0] sm:$0xff]
          %v925 = vld [vmem:[%s4 + $0xb8] sm:$0xff]
          %v926 = vld [vmem:[%s4 + $0xc0] sm:$0xff]
          %v927 = vld [vmem:[%s4 + $0xc8] sm:$0xff]
          %v928 = vld [vmem:[%s4 + $0xd0] sm:$0xff]
          %v929 = vld [vmem:[%s4 + $0xd8] sm:$0xff]
          %v930 = vld [vmem:[%s4 + $0xe0] sm:$0xff]
          %v931 = vld [vmem:[%s4 + $0xe8] sm:$0xff]
          %v932 = vld [vmem:[%s4 + $0xf0] sm:$0xff]
          %v933 = vld [vmem:[%s4 + $0xf8] sm:$0xff]
          %v934 = vld [vmem:[%s5] sm:$0x3]
          %v936 = vlaneseq
          %v937 = vshrl.u32 %v936, 7
          %v938 = vsub.s32 0, %v937
          %v939 = vrot.slane %v934, %v938
          %v940 = vlaneseq
          %v941 = vshrl.u32 %v940, 7
          %v942 = vsub.s32 1, %v941
          %v943 = vrot.slane %v934, %v942
          %v978 = vunpack.c.l.b16 %v902
          %v979 = vunpack.c.h.b16 %v902
          %v980 = vunpack.c.l.b16 %v903
          %v981 = vunpack.c.h.b16 %v903
          %v982 = vunpack.c.l.b16 %v904
          %v983 = vunpack.c.h.b16 %v904
          %v984 = vunpack.c.l.b16 %v905
          %v985 = vunpack.c.h.b16 %v905
          %v986 = vunpack.c.l.b16 %v906
          %v987 = vunpack.c.h.b16 %v906
          %v988 = vunpack.c.l.b16 %v907
          %v989 = vunpack.c.h.b16 %v907
          %v990 = vunpack.c.l.b16 %v908
          %v991 = vunpack.c.h.b16 %v908
          %v992 = vunpack.c.l.b16 %v909
          %v993 = vunpack.c.h.b16 %v909
          %v994 = vunpack.c.l.b16 %v910
          %v995 = vunpack.c.h.b16 %v910
          %v996 = vunpack.c.l.b16 %v911
          %v997 = vunpack.c.h.b16 %v911
          %v998 = vunpack.c.l.b16 %v912
          %v999 = vunpack.c.h.b16 %v912
          %v1000 = vunpack.c.l.b16 %v913
          %v1001 = vunpack.c.h.b16 %v913
          %v1002 = vunpack.c.l.b16 %v914
          %v1003 = vunpack.c.h.b16 %v914
          %v1004 = vunpack.c.l.b16 %v915
          %v1005 = vunpack.c.h.b16 %v915
          %v1006 = vunpack.c.l.b16 %v916
          %v1007 = vunpack.c.h.b16 %v916
          %v1008 = vunpack.c.l.b16 %v917
          %v1009 = vunpack.c.h.b16 %v917
          %v1010 = vunpack.c.l.b16 %v918
          %v1011 = vunpack.c.h.b16 %v918
          %v1012 = vunpack.c.l.b16 %v919
          %v1013 = vunpack.c.h.b16 %v919
          %v1014 = vunpack.c.l.b16 %v920
          %v1015 = vunpack.c.h.b16 %v920
          %v1016 = vunpack.c.l.b16 %v921
          %v1017 = vunpack.c.h.b16 %v921
          %v1018 = vunpack.c.l.b16 %v922
          %v1019 = vunpack.c.h.b16 %v922
          %v1020 = vunpack.c.l.b16 %v923
          %v1021 = vunpack.c.h.b16 %v923
          %v1022 = vunpack.c.l.b16 %v924
          %v1023 = vunpack.c.h.b16 %v924
          %v1024 = vunpack.c.l.b16 %v925
          %v1025 = vunpack.c.h.b16 %v925
          %v1026 = vunpack.c.l.b16 %v926
          %v1027 = vunpack.c.h.b16 %v926
          %v1028 = vunpack.c.l.b16 %v927
          %v1029 = vunpack.c.h.b16 %v927
          %v1030 = vunpack.c.l.b16 %v928
          %v1031 = vunpack.c.h.b16 %v928
          %v1032 = vunpack.c.l.b16 %v929
          %v1033 = vunpack.c.h.b16 %v929
          %v1034 = vunpack.c.l.b16 %v930
          %v1035 = vunpack.c.h.b16 %v930
          %v1036 = vunpack.c.l.b16 %v931
          %v1037 = vunpack.c.h.b16 %v931
          %v1038 = vunpack.c.l.b16 %v932
          %v1039 = vunpack.c.h.b16 %v932
          %v1040 = vunpack.c.l.b16 %v933
          %v1041 = vunpack.c.h.b16 %v933
          %v1042 = vpack.c.b16 %v980, %v978
          %v1043 = vpack.c.b16 %v981, %v979
          %v1044 = vpack.c.b16 %v984, %v982
          %v1045 = vpack.c.b16 %v985, %v983
          %v1046 = vpack.c.b16 %v988, %v986
          %v1047 = vpack.c.b16 %v989, %v987
          %v1048 = vpack.c.b16 %v992, %v990
          %v1049 = vpack.c.b16 %v993, %v991
          %v1050 = vpack.c.b16 %v996, %v994
          %v1051 = vpack.c.b16 %v997, %v995
          %v1052 = vpack.c.b16 %v1000, %v998
          %v1053 = vpack.c.b16 %v1001, %v999
          %v1054 = vpack.c.b16 %v1004, %v1002
          %v1055 = vpack.c.b16 %v1005, %v1003
          %v1056 = vpack.c.b16 %v1008, %v1006
          %v1057 = vpack.c.b16 %v1009, %v1007
          %v1058 = vpack.c.b16 %v1012, %v1010
          %v1059 = vpack.c.b16 %v1013, %v1011
          %v1060 = vpack.c.b16 %v1016, %v1014
          %v1061 = vpack.c.b16 %v1017, %v1015
          %v1062 = vpack.c.b16 %v1020, %v1018
          %v1063 = vpack.c.b16 %v1021, %v1019
          %v1064 = vpack.c.b16 %v1024, %v1022
          %v1065 = vpack.c.b16 %v1025, %v1023
          %v1066 = vpack.c.b16 %v1028, %v1026
          %v1067 = vpack.c.b16 %v1029, %v1027
          %v1068 = vpack.c.b16 %v1032, %v1030
          %v1069 = vpack.c.b16 %v1033, %v1031
          %v1070 = vpack.c.b16 %v1036, %v1034
          %v1071 = vpack.c.b16 %v1037, %v1035
          %v1072 = vpack.c.b16 %v1040, %v1038
          %v1073 = vpack.c.b16 %v1041, %v1039
          %1106 = vmatprep.subr.bf16.mxu0 %v1043
          %1107 = vmatpush1.bf16.msra.mxu0 %v1042
          %1108 = vmatprep.subr.bf16.mxu0 %v1045
          %1109 = vmatpush1.bf16.msra.mxu0 %v1044
          %1110 = vmatprep.subr.bf16.mxu0 %v1047
          %1111 = vmatpush1.bf16.msra.mxu0 %v1046
          %1112 = vmatprep.subr.bf16.mxu0 %v1049
          %1113 = vmatpush1.bf16.msra.mxu0 %v1048
          %1114 = vmatprep.subr.bf16.mxu0 %v1051
          %1115 = vmatpush1.bf16.msra.mxu0 %v1050
          %1116 = vmatprep.subr.bf16.mxu0 %v1053
          %1117 = vmatpush1.bf16.msra.mxu0 %v1052
          %1118 = vmatprep.subr.bf16.mxu0 %v1055
          %1119 = vmatpush1.bf16.msra.mxu0 %v1054
          %1120 = vmatprep.subr.bf16.mxu0 %v1057
          %1121 = vmatpush1.bf16.msra.mxu0 %v1056
          %1122 = vmatprep.subr.bf16.mxu0 %v1059
          %1123 = vmatpush1.bf16.msra.mxu0 %v1058
          %1124 = vmatprep.subr.bf16.mxu0 %v1061
          %1125 = vmatpush1.bf16.msra.mxu0 %v1060
          %1126 = vmatprep.subr.bf16.mxu0 %v1063
          %1127 = vmatpush1.bf16.msra.mxu0 %v1062
          %1128 = vmatprep.subr.bf16.mxu0 %v1065
          %1129 = vmatpush1.bf16.msra.mxu0 %v1064
          %1130 = vmatprep.subr.bf16.mxu0 %v1067
          %1131 = vmatpush1.bf16.msra.mxu0 %v1066
          %1132 = vmatprep.subr.bf16.mxu0 %v1069
          %1133 = vmatpush1.bf16.msra.mxu0 %v1068
          %1134 = vmatprep.subr.bf16.mxu0 %v1071
          %1135 = vmatpush1.bf16.msra.mxu0 %v1070
          %1136 = vmatprep.subr.bf16.mxu0 %v1073
          %1137 = vmatpush1.bf16.msra.mxu0 %v1072
          %1138 = vmatprep.mubr.bf16.mxu0 %v899
          %1139 = vmatmul.mubr.bf16.gmra.mrb[0].mxu0 %v898
          %v1140 = vpop.f32.mrb[0].mxu0
          %v1141 = vadd.f32 %v939, %v1140
          %v1142 = vpop.f32.mrb[0].mxu0
          %v1143 = vadd.f32 %v943, %v1142
          %v1144 = vpop.f32.mrb[0].mxu0
          %v1145 = vadd.f32 %v939, %v1144
          %v1146 = vpop.f32.mrb[0].mxu0
          %v1147 = vadd.f32 %v943, %v1146
          %1148 = vmatprep.mubr.bf16.mxu0 %v901
          %1149 = vmatmul.mubr.bf16.gmra.mrb[0].mxu0 %v900
          %v1150 = vpop.f32.mrb[0].mxu0
          %v1151 = vadd.f32 %v939, %v1150
          %v1152 = vpop.f32.mrb[0].mxu0
          %v1153 = vadd.f32 %v943, %v1152
          %v1154 = vpop.f32.mrb[0].mxu0
          %v1155 = vadd.f32 %v939, %v1154
          %v1156 = vpop.f32.mrb[0].mxu0
          %v1157 = vadd.f32 %v943, %v1156
          %1158 = vdwg.mxu0
          %v1159 = vmax.f32 %v1141, 0.0
          %v1160 = vmax.f32 %v1143, 0.0
          %v1161 = vmax.f32 %v1145, 0.0
          %v1162 = vmax.f32 %v1147, 0.0
          %v1163 = vmax.f32 %v1151, 0.0
          %v1164 = vmax.f32 %v1153, 0.0
          %v1165 = vmax.f32 %v1155, 0.0
          %v1166 = vmax.f32 %v1157, 0.0
          %1167 = vst [vmem:[%s365] sm:$0xff] %v1159
          %1168 = vst [vmem:[%s365 + $0x8] sm:$0xff] %v1160
          %1169 = vst [vmem:[%s365 + $0x10] sm:$0xff] %v1161
          %1170 = vst [vmem:[%s365 + $0x18] sm:$0xff] %v1162
          %1171 = vst [vmem:[%s365 + $0x20] sm:$0xff] %v1163
          %1172 = vst [vmem:[%s365 + $0x28] sm:$0xff] %v1164
          %1173 = vst [vmem:[%s365 + $0x30] sm:$0xff] %v1165
          %1174 = vst [vmem:[%s365 + $0x38] sm:$0xff] %v1166
        $region78: #{tower_forward.11} parent=65 // pred_fallthru
          _
        %s1175 = smul.u32 4, %s21
        %p1176 = scmp.lt.s32.totalorder %s1175, 3
        %s1177 = scalar_select %p1176, %s1175, 3
        %s1178 = smul.addr %s1177, 2
        %s1179 = smul.addr %s1178, 8
        %s1180 = scalar_lea.vmem %s6, %s1179
        // Predicated region
        $region79: #{tower_forward.11} parent=65 // pred_check
          %p1181 = pneg %p190
        $region80: #{tower_forward.11} parent=65 // pred_check_branch
          %1183 = sbr.rel (%p1181) target = $region82
        $region81: #{tower_forward.11} parent=65 // pred_region
          %s1184 = smul.u32 4, %s21
        $region82: #{tower_forward.11} parent=65 // pred_fallthru
          _
        // Predicated region
        $region83: #{tower_forward.11} parent=65 // pred_check
          %p1185 = pneg %p190
        $region84: #{tower_forward.11} parent=65 // pred_check_branch
          %1187 = sbr.rel (%p1185) target = $region86
        $region85: #{tower_forward.11} parent=65 // pred_region
          %s1188 = smul.u32 4, %s21
          %p1189 = scmp.lt.s32.totalorder %s1188, 3
          %s1190 = scalar_select %p1189, %s1188, 3
          %s1191 = smul.addr %s1190, 2
          %s1192 = smul.addr %s1191, 8
          %s1193 = scalar_lea.vmem %s6, %s1192
        $region86: #{tower_forward.11} parent=65 // pred_fallthru
          _
      $region66: #{tower_forward.11} parent=5 // pred_fallthru
        _
      %p1194 = scmp.le.s32.totalorder 2, %s12
      // Predicated region
      $region87: #{tower_forward.11} parent=5 // pred_check
        %p1195 = pneg %p1194
      $region88: #{tower_forward.11} parent=5 // pred_check_branch
        %1197 = sbr.rel (%p1195) target = $region90
      $region89: #{tower_forward.11} parent=5 // pred_region
        %s1198 = ssub.s32 %s12, 2
      $region90: #{tower_forward.11} parent=5 // pred_fallthru
        _
    $region6: #{tower_forward.11} parent=1 // loop_footer
      %s16 = sadd.s32 1, %s12
    $region7: #{tower_forward.11} parent=1 // loop_footer_branch
      %11 = sbr.rel target = $region3
    $region8: #{tower_forward.11} parent=1 // loop_exit
      _

</llo_original>
